<compile_context>
chip_gen: v7x
topology: tpu7x:2x2x1
jax: 0.10.0
libtpu: 0.0.40
codegen_flags: <defaults>
</compile_context>

<pallas_src>
import math
import functools

import jax
import jax.numpy as jnp
from jax.experimental import pallas as pl
from jax.experimental.pallas import tpu as pltpu


BF = jnp.bfloat16  # storage dtype for intermediate activations / matmul operands


def _round_up(x, m):
    return ((x + m - 1) // m) * m


# ----------------------------------------------------------------------------
# Pallas kernels
# ----------------------------------------------------------------------------
def _conv3x3_kernel(alpha_ref, x1_ref, x2_ref, w_ref, b_ref, o_ref, scr_ref,
                    *, offsets, act):
    """Direct 3x3x3 conv on a flattened, padded, channels-first block.

    x1/x2 are two consecutive lane-blocks of the flattened padded input
    (the second one provides the tap halo).  For each of the 27 taps the
    kernel takes a statically lane-shifted window and accumulates
    W_tap (Cout,Cin) @ window (Cin,TN) into an f32 accumulator, then applies
    bias (+ PReLU) and stores a lane-dense (Cout, TN) tile.
    """
    tn = o_ref.shape[2]
    cout = o_ref.shape[1]
    # Stitch the two consecutive blocks into one (Cin, 2*TN) VMEM scratch.
    scr_ref[:, :tn] = x1_ref[0]
    scr_ref[:, tn:] = x2_ref[0]

    acc = jnp.zeros((cout, tn), jnp.float32)
    for t, off in enumerate(offsets):            # 27 static taps
        win = scr_ref[:, off:off + tn]           # (Cin, TN) bf16
        acc = acc + jnp.dot(w_ref[t], win, preferred_element_type=jnp.float32)

    y = acc + b_ref[...]                         # (Cout, 1) broadcast, f32
    if act == "prelu":
        a = alpha_ref[0]
        y = jnp.where(y >= 0, y, a * y)
    o_ref[0] = y.astype(o_ref.dtype)


def _mm_kernel(alpha_ref, x_ref, w_ref, b_ref, *rest, act, has_res):
    """Channels-first matmul: (Cout, K) @ (K, TL) + bias, fused epilogue."""
    if has_res:
        r_ref, o_ref = rest
    else:
        (o_ref,) = rest
    y = jnp.dot(w_ref[...], x_ref[0], preferred_element_type=jnp.float32)
    y = y + b_ref[...]
    if has_res:
        y = y + r_ref[0].astype(jnp.float32)
    if act == "prelu":
        a = alpha_ref[0]
        y = jnp.where(y >= 0, y, a * y)
    elif act == "relu":
        y = jnp.maximum(y, 0.0)
    elif act == "sigmoid":
        y = jax.nn.sigmoid(y)
    o_ref[0] = y.astype(o_ref.dtype)


def _add_act_kernel(alpha_ref, a_ref, b_ref, o_ref, *, act):
    """Fused residual add + PReLU (f32 math, bf16 storage)."""
    s = a_ref[...].astype(jnp.float32) + b_ref[...].astype(jnp.float32)
    if act == "prelu":
        al = alpha_ref[0]
        s = jnp.where(s >= 0, s, al * s)
    o_ref[...] = s.astype(o_ref.dtype)


_SMEM_SPEC = lambda: pl.BlockSpec(memory_space=pltpu.MemorySpace.SMEM)


def _alpha_arr(alpha):
    if alpha is None:
        return jnp.full((1,), 0.25, jnp.float32)
    return jnp.asarray(alpha, jnp.float32).reshape((1,))


# ----------------------------------------------------------------------------
# Pallas wrappers (jitted so identical shapes reuse one compiled kernel)
# ----------------------------------------------------------------------------
@functools.partial(jax.jit, static_argnames=("act",))
def _cf_matmul(x3, w2, bias, alpha=None, residual3=None, *, act="none"):
    """(B, K, L) x (Cout, K) -> (B, Cout, L), bias + activation (+residual) fused."""
    B, K, L = x3.shape
    Cout = w2.shape[0]
    if L >= 128 and L % 128 == 0:
        TL = min(512, L)
    else:
        TL = L                       # tiny deep layers: full-extent lane block
    nL = pl.cdiv(L, TL)

    x3 = x3.astype(BF)
    w2 = w2.astype(BF)
    b2 = bias.reshape(Cout, 1).astype(jnp.float32)
    a1 = _alpha_arr(alpha)

    in_specs = [
        _SMEM_SPEC(),                                            # alpha
        pl.BlockSpec((1, K, TL), lambda b, j: (b, 0, j)),        # activations
        pl.BlockSpec((Cout, K), lambda b, j: (0, 0)),            # weights (resident)
        pl.BlockSpec((Cout, 1), lambda b, j: (0, 0)),            # bias (resident)
    ]
    args = [a1, x3, w2, b2]
    has_res = residual3 is not None
    if has_res:
        in_specs.append(pl.BlockSpec((1, Cout, TL), lambda b, j: (b, 0, j)))
        args.append(residual3.astype(BF))

    kernel = functools.partial(_mm_kernel, act=act, has_res=has_res)
    out = pl.pallas_call(
        kernel,
        out_shape=jax.ShapeDtypeStruct((B, Cout, L), BF),
        grid=(B, nL),
        in_specs=in_specs,
        out_specs=pl.BlockSpec((1, Cout, TL), lambda b, j: (b, 0, j)),
        compiler_params=pltpu.CompilerParams(
            dimension_semantics=("parallel", "parallel")),
    )(*args)
    return out


@functools.partial(jax.jit, static_argnames=("act",))
def conv3x3_cf(x5, w, bias, alpha=None, *, act="none"):
    """3x3x3 'same' conv.  x5: (B, Cin, D, H, W); w: PyTorch (Cout, Cin, 3, 3, 3)."""
    B, Cin, D, H, W = x5.shape
    Cout = w.shape[0]
    Hp, Wp = H + 2, W + 2
    HpWp = Hp * Wp
    dmax = 2 * HpWp + 2 * Wp + 2                      # largest tap offset
    Lo_base = D * HpWp                                # "raw" output length
    TN = _round_up(max(dmax, min(512, Lo_base)), 128)  # lane block (>= halo)
    nb = pl.cdiv(Lo_base, TN)
    Lo = nb * TN
    Lin = (nb + 1) * TN                               # +1 block so x2 always exists

    # Spatial halo pad (the only activation-sized copy), then flatten + tail pad.
    xp = jnp.pad(x5, ((0, 0), (0, 0), (1, 1), (1, 1), (1, 1))).astype(BF)
    xf = xp.reshape(B, Cin, (D + 2) * HpWp)
    xf = jnp.pad(xf, ((0, 0), (0, 0), (0, Lin - (D + 2) * HpWp)))

    w27 = jnp.transpose(w, (2, 3, 4, 0, 1)).reshape(27, Cout, Cin).astype(BF)
    b2 = bias.reshape(Cout, 1).astype(jnp.float32)
    a1 = _alpha_arr(alpha)
    offsets = tuple(kd * HpWp + kh * Wp + kw
                    for kd in range(3) for kh in range(3) for kw in range(3))

    kernel = functools.partial(_conv3x3_kernel, offsets=offsets, act=act)
    y = pl.pallas_call(
        kernel,
        out_shape=jax.ShapeDtypeStruct((B, Cout, Lo), BF),
        grid=(B, nb),
        in_specs=[
            _SMEM_SPEC(),                                           # alpha
            pl.BlockSpec((1, Cin, TN), lambda b, j: (b, 0, j)),     # block j
            pl.BlockSpec((1, Cin, TN), lambda b, j: (b, 0, j + 1)),  # halo block
            pl.BlockSpec((27, Cout, Cin), lambda b, j: (0, 0, 0)),  # weights
            pl.BlockSpec((Cout, 1), lambda b, j: (0, 0)),           # bias
        ],
        out_specs=pl.BlockSpec((1, Cout, TN), lambda b, j: (b, 0, j)),
        scratch_shapes=[pltpu.VMEM((Cin, 2 * TN), BF)],
        compiler_params=pltpu.CompilerParams(
            dimension_semantics=("parallel", "arbitrary")),
    )(a1, xf, xf, w27, b2)

    # Gather the valid voxels back out of the padded-stride index space.
    y = y[:, :, :D * HpWp].reshape(B, Cout, D, Hp, Wp)[:, :, :, :H, :W]
    return y


@functools.partial(jax.jit, static_argnames=("act",))
def add_prelu(a5, b5, alpha=None, *, act="prelu"):
    """out = PReLU(a + b), fused in one Pallas pass."""
    B, C, D, H, W = a5.shape
    L = D * H * W
    R = B * C
    a2 = a5.reshape(R, L).astype(BF)
    b2 = b5.reshape(R, L).astype(BF)
    if L >= 128 and L % 128 == 0:
        TL = min(512, L)
    else:
        TL = L
    nL = pl.cdiv(L, TL)
    al = _alpha_arr(alpha)
    kernel = functools.partial(_add_act_kernel, act=act)
    out = pl.pallas_call(
        kernel,
        out_shape=jax.ShapeDtypeStruct((R, L), BF),
        grid=(nL,),
        in_specs=[
            _SMEM_SPEC(),
            pl.BlockSpec((R, TL), lambda j: (0, j)),
            pl.BlockSpec((R, TL), lambda j: (0, j)),
        ],
        out_specs=pl.BlockSpec((R, TL), lambda j: (0, j)),
        compiler_params=pltpu.CompilerParams(dimension_semantics=("parallel",)),
    )(al, a2, b2)
    return out.reshape(B, C, D, H, W)


# ----------------------------------------------------------------------------
# Conv variants built on the matmul kernel (channels-first)
# ----------------------------------------------------------------------------
def conv_down2(x5, w, b, alpha=None, act="none"):
    """kernel=2, stride=2, valid.  w: (Cout, Cin, 2, 2, 2)."""
    B, C, D, H, W = x5.shape
    Cout = w.shape[0]
    d, h, q = D // 2, H // 2, W // 2
    xr = x5.reshape(B, C, d, 2, h, 2, q, 2)
    xr = jnp.transpose(xr, (0, 1, 3, 5, 7, 2, 4, 6)).reshape(B, 8 * C, d * h * q)
    y = _cf_matmul(xr, w.reshape(Cout, 8 * C), b, alpha=alpha, act=act)
    return y.reshape(B, Cout, d, h, q)


def conv_transpose_up2(x5, w, b, alpha=None, act="none"):
    """ConvTranspose3d kernel=2 stride=2.  w: PyTorch (Cin, Cout, 2, 2, 2)."""
    B, C, D, H, W = x5.shape
    Cout = w.shape[1]
    w8 = jnp.transpose(w, (2, 3, 4, 1, 0)).reshape(8 * Cout, C)
    b8 = jnp.tile(b, 8)
    z = _cf_matmul(x5.reshape(B, C, D * H * W), w8, b8, alpha=alpha, act=act)
    z = z.reshape(B, 2, 2, 2, Cout, D, H, W)
    z = jnp.transpose(z, (0, 4, 5, 1, 6, 2, 7, 3)).reshape(
        B, Cout, 2 * D, 2 * H, 2 * W)
    return z


def conv1x1(x5, w, b, alpha=None, act="none", residual5=None):
    """1x1x1 conv; optional fused residual add on the output."""
    B, C, D, H, W = x5.shape
    Cout = w.shape[0]
    L = D * H * W
    res3 = None if residual5 is None else residual5.reshape(B, Cout, L)
    y = _cf_matmul(x5.reshape(B, C, L), w.reshape(Cout, C), b,
                   alpha=alpha, residual3=res3, act=act)
    return y.reshape(B, Cout, D, H, W)


def upsample_trilinear(x, out_size):
    """F.interpolate(mode='trilinear', align_corners=False); x: (B, C, D, H, W)."""
    x = x.astype(jnp.float32)

    def interp_axis(x, axis, out_n):
        in_n = x.shape[axis]
        scale = in_n / out_n
        o = jnp.arange(out_n, dtype=jnp.float32)
        src = jnp.maximum(scale * (o + 0.5) - 0.5, 0.0)
        i0 = jnp.minimum(jnp.floor(src).astype(jnp.int32), in_n - 1)
        i1 = jnp.minimum(i0 + 1, in_n - 1)
        w1 = src - i0.astype(jnp.float32)
        x0 = jnp.take(x, i0, axis=axis)
        x1 = jnp.take(x, i1, axis=axis)
        shp = [1] * x.ndim
        shp[axis] = out_n
        w1 = w1.reshape(shp)
        return x0 * (1.0 - w1) + x1 * w1

    x = interp_axis(x, 2, out_size[0])
    x = interp_axis(x, 3, out_size[1])
    x = interp_axis(x, 4, out_size[2])
    return x


# ----------------------------------------------------------------------------
# Parameter initialization (deterministic, PyTorch-shaped)
# ----------------------------------------------------------------------------
class KeyGen:
    def __init__(self, key):
        self.key = key

    def __call__(self):
        self.key, sub = jax.random.split(self.key)
        return sub


def init_conv(key, cin, cout, k):
    k1, k2 = jax.random.split(key)
    fan_in = cin * k * k * k
    bound = 1.0 / math.sqrt(fan_in)
    w = jax.random.uniform(k1, (cout, cin, k, k, k), jnp.float32, -bound, bound)
    b = jax.random.uniform(k2, (cout,), jnp.float32, -bound, bound)
    return {'w': w, 'b': b}


def init_convT(key, cin, cout, k=2):
    k1, k2 = jax.random.split(key)
    fan_in = cout * k * k * k
    bound = 1.0 / math.sqrt(fan_in)
    w = jax.random.uniform(k1, (cin, cout, k, k, k), jnp.float32, -bound, bound)
    b = jax.random.uniform(k2, (cout,), jnp.float32, -bound, bound)
    return {'w': w, 'b': b}


def prelu_param():
    # nn.PReLU() default: one shared parameter, init 0.25
    return jnp.full((1,), 0.25, jnp.float32)


def init_encoder(kg, ch, in_ch):
    p = {}
    p['prelu1_conv'] = init_conv(kg(), in_ch, ch[0], 3); p['prelu1_a'] = prelu_param()
    p['drop1_conv'] = init_conv(kg(), ch[0], ch[1], 2);  p['drop1_a'] = prelu_param()
    p['layer2_c1'] = init_conv(kg(), ch[1], ch[1], 3);   p['layer2_a1'] = prelu_param()
    p['layer2_c2'] = init_conv(kg(), ch[1], ch[1], 3)
    p['prelu2_a'] = prelu_param()
    p['drop2_conv'] = init_conv(kg(), ch[1], ch[2], 2);  p['drop2_a'] = prelu_param()
    p['layer3_c1'] = init_conv(kg(), ch[2], ch[2], 3);   p['layer3_a1'] = prelu_param()
    p['layer3_c2'] = init_conv(kg(), ch[2], ch[2], 3);   p['layer3_a2'] = prelu_param()
    p['layer3_c3'] = init_conv(kg(), ch[2], ch[2], 3)
    p['prelu3_a'] = prelu_param()
    p['drop3_conv'] = init_conv(kg(), ch[2], ch[3], 2);  p['drop3_a'] = prelu_param()
    p['layer4_c1'] = init_conv(kg(), ch[3], ch[3], 3);   p['layer4_a1'] = prelu_param()
    p['layer4_c2'] = init_conv(kg(), ch[3], ch[3], 3);   p['layer4_a2'] = prelu_param()
    p['layer4_c3'] = init_conv(kg(), ch[3], ch[3], 3)
    p['prelu4_a'] = prelu_param()
    p['drop4_conv'] = init_conv(kg(), ch[3], ch[4], 2);  p['drop4_a'] = prelu_param()
    p['layer5_c1'] = init_conv(kg(), ch[4], ch[4], 3);   p['layer5_a1'] = prelu_param()
    p['layer5_c2'] = init_conv(kg(), ch[4], ch[4], 3);   p['layer5_a2'] = prelu_param()
    p['layer5_c3'] = init_conv(kg(), ch[4], ch[4], 3)
    p['prelu5_a'] = prelu_param()
    p['drop5_convT'] = init_convT(kg(), ch[4], ch[2], 2); p['drop5_a'] = prelu_param()
    return p


def init_ag(kg, c):
    inter = max(c // 2, 1)
    return {
        'wx': init_conv(kg(), c, inter, 2),
        'wg': init_conv(kg(), 2 * c, inter, 1),
        'psi': init_conv(kg(), inter, 1, 1),
        'wy': init_conv(kg(), c, c, 1),
    }


def init_decoder(kg, ch, out_channels):
    p = {}
    p['ag4_t1'] = init_ag(kg, ch[3]); p['ag4_rgb'] = init_ag(kg, ch[3])
    p['layer4a_c1'] = init_conv(kg(), 2 * ch[3] + 2 * ch[2], ch[3], 3)
    p['layer4a_a1'] = prelu_param()
    p['layer4a_c2'] = init_conv(kg(), ch[3], ch[3], 3); p['layer4a_a2'] = prelu_param()
    p['layer4a_c3'] = init_conv(kg(), ch[3], ch[3], 3)
    p['layer4b_a'] = prelu_param()
    p['layer4c_convT'] = init_convT(kg(), ch[3], ch[3], 2); p['layer4c_a'] = prelu_param()
    p['ag3_t1'] = init_ag(kg, ch[2]); p['ag3_rgb'] = init_ag(kg, ch[2])
    p['layer3a_c1'] = init_conv(kg(), ch[4], ch[3], 3); p['layer3a_a1'] = prelu_param()
    p['layer3a_c2'] = init_conv(kg(), ch[3], ch[3], 3); p['layer3a_a2'] = prelu_param()
    p['layer3a_c3'] = init_conv(kg(), ch[3], ch[3], 3)
    p['layer3b_a'] = prelu_param()
    p['layer3c_convT'] = init_convT(kg(), ch[3], ch[2], 2); p['layer3c_a'] = prelu_param()
    p['ag2_t1'] = init_ag(kg, ch[1]); p['ag2_rgb'] = init_ag(kg, ch[1])
    p['layer2a_c1'] = init_conv(kg(), ch[3], ch[2], 3); p['layer2a_a1'] = prelu_param()
    p['layer2a_c2'] = init_conv(kg(), ch[2], ch[2], 3)
    p['layer2b_a'] = prelu_param()
    p['layer2c_convT'] = init_convT(kg(), ch[2], ch[1], 2); p['layer2c_a'] = prelu_param()
    p['ag1_t1'] = init_ag(kg, ch[0]); p['ag1_rgb'] = init_ag(kg, ch[0])
    p['layer1a_c1'] = init_conv(kg(), ch[2], ch[1], 3)
    p['layer1b_a'] = prelu_param()
    p['layer1c_conv'] = init_conv(kg(), ch[1], out_channels, 1)
    return p


# ----------------------------------------------------------------------------
# Network forward (functional, channels-first everywhere)
# ----------------------------------------------------------------------------
def attention_gate(p, x, xg, g, in_shape):
    theta = conv_down2(xg, p['wx']['w'], p['wx']['b'], act='none')
    # ReLU(theta + phi): fuse theta as residual into the Wg 1x1 conv.
    s = conv1x1(g, p['wg']['w'], p['wg']['b'], act='relu', residual5=theta)
    mask = conv1x1(s, p['psi']['w'], p['psi']['b'], act='sigmoid')
    up = upsample_trilinear(mask, in_shape)                 # (B,1,...) f32
    attended = (up * x.astype(jnp.float32)).astype(BF)
    # Wy(attended) + x fused as residual.
    return conv1x1(attended, p['wy']['w'], p['wy']['b'], act='none', residual5=x)


def encoder_forward(p, x):
    pre = {}
    pre[1] = conv3x3_cf(x, p['prelu1_conv']['w'], p['prelu1_conv']['b'],
                        alpha=p['prelu1_a'], act='prelu')
    # TODO(synk): Dropout layers are identity (inference semantics).
    x = conv_down2(pre[1], p['drop1_conv']['w'], p['drop1_conv']['b'],
                   alpha=p['drop1_a'], act='prelu')

    r = conv3x3_cf(x, p['layer2_c1']['w'], p['layer2_c1']['b'],
                   alpha=p['layer2_a1'], act='prelu')
    r = conv3x3_cf(r, p['layer2_c2']['w'], p['layer2_c2']['b'], act='none')
    pre[2] = add_prelu(r, x, alpha=p['prelu2_a'])
    x = conv_down2(pre[2], p['drop2_conv']['w'], p['drop2_conv']['b'],
                   alpha=p['drop2_a'], act='prelu')

    r = conv3x3_cf(x, p['layer3_c1']['w'], p['layer3_c1']['b'],
                   alpha=p['layer3_a1'], act='prelu')
    r = conv3x3_cf(r, p['layer3_c2']['w'], p['layer3_c2']['b'],
                   alpha=p['layer3_a2'], act='prelu')
    r = conv3x3_cf(r, p['layer3_c3']['w'], p['layer3_c3']['b'], act='none')
    pre[3] = add_prelu(r, x, alpha=p['prelu3_a'])
    x = conv_down2(pre[3], p['drop3_conv']['w'], p['drop3_conv']['b'],
                   alpha=p['drop3_a'], act='prelu')

    r = conv3x3_cf(x, p['layer4_c1']['w'], p['layer4_c1']['b'],
                   alpha=p['layer4_a1'], act='prelu')
    r = conv3x3_cf(r, p['layer4_c2']['w'], p['layer4_c2']['b'],
                   alpha=p['layer4_a2'], act='prelu')
    r = conv3x3_cf(r, p['layer4_c3']['w'], p['layer4_c3']['b'], act='none')
    pre[4] = add_prelu(r, x, alpha=p['prelu4_a'])
    x = conv_down2(pre[4], p['drop4_conv']['w'], p['drop4_conv']['b'],
                   alpha=p['drop4_a'], act='prelu')

    r = conv3x3_cf(x, p['layer5_c1']['w'], p['layer5_c1']['b'],
                   alpha=p['layer5_a1'], act='prelu')
    r = conv3x3_cf(r, p['layer5_c2']['w'], p['layer5_c2']['b'],
                   alpha=p['layer5_a2'], act='prelu')
    r = conv3x3_cf(r, p['layer5_c3']['w'], p['layer5_c3']['b'], act='none')
    pre[5] = add_prelu(r, x, alpha=p['prelu5_a'])
    x = conv_transpose_up2(pre[5], p['drop5_convT']['w'], p['drop5_convT']['b'],
                           alpha=p['drop5_a'], act='prelu')
    return pre, x


def decoder_forward(p, pre_t1, drop_t1, pre_rgb, drop_rgb, mri_dims, use_sigmoid):
    d8 = tuple(d // 8 for d in mri_dims)
    d4 = tuple(d // 4 for d in mri_dims)
    d2 = tuple(d // 2 for d in mri_dims)

    merge_t1_rgb = jnp.concatenate([drop_t1, drop_rgb], axis=1)
    pr4_t1 = attention_gate(p['ag4_t1'], pre_t1[4], pre_rgb[4], pre_rgb[5], d8)
    pr4_rgb = attention_gate(p['ag4_rgb'], pre_rgb[4], pre_t1[4], pre_t1[5], d8)
    merge_f = jnp.concatenate([pr4_t1, pr4_rgb, drop_t1, drop_rgb], axis=1)
    h = conv3x3_cf(merge_f, p['layer4a_c1']['w'], p['layer4a_c1']['b'],
                   alpha=p['layer4a_a1'], act='prelu')
    h = conv3x3_cf(h, p['layer4a_c2']['w'], p['layer4a_c2']['b'],
                   alpha=p['layer4a_a2'], act='prelu')
    h = conv3x3_cf(h, p['layer4a_c3']['w'], p['layer4a_c3']['b'], act='none')
    h = add_prelu(merge_t1_rgb, h, alpha=p['layer4b_a'])
    drop4 = conv_transpose_up2(h, p['layer4c_convT']['w'], p['layer4c_convT']['b'],
                               alpha=p['layer4c_a'], act='prelu')

    pr3_t1 = attention_gate(p['ag3_t1'], pre_t1[3], pre_rgb[3], pr4_rgb, d4)
    pr3_rgb = attention_gate(p['ag3_rgb'], pre_rgb[3], pre_t1[3], pr4_t1, d4)
    merge3 = jnp.concatenate([drop4, pr3_t1, pr3_rgb], axis=1)
    h = conv3x3_cf(merge3, p['layer3a_c1']['w'], p['layer3a_c1']['b'],
                   alpha=p['layer3a_a1'], act='prelu')
    h = conv3x3_cf(h, p['layer3a_c2']['w'], p['layer3a_c2']['b'],
                   alpha=p['layer3a_a2'], act='prelu')
    h = conv3x3_cf(h, p['layer3a_c3']['w'], p['layer3a_c3']['b'], act='none')
    h = add_prelu(drop4, h, alpha=p['layer3b_a'])
    drop3 = conv_transpose_up2(h, p['layer3c_convT']['w'], p['layer3c_convT']['b'],
                               alpha=p['layer3c_a'], act='prelu')

    pr2_t1 = attention_gate(p['ag2_t1'], pre_t1[2], pre_rgb[2], pr3_rgb, d2)
    pr2_rgb = attention_gate(p['ag2_rgb'], pre_rgb[2], pre_t1[2], pr3_t1, d2)
    merge2 = jnp.concatenate([drop3, pr2_t1, pr2_rgb], axis=1)
    h = conv3x3_cf(merge2, p['layer2a_c1']['w'], p['layer2a_c1']['b'],
                   alpha=p['layer2a_a1'], act='prelu')
    h = conv3x3_cf(h, p['layer2a_c2']['w'], p['layer2a_c2']['b'], act='none')
    h = add_prelu(drop3, h, alpha=p['layer2b_a'])
    drop2 = conv_transpose_up2(h, p['layer2c_convT']['w'], p['layer2c_convT']['b'],
                               alpha=p['layer2c_a'], act='prelu')

    pr1_t1 = attention_gate(p['ag1_t1'], pre_t1[1], pre_rgb[1], pr2_rgb, mri_dims)
    pr1_rgb = attention_gate(p['ag1_rgb'], pre_rgb[1], pre_t1[1], pr2_t1, mri_dims)
    merge1 = jnp.concatenate([drop2, pr1_t1, pr1_rgb], axis=1)
    h = conv3x3_cf(merge1, p['layer1a_c1']['w'], p['layer1a_c1']['b'], act='none')
    h = add_prelu(drop2, h, alpha=p['layer1b_a'])
    pre_out = conv1x1(h, p['layer1c_conv']['w'], p['layer1c_conv']['b'], act='none')

    pre_out = pre_out.astype(jnp.float32)
    if use_sigmoid:
        return jax.nn.sigmoid(pre_out)
    return jax.nn.softmax(pre_out, axis=1)   # torch Softmax(dim=1) == channel axis


def agynet_forward(params, t1, rgb, mri_dims, use_sigmoid):
    # Inputs / outputs are PyTorch-style NCDHW; internal compute is channels-first
    # with the flattened spatial axis on the lane dimension.
    t1 = t1.astype(BF)
    rgb = rgb.astype(BF)
    pre_t1, d_t1 = encoder_forward(params['t1'], t1)
    pre_rgb, d_rgb = encoder_forward(params['rgb'], rgb)
    out = decoder_forward(params['dec'], pre_t1, d_t1, pre_rgb, d_rgb,
                          mri_dims, use_sigmoid)
    return out


# ----------------------------------------------------------------------------
# Driver
# ----------------------------------------------------------------------------
if __name__ == "__main__":
    mri_dims = (16, 16, 16)          # must be divisible by 16
    ynet_ch = [2, 4, 8, 16, 32]      # doubling channels (required by AG wiring)
    out_channels = 2                 # -> softmax head (use_sigmoid=False)
    B = 1

    kg = KeyGen(jax.random.PRNGKey(1))
    params = {
        't1': init_encoder(kg, ynet_ch, 1),
        'rgb': init_encoder(kg, ynet_ch, 3),
        'dec': init_decoder(kg, ynet_ch, out_channels),
    }

    k_in1, k_in2 = jax.random.split(jax.random.PRNGKey(0))
    t1 = jax.random.normal(k_in1, (B, 1) + mri_dims, jnp.float32)
    rgb = jax.random.normal(k_in2, (B, 3) + mri_dims, jnp.float32)

    out = agynet_forward(params, t1, rgb, mri_dims,
                         use_sigmoid=(out_channels == 1))
    out = jax.block_until_ready(out)
    assert out.shape == (B, out_channels) + mri_dims, out.shape
    assert bool(jnp.all(jnp.isfinite(out)))
    print("KERNEL_OK")
</pallas_src>

<mosaic_0001>
module attributes {stable_mosaic.version = 11 : i64} {
  func.func @_conv3x3_kernel(%arg0: i32, %arg1: i32, %arg2: memref<1xf32, #tpu.memory_space<smem>>, %arg3: memref<1x1x768xbf16, #tpu.memory_space<vmem>>, %arg4: memref<1x1x768xbf16, #tpu.memory_space<vmem>>, %arg5: memref<27x2x1xbf16, #tpu.memory_space<vmem>>, %arg6: memref<2x1xf32, #tpu.memory_space<vmem>>, %arg7: memref<1x2x768xbf16, #tpu.memory_space<vmem>>, %arg8: memref<1x1536xbf16, #tpu.memory_space<vmem>>) attributes {dimension_semantics = [#tpu.dimension_semantics<parallel>, #tpu.dimension_semantics<arbitrary>], iteration_bounds = array<i64: 1, 7>, scalar_prefetch = 0 : i64, scratch_operands = 1 : i64, tpu.core_type = #tpu.core_type<tc>, window_params = [{transform_indices = @transform_0, window_bounds = array<i64: 1>}, {transform_indices = @transform_1, window_bounds = array<i64: 1, 1, 768>}, {transform_indices = @transform_2, window_bounds = array<i64: 1, 1, 768>}, {pipeline_mode = #tpu.pipeline_mode<synchronous>, transform_indices = @transform_3, window_bounds = array<i64: 27, 2, 1>}, {pipeline_mode = #tpu.pipeline_mode<synchronous>, transform_indices = @transform_4, window_bounds = array<i64: 2, 1>}, {transform_indices = @transform_5, window_bounds = array<i64: 1, 2, 768>}]} {
    %c0 = arith.constant 0 : index
    %c0_0 = arith.constant 0 : index
    %c0_1 = arith.constant 0 : index
    %0 = vector.load %arg3[%c0, %c0_0, %c0_1] : memref<1x1x768xbf16, #tpu.memory_space<vmem>>, vector<1x1x768xbf16>
    %1 = vector.shape_cast %0 : vector<1x1x768xbf16> to vector<1x768xbf16>
    %c0_2 = arith.constant 0 : index
    %c0_3 = arith.constant 0 : index
    %2 = vector.load %arg8[%c0_2, %c0_3] : memref<1x1536xbf16, #tpu.memory_space<vmem>>, vector<1x768xbf16>
    tpu.vector_store %arg8[%c0_2, %c0_3], %1 {strides = array<i32>} : memref<1x1536xbf16, #tpu.memory_space<vmem>>, vector<1x768xbf16>,
    %c0_4 = arith.constant 0 : index
    %c0_5 = arith.constant 0 : index
    %c0_6 = arith.constant 0 : index
    %3 = vector.load %arg4[%c0_4, %c0_5, %c0_6] : memref<1x1x768xbf16, #tpu.memory_space<vmem>>, vector<1x1x768xbf16>
    %4 = vector.shape_cast %3 : vector<1x1x768xbf16> to vector<1x768xbf16>
    %c0_7 = arith.constant 0 : index
    %c768 = arith.constant 768 : index
    %5 = vector.load %arg8[%c0_7, %c768] : memref<1x1536xbf16, #tpu.memory_space<vmem>>, vector<1x768xbf16>
    tpu.vector_store %arg8[%c0_7, %c768], %4 {strides = array<i32>} : memref<1x1536xbf16, #tpu.memory_space<vmem>>, vector<1x768xbf16>,
    %cst = arith.constant 0.000000e+00 : f32
    %6 = vector.broadcast %cst : f32 to vector<2x768xf32>
    %c0_8 = arith.constant 0 : index
    %c0_9 = arith.constant 0 : index
    %7 = vector.load %arg8[%c0_8, %c0_9] : memref<1x1536xbf16, #tpu.memory_space<vmem>>, vector<1x768xbf16>
    %c0_10 = arith.constant 0 : index
    %c0_11 = arith.constant 0 : index
    %c0_12 = arith.constant 0 : index
    %8 = vector.load %arg5[%c0_10, %c0_11, %c0_12] : memref<27x2x1xbf16, #tpu.memory_space<vmem>>, vector<1x2x1xbf16>
    %9 = vector.shape_cast %8 : vector<1x2x1xbf16> to vector<2x1xbf16>
    %cst_13 = arith.constant dense<0.000000e+00> : vector<2x768xf32>
    %10 = tpu.matmul %9, %7, %cst_13 {dimension_numbers = #tpu.dot_dimension_numbers<[1], [0], [0], [1], [0, 0, 1, 1], [], []>} : vector<2x1xbf16>, vector<1x768xbf16>, vector<2x768xf32> -> vector<2x768xf32>
    %11 = arith.addf %6, %10 : vector<2x768xf32>
    %c0_14 = arith.constant 0 : index
    %c1 = arith.constant 1 : index
    %12 = vector.load %arg8[%c0_14, %c1] : memref<1x1536xbf16, #tpu.memory_space<vmem>>, vector<1x768xbf16>
    %c1_15 = arith.constant 1 : index
    %c0_16 = arith.constant 0 : index
    %c0_17 = arith.constant 0 : index
    %13 = vector.load %arg5[%c1_15, %c0_16, %c0_17] : memref<27x2x1xbf16, #tpu.memory_space<vmem>>, vector<1x2x1xbf16>
    %14 = vector.shape_cast %13 : vector<1x2x1xbf16> to vector<2x1xbf16>
    %cst_18 = arith.constant dense<0.000000e+00> : vector<2x768xf32>
    %15 = tpu.matmul %14, %12, %cst_18 {dimension_numbers = #tpu.dot_dimension_numbers<[1], [0], [0], [1], [0, 0, 1, 1], [], []>} : vector<2x1xbf16>, vector<1x768xbf16>, vector<2x768xf32> -> vector<2x768xf32>
    %16 = arith.addf %11, %15 : vector<2x768xf32>
    %c0_19 = arith.constant 0 : index
    %c2 = arith.constant 2 : index
    %17 = vector.load %arg8[%c0_19, %c2] : memref<1x1536xbf16, #tpu.memory_space<vmem>>, vector<1x768xbf16>
    %c2_20 = arith.constant 2 : index
    %c0_21 = arith.constant 0 : index
    %c0_22 = arith.constant 0 : index
    %18 = vector.load %arg5[%c2_20, %c0_21, %c0_22] : memref<27x2x1xbf16, #tpu.memory_space<vmem>>, vector<1x2x1xbf16>
    %19 = vector.shape_cast %18 : vector<1x2x1xbf16> to vector<2x1xbf16>
    %cst_23 = arith.constant dense<0.000000e+00> : vector<2x768xf32>
    %20 = tpu.matmul %19, %17, %cst_23 {dimension_numbers = #tpu.dot_dimension_numbers<[1], [0], [0], [1], [0, 0, 1, 1], [], []>} : vector<2x1xbf16>, vector<1x768xbf16>, vector<2x768xf32> -> vector<2x768xf32>
    %21 = arith.addf %16, %20 : vector<2x768xf32>
    %c0_24 = arith.constant 0 : index
    %c18 = arith.constant 18 : index
    %22 = vector.load %arg8[%c0_24, %c18] : memref<1x1536xbf16, #tpu.memory_space<vmem>>, vector<1x768xbf16>
    %c3 = arith.constant 3 : index
    %c0_25 = arith.constant 0 : index
    %c0_26 = arith.constant 0 : index
    %23 = vector.load %arg5[%c3, %c0_25, %c0_26] : memref<27x2x1xbf16, #tpu.memory_space<vmem>>, vector<1x2x1xbf16>
    %24 = vector.shape_cast %23 : vector<1x2x1xbf16> to vector<2x1xbf16>
    %cst_27 = arith.constant dense<0.000000e+00> : vector<2x768xf32>
    %25 = tpu.matmul %24, %22, %cst_27 {dimension_numbers = #tpu.dot_dimension_numbers<[1], [0], [0], [1], [0, 0, 1, 1], [], []>} : vector<2x1xbf16>, vector<1x768xbf16>, vector<2x768xf32> -> vector<2x768xf32>
    %26 = arith.addf %21, %25 : vector<2x768xf32>
    %c0_28 = arith.constant 0 : index
    %c19 = arith.constant 19 : index
    %27 = vector.load %arg8[%c0_28, %c19] : memref<1x1536xbf16, #tpu.memory_space<vmem>>, vector<1x768xbf16>
    %c4 = arith.constant 4 : index
    %c0_29 = arith.constant 0 : index
    %c0_30 = arith.constant 0 : index
    %28 = vector.load %arg5[%c4, %c0_29, %c0_30] : memref<27x2x1xbf16, #tpu.memory_space<vmem>>, vector<1x2x1xbf16>
    %29 = vector.shape_cast %28 : vector<1x2x1xbf16> to vector<2x1xbf16>
    %cst_31 = arith.constant dense<0.000000e+00> : vector<2x768xf32>
    %30 = tpu.matmul %29, %27, %cst_31 {dimension_numbers = #tpu.dot_dimension_numbers<[1], [0], [0], [1], [0, 0, 1, 1], [], []>} : vector<2x1xbf16>, vector<1x768xbf16>, vector<2x768xf32> -> vector<2x768xf32>
    %31 = arith.addf %26, %30 : vector<2x768xf32>
    %c0_32 = arith.constant 0 : index
    %c20 = arith.constant 20 : index
    %32 = vector.load %arg8[%c0_32, %c20] : memref<1x1536xbf16, #tpu.memory_space<vmem>>, vector<1x768xbf16>
    %c5 = arith.constant 5 : index
    %c0_33 = arith.constant 0 : index
    %c0_34 = arith.constant 0 : index
    %33 = vector.load %arg5[%c5, %c0_33, %c0_34] : memref<27x2x1xbf16, #tpu.memory_space<vmem>>, vector<1x2x1xbf16>
    %34 = vector.shape_cast %33 : vector<1x2x1xbf16> to vector<2x1xbf16>
    %cst_35 = arith.constant dense<0.000000e+00> : vector<2x768xf32>
    %35 = tpu.matmul %34, %32, %cst_35 {dimension_numbers = #tpu.dot_dimension_numbers<[1], [0], [0], [1], [0, 0, 1, 1], [], []>} : vector<2x1xbf16>, vector<1x768xbf16>, vector<2x768xf32> -> vector<2x768xf32>
    %36 = arith.addf %31, %35 : vector<2x768xf32>
    %c0_36 = arith.constant 0 : index
    %c36 = arith.constant 36 : index
    %37 = vector.load %arg8[%c0_36, %c36] : memref<1x1536xbf16, #tpu.memory_space<vmem>>, vector<1x768xbf16>
    %c6 = arith.constant 6 : index
    %c0_37 = arith.constant 0 : index
    %c0_38 = arith.constant 0 : index
    %38 = vector.load %arg5[%c6, %c0_37, %c0_38] : memref<27x2x1xbf16, #tpu.memory_space<vmem>>, vector<1x2x1xbf16>
    %39 = vector.shape_cast %38 : vector<1x2x1xbf16> to vector<2x1xbf16>
    %cst_39 = arith.constant dense<0.000000e+00> : vector<2x768xf32>
    %40 = tpu.matmul %39, %37, %cst_39 {dimension_numbers = #tpu.dot_dimension_numbers<[1], [0], [0], [1], [0, 0, 1, 1], [], []>} : vector<2x1xbf16>, vector<1x768xbf16>, vector<2x768xf32> -> vector<2x768xf32>
    %41 = arith.addf %36, %40 : vector<2x768xf32>
    %c0_40 = arith.constant 0 : index
    %c37 = arith.constant 37 : index
    %42 = vector.load %arg8[%c0_40, %c37] : memref<1x1536xbf16, #tpu.memory_space<vmem>>, vector<1x768xbf16>
    %c7 = arith.constant 7 : index
    %c0_41 = arith.constant 0 : index
    %c0_42 = arith.constant 0 : index
    %43 = vector.load %arg5[%c7, %c0_41, %c0_42] : memref<27x2x1xbf16, #tpu.memory_space<vmem>>, vector<1x2x1xbf16>
    %44 = vector.shape_cast %43 : vector<1x2x1xbf16> to vector<2x1xbf16>
    %cst_43 = arith.constant dense<0.000000e+00> : vector<2x768xf32>
    %45 = tpu.matmul %44, %42, %cst_43 {dimension_numbers = #tpu.dot_dimension_numbers<[1], [0], [0], [1], [0, 0, 1, 1], [], []>} : vector<2x1xbf16>, vector<1x768xbf16>, vector<2x768xf32> -> vector<2x768xf32>
    %46 = arith.addf %41, %45 : vector<2x768xf32>
    %c0_44 = arith.constant 0 : index
    %c38 = arith.constant 38 : index
    %47 = vector.load %arg8[%c0_44, %c38] : memref<1x1536xbf16, #tpu.memory_space<vmem>>, vector<1x768xbf16>
    %c8 = arith.constant 8 : index
    %c0_45 = arith.constant 0 : index
    %c0_46 = arith.constant 0 : index
    %48 = vector.load %arg5[%c8, %c0_45, %c0_46] : memref<27x2x1xbf16, #tpu.memory_space<vmem>>, vector<1x2x1xbf16>
    %49 = vector.shape_cast %48 : vector<1x2x1xbf16> to vector<2x1xbf16>
    %cst_47 = arith.constant dense<0.000000e+00> : vector<2x768xf32>
    %50 = tpu.matmul %49, %47, %cst_47 {dimension_numbers = #tpu.dot_dimension_numbers<[1], [0], [0], [1], [0, 0, 1, 1], [], []>} : vector<2x1xbf16>, vector<1x768xbf16>, vector<2x768xf32> -> vector<2x768xf32>
    %51 = arith.addf %46, %50 : vector<2x768xf32>
    %c0_48 = arith.constant 0 : index
    %c324 = arith.constant 324 : index
    %52 = vector.load %arg8[%c0_48, %c324] : memref<1x1536xbf16, #tpu.memory_space<vmem>>, vector<1x768xbf16>
    %c9 = arith.constant 9 : index
    %c0_49 = arith.constant 0 : index
    %c0_50 = arith.constant 0 : index
    %53 = vector.load %arg5[%c9, %c0_49, %c0_50] : memref<27x2x1xbf16, #tpu.memory_space<vmem>>, vector<1x2x1xbf16>
    %54 = vector.shape_cast %53 : vector<1x2x1xbf16> to vector<2x1xbf16>
    %cst_51 = arith.constant dense<0.000000e+00> : vector<2x768xf32>
    %55 = tpu.matmul %54, %52, %cst_51 {dimension_numbers = #tpu.dot_dimension_numbers<[1], [0], [0], [1], [0, 0, 1, 1], [], []>} : vector<2x1xbf16>, vector<1x768xbf16>, vector<2x768xf32> -> vector<2x768xf32>
    %56 = arith.addf %51, %55 : vector<2x768xf32>
    %c0_52 = arith.constant 0 : index
    %c325 = arith.constant 325 : index
    %57 = vector.load %arg8[%c0_52, %c325] : memref<1x1536xbf16, #tpu.memory_space<vmem>>, vector<1x768xbf16>
    %c10 = arith.constant 10 : index
    %c0_53 = arith.constant 0 : index
    %c0_54 = arith.constant 0 : index
    %58 = vector.load %arg5[%c10, %c0_53, %c0_54] : memref<27x2x1xbf16, #tpu.memory_space<vmem>>, vector<1x2x1xbf16>
    %59 = vector.shape_cast %58 : vector<1x2x1xbf16> to vector<2x1xbf16>
    %cst_55 = arith.constant dense<0.000000e+00> : vector<2x768xf32>
    %60 = tpu.matmul %59, %57, %cst_55 {dimension_numbers = #tpu.dot_dimension_numbers<[1], [0], [0], [1], [0, 0, 1, 1], [], []>} : vector<2x1xbf16>, vector<1x768xbf16>, vector<2x768xf32> -> vector<2x768xf32>
    %61 = arith.addf %56, %60 : vector<2x768xf32>
    %c0_56 = arith.constant 0 : index
    %c326 = arith.constant 326 : index
    %62 = vector.load %arg8[%c0_56, %c326] : memref<1x1536xbf16, #tpu.memory_space<vmem>>, vector<1x768xbf16>
    %c11 = arith.constant 11 : index
    %c0_57 = arith.constant 0 : index
    %c0_58 = arith.constant 0 : index
    %63 = vector.load %arg5[%c11, %c0_57, %c0_58] : memref<27x2x1xbf16, #tpu.memory_space<vmem>>, vector<1x2x1xbf16>
    %64 = vector.shape_cast %63 : vector<1x2x1xbf16> to vector<2x1xbf16>
    %cst_59 = arith.constant dense<0.000000e+00> : vector<2x768xf32>
    %65 = tpu.matmul %64, %62, %cst_59 {dimension_numbers = #tpu.dot_dimension_numbers<[1], [0], [0], [1], [0, 0, 1, 1], [], []>} : vector<2x1xbf16>, vector<1x768xbf16>, vector<2x768xf32> -> vector<2x768xf32>
    %66 = arith.addf %61, %65 : vector<2x768xf32>
    %c0_60 = arith.constant 0 : index
    %c342 = arith.constant 342 : index
    %67 = vector.load %arg8[%c0_60, %c342] : memref<1x1536xbf16, #tpu.memory_space<vmem>>, vector<1x768xbf16>
    %c12 = arith.constant 12 : index
    %c0_61 = arith.constant 0 : index
    %c0_62 = arith.constant 0 : index
    %68 = vector.load %arg5[%c12, %c0_61, %c0_62] : memref<27x2x1xbf16, #tpu.memory_space<vmem>>, vector<1x2x1xbf16>
    %69 = vector.shape_cast %68 : vector<1x2x1xbf16> to vector<2x1xbf16>
    %cst_63 = arith.constant dense<0.000000e+00> : vector<2x768xf32>
    %70 = tpu.matmul %69, %67, %cst_63 {dimension_numbers = #tpu.dot_dimension_numbers<[1], [0], [0], [1], [0, 0, 1, 1], [], []>} : vector<2x1xbf16>, vector<1x768xbf16>, vector<2x768xf32> -> vector<2x768xf32>
    %71 = arith.addf %66, %70 : vector<2x768xf32>
    %c0_64 = arith.constant 0 : index
    %c343 = arith.constant 343 : index
    %72 = vector.load %arg8[%c0_64, %c343] : memref<1x1536xbf16, #tpu.memory_space<vmem>>, vector<1x768xbf16>
    %c13 = arith.constant 13 : index
    %c0_65 = arith.constant 0 : index
    %c0_66 = arith.constant 0 : index
    %73 = vector.load %arg5[%c13, %c0_65, %c0_66] : memref<27x2x1xbf16, #tpu.memory_space<vmem>>, vector<1x2x1xbf16>
    %74 = vector.shape_cast %73 : vector<1x2x1xbf16> to vector<2x1xbf16>
    %cst_67 = arith.constant dense<0.000000e+00> : vector<2x768xf32>
    %75 = tpu.matmul %74, %72, %cst_67 {dimension_numbers = #tpu.dot_dimension_numbers<[1], [0], [0], [1], [0, 0, 1, 1], [], []>} : vector<2x1xbf16>, vector<1x768xbf16>, vector<2x768xf32> -> vector<2x768xf32>
    %76 = arith.addf %71, %75 : vector<2x768xf32>
    %c0_68 = arith.constant 0 : index
    %c344 = arith.constant 344 : index
    %77 = vector.load %arg8[%c0_68, %c344] : memref<1x1536xbf16, #tpu.memory_space<vmem>>, vector<1x768xbf16>
    %c14 = arith.constant 14 : index
    %c0_69 = arith.constant 0 : index
    %c0_70 = arith.constant 0 : index
    %78 = vector.load %arg5[%c14, %c0_69, %c0_70] : memref<27x2x1xbf16, #tpu.memory_space<vmem>>, vector<1x2x1xbf16>
    %79 = vector.shape_cast %78 : vector<1x2x1xbf16> to vector<2x1xbf16>
    %cst_71 = arith.constant dense<0.000000e+00> : vector<2x768xf32>
    %80 = tpu.matmul %79, %77, %cst_71 {dimension_numbers = #tpu.dot_dimension_numbers<[1], [0], [0], [1], [0, 0, 1, 1], [], []>} : vector<2x1xbf16>, vector<1x768xbf16>, vector<2x768xf32> -> vector<2x768xf32>
    %81 = arith.addf %76, %80 : vector<2x768xf32>
    %c0_72 = arith.constant 0 : index
    %c360 = arith.constant 360 : index
    %82 = vector.load %arg8[%c0_72, %c360] : memref<1x1536xbf16, #tpu.memory_space<vmem>>, vector<1x768xbf16>
    %c15 = arith.constant 15 : index
    %c0_73 = arith.constant 0 : index
    %c0_74 = arith.constant 0 : index
    %83 = vector.load %arg5[%c15, %c0_73, %c0_74] : memref<27x2x1xbf16, #tpu.memory_space<vmem>>, vector<1x2x1xbf16>
    %84 = vector.shape_cast %83 : vector<1x2x1xbf16> to vector<2x1xbf16>
    %cst_75 = arith.constant dense<0.000000e+00> : vector<2x768xf32>
    %85 = tpu.matmul %84, %82, %cst_75 {dimension_numbers = #tpu.dot_dimension_numbers<[1], [0], [0], [1], [0, 0, 1, 1], [], []>} : vector<2x1xbf16>, vector<1x768xbf16>, vector<2x768xf32> -> vector<2x768xf32>
    %86 = arith.addf %81, %85 : vector<2x768xf32>
    %c0_76 = arith.constant 0 : index
    %c361 = arith.constant 361 : index
    %87 = vector.load %arg8[%c0_76, %c361] : memref<1x1536xbf16, #tpu.memory_space<vmem>>, vector<1x768xbf16>
    %c16 = arith.constant 16 : index
    %c0_77 = arith.constant 0 : index
    %c0_78 = arith.constant 0 : index
    %88 = vector.load %arg5[%c16, %c0_77, %c0_78] : memref<27x2x1xbf16, #tpu.memory_space<vmem>>, vector<1x2x1xbf16>
    %89 = vector.shape_cast %88 : vector<1x2x1xbf16> to vector<2x1xbf16>
    %cst_79 = arith.constant dense<0.000000e+00> : vector<2x768xf32>
    %90 = tpu.matmul %89, %87, %cst_79 {dimension_numbers = #tpu.dot_dimension_numbers<[1], [0], [0], [1], [0, 0, 1, 1], [], []>} : vector<2x1xbf16>, vector<1x768xbf16>, vector<2x768xf32> -> vector<2x768xf32>
    %91 = arith.addf %86, %90 : vector<2x768xf32>
    %c0_80 = arith.constant 0 : index
    %c362 = arith.constant 362 : index
    %92 = vector.load %arg8[%c0_80, %c362] : memref<1x1536xbf16, #tpu.memory_space<vmem>>, vector<1x768xbf16>
    %c17 = arith.constant 17 : index
    %c0_81 = arith.constant 0 : index
    %c0_82 = arith.constant 0 : index
    %93 = vector.load %arg5[%c17, %c0_81, %c0_82] : memref<27x2x1xbf16, #tpu.memory_space<vmem>>, vector<1x2x1xbf16>
    %94 = vector.shape_cast %93 : vector<1x2x1xbf16> to vector<2x1xbf16>
    %cst_83 = arith.constant dense<0.000000e+00> : vector<2x768xf32>
    %95 = tpu.matmul %94, %92, %cst_83 {dimension_numbers = #tpu.dot_dimension_numbers<[1], [0], [0], [1], [0, 0, 1, 1], [], []>} : vector<2x1xbf16>, vector<1x768xbf16>, vector<2x768xf32> -> vector<2x768xf32>
    %96 = arith.addf %91, %95 : vector<2x768xf32>
    %c0_84 = arith.constant 0 : index
    %c648 = arith.constant 648 : index
    %97 = vector.load %arg8[%c0_84, %c648] : memref<1x1536xbf16, #tpu.memory_space<vmem>>, vector<1x768xbf16>
    %c18_85 = arith.constant 18 : index
    %c0_86 = arith.constant 0 : index
    %c0_87 = arith.constant 0 : index
    %98 = vector.load %arg5[%c18_85, %c0_86, %c0_87] : memref<27x2x1xbf16, #tpu.memory_space<vmem>>, vector<1x2x1xbf16>
    %99 = vector.shape_cast %98 : vector<1x2x1xbf16> to vector<2x1xbf16>
    %cst_88 = arith.constant dense<0.000000e+00> : vector<2x768xf32>
    %100 = tpu.matmul %99, %97, %cst_88 {dimension_numbers = #tpu.dot_dimension_numbers<[1], [0], [0], [1], [0, 0, 1, 1], [], []>} : vector<2x1xbf16>, vector<1x768xbf16>, vector<2x768xf32> -> vector<2x768xf32>
    %101 = arith.addf %96, %100 : vector<2x768xf32>
    %c0_89 = arith.constant 0 : index
    %c649 = arith.constant 649 : index
    %102 = vector.load %arg8[%c0_89, %c649] : memref<1x1536xbf16, #tpu.memory_space<vmem>>, vector<1x768xbf16>
    %c19_90 = arith.constant 19 : index
    %c0_91 = arith.constant 0 : index
    %c0_92 = arith.constant 0 : index
    %103 = vector.load %arg5[%c19_90, %c0_91, %c0_92] : memref<27x2x1xbf16, #tpu.memory_space<vmem>>, vector<1x2x1xbf16>
    %104 = vector.shape_cast %103 : vector<1x2x1xbf16> to vector<2x1xbf16>
    %cst_93 = arith.constant dense<0.000000e+00> : vector<2x768xf32>
    %105 = tpu.matmul %104, %102, %cst_93 {dimension_numbers = #tpu.dot_dimension_numbers<[1], [0], [0], [1], [0, 0, 1, 1], [], []>} : vector<2x1xbf16>, vector<1x768xbf16>, vector<2x768xf32> -> vector<2x768xf32>
    %106 = arith.addf %101, %105 : vector<2x768xf32>
    %c0_94 = arith.constant 0 : index
    %c650 = arith.constant 650 : index
    %107 = vector.load %arg8[%c0_94, %c650] : memref<1x1536xbf16, #tpu.memory_space<vmem>>, vector<1x768xbf16>
    %c20_95 = arith.constant 20 : index
    %c0_96 = arith.constant 0 : index
    %c0_97 = arith.constant 0 : index
    %108 = vector.load %arg5[%c20_95, %c0_96, %c0_97] : memref<27x2x1xbf16, #tpu.memory_space<vmem>>, vector<1x2x1xbf16>
    %109 = vector.shape_cast %108 : vector<1x2x1xbf16> to vector<2x1xbf16>
    %cst_98 = arith.constant dense<0.000000e+00> : vector<2x768xf32>
    %110 = tpu.matmul %109, %107, %cst_98 {dimension_numbers = #tpu.dot_dimension_numbers<[1], [0], [0], [1], [0, 0, 1, 1], [], []>} : vector<2x1xbf16>, vector<1x768xbf16>, vector<2x768xf32> -> vector<2x768xf32>
    %111 = arith.addf %106, %110 : vector<2x768xf32>
    %c0_99 = arith.constant 0 : index
    %c666 = arith.constant 666 : index
    %112 = vector.load %arg8[%c0_99, %c666] : memref<1x1536xbf16, #tpu.memory_space<vmem>>, vector<1x768xbf16>
    %c21 = arith.constant 21 : index
    %c0_100 = arith.constant 0 : index
    %c0_101 = arith.constant 0 : index
    %113 = vector.load %arg5[%c21, %c0_100, %c0_101] : memref<27x2x1xbf16, #tpu.memory_space<vmem>>, vector<1x2x1xbf16>
    %114 = vector.shape_cast %113 : vector<1x2x1xbf16> to vector<2x1xbf16>
    %cst_102 = arith.constant dense<0.000000e+00> : vector<2x768xf32>
    %115 = tpu.matmul %114, %112, %cst_102 {dimension_numbers = #tpu.dot_dimension_numbers<[1], [0], [0], [1], [0, 0, 1, 1], [], []>} : vector<2x1xbf16>, vector<1x768xbf16>, vector<2x768xf32> -> vector<2x768xf32>
    %116 = arith.addf %111, %115 : vector<2x768xf32>
    %c0_103 = arith.constant 0 : index
    %c667 = arith.constant 667 : index
    %117 = vector.load %arg8[%c0_103, %c667] : memref<1x1536xbf16, #tpu.memory_space<vmem>>, vector<1x768xbf16>
    %c22 = arith.constant 22 : index
    %c0_104 = arith.constant 0 : index
    %c0_105 = arith.constant 0 : index
    %118 = vector.load %arg5[%c22, %c0_104, %c0_105] : memref<27x2x1xbf16, #tpu.memory_space<vmem>>, vector<1x2x1xbf16>
    %119 = vector.shape_cast %118 : vector<1x2x1xbf16> to vector<2x1xbf16>
    %cst_106 = arith.constant dense<0.000000e+00> : vector<2x768xf32>
    %120 = tpu.matmul %119, %117, %cst_106 {dimension_numbers = #tpu.dot_dimension_numbers<[1], [0], [0], [1], [0, 0, 1, 1], [], []>} : vector<2x1xbf16>, vector<1x768xbf16>, vector<2x768xf32> -> vector<2x768xf32>
    %121 = arith.addf %116, %120 : vector<2x768xf32>
    %c0_107 = arith.constant 0 : index
    %c668 = arith.constant 668 : index
    %122 = vector.load %arg8[%c0_107, %c668] : memref<1x1536xbf16, #tpu.memory_space<vmem>>, vector<1x768xbf16>
    %c23 = arith.constant 23 : index
    %c0_108 = arith.constant 0 : index
    %c0_109 = arith.constant 0 : index
    %123 = vector.load %arg5[%c23, %c0_108, %c0_109] : memref<27x2x1xbf16, #tpu.memory_space<vmem>>, vector<1x2x1xbf16>
    %124 = vector.shape_cast %123 : vector<1x2x1xbf16> to vector<2x1xbf16>
    %cst_110 = arith.constant dense<0.000000e+00> : vector<2x768xf32>
    %125 = tpu.matmul %124, %122, %cst_110 {dimension_numbers = #tpu.dot_dimension_numbers<[1], [0], [0], [1], [0, 0, 1, 1], [], []>} : vector<2x1xbf16>, vector<1x768xbf16>, vector<2x768xf32> -> vector<2x768xf32>
    %126 = arith.addf %121, %125 : vector<2x768xf32>
    %c0_111 = arith.constant 0 : index
    %c684 = arith.constant 684 : index
    %127 = vector.load %arg8[%c0_111, %c684] : memref<1x1536xbf16, #tpu.memory_space<vmem>>, vector<1x768xbf16>
    %c24 = arith.constant 24 : index
    %c0_112 = arith.constant 0 : index
    %c0_113 = arith.constant 0 : index
    %128 = vector.load %arg5[%c24, %c0_112, %c0_113] : memref<27x2x1xbf16, #tpu.memory_space<vmem>>, vector<1x2x1xbf16>
    %129 = vector.shape_cast %128 : vector<1x2x1xbf16> to vector<2x1xbf16>
    %cst_114 = arith.constant dense<0.000000e+00> : vector<2x768xf32>
    %130 = tpu.matmul %129, %127, %cst_114 {dimension_numbers = #tpu.dot_dimension_numbers<[1], [0], [0], [1], [0, 0, 1, 1], [], []>} : vector<2x1xbf16>, vector<1x768xbf16>, vector<2x768xf32> -> vector<2x768xf32>
    %131 = arith.addf %126, %130 : vector<2x768xf32>
    %c0_115 = arith.constant 0 : index
    %c685 = arith.constant 685 : index
    %132 = vector.load %arg8[%c0_115, %c685] : memref<1x1536xbf16, #tpu.memory_space<vmem>>, vector<1x768xbf16>
    %c25 = arith.constant 25 : index
    %c0_116 = arith.constant 0 : index
    %c0_117 = arith.constant 0 : index
    %133 = vector.load %arg5[%c25, %c0_116, %c0_117] : memref<27x2x1xbf16, #tpu.memory_space<vmem>>, vector<1x2x1xbf16>
    %134 = vector.shape_cast %133 : vector<1x2x1xbf16> to vector<2x1xbf16>
    %cst_118 = arith.constant dense<0.000000e+00> : vector<2x768xf32>
    %135 = tpu.matmul %134, %132, %cst_118 {dimension_numbers = #tpu.dot_dimension_numbers<[1], [0], [0], [1], [0, 0, 1, 1], [], []>} : vector<2x1xbf16>, vector<1x768xbf16>, vector<2x768xf32> -> vector<2x768xf32>
    %136 = arith.addf %131, %135 : vector<2x768xf32>
    %c0_119 = arith.constant 0 : index
    %c686 = arith.constant 686 : index
    %137 = vector.load %arg8[%c0_119, %c686] : memref<1x1536xbf16, #tpu.memory_space<vmem>>, vector<1x768xbf16>
    %c26 = arith.constant 26 : index
    %c0_120 = arith.constant 0 : index
    %c0_121 = arith.constant 0 : index
    %138 = vector.load %arg5[%c26, %c0_120, %c0_121] : memref<27x2x1xbf16, #tpu.memory_space<vmem>>, vector<1x2x1xbf16>
    %139 = vector.shape_cast %138 : vector<1x2x1xbf16> to vector<2x1xbf16>
    %cst_122 = arith.constant dense<0.000000e+00> : vector<2x768xf32>
    %140 = tpu.matmul %139, %137, %cst_122 {dimension_numbers = #tpu.dot_dimension_numbers<[1], [0], [0], [1], [0, 0, 1, 1], [], []>} : vector<2x1xbf16>, vector<1x768xbf16>, vector<2x768xf32> -> vector<2x768xf32>
    %141 = arith.addf %136, %140 : vector<2x768xf32>
    %c0_123 = arith.constant 0 : index
    %c0_124 = arith.constant 0 : index
    %142 = vector.load %arg6[%c0_123, %c0_124] : memref<2x1xf32, #tpu.memory_space<vmem>>, vector<2x1xf32>
    %143 = vector.broadcast %142 : vector<2x1xf32> to vector<2x768xf32>
    %144 = arith.addf %141, %143 : vector<2x768xf32>
    %c0_125 = arith.constant 0 : index
    %145 = memref.load %arg2[%c0_125] : memref<1xf32, #tpu.memory_space<smem>>
    %cst_126 = arith.constant 0.000000e+00 : f32
    %146 = vector.broadcast %cst_126 : f32 to vector<2x768xf32>
    %147 = arith.cmpf oge, %144, %146 : vector<2x768xf32>
    %148 = vector.broadcast %145 : f32 to vector<2x768xf32>
    %149 = arith.mulf %148, %144 : vector<2x768xf32>
    %150 = arith.select %147, %144, %149 : vector<2x768xi1>, vector<2x768xf32>
    %151 = arith.truncf %150 : vector<2x768xf32> to vector<2x768xbf16>
    %c0_127 = arith.constant 0 : index
    %c0_128 = arith.constant 0 : index
    %c0_129 = arith.constant 0 : index
    %152 = vector.load %arg7[%c0_127, %c0_128, %c0_129] : memref<1x2x768xbf16, #tpu.memory_space<vmem>>, vector<1x2x768xbf16>
    %153 = vector.shape_cast %152 : vector<1x2x768xbf16> to vector<2x768xbf16>
    %154 = vector.shape_cast %151 : vector<2x768xbf16> to vector<1x2x768xbf16>
    tpu.vector_store %arg7[%c0_127, %c0_128, %c0_129], %154 {strides = array<i32>} : memref<1x2x768xbf16, #tpu.memory_space<vmem>>, vector<1x2x768xbf16>,
    return
  }
  func.func @transform_0(%arg0: i32, %arg1: i32) -> i32 {
    %c0_i32 = arith.constant 0 : i32
    %c0_i32_0 = arith.constant 0 : i32
    return %c0_i32 : i32
  }
  func.func @transform_1(%arg0: i32, %arg1: i32) -> (i32, i32, i32) {
    %c0_i32 = arith.constant 0 : i32
    %c0_i32_0 = arith.constant 0 : i32
    return %arg0, %c0_i32, %arg1 : i32, i32, i32
  }
  func.func @transform_2(%arg0: i32, %arg1: i32) -> (i32, i32, i32) {
    %c1_i32 = arith.constant 1 : i32
    %0 = arith.addi %arg1, %c1_i32 : i32
    %c0_i32 = arith.constant 0 : i32
    %c0_i32_0 = arith.constant 0 : i32
    return %arg0, %c0_i32, %0 : i32, i32, i32
  }
  func.func @transform_3(%arg0: i32, %arg1: i32) -> (i32, i32, i32) {
    %c0_i32 = arith.constant 0 : i32
    %c0_i32_0 = arith.constant 0 : i32
    %c0_i32_1 = arith.constant 0 : i32
    %c0_i32_2 = arith.constant 0 : i32
    return %c0_i32, %c0_i32_0, %c0_i32_1 : i32, i32, i32
  }
  func.func @transform_4(%arg0: i32, %arg1: i32) -> (i32, i32) {
    %c0_i32 = arith.constant 0 : i32
    %c0_i32_0 = arith.constant 0 : i32
    %c0_i32_1 = arith.constant 0 : i32
    return %c0_i32, %c0_i32_0 : i32, i32
  }
  func.func @transform_5(%arg0: i32, %arg1: i32) -> (i32, i32, i32) {
    %c0_i32 = arith.constant 0 : i32
    %c0_i32_0 = arith.constant 0 : i32
    return %arg0, %c0_i32, %arg1 : i32, i32, i32
  }
}

</mosaic_0001>

<llo_original>
// kernel: conv3x3_cf.1
$region0: #{conv3x3_cf.1}
  #allocation0 [shape = 'u32[]', space=smem, size = 0x4, offset = 0x4, fixed_abs, tag = 'smem constant byte address 0x4 - core index']
  #allocation1 [shape = 'u32[144,128]{1,0:T(1,128)}', space=vmem, size = 0x12000, scoped, tag = 'internal scratch']
  #allocation2 [shape = 'bf16[1,1536]{1,0:T(2,128)(2,1)}', space=vmem, size = 0x1800, scoped, tag = 'scratch operand']
  #allocation3 [shape = 'f32[1]{0:T(128)S(6)}', space=smem, size = 0x200, scoped, tag = 'scoped memory for conv3x3_cf.1']
  %s0 = inlined_call_operand.<no memory space> [shape: f32[1], index: 0, kind: input, shape index: {}]
  %s1 = inlined_call_operand.vmem [shape: bf16[1,1,6144], index: 1, kind: input, shape index: {}, may-alias: {1,2}]
  %s2 = inlined_call_operand.vmem [shape: bf16[1,1,6144], index: 2, kind: input, shape index: {}, may-alias: {1,2}]
  %s3 = inlined_call_operand.vmem [shape: bf16[27,2,1], index: 3, kind: input, shape index: {}]
  %s4 = inlined_call_operand.vmem [shape: f32[2,1], index: 4, kind: input, shape index: {}]
  %s5 = inlined_call_operand.vmem [shape: bf16[1,2,5376], index: 5, kind: output, shape index: {}]
  %s6 = sld [smem:[#allocation0]]
  $region53: #{conv3x3_cf.1} parent=0
    _
  %s8 = ssub.s32 1, %s6
  %s9 = scalar_select 0, %s8, %s6
  %10 = sst [smem:[#allocation3]] %s0
  loop: start=0, step=1, limit=9
  $region2: #{conv3x3_cf.1} parent=0 // loop_pre_header
    _
  $region3: #{conv3x3_cf.1} parent=0 // loop_header
    %s12 = sphi 0, %s16
    %p13 = scmp.ge.s32.totalorder %s12, 9
    %s19 = sphi 0, %s31
    %s20 = sphi 0, %s27
    %s21 = sphi 0, %s19
    %s22 = sphi 0, %s20
    %s23 = sphi 0, %s21
    %s24 = sphi 0, %s22
    %s32 = sphi 0, %s32
    %s34 = sphi 0, %s32
    %s35 = sphi 0, %s34
    %s49 = sphi 0, %s35
    %s57 = sphi 0, %s59
    %s60 = sphi 0, %s57
    %s61 = sphi 0, %s60
    %s77 = sphi 0, %s61
    %s87 = sphi 0, %s89
    %s90 = sphi 0, %s87
    %s91 = sphi 0, %s90
    %s107 = sphi 0, %s91
    %s111 = sphi 0, %s111
    %s113 = sphi 0, %s111
    %s114 = sphi 0, %s113
    %s128 = sphi 0, %s114
    %s132 = sphi 0, %s132
    %s134 = sphi 0, %s132
    %s135 = sphi 0, %s134
    %s149 = sphi 0, %s135
    %s157 = sphi 0, %s159
    %s160 = sphi 0, %s157
    %s161 = sphi 0, %s160
    %s177 = sphi 0, %s161
  $region4: #{conv3x3_cf.1} parent=0 // loop_header_branch
    %15 = sbr.rel (%p13) target = $region8
  $region5: #{conv3x3_cf.1} parent=0 // loop_body
    %s17 = ssub.s32 %s12, 1
    %s18 = ssub.s32 %s12, 2
    %s25 = sadd.s32 1, %s20
    %p26 = scmp.ge.s32.totalorder %s25, 7
    %s27 = scalar_select %p26, 0, %s25
    %s28 = sadd.s32 1, %s19
    %s29 = scalar_select %p26, %s28, %s19
    %p30 = scmp.ge.s32.totalorder %s29, 1
    %s31 = scalar_select %p30, 0, %s29
    %s33 = sadd.s32 %s32, 1
    %p36 = scmp.eq.s32.totalorder %s12, 6
    %p37 = scmp.ne.s32.totalorder %s32, %s34
    %p38 = scmp.eq.s32.totalorder %s12, 0
    %p39 = por %p37, %p38
    %p40 = scmp.ne.s32.totalorder %s32, %s34
    %p41 = scmp.eq.s32.totalorder %s17, 6
    %p42 = por %p40, %p41
    %p43 = scmp.ne.s32.totalorder %s34, %s35
    %p44 = scmp.eq.s32.totalorder %s17, 0
    %p45 = por %p43, %p44
    %p46 = scmp.ne.s32.totalorder %s34, %s35
    %p47 = scmp.eq.s32.totalorder %s18, 6
    %p48 = por %p46, %p47
    %p50 = scmp.ne.s32.totalorder %s35, %s49
    %p51 = scmp.eq.s32.totalorder %s18, 0
    %p52 = por %p50, %p51
    %s53 = ssub.s32 %s19, %s31
    %s54 = ssub.s32 %s20, %s27
    %s55 = sor.u32 %s53, %s54
    %p56 = scmp.eq.s32.totalorder %s55, 0
    %s58 = sadd.s32 %s57, 1
    %s59 = scalar_select %p56, %s57, %s58
    %p62 = pneg %p56
    %p63 = scmp.eq.s32.totalorder %s12, 6
    %p64 = por %p62, %p63
    %p65 = scmp.ne.s32.totalorder %s57, %s60
    %p66 = scmp.eq.s32.totalorder %s12, 0
    %p67 = por %p65, %p66
    %p68 = scmp.ne.s32.totalorder %s57, %s60
    %p69 = scmp.eq.s32.totalorder %s17, 6
    %p70 = por %p68, %p69
    %p71 = scmp.ne.s32.totalorder %s60, %s61
    %p72 = scmp.eq.s32.totalorder %s17, 0
    %p73 = por %p71, %p72
    %p74 = scmp.ne.s32.totalorder %s60, %s61
    %p75 = scmp.eq.s32.totalorder %s18, 6
    %p76 = por %p74, %p75
    %p78 = scmp.ne.s32.totalorder %s61, %s77
    %p79 = scmp.eq.s32.totalorder %s18, 0
    %p80 = por %p78, %p79
    %s81 = sadd.s32 %s20, 1
    %s82 = sadd.s32 %s27, 1
    %s83 = ssub.s32 %s19, %s31
    %s84 = ssub.s32 %s81, %s82
    %s85 = sor.u32 %s83, %s84
    %p86 = scmp.eq.s32.totalorder %s85, 0
    %s88 = sadd.s32 %s87, 1
    %s89 = scalar_select %p86, %s87, %s88
    %p92 = pneg %p86
    %p93 = scmp.eq.s32.totalorder %s12, 6
    %p94 = por %p92, %p93
    %p95 = scmp.ne.s32.totalorder %s87, %s90
    %p96 = scmp.eq.s32.totalorder %s12, 0
    %p97 = por %p95, %p96
    %p98 = scmp.ne.s32.totalorder %s87, %s90
    %p99 = scmp.eq.s32.totalorder %s17, 6
    %p100 = por %p98, %p99
    %p101 = scmp.ne.s32.totalorder %s90, %s91
    %p102 = scmp.eq.s32.totalorder %s17, 0
    %p103 = por %p101, %p102
    %p104 = scmp.ne.s32.totalorder %s90, %s91
    %p105 = scmp.eq.s32.totalorder %s18, 6
    %p106 = por %p104, %p105
    %p108 = scmp.ne.s32.totalorder %s91, %s107
    %p109 = scmp.eq.s32.totalorder %s18, 0
    %p110 = por %p108, %p109
    %s112 = sadd.s32 %s111, 1
    %p115 = scmp.eq.s32.totalorder %s12, 6
    %p116 = scmp.ne.s32.totalorder %s111, %s113
    %p117 = scmp.eq.s32.totalorder %s12, 0
    %p118 = por %p116, %p117
    %p119 = scmp.ne.s32.totalorder %s111, %s113
    %p120 = scmp.eq.s32.totalorder %s17, 6
    %p121 = por %p119, %p120
    %p122 = scmp.ne.s32.totalorder %s113, %s114
    %p123 = scmp.eq.s32.totalorder %s17, 0
    %p124 = por %p122, %p123
    %p125 = scmp.ne.s32.totalorder %s113, %s114
    %p126 = scmp.eq.s32.totalorder %s18, 6
    %p127 = por %p125, %p126
    %p129 = scmp.ne.s32.totalorder %s114, %s128
    %p130 = scmp.eq.s32.totalorder %s18, 0
    %p131 = por %p129, %p130
    %s133 = sadd.s32 %s132, 1
    %p136 = scmp.eq.s32.totalorder %s12, 6
    %p137 = scmp.ne.s32.totalorder %s132, %s134
    %p138 = scmp.eq.s32.totalorder %s12, 0
    %p139 = por %p137, %p138
    %p140 = scmp.ne.s32.totalorder %s132, %s134
    %p141 = scmp.eq.s32.totalorder %s17, 6
    %p142 = por %p140, %p141
    %p143 = scmp.ne.s32.totalorder %s134, %s135
    %p144 = scmp.eq.s32.totalorder %s17, 0
    %p145 = por %p143, %p144
    %p146 = scmp.ne.s32.totalorder %s134, %s135
    %p147 = scmp.eq.s32.totalorder %s18, 6
    %p148 = por %p146, %p147
    %p150 = scmp.ne.s32.totalorder %s135, %s149
    %p151 = scmp.eq.s32.totalorder %s18, 0
    %p152 = por %p150, %p151
    %s153 = ssub.s32 %s19, %s31
    %s154 = ssub.s32 %s20, %s27
    %s155 = sor.u32 %s153, %s154
    %p156 = scmp.eq.s32.totalorder %s155, 0
    %s158 = sadd.s32 %s157, 1
    %s159 = scalar_select %p156, %s157, %s158
    %p162 = pneg %p156
    %p163 = scmp.eq.s32.totalorder %s12, 6
    %p164 = por %p162, %p163
    %p165 = scmp.ne.s32.totalorder %s157, %s160
    %p166 = scmp.eq.s32.totalorder %s12, 0
    %p167 = por %p165, %p166
    %p168 = scmp.ne.s32.totalorder %s157, %s160
    %p169 = scmp.eq.s32.totalorder %s17, 6
    %p170 = por %p168, %p169
    %p171 = scmp.ne.s32.totalorder %s160, %s161
    %p172 = scmp.eq.s32.totalorder %s17, 0
    %p173 = por %p171, %p172
    %p174 = scmp.ne.s32.totalorder %s160, %s161
    %p175 = scmp.eq.s32.totalorder %s18, 6
    %p176 = por %p174, %p175
    %p178 = scmp.ne.s32.totalorder %s161, %s177
    %p179 = scmp.eq.s32.totalorder %s18, 0
    %p180 = por %p178, %p179
    %p181 = scmp.le.s32.totalorder 1, %s12
    %p182 = scmp.lt.s32.totalorder %s12, 8
    %p183 = pnand %p181, %p182
    %p184 = pneg %p183
    // Predicated region
    $region9: #{conv3x3_cf.1} parent=5 // pred_check
      _
    $region10: #{conv3x3_cf.1} parent=5 // pred_check_branch
      %186 = sbr.rel (%p183) target = $region12
    $region11: #{conv3x3_cf.1} parent=5 // pred_region
      %s187 = ssub.s32 %s12, 1
      // Predicated region
      $region13: #{conv3x3_cf.1} parent=11 // pred_check
        %p188 = pneg %p45
      $region14: #{conv3x3_cf.1} parent=11 // pred_check_branch
        %190 = sbr.rel (%p188) target = $region16
      $region15: #{conv3x3_cf.1} parent=11 // pred_region
        _
      $region16: #{conv3x3_cf.1} parent=11 // pred_fallthru
        _
      // Predicated region
      $region17: #{conv3x3_cf.1} parent=11 // pred_check
        %p191 = pneg %p124
      $region18: #{conv3x3_cf.1} parent=11 // pred_check_branch
        %193 = sbr.rel (%p191) target = $region20
      $region19: #{conv3x3_cf.1} parent=11 // pred_region
        _
      $region20: #{conv3x3_cf.1} parent=11 // pred_fallthru
        _
      // Predicated region
      $region21: #{conv3x3_cf.1} parent=11 // pred_check
        %p194 = pneg %p145
      $region22: #{conv3x3_cf.1} parent=11 // pred_check_branch
        %196 = sbr.rel (%p194) target = $region24
      $region23: #{conv3x3_cf.1} parent=11 // pred_region
        _
      $region24: #{conv3x3_cf.1} parent=11 // pred_fallthru
        _
    $region12: #{conv3x3_cf.1} parent=5 // pred_fallthru
      _
    %p197 = scmp.lt.s32.totalorder %s12, 7
    // Predicated region
    $region25: #{conv3x3_cf.1} parent=5 // pred_check
      %p198 = pneg %p197
    $region26: #{conv3x3_cf.1} parent=5 // pred_check_branch
      %200 = sbr.rel (%p198) target = $region28
    $region27: #{conv3x3_cf.1} parent=5 // pred_region
      // Predicated region
      $region29: #{conv3x3_cf.1} parent=27 // pred_check
        %p201 = pneg %p67
      $region30: #{conv3x3_cf.1} parent=27 // pred_check_branch
        %203 = sbr.rel (%p201) target = $region32
      $region31: #{conv3x3_cf.1} parent=27 // pred_region
        %s204 = smul.u32 6, %s20
        %p205 = scmp.lt.s32.totalorder %s19, 0
        %s206 = scalar_select %p205, %s19, 0
        %p207 = scmp.lt.s32.totalorder %s204, 47
        %s208 = scalar_select %p207, %s204, 47
        %s209 = smul.addr %s206, 48
        %s210 = sadd.s32 %s208, %s209
        %s211 = scalar_lea.vmem %s1, %s210
        %s212 = smul.u32 6, %s20
      $region32: #{conv3x3_cf.1} parent=27 // pred_fallthru
        _
      // Predicated region
      $region33: #{conv3x3_cf.1} parent=27 // pred_check
        %p213 = pneg %p97
      $region34: #{conv3x3_cf.1} parent=27 // pred_check_branch
        %215 = sbr.rel (%p213) target = $region36
      $region35: #{conv3x3_cf.1} parent=27 // pred_region
        %s216 = sadd.s32 %s20, 1
        %s217 = smul.u32 6, %s216
        %p218 = scmp.lt.s32.totalorder %s19, 0
        %s219 = scalar_select %p218, %s19, 0
        %p220 = scmp.lt.s32.totalorder %s217, 47
        %s221 = scalar_select %p220, %s217, 47
        %s222 = smul.addr %s219, 48
        %s223 = sadd.s32 %s221, %s222
        %s224 = scalar_lea.vmem %s2, %s223
        %s225 = sadd.s32 %s20, 1
        %s226 = smul.u32 6, %s225
      $region36: #{conv3x3_cf.1} parent=27 // pred_fallthru
        _
    $region28: #{conv3x3_cf.1} parent=5 // pred_fallthru
      _
    %p227 = scmp.le.s32.totalorder 1, %s12
    %p228 = scmp.lt.s32.totalorder %s12, 8
    %p229 = pnand %p227, %p228
    %p230 = pneg %p229
    // Predicated region
    $region37: #{conv3x3_cf.1} parent=5 // pred_check
      _
    $region38: #{conv3x3_cf.1} parent=5 // pred_check_branch
      %232 = sbr.rel (%p229) target = $region40
    $region39: #{conv3x3_cf.1} parent=5 // pred_region
      %s233 = ssub.s32 %s12, 1
      %p234 = pneg %p45
      %p235 = pneg %p42
      %s236 = smul.u32 6, %s22
      %p237 = scmp.lt.s32.totalorder %s21, 0
      %s238 = scalar_select %p237, %s21, 0
      %p239 = scmp.lt.s32.totalorder %s236, 47
      %s240 = scalar_select %p239, %s236, 47
      %s241 = smul.addr %s238, 48
      %s242 = sadd.s32 %s240, %s241
      %s243 = scalar_lea.vmem %s1, %s242
      %p244 = pneg %p73
      %p245 = pneg %p70
      %s246 = sadd.s32 %s22, 1
      %s247 = smul.u32 6, %s246
      %p248 = scmp.lt.s32.totalorder %s21, 0
      %s249 = scalar_select %p248, %s21, 0
      %p250 = scmp.lt.s32.totalorder %s247, 47
      %s251 = scalar_select %p250, %s247, 47
      %s252 = smul.addr %s249, 48
      %s253 = sadd.s32 %s251, %s252
      %s254 = scalar_lea.vmem %s2, %s253
      %p255 = pneg %p103
      %p256 = pneg %p100
      %p257 = pneg %p124
      %p258 = pneg %p121
      %p259 = pneg %p145
      %p260 = pneg %p142
      %p261 = pneg %p173
      %p262 = pneg %p170
      %s263 = smul.u32 6, %s22
      %p264 = scmp.lt.s32.totalorder %s21, 0
      %s265 = scalar_select %p264, %s21, 0
      %p266 = scmp.lt.s32.totalorder %s263, 41
      %s267 = scalar_select %p266, %s263, 41
      %s268 = smul.addr %s265, 42
      %s269 = sadd.s32 %s267, %s268
      %s270 = scalar_lea.vmem %s5, %s269
      %s271 = smul.u32 6, %s22
      %p272 = scmp.lt.s32.totalorder %s21, 0
      %s273 = scalar_select %p272, %s21, 0
      %p274 = scmp.lt.s32.totalorder %s271, 47
      %s275 = scalar_select %p274, %s271, 47
      %s276 = smul.addr %s273, 48
      %s277 = sadd.s32 %s275, %s276
      %s278 = scalar_lea.vmem %s1, %s277
      %s279 = smul.u32 6, %s22
      %s280 = sadd.s32 %s22, 1
      %s281 = smul.u32 6, %s280
      %p282 = scmp.lt.s32.totalorder %s21, 0
      %s283 = scalar_select %p282, %s21, 0
      %p284 = scmp.lt.s32.totalorder %s281, 47
      %s285 = scalar_select %p284, %s281, 47
      %s286 = smul.addr %s283, 48
      %s287 = sadd.s32 %s285, %s286
      %s288 = scalar_lea.vmem %s2, %s287
      %s289 = sadd.s32 %s22, 1
      %s290 = smul.u32 6, %s289
      %s291 = smul.u32 6, %s22
      %p292 = scmp.lt.s32.totalorder %s21, 0
      %s293 = scalar_select %p292, %s21, 0
      %p294 = scmp.lt.s32.totalorder %s291, 41
      %s295 = scalar_select %p294, %s291, 41
      %s296 = smul.addr %s293, 42
      %s297 = sadd.s32 %s295, %s296
      %s298 = scalar_lea.vmem %s5, %s297
      %s299 = smul.u32 6, %s22
      %v301 = vld [vmem:[%s278] sm:$0x3f]
      %vm302 = vcmask 1040384
      %vm303 = vsmask.f32 256
      %vm304 = vmand %vm302, %vm303
      %vm305 = vcmask 1041409
      %vm306 = vsmask.f32 1280
      %vm307 = vmand %vm305, %vm306
      %vm308 = vmor %vm307, %vm304
      %vm309 = vcmask 1042434
      %vm310 = vsmask.f32 2304
      %vm311 = vmand %vm309, %vm310
      %vm312 = vmor %vm311, %vm308
      %vm313 = vcmask 1043459
      %vm314 = vsmask.f32 3328
      %vm315 = vmand %vm313, %vm314
      %vm316 = vmor %vm315, %vm312
      %vm317 = vcmask 1044484
      %vm318 = vsmask.f32 4352
      %vm319 = vmand %vm317, %vm318
      %vm320 = vmor %vm319, %vm316
      %vm321 = vcmask 1045509
      %vm322 = vsmask.f32 5376
      %vm323 = vmand %vm321, %vm322
      %vm324 = vmor %vm323, %vm320
      %v325 = vld [vmem:[#allocation2] sm:$0x3f]
      %v326 = vsel %vm324, %v301, %v325
      %327 = vst [vmem:[#allocation2] sm:$0x3f] %v326
      %v328 = vld [vmem:[%s288] sm:$0x3f]
      %v329 = vld [vmem:[#allocation2 + $0x6] sm:$0x3f]
      %v330 = vsel %vm324, %v328, %v329
      %331 = vst [vmem:[#allocation2 + $0x6] sm:$0x3f] %v330
      %v332 = vld [vmem:[#allocation2] sm:$0x3f]
      %v333 = vld [vmem:[%s3] sm:$0x1]
      %v334 = vld [vmem:[#allocation2] sm:$0x7f]
      %s335 = scalar_lea.vmem %s3, 1
      %v336 = vld [vmem:[%s335] sm:$0x1]
      %v338 = vcombine.high %v334, %v334
      %v340 = vunpack.c.l.s4 1966171168
      %v341 = vunpack.c.0.s8 %v340
      %v342 = vlaneseq
      %v343 = vshrl.u32 %v342, 7
      %v344 = vsub.s32 %v341, %v343
      %v345 = vrot.slane %v334, %v344
      %v347 = vunpack.c.l.s4 1966171168
      %v348 = vunpack.c.0.s8 %v347
      %v349 = vlaneseq
      %v350 = vshrl.u32 %v349, 7
      %v351 = vsub.s32 %v348, %v350
      %v352 = vrot.slane %v338, %v351
      %v353 = vcombine.high %v345, %v345
      %v354 = vcombine.high %v352, %v352
      %v356 = vunpack.c.l.s4 1966171168
      %v357 = vunpack.c.0.s8 %v356
      %v358 = vlaneseq
      %v359 = vshrl.u32 %v358, 7
      %v360 = vsub.s32 %v357, %v359
      %v361 = vrot.slane %v345, %v360
      %v363 = vunpack.c.l.s4 1966171168
      %v364 = vunpack.c.0.s8 %v363
      %v365 = vlaneseq
      %v366 = vshrl.u32 %v365, 7
      %v367 = vsub.s32 %v364, %v366
      %v368 = vrot.slane %v352, %v367
      %v370 = vunpack.c.l.s4 1966171168
      %v371 = vunpack.c.0.s8 %v370
      %v372 = vlaneseq
      %v373 = vshrl.u32 %v372, 7
      %v374 = vsub.s32 %v371, %v373
      %v375 = vrot.slane %v353, %v374
      %v377 = vunpack.c.l.s4 1966171168
      %v378 = vunpack.c.0.s8 %v377
      %v379 = vlaneseq
      %v380 = vshrl.u32 %v379, 7
      %v381 = vsub.s32 %v378, %v380
      %v382 = vrot.slane %v354, %v381
      %v383 = vcombine.high %v361, %v361
      %v384 = vcombine.high %v368, %v368
      %v385 = vcombine.high %v375, %v375
      %386 = vrot.lane.b32.xlu0 %v361, 127
      %v387 = vpop.permute.xlu0 %386
      %388 = vrot.lane.b32.xlu0 %v375, 127
      %v389 = vpop.permute.xlu0 %388
      %390 = vrot.lane.b32.xlu0 %v383, 127
      %v391 = vpop.permute.xlu0 %390
      %392 = vrot.lane.b32.xlu0 %v385, 127
      %v393 = vpop.permute.xlu0 %392
      %394 = vrot.lane.b32.xlu0 %v368, 127
      %v395 = vpop.permute.xlu0 %394
      %396 = vrot.lane.b32.xlu0 %v382, 127
      %v397 = vpop.permute.xlu0 %396
      %398 = vrot.lane.b32.xlu0 %v384, 127
      %v399 = vpop.permute.xlu0 %398
      %vm400 = vcmask 1039360
      %v401 = vsel %vm400, %v387, %v389
      %v402 = vsel %vm400, %v389, %v391
      %v403 = vsel %vm400, %v391, %v393
      %v404 = vsel %vm400, %v393, %v395
      %v405 = vsel %vm400, %v395, %v397
      %v406 = vsel %vm400, %v397, %v399
      %vm407 = vcmask 7168
      %v409 = vsel %vm407, %v336, 0
      %vm411 = vcmask 1040384
      %v412 = vsel 0, 4294967295, 65535
      %v413 = vsel %vm411, %v412, 0
      %v415 = vand.u32 %v401, %v413
      %v418 = vand.u32 %v402, %v413
      %v421 = vand.u32 %v403, %v413
      %v424 = vand.u32 %v404, %v413
      %v427 = vand.u32 %v405, %v413
      %v430 = vand.u32 %v406, %v413
      %432 = vmatprep.subr.bf16.mxu0 %v418
      %433 = vmatpush1.bf16.msra.mxu0 %v415
      %434 = vmatprep.subr.bf16.mxu0 0
      %435 = vmatpush1.bf16.msra.mxu0 0
      %436 = vmatprep.subr.bf16.mxu0 0
      %437 = vmatpush1.bf16.msra.mxu0 0
      %438 = vmatprep.subr.bf16.mxu0 0
      %439 = vmatpush1.bf16.msra.mxu0 0
      %440 = vmatprep.subr.bf16.mxu0 0
      %441 = vmatpush1.bf16.msra.mxu0 0
      %442 = vmatprep.subr.bf16.mxu0 0
      %443 = vmatpush1.bf16.msra.mxu0 0
      %444 = vmatprep.subr.bf16.mxu0 0
      %445 = vmatpush1.bf16.msra.mxu0 0
      %446 = vmatprep.subr.bf16.mxu0 0
      %447 = vmatpush1.bf16.msra.mxu0 0
      %448 = vmatprep.subr.bf16.mxu0 0
      %449 = vmatpush1.bf16.msra.mxu0 0
      %450 = vmatprep.subr.bf16.mxu0 0
      %451 = vmatpush1.bf16.msra.mxu0 0
      %452 = vmatprep.subr.bf16.mxu0 0
      %453 = vmatpush1.bf16.msra.mxu0 0
      %454 = vmatprep.subr.bf16.mxu0 0
      %455 = vmatpush1.bf16.msra.mxu0 0
      %456 = vmatprep.subr.bf16.mxu0 0
      %457 = vmatpush1.bf16.msra.mxu0 0
      %458 = vmatprep.subr.bf16.mxu0 0
      %459 = vmatpush1.bf16.msra.mxu0 0
      %460 = vmatprep.subr.bf16.mxu0 0
      %461 = vmatpush1.bf16.msra.mxu0 0
      %462 = vmatprep.subr.bf16.mxu0 0
      %463 = vmatpush1.bf16.msra.mxu0 0
      %464 = vmatprep.mubr.bf16.mxu0 0
      %465 = vmatmul.mubr.bf16.gmra.mrb[0].mxu0 %v409
      %v466 = vpop.f32.mrb[0].mxu0
      %v467 = vadd.f32 0.0, %v466
      %v468 = vpop.f32.mrb[0].mxu0
      %v469 = vadd.f32 0.0, %v468
      %v470 = vpop.f32.mrb[0].mxu0
      %v471 = vpop.f32.mrb[0].mxu0
      %472 = vdwg.mxu0
      %473 = vmatprep.subr.bf16.mxu0 %v424
      %474 = vmatpush1.bf16.msra.mxu0 %v421
      %475 = vmatprep.subr.bf16.mxu0 0
      %476 = vmatpush1.bf16.msra.mxu0 0
      %477 = vmatprep.subr.bf16.mxu0 0
      %478 = vmatpush1.bf16.msra.mxu0 0
      %479 = vmatprep.subr.bf16.mxu0 0
      %480 = vmatpush1.bf16.msra.mxu0 0
      %481 = vmatprep.subr.bf16.mxu0 0
      %482 = vmatpush1.bf16.msra.mxu0 0
      %483 = vmatprep.subr.bf16.mxu0 0
      %484 = vmatpush1.bf16.msra.mxu0 0
      %485 = vmatprep.subr.bf16.mxu0 0
      %486 = vmatpush1.bf16.msra.mxu0 0
      %487 = vmatprep.subr.bf16.mxu0 0
      %488 = vmatpush1.bf16.msra.mxu0 0
      %489 = vmatprep.subr.bf16.mxu0 0
      %490 = vmatpush1.bf16.msra.mxu0 0
      %491 = vmatprep.subr.bf16.mxu0 0
      %492 = vmatpush1.bf16.msra.mxu0 0
      %493 = vmatprep.subr.bf16.mxu0 0
      %494 = vmatpush1.bf16.msra.mxu0 0
      %495 = vmatprep.subr.bf16.mxu0 0
      %496 = vmatpush1.bf16.msra.mxu0 0
      %497 = vmatprep.subr.bf16.mxu0 0
      %498 = vmatpush1.bf16.msra.mxu0 0
      %499 = vmatprep.subr.bf16.mxu0 0
      %500 = vmatpush1.bf16.msra.mxu0 0
      %501 = vmatprep.subr.bf16.mxu0 0
      %502 = vmatpush1.bf16.msra.mxu0 0
      %503 = vmatprep.subr.bf16.mxu0 0
      %504 = vmatpush1.bf16.msra.mxu0 0
      %505 = vmatprep.mubr.bf16.mxu0 0
      %506 = vmatmul.mubr.bf16.gmra.mrb[0].mxu0 %v409
      %v507 = vpop.f32.mrb[0].mxu0
      %v508 = vadd.f32 0.0, %v507
      %v509 = vpop.f32.mrb[0].mxu0
      %v510 = vadd.f32 0.0, %v509
      %v511 = vpop.f32.mrb[0].mxu0
      %v512 = vpop.f32.mrb[0].mxu0
      %513 = vdwg.mxu0
      %514 = vmatprep.subr.bf16.mxu0 %v430
      %515 = vmatpush1.bf16.msra.mxu0 %v427
      %516 = vmatprep.subr.bf16.mxu0 0
      %517 = vmatpush1.bf16.msra.mxu0 0
      %518 = vmatprep.subr.bf16.mxu0 0
      %519 = vmatpush1.bf16.msra.mxu0 0
      %520 = vmatprep.subr.bf16.mxu0 0
      %521 = vmatpush1.bf16.msra.mxu0 0
      %522 = vmatprep.subr.bf16.mxu0 0
      %523 = vmatpush1.bf16.msra.mxu0 0
      %524 = vmatprep.subr.bf16.mxu0 0
      %525 = vmatpush1.bf16.msra.mxu0 0
      %526 = vmatprep.subr.bf16.mxu0 0
      %527 = vmatpush1.bf16.msra.mxu0 0
      %528 = vmatprep.subr.bf16.mxu0 0
      %529 = vmatpush1.bf16.msra.mxu0 0
      %530 = vmatprep.subr.bf16.mxu0 0
      %531 = vmatpush1.bf16.msra.mxu0 0
      %532 = vmatprep.subr.bf16.mxu0 0
      %533 = vmatpush1.bf16.msra.mxu0 0
      %534 = vmatprep.subr.bf16.mxu0 0
      %535 = vmatpush1.bf16.msra.mxu0 0
      %536 = vmatprep.subr.bf16.mxu0 0
      %537 = vmatpush1.bf16.msra.mxu0 0
      %538 = vmatprep.subr.bf16.mxu0 0
      %539 = vmatpush1.bf16.msra.mxu0 0
      %540 = vmatprep.subr.bf16.mxu0 0
      %541 = vmatpush1.bf16.msra.mxu0 0
      %542 = vmatprep.subr.bf16.mxu0 0
      %543 = vmatpush1.bf16.msra.mxu0 0
      %544 = vmatprep.subr.bf16.mxu0 0
      %545 = vmatpush1.bf16.msra.mxu0 0
      %546 = vmatprep.mubr.bf16.mxu0 0
      %547 = vmatmul.mubr.bf16.gmra.mrb[0].mxu0 %v409
      %v548 = vpop.f32.mrb[0].mxu0
      %v549 = vadd.f32 0.0, %v548
      %v550 = vpop.f32.mrb[0].mxu0
      %v551 = vadd.f32 0.0, %v550
      %v552 = vpop.f32.mrb[0].mxu0
      %v553 = vpop.f32.mrb[0].mxu0
      %554 = vdwg.mxu0
      %v556 = vcombine.high %v332, %v332
      %v558 = vunpack.c.l.s4 1966171168
      %v559 = vunpack.c.0.s8 %v558
      %v560 = vlaneseq
      %v561 = vshrl.u32 %v560, 7
      %v562 = vsub.s32 %v559, %v561
      %v563 = vrot.slane %v332, %v562
      %v565 = vunpack.c.l.s4 1966171168
      %v566 = vunpack.c.0.s8 %v565
      %v567 = vlaneseq
      %v568 = vshrl.u32 %v567, 7
      %v569 = vsub.s32 %v566, %v568
      %v570 = vrot.slane %v556, %v569
      %v571 = vcombine.high %v563, %v563
      %v572 = vcombine.high %v570, %v570
      %v574 = vunpack.c.l.s4 1966171168
      %v575 = vunpack.c.0.s8 %v574
      %v576 = vlaneseq
      %v577 = vshrl.u32 %v576, 7
      %v578 = vsub.s32 %v575, %v577
      %v579 = vrot.slane %v563, %v578
      %v581 = vunpack.c.l.s4 1966171168
      %v582 = vunpack.c.0.s8 %v581
      %v583 = vlaneseq
      %v584 = vshrl.u32 %v583, 7
      %v585 = vsub.s32 %v582, %v584
      %v586 = vrot.slane %v570, %v585
      %v588 = vunpack.c.l.s4 1966171168
      %v589 = vunpack.c.0.s8 %v588
      %v590 = vlaneseq
      %v591 = vshrl.u32 %v590, 7
      %v592 = vsub.s32 %v589, %v591
      %v593 = vrot.slane %v571, %v592
      %v595 = vunpack.c.l.s4 1966171168
      %v596 = vunpack.c.0.s8 %v595
      %v597 = vlaneseq
      %v598 = vshrl.u32 %v597, 7
      %v599 = vsub.s32 %v596, %v598
      %v600 = vrot.slane %v572, %v599
      %v601 = vcombine.high %v579, %v579
      %v602 = vcombine.high %v593, %v593
      %v604 = vsel %vm407, %v333, 0
      %v607 = vand.u32 %v579, %v413
      %v610 = vand.u32 %v593, %v413
      %v613 = vand.u32 %v601, %v413
      %v616 = vand.u32 %v602, %v413
      %v619 = vand.u32 %v586, %v413
      %v622 = vand.u32 %v600, %v413
      %624 = vmatprep.subr.bf16.mxu0 %v610
      %625 = vmatpush1.bf16.msra.mxu0 %v607
      %626 = vmatprep.subr.bf16.mxu0 0
      %627 = vmatpush1.bf16.msra.mxu0 0
      %628 = vmatprep.subr.bf16.mxu0 0
      %629 = vmatpush1.bf16.msra.mxu0 0
      %630 = vmatprep.subr.bf16.mxu0 0
      %631 = vmatpush1.bf16.msra.mxu0 0
      %632 = vmatprep.subr.bf16.mxu0 0
      %633 = vmatpush1.bf16.msra.mxu0 0
      %634 = vmatprep.subr.bf16.mxu0 0
      %635 = vmatpush1.bf16.msra.mxu0 0
      %636 = vmatprep.subr.bf16.mxu0 0
      %637 = vmatpush1.bf16.msra.mxu0 0
      %638 = vmatprep.subr.bf16.mxu0 0
      %639 = vmatpush1.bf16.msra.mxu0 0
      %640 = vmatprep.subr.bf16.mxu0 0
      %641 = vmatpush1.bf16.msra.mxu0 0
      %642 = vmatprep.subr.bf16.mxu0 0
      %643 = vmatpush1.bf16.msra.mxu0 0
      %644 = vmatprep.subr.bf16.mxu0 0
      %645 = vmatpush1.bf16.msra.mxu0 0
      %646 = vmatprep.subr.bf16.mxu0 0
      %647 = vmatpush1.bf16.msra.mxu0 0
      %648 = vmatprep.subr.bf16.mxu0 0
      %649 = vmatpush1.bf16.msra.mxu0 0
      %650 = vmatprep.subr.bf16.mxu0 0
      %651 = vmatpush1.bf16.msra.mxu0 0
      %652 = vmatprep.subr.bf16.mxu0 0
      %653 = vmatpush1.bf16.msra.mxu0 0
      %654 = vmatprep.subr.bf16.mxu0 0
      %655 = vmatpush1.bf16.msra.mxu0 0
      %656 = vmatprep.mubr.bf16.mxu0 0
      %657 = vmatmul.mubr.bf16.gmra.mrb[0].mxu0 %v604
      %v658 = vpop.f32.mrb[0].mxu0
      %v659 = vadd.f32 %v467, %v658
      %v660 = vpop.f32.mrb[0].mxu0
      %v661 = vadd.f32 %v469, %v660
      %v662 = vpop.f32.mrb[0].mxu0
      %v663 = vpop.f32.mrb[0].mxu0
      %664 = vdwg.mxu0
      %665 = vmatprep.subr.bf16.mxu0 %v616
      %666 = vmatpush1.bf16.msra.mxu0 %v613
      %667 = vmatprep.subr.bf16.mxu0 0
      %668 = vmatpush1.bf16.msra.mxu0 0
      %669 = vmatprep.subr.bf16.mxu0 0
      %670 = vmatpush1.bf16.msra.mxu0 0
      %671 = vmatprep.subr.bf16.mxu0 0
      %672 = vmatpush1.bf16.msra.mxu0 0
      %673 = vmatprep.subr.bf16.mxu0 0
      %674 = vmatpush1.bf16.msra.mxu0 0
      %675 = vmatprep.subr.bf16.mxu0 0
      %676 = vmatpush1.bf16.msra.mxu0 0
      %677 = vmatprep.subr.bf16.mxu0 0
      %678 = vmatpush1.bf16.msra.mxu0 0
      %679 = vmatprep.subr.bf16.mxu0 0
      %680 = vmatpush1.bf16.msra.mxu0 0
      %681 = vmatprep.subr.bf16.mxu0 0
      %682 = vmatpush1.bf16.msra.mxu0 0
      %683 = vmatprep.subr.bf16.mxu0 0
      %684 = vmatpush1.bf16.msra.mxu0 0
      %685 = vmatprep.subr.bf16.mxu0 0
      %686 = vmatpush1.bf16.msra.mxu0 0
      %687 = vmatprep.subr.bf16.mxu0 0
      %688 = vmatpush1.bf16.msra.mxu0 0
      %689 = vmatprep.subr.bf16.mxu0 0
      %690 = vmatpush1.bf16.msra.mxu0 0
      %691 = vmatprep.subr.bf16.mxu0 0
      %692 = vmatpush1.bf16.msra.mxu0 0
      %693 = vmatprep.subr.bf16.mxu0 0
      %694 = vmatpush1.bf16.msra.mxu0 0
      %695 = vmatprep.subr.bf16.mxu0 0
      %696 = vmatpush1.bf16.msra.mxu0 0
      %697 = vmatprep.mubr.bf16.mxu0 0
      %698 = vmatmul.mubr.bf16.gmra.mrb[0].mxu0 %v604
      %v699 = vpop.f32.mrb[0].mxu0
      %v700 = vadd.f32 %v508, %v699
      %v701 = vpop.f32.mrb[0].mxu0
      %v702 = vadd.f32 %v510, %v701
      %v703 = vpop.f32.mrb[0].mxu0
      %v704 = vpop.f32.mrb[0].mxu0
      %705 = vdwg.mxu0
      %706 = vmatprep.subr.bf16.mxu0 %v622
      %707 = vmatpush1.bf16.msra.mxu0 %v619
      %708 = vmatprep.subr.bf16.mxu0 0
      %709 = vmatpush1.bf16.msra.mxu0 0
      %710 = vmatprep.subr.bf16.mxu0 0
      %711 = vmatpush1.bf16.msra.mxu0 0
      %712 = vmatprep.subr.bf16.mxu0 0
      %713 = vmatpush1.bf16.msra.mxu0 0
      %714 = vmatprep.subr.bf16.mxu0 0
      %715 = vmatpush1.bf16.msra.mxu0 0
      %716 = vmatprep.subr.bf16.mxu0 0
      %717 = vmatpush1.bf16.msra.mxu0 0
      %718 = vmatprep.subr.bf16.mxu0 0
      %719 = vmatpush1.bf16.msra.mxu0 0
      %720 = vmatprep.subr.bf16.mxu0 0
      %721 = vmatpush1.bf16.msra.mxu0 0
      %722 = vmatprep.subr.bf16.mxu0 0
      %723 = vmatpush1.bf16.msra.mxu0 0
      %724 = vmatprep.subr.bf16.mxu0 0
      %725 = vmatpush1.bf16.msra.mxu0 0
      %726 = vmatprep.subr.bf16.mxu0 0
      %727 = vmatpush1.bf16.msra.mxu0 0
      %728 = vmatprep.subr.bf16.mxu0 0
      %729 = vmatpush1.bf16.msra.mxu0 0
      %730 = vmatprep.subr.bf16.mxu0 0
      %731 = vmatpush1.bf16.msra.mxu0 0
      %732 = vmatprep.subr.bf16.mxu0 0
      %733 = vmatpush1.bf16.msra.mxu0 0
      %734 = vmatprep.subr.bf16.mxu0 0
      %735 = vmatpush1.bf16.msra.mxu0 0
      %736 = vmatprep.subr.bf16.mxu0 0
      %737 = vmatpush1.bf16.msra.mxu0 0
      %738 = vmatprep.mubr.bf16.mxu0 0
      %739 = vmatmul.mubr.bf16.gmra.mrb[0].mxu0 %v604
      %v740 = vpop.f32.mrb[0].mxu0
      %v741 = vadd.f32 %v549, %v740
      %v742 = vpop.f32.mrb[0].mxu0
      %v743 = vadd.f32 %v551, %v742
      %v744 = vpop.f32.mrb[0].mxu0
      %v745 = vpop.f32.mrb[0].mxu0
      %746 = vdwg.mxu0
      %v747 = vld [vmem:[#allocation2] sm:$0x7f]
      %s748 = scalar_lea.vmem %s3, 2
      %v749 = vld [vmem:[%s748] sm:$0x1]
      %v751 = vcombine.high %v747, %v747
      %v753 = vunpack.c.l.s4 1966171168
      %v754 = vunpack.c.0.s8 %v753
      %v755 = vlaneseq
      %v756 = vshrl.u32 %v755, 7
      %v757 = vsub.s32 %v754, %v756
      %v758 = vrot.slane %v747, %v757
      %v760 = vunpack.c.l.s4 1966171168
      %v761 = vunpack.c.0.s8 %v760
      %v762 = vlaneseq
      %v763 = vshrl.u32 %v762, 7
      %v764 = vsub.s32 %v761, %v763
      %v765 = vrot.slane %v751, %v764
      %v766 = vcombine.high %v758, %v758
      %v767 = vcombine.high %v765, %v765
      %v769 = vunpack.c.l.s4 1966171168
      %v770 = vunpack.c.0.s8 %v769
      %v771 = vlaneseq
      %v772 = vshrl.u32 %v771, 7
      %v773 = vsub.s32 %v770, %v772
      %v774 = vrot.slane %v758, %v773
      %v776 = vunpack.c.l.s4 1966171168
      %v777 = vunpack.c.0.s8 %v776
      %v778 = vlaneseq
      %v779 = vshrl.u32 %v778, 7
      %v780 = vsub.s32 %v777, %v779
      %v781 = vrot.slane %v765, %v780
      %v783 = vunpack.c.l.s4 1966171168
      %v784 = vunpack.c.0.s8 %v783
      %v785 = vlaneseq
      %v786 = vshrl.u32 %v785, 7
      %v787 = vsub.s32 %v784, %v786
      %v788 = vrot.slane %v766, %v787
      %v790 = vunpack.c.l.s4 1966171168
      %v791 = vunpack.c.0.s8 %v790
      %v792 = vlaneseq
      %v793 = vshrl.u32 %v792, 7
      %v794 = vsub.s32 %v791, %v793
      %v795 = vrot.slane %v767, %v794
      %v796 = vcombine.high %v774, %v774
      %v797 = vcombine.high %v781, %v781
      %v798 = vcombine.high %v788, %v788
      %799 = vrot.lane.b32.xlu0 %v774, 126
      %v800 = vpop.permute.xlu0 %799
      %801 = vrot.lane.b32.xlu0 %v788, 126
      %v802 = vpop.permute.xlu0 %801
      %803 = vrot.lane.b32.xlu0 %v796, 126
      %v804 = vpop.permute.xlu0 %803
      %805 = vrot.lane.b32.xlu0 %v798, 126
      %v806 = vpop.permute.xlu0 %805
      %807 = vrot.lane.b32.xlu0 %v781, 126
      %v808 = vpop.permute.xlu0 %807
      %809 = vrot.lane.b32.xlu0 %v795, 126
      %v810 = vpop.permute.xlu0 %809
      %811 = vrot.lane.b32.xlu0 %v797, 126
      %v812 = vpop.permute.xlu0 %811
      %vm813 = vcmask 1031168
      %v814 = vsel %vm813, %v800, %v802
      %v815 = vsel %vm813, %v802, %v804
      %v816 = vsel %vm813, %v804, %v806
      %v817 = vsel %vm813, %v806, %v808
      %v818 = vsel %vm813, %v808, %v810
      %v819 = vsel %vm813, %v810, %v812
      %v821 = vsel %vm407, %v749, 0
      %v824 = vand.u32 %v814, %v413
      %v827 = vand.u32 %v815, %v413
      %v830 = vand.u32 %v816, %v413
      %v833 = vand.u32 %v817, %v413
      %v836 = vand.u32 %v818, %v413
      %v839 = vand.u32 %v819, %v413
      %841 = vmatprep.subr.bf16.mxu0 %v827
      %842 = vmatpush1.bf16.msra.mxu0 %v824
      %843 = vmatprep.subr.bf16.mxu0 0
      %844 = vmatpush1.bf16.msra.mxu0 0
      %845 = vmatprep.subr.bf16.mxu0 0
      %846 = vmatpush1.bf16.msra.mxu0 0
      %847 = vmatprep.subr.bf16.mxu0 0
      %848 = vmatpush1.bf16.msra.mxu0 0
      %849 = vmatprep.subr.bf16.mxu0 0
      %850 = vmatpush1.bf16.msra.mxu0 0
      %851 = vmatprep.subr.bf16.mxu0 0
      %852 = vmatpush1.bf16.msra.mxu0 0
      %853 = vmatprep.subr.bf16.mxu0 0
      %854 = vmatpush1.bf16.msra.mxu0 0
      %855 = vmatprep.subr.bf16.mxu0 0
      %856 = vmatpush1.bf16.msra.mxu0 0
      %857 = vmatprep.subr.bf16.mxu0 0
      %858 = vmatpush1.bf16.msra.mxu0 0
      %859 = vmatprep.subr.bf16.mxu0 0
      %860 = vmatpush1.bf16.msra.mxu0 0
      %861 = vmatprep.subr.bf16.mxu0 0
      %862 = vmatpush1.bf16.msra.mxu0 0
      %863 = vmatprep.subr.bf16.mxu0 0
      %864 = vmatpush1.bf16.msra.mxu0 0
      %865 = vmatprep.subr.bf16.mxu0 0
      %866 = vmatpush1.bf16.msra.mxu0 0
      %867 = vmatprep.subr.bf16.mxu0 0
      %868 = vmatpush1.bf16.msra.mxu0 0
      %869 = vmatprep.subr.bf16.mxu0 0
      %870 = vmatpush1.bf16.msra.mxu0 0
      %871 = vmatprep.subr.bf16.mxu0 0
      %872 = vmatpush1.bf16.msra.mxu0 0
      %873 = vmatprep.mubr.bf16.mxu0 0
      %874 = vmatmul.mubr.bf16.gmra.mrb[0].mxu0 %v821
      %v875 = vpop.f32.mrb[0].mxu0
      %v876 = vadd.f32 0.0, %v875
      %v877 = vpop.f32.mrb[0].mxu0
      %v878 = vadd.f32 0.0, %v877
      %v879 = vpop.f32.mrb[0].mxu0
      %v880 = vpop.f32.mrb[0].mxu0
      %881 = vdwg.mxu0
      %882 = vmatprep.subr.bf16.mxu0 %v833
      %883 = vmatpush1.bf16.msra.mxu0 %v830
      %884 = vmatprep.subr.bf16.mxu0 0
      %885 = vmatpush1.bf16.msra.mxu0 0
      %886 = vmatprep.subr.bf16.mxu0 0
      %887 = vmatpush1.bf16.msra.mxu0 0
      %888 = vmatprep.subr.bf16.mxu0 0
      %889 = vmatpush1.bf16.msra.mxu0 0
      %890 = vmatprep.subr.bf16.mxu0 0
      %891 = vmatpush1.bf16.msra.mxu0 0
      %892 = vmatprep.subr.bf16.mxu0 0
      %893 = vmatpush1.bf16.msra.mxu0 0
      %894 = vmatprep.subr.bf16.mxu0 0
      %895 = vmatpush1.bf16.msra.mxu0 0
      %896 = vmatprep.subr.bf16.mxu0 0
      %897 = vmatpush1.bf16.msra.mxu0 0
      %898 = vmatprep.subr.bf16.mxu0 0
      %899 = vmatpush1.bf16.msra.mxu0 0
      %900 = vmatprep.subr.bf16.mxu0 0
      %901 = vmatpush1.bf16.msra.mxu0 0
      %902 = vmatprep.subr.bf16.mxu0 0
      %903 = vmatpush1.bf16.msra.mxu0 0
      %904 = vmatprep.subr.bf16.mxu0 0
      %905 = vmatpush1.bf16.msra.mxu0 0
      %906 = vmatprep.subr.bf16.mxu0 0
      %907 = vmatpush1.bf16.msra.mxu0 0
      %908 = vmatprep.subr.bf16.mxu0 0
      %909 = vmatpush1.bf16.msra.mxu0 0
      %910 = vmatprep.subr.bf16.mxu0 0
      %911 = vmatpush1.bf16.msra.mxu0 0
      %912 = vmatprep.subr.bf16.mxu0 0
      %913 = vmatpush1.bf16.msra.mxu0 0
      %914 = vmatprep.mubr.bf16.mxu0 0
      %915 = vmatmul.mubr.bf16.gmra.mrb[0].mxu0 %v821
      %v916 = vpop.f32.mrb[0].mxu0
      %v917 = vadd.f32 0.0, %v916
      %v918 = vpop.f32.mrb[0].mxu0
      %v919 = vadd.f32 0.0, %v918
      %v920 = vpop.f32.mrb[0].mxu0
      %v921 = vpop.f32.mrb[0].mxu0
      %922 = vdwg.mxu0
      %923 = vmatprep.subr.bf16.mxu0 %v839
      %924 = vmatpush1.bf16.msra.mxu0 %v836
      %925 = vmatprep.subr.bf16.mxu0 0
      %926 = vmatpush1.bf16.msra.mxu0 0
      %927 = vmatprep.subr.bf16.mxu0 0
      %928 = vmatpush1.bf16.msra.mxu0 0
      %929 = vmatprep.subr.bf16.mxu0 0
      %930 = vmatpush1.bf16.msra.mxu0 0
      %931 = vmatprep.subr.bf16.mxu0 0
      %932 = vmatpush1.bf16.msra.mxu0 0
      %933 = vmatprep.subr.bf16.mxu0 0
      %934 = vmatpush1.bf16.msra.mxu0 0
      %935 = vmatprep.subr.bf16.mxu0 0
      %936 = vmatpush1.bf16.msra.mxu0 0
      %937 = vmatprep.subr.bf16.mxu0 0
      %938 = vmatpush1.bf16.msra.mxu0 0
      %939 = vmatprep.subr.bf16.mxu0 0
      %940 = vmatpush1.bf16.msra.mxu0 0
      %941 = vmatprep.subr.bf16.mxu0 0
      %942 = vmatpush1.bf16.msra.mxu0 0
      %943 = vmatprep.subr.bf16.mxu0 0
      %944 = vmatpush1.bf16.msra.mxu0 0
      %945 = vmatprep.subr.bf16.mxu0 0
      %946 = vmatpush1.bf16.msra.mxu0 0
      %947 = vmatprep.subr.bf16.mxu0 0
      %948 = vmatpush1.bf16.msra.mxu0 0
      %949 = vmatprep.subr.bf16.mxu0 0
      %950 = vmatpush1.bf16.msra.mxu0 0
      %951 = vmatprep.subr.bf16.mxu0 0
      %952 = vmatpush1.bf16.msra.mxu0 0
      %953 = vmatprep.subr.bf16.mxu0 0
      %954 = vmatpush1.bf16.msra.mxu0 0
      %955 = vmatprep.mubr.bf16.mxu0 0
      %956 = vmatmul.mubr.bf16.gmra.mrb[0].mxu0 %v821
      %v957 = vpop.f32.mrb[0].mxu0
      %v958 = vadd.f32 0.0, %v957
      %v959 = vpop.f32.mrb[0].mxu0
      %v960 = vadd.f32 0.0, %v959
      %v961 = vpop.f32.mrb[0].mxu0
      %v962 = vpop.f32.mrb[0].mxu0
      %963 = vdwg.mxu0
      %v964 = vadd.f32 %v659, %v876
      %v965 = vadd.f32 %v661, %v878
      %v966 = vadd.f32 %v700, %v917
      %v967 = vadd.f32 %v702, %v919
      %v968 = vadd.f32 %v741, %v958
      %v969 = vadd.f32 %v743, %v960
      %v970 = vld [vmem:[#allocation2] sm:$0x7f]
      %s971 = scalar_lea.vmem %s3, 3
      %v972 = vld [vmem:[%s971] sm:$0x1]
      %v974 = vcombine.high %v970, %v970
      %v976 = vunpack.c.l.s4 1966171168
      %v977 = vunpack.c.0.s8 %v976
      %v978 = vlaneseq
      %v979 = vshrl.u32 %v978, 7
      %v980 = vsub.s32 %v977, %v979
      %v981 = vrot.slane %v970, %v980
      %v983 = vunpack.c.l.s4 1966171168
      %v984 = vunpack.c.0.s8 %v983
      %v985 = vlaneseq
      %v986 = vshrl.u32 %v985, 7
      %v987 = vsub.s32 %v984, %v986
      %v988 = vrot.slane %v974, %v987
      %v989 = vcombine.high %v981, %v981
      %v990 = vcombine.high %v988, %v988
      %v992 = vunpack.c.l.s4 1966171168
      %v993 = vunpack.c.0.s8 %v992
      %v994 = vlaneseq
      %v995 = vshrl.u32 %v994, 7
      %v996 = vsub.s32 %v993, %v995
      %v997 = vrot.slane %v981, %v996
      %v999 = vunpack.c.l.s4 1966171168
      %v1000 = vunpack.c.0.s8 %v999
      %v1001 = vlaneseq
      %v1002 = vshrl.u32 %v1001, 7
      %v1003 = vsub.s32 %v1000, %v1002
      %v1004 = vrot.slane %v988, %v1003
      %v1006 = vunpack.c.l.s4 1966171168
      %v1007 = vunpack.c.0.s8 %v1006
      %v1008 = vlaneseq
      %v1009 = vshrl.u32 %v1008, 7
      %v1010 = vsub.s32 %v1007, %v1009
      %v1011 = vrot.slane %v989, %v1010
      %v1013 = vunpack.c.l.s4 1966171168
      %v1014 = vunpack.c.0.s8 %v1013
      %v1015 = vlaneseq
      %v1016 = vshrl.u32 %v1015, 7
      %v1017 = vsub.s32 %v1014, %v1016
      %v1018 = vrot.slane %v990, %v1017
      %v1019 = vcombine.high %v997, %v997
      %v1020 = vcombine.high %v1004, %v1004
      %v1021 = vcombine.high %v1011, %v1011
      %1022 = vrot.lane.b32.xlu0 %v997, 110
      %v1023 = vpop.permute.xlu0 %1022
      %1024 = vrot.lane.b32.xlu0 %v1011, 110
      %v1025 = vpop.permute.xlu0 %1024
      %1026 = vrot.lane.b32.xlu0 %v1019, 110
      %v1027 = vpop.permute.xlu0 %1026
      %1028 = vrot.lane.b32.xlu0 %v1021, 110
      %v1029 = vpop.permute.xlu0 %1028
      %1030 = vrot.lane.b32.xlu0 %v1004, 110
      %v1031 = vpop.permute.xlu0 %1030
      %1032 = vrot.lane.b32.xlu0 %v1018, 110
      %v1033 = vpop.permute.xlu0 %1032
      %1034 = vrot.lane.b32.xlu0 %v1020, 110
      %v1035 = vpop.permute.xlu0 %1034
      %vm1036 = vcmask 900096
      %v1037 = vsel %vm1036, %v1023, %v1025
      %v1038 = vsel %vm1036, %v1025, %v1027
      %v1039 = vsel %vm1036, %v1027, %v1029
      %v1040 = vsel %vm1036, %v1029, %v1031
      %v1041 = vsel %vm1036, %v1031, %v1033
      %v1042 = vsel %vm1036, %v1033, %v1035
      %v1044 = vsel %vm407, %v972, 0
      %v1047 = vand.u32 %v1037, %v413
      %v1050 = vand.u32 %v1038, %v413
      %v1053 = vand.u32 %v1039, %v413
      %v1056 = vand.u32 %v1040, %v413
      %v1059 = vand.u32 %v1041, %v413
      %v1062 = vand.u32 %v1042, %v413
      %1064 = vmatprep.subr.bf16.mxu0 %v1050
      %1065 = vmatpush1.bf16.msra.mxu0 %v1047
      %1066 = vmatprep.subr.bf16.mxu0 0
      %1067 = vmatpush1.bf16.msra.mxu0 0
      %1068 = vmatprep.subr.bf16.mxu0 0
      %1069 = vmatpush1.bf16.msra.mxu0 0
      %1070 = vmatprep.subr.bf16.mxu0 0
      %1071 = vmatpush1.bf16.msra.mxu0 0
      %1072 = vmatprep.subr.bf16.mxu0 0
      %1073 = vmatpush1.bf16.msra.mxu0 0
      %1074 = vmatprep.subr.bf16.mxu0 0
      %1075 = vmatpush1.bf16.msra.mxu0 0
      %1076 = vmatprep.subr.bf16.mxu0 0
      %1077 = vmatpush1.bf16.msra.mxu0 0
      %1078 = vmatprep.subr.bf16.mxu0 0
      %1079 = vmatpush1.bf16.msra.mxu0 0
      %1080 = vmatprep.subr.bf16.mxu0 0
      %1081 = vmatpush1.bf16.msra.mxu0 0
      %1082 = vmatprep.subr.bf16.mxu0 0
      %1083 = vmatpush1.bf16.msra.mxu0 0
      %1084 = vmatprep.subr.bf16.mxu0 0
      %1085 = vmatpush1.bf16.msra.mxu0 0
      %1086 = vmatprep.subr.bf16.mxu0 0
      %1087 = vmatpush1.bf16.msra.mxu0 0
      %1088 = vmatprep.subr.bf16.mxu0 0
      %1089 = vmatpush1.bf16.msra.mxu0 0
      %1090 = vmatprep.subr.bf16.mxu0 0
      %1091 = vmatpush1.bf16.msra.mxu0 0
      %1092 = vmatprep.subr.bf16.mxu0 0
      %1093 = vmatpush1.bf16.msra.mxu0 0
      %1094 = vmatprep.subr.bf16.mxu0 0
      %1095 = vmatpush1.bf16.msra.mxu0 0
      %1096 = vmatprep.mubr.bf16.mxu0 0
      %1097 = vmatmul.mubr.bf16.gmra.mrb[0].mxu0 %v1044
      %v1098 = vpop.f32.mrb[0].mxu0
      %v1099 = vadd.f32 0.0, %v1098
      %v1100 = vpop.f32.mrb[0].mxu0
      %v1101 = vadd.f32 0.0, %v1100
      %v1102 = vpop.f32.mrb[0].mxu0
      %v1103 = vpop.f32.mrb[0].mxu0
      %1104 = vdwg.mxu0
      %1105 = vmatprep.subr.bf16.mxu0 %v1056
      %1106 = vmatpush1.bf16.msra.mxu0 %v1053
      %1107 = vmatprep.subr.bf16.mxu0 0
      %1108 = vmatpush1.bf16.msra.mxu0 0
      %1109 = vmatprep.subr.bf16.mxu0 0
      %1110 = vmatpush1.bf16.msra.mxu0 0
      %1111 = vmatprep.subr.bf16.mxu0 0
      %1112 = vmatpush1.bf16.msra.mxu0 0
      %1113 = vmatprep.subr.bf16.mxu0 0
      %1114 = vmatpush1.bf16.msra.mxu0 0
      %1115 = vmatprep.subr.bf16.mxu0 0
      %1116 = vmatpush1.bf16.msra.mxu0 0
      %1117 = vmatprep.subr.bf16.mxu0 0
      %1118 = vmatpush1.bf16.msra.mxu0 0
      %1119 = vmatprep.subr.bf16.mxu0 0
      %1120 = vmatpush1.bf16.msra.mxu0 0
      %1121 = vmatprep.subr.bf16.mxu0 0
      %1122 = vmatpush1.bf16.msra.mxu0 0
      %1123 = vmatprep.subr.bf16.mxu0 0
      %1124 = vmatpush1.bf16.msra.mxu0 0
      %1125 = vmatprep.subr.bf16.mxu0 0
      %1126 = vmatpush1.bf16.msra.mxu0 0
      %1127 = vmatprep.subr.bf16.mxu0 0
      %1128 = vmatpush1.bf16.msra.mxu0 0
      %1129 = vmatprep.subr.bf16.mxu0 0
      %1130 = vmatpush1.bf16.msra.mxu0 0
      %1131 = vmatprep.subr.bf16.mxu0 0
      %1132 = vmatpush1.bf16.msra.mxu0 0
      %1133 = vmatprep.subr.bf16.mxu0 0
      %1134 = vmatpush1.bf16.msra.mxu0 0
      %1135 = vmatprep.subr.bf16.mxu0 0
      %1136 = vmatpush1.bf16.msra.mxu0 0
      %1137 = vmatprep.mubr.bf16.mxu0 0
      %1138 = vmatmul.mubr.bf16.gmra.mrb[0].mxu0 %v1044
      %v1139 = vpop.f32.mrb[0].mxu0
      %v1140 = vadd.f32 0.0, %v1139
      %v1141 = vpop.f32.mrb[0].mxu0
      %v1142 = vadd.f32 0.0, %v1141
      %v1143 = vpop.f32.mrb[0].mxu0
      %v1144 = vpop.f32.mrb[0].mxu0
      %1145 = vdwg.mxu0
      %1146 = vmatprep.subr.bf16.mxu0 %v1062
      %1147 = vmatpush1.bf16.msra.mxu0 %v1059
      %1148 = vmatprep.subr.bf16.mxu0 0
      %1149 = vmatpush1.bf16.msra.mxu0 0
      %1150 = vmatprep.subr.bf16.mxu0 0
      %1151 = vmatpush1.bf16.msra.mxu0 0
      %1152 = vmatprep.subr.bf16.mxu0 0
      %1153 = vmatpush1.bf16.msra.mxu0 0
      %1154 = vmatprep.subr.bf16.mxu0 0
      %1155 = vmatpush1.bf16.msra.mxu0 0
      %1156 = vmatprep.subr.bf16.mxu0 0
      %1157 = vmatpush1.bf16.msra.mxu0 0
      %1158 = vmatprep.subr.bf16.mxu0 0
      %1159 = vmatpush1.bf16.msra.mxu0 0
      %1160 = vmatprep.subr.bf16.mxu0 0
      %1161 = vmatpush1.bf16.msra.mxu0 0
      %1162 = vmatprep.subr.bf16.mxu0 0
      %1163 = vmatpush1.bf16.msra.mxu0 0
      %1164 = vmatprep.subr.bf16.mxu0 0
      %1165 = vmatpush1.bf16.msra.mxu0 0
      %1166 = vmatprep.subr.bf16.mxu0 0
      %1167 = vmatpush1.bf16.msra.mxu0 0
      %1168 = vmatprep.subr.bf16.mxu0 0
      %1169 = vmatpush1.bf16.msra.mxu0 0
      %1170 = vmatprep.subr.bf16.mxu0 0
      %1171 = vmatpush1.bf16.msra.mxu0 0
      %1172 = vmatprep.subr.bf16.mxu0 0
      %1173 = vmatpush1.bf16.msra.mxu0 0
      %1174 = vmatprep.subr.bf16.mxu0 0
      %1175 = vmatpush1.bf16.msra.mxu0 0
      %1176 = vmatprep.subr.bf16.mxu0 0
      %1177 = vmatpush1.bf16.msra.mxu0 0
      %1178 = vmatprep.mubr.bf16.mxu0 0
      %1179 = vmatmul.mubr.bf16.gmra.mrb[0].mxu0 %v1044
      %v1180 = vpop.f32.mrb[0].mxu0
      %v1181 = vadd.f32 0.0, %v1180
      %v1182 = vpop.f32.mrb[0].mxu0
      %v1183 = vadd.f32 0.0, %v1182
      %v1184 = vpop.f32.mrb[0].mxu0
      %v1185 = vpop.f32.mrb[0].mxu0
      %1186 = vdwg.mxu0
      %v1187 = vadd.f32 %v964, %v1099
      %v1188 = vadd.f32 %v965, %v1101
      %v1189 = vadd.f32 %v966, %v1140
      %v1190 = vadd.f32 %v967, %v1142
      %v1191 = vadd.f32 %v968, %v1181
      %v1192 = vadd.f32 %v969, %v1183
      %v1193 = vld [vmem:[#allocation2] sm:$0x7f]
      %s1194 = scalar_lea.vmem %s3, 4
      %v1195 = vld [vmem:[%s1194] sm:$0x1]
      %v1197 = vcombine.high %v1193, %v1193
      %v1199 = vunpack.c.l.s4 1966171168
      %v1200 = vunpack.c.0.s8 %v1199
      %v1201 = vlaneseq
      %v1202 = vshrl.u32 %v1201, 7
      %v1203 = vsub.s32 %v1200, %v1202
      %v1204 = vrot.slane %v1193, %v1203
      %v1206 = vunpack.c.l.s4 1966171168
      %v1207 = vunpack.c.0.s8 %v1206
      %v1208 = vlaneseq
      %v1209 = vshrl.u32 %v1208, 7
      %v1210 = vsub.s32 %v1207, %v1209
      %v1211 = vrot.slane %v1197, %v1210
      %v1212 = vcombine.high %v1204, %v1204
      %v1213 = vcombine.high %v1211, %v1211
      %v1215 = vunpack.c.l.s4 1966171168
      %v1216 = vunpack.c.0.s8 %v1215
      %v1217 = vlaneseq
      %v1218 = vshrl.u32 %v1217, 7
      %v1219 = vsub.s32 %v1216, %v1218
      %v1220 = vrot.slane %v1204, %v1219
      %v1222 = vunpack.c.l.s4 1966171168
      %v1223 = vunpack.c.0.s8 %v1222
      %v1224 = vlaneseq
      %v1225 = vshrl.u32 %v1224, 7
      %v1226 = vsub.s32 %v1223, %v1225
      %v1227 = vrot.slane %v1211, %v1226
      %v1229 = vunpack.c.l.s4 1966171168
      %v1230 = vunpack.c.0.s8 %v1229
      %v1231 = vlaneseq
      %v1232 = vshrl.u32 %v1231, 7
      %v1233 = vsub.s32 %v1230, %v1232
      %v1234 = vrot.slane %v1212, %v1233
      %v1236 = vunpack.c.l.s4 1966171168
      %v1237 = vunpack.c.0.s8 %v1236
      %v1238 = vlaneseq
      %v1239 = vshrl.u32 %v1238, 7
      %v1240 = vsub.s32 %v1237, %v1239
      %v1241 = vrot.slane %v1213, %v1240
      %v1242 = vcombine.high %v1220, %v1220
      %v1243 = vcombine.high %v1227, %v1227
      %v1244 = vcombine.high %v1234, %v1234
      %1245 = vrot.lane.b32.xlu0 %v1220, 109
      %v1246 = vpop.permute.xlu0 %1245
      %1247 = vrot.lane.b32.xlu0 %v1234, 109
      %v1248 = vpop.permute.xlu0 %1247
      %1249 = vrot.lane.b32.xlu0 %v1242, 109
      %v1250 = vpop.permute.xlu0 %1249
      %1251 = vrot.lane.b32.xlu0 %v1244, 109
      %v1252 = vpop.permute.xlu0 %1251
      %1253 = vrot.lane.b32.xlu0 %v1227, 109
      %v1254 = vpop.permute.xlu0 %1253
      %1255 = vrot.lane.b32.xlu0 %v1241, 109
      %v1256 = vpop.permute.xlu0 %1255
      %1257 = vrot.lane.b32.xlu0 %v1243, 109
      %v1258 = vpop.permute.xlu0 %1257
      %vm1259 = vcmask 891904
      %v1260 = vsel %vm1259, %v1246, %v1248
      %v1261 = vsel %vm1259, %v1248, %v1250
      %v1262 = vsel %vm1259, %v1250, %v1252
      %v1263 = vsel %vm1259, %v1252, %v1254
      %v1264 = vsel %vm1259, %v1254, %v1256
      %v1265 = vsel %vm1259, %v1256, %v1258
      %v1267 = vsel %vm407, %v1195, 0
      %v1270 = vand.u32 %v1260, %v413
      %v1273 = vand.u32 %v1261, %v413
      %v1276 = vand.u32 %v1262, %v413
      %v1279 = vand.u32 %v1263, %v413
      %v1282 = vand.u32 %v1264, %v413
      %v1285 = vand.u32 %v1265, %v413
      %1287 = vmatprep.subr.bf16.mxu0 %v1273
      %1288 = vmatpush1.bf16.msra.mxu0 %v1270
      %1289 = vmatprep.subr.bf16.mxu0 0
      %1290 = vmatpush1.bf16.msra.mxu0 0
      %1291 = vmatprep.subr.bf16.mxu0 0
      %1292 = vmatpush1.bf16.msra.mxu0 0
      %1293 = vmatprep.subr.bf16.mxu0 0
      %1294 = vmatpush1.bf16.msra.mxu0 0
      %1295 = vmatprep.subr.bf16.mxu0 0
      %1296 = vmatpush1.bf16.msra.mxu0 0
      %1297 = vmatprep.subr.bf16.mxu0 0
      %1298 = vmatpush1.bf16.msra.mxu0 0
      %1299 = vmatprep.subr.bf16.mxu0 0
      %1300 = vmatpush1.bf16.msra.mxu0 0
      %1301 = vmatprep.subr.bf16.mxu0 0
      %1302 = vmatpush1.bf16.msra.mxu0 0
      %1303 = vmatprep.subr.bf16.mxu0 0
      %1304 = vmatpush1.bf16.msra.mxu0 0
      %1305 = vmatprep.subr.bf16.mxu0 0
      %1306 = vmatpush1.bf16.msra.mxu0 0
      %1307 = vmatprep.subr.bf16.mxu0 0
      %1308 = vmatpush1.bf16.msra.mxu0 0
      %1309 = vmatprep.subr.bf16.mxu0 0
      %1310 = vmatpush1.bf16.msra.mxu0 0
      %1311 = vmatprep.subr.bf16.mxu0 0
      %1312 = vmatpush1.bf16.msra.mxu0 0
      %1313 = vmatprep.subr.bf16.mxu0 0
      %1314 = vmatpush1.bf16.msra.mxu0 0
      %1315 = vmatprep.subr.bf16.mxu0 0
      %1316 = vmatpush1.bf16.msra.mxu0 0
      %1317 = vmatprep.subr.bf16.mxu0 0
      %1318 = vmatpush1.bf16.msra.mxu0 0
      %1319 = vmatprep.mubr.bf16.mxu0 0
      %1320 = vmatmul.mubr.bf16.gmra.mrb[0].mxu0 %v1267
      %v1321 = vpop.f32.mrb[0].mxu0
      %v1322 = vadd.f32 0.0, %v1321
      %v1323 = vpop.f32.mrb[0].mxu0
      %v1324 = vadd.f32 0.0, %v1323
      %v1325 = vpop.f32.mrb[0].mxu0
      %v1326 = vpop.f32.mrb[0].mxu0
      %1327 = vdwg.mxu0
      %1328 = vmatprep.subr.bf16.mxu0 %v1279
      %1329 = vmatpush1.bf16.msra.mxu0 %v1276
      %1330 = vmatprep.subr.bf16.mxu0 0
      %1331 = vmatpush1.bf16.msra.mxu0 0
      %1332 = vmatprep.subr.bf16.mxu0 0
      %1333 = vmatpush1.bf16.msra.mxu0 0
      %1334 = vmatprep.subr.bf16.mxu0 0
      %1335 = vmatpush1.bf16.msra.mxu0 0
      %1336 = vmatprep.subr.bf16.mxu0 0
      %1337 = vmatpush1.bf16.msra.mxu0 0
      %1338 = vmatprep.subr.bf16.mxu0 0
      %1339 = vmatpush1.bf16.msra.mxu0 0
      %1340 = vmatprep.subr.bf16.mxu0 0
      %1341 = vmatpush1.bf16.msra.mxu0 0
      %1342 = vmatprep.subr.bf16.mxu0 0
      %1343 = vmatpush1.bf16.msra.mxu0 0
      %1344 = vmatprep.subr.bf16.mxu0 0
      %1345 = vmatpush1.bf16.msra.mxu0 0
      %1346 = vmatprep.subr.bf16.mxu0 0
      %1347 = vmatpush1.bf16.msra.mxu0 0
      %1348 = vmatprep.subr.bf16.mxu0 0
      %1349 = vmatpush1.bf16.msra.mxu0 0
      %1350 = vmatprep.subr.bf16.mxu0 0
      %1351 = vmatpush1.bf16.msra.mxu0 0
      %1352 = vmatprep.subr.bf16.mxu0 0
      %1353 = vmatpush1.bf16.msra.mxu0 0
      %1354 = vmatprep.subr.bf16.mxu0 0
      %1355 = vmatpush1.bf16.msra.mxu0 0
      %1356 = vmatprep.subr.bf16.mxu0 0
      %1357 = vmatpush1.bf16.msra.mxu0 0
      %1358 = vmatprep.subr.bf16.mxu0 0
      %1359 = vmatpush1.bf16.msra.mxu0 0
      %1360 = vmatprep.mubr.bf16.mxu0 0
      %1361 = vmatmul.mubr.bf16.gmra.mrb[0].mxu0 %v1267
      %v1362 = vpop.f32.mrb[0].mxu0
      %v1363 = vadd.f32 0.0, %v1362
      %v1364 = vpop.f32.mrb[0].mxu0
      %v1365 = vadd.f32 0.0, %v1364
      %v1366 = vpop.f32.mrb[0].mxu0
      %v1367 = vpop.f32.mrb[0].mxu0
      %1368 = vdwg.mxu0
      %1369 = vmatprep.subr.bf16.mxu0 %v1285
      %1370 = vmatpush1.bf16.msra.mxu0 %v1282
      %1371 = vmatprep.subr.bf16.mxu0 0
      %1372 = vmatpush1.bf16.msra.mxu0 0
      %1373 = vmatprep.subr.bf16.mxu0 0
      %1374 = vmatpush1.bf16.msra.mxu0 0
      %1375 = vmatprep.subr.bf16.mxu0 0
      %1376 = vmatpush1.bf16.msra.mxu0 0
      %1377 = vmatprep.subr.bf16.mxu0 0
      %1378 = vmatpush1.bf16.msra.mxu0 0
      %1379 = vmatprep.subr.bf16.mxu0 0
      %1380 = vmatpush1.bf16.msra.mxu0 0
      %1381 = vmatprep.subr.bf16.mxu0 0
      %1382 = vmatpush1.bf16.msra.mxu0 0
      %1383 = vmatprep.subr.bf16.mxu0 0
      %1384 = vmatpush1.bf16.msra.mxu0 0
      %1385 = vmatprep.subr.bf16.mxu0 0
      %1386 = vmatpush1.bf16.msra.mxu0 0
      %1387 = vmatprep.subr.bf16.mxu0 0
      %1388 = vmatpush1.bf16.msra.mxu0 0
      %1389 = vmatprep.subr.bf16.mxu0 0
      %1390 = vmatpush1.bf16.msra.mxu0 0
      %1391 = vmatprep.subr.bf16.mxu0 0
      %1392 = vmatpush1.bf16.msra.mxu0 0
      %1393 = vmatprep.subr.bf16.mxu0 0
      %1394 = vmatpush1.bf16.msra.mxu0 0
      %1395 = vmatprep.subr.bf16.mxu0 0
      %1396 = vmatpush1.bf16.msra.mxu0 0
      %1397 = vmatprep.subr.bf16.mxu0 0
      %1398 = vmatpush1.bf16.msra.mxu0 0
      %1399 = vmatprep.subr.bf16.mxu0 0
      %1400 = vmatpush1.bf16.msra.mxu0 0
      %1401 = vmatprep.mubr.bf16.mxu0 0
      %1402 = vmatmul.mubr.bf16.gmra.mrb[0].mxu0 %v1267
      %v1403 = vpop.f32.mrb[0].mxu0
      %v1404 = vadd.f32 0.0, %v1403
      %v1405 = vpop.f32.mrb[0].mxu0
      %v1406 = vadd.f32 0.0, %v1405
      %v1407 = vpop.f32.mrb[0].mxu0
      %v1408 = vpop.f32.mrb[0].mxu0
      %1409 = vdwg.mxu0
      %v1410 = vadd.f32 %v1187, %v1322
      %v1411 = vadd.f32 %v1188, %v1324
      %v1412 = vadd.f32 %v1189, %v1363
      %v1413 = vadd.f32 %v1190, %v1365
      %v1414 = vadd.f32 %v1191, %v1404
      %v1415 = vadd.f32 %v1192, %v1406
      %v1416 = vld [vmem:[#allocation2] sm:$0x7f]
      %s1417 = scalar_lea.vmem %s3, 5
      %v1418 = vld [vmem:[%s1417] sm:$0x1]
      %v1420 = vcombine.high %v1416, %v1416
      %v1422 = vunpack.c.l.s4 1966171168
      %v1423 = vunpack.c.0.s8 %v1422
      %v1424 = vlaneseq
      %v1425 = vshrl.u32 %v1424, 7
      %v1426 = vsub.s32 %v1423, %v1425
      %v1427 = vrot.slane %v1416, %v1426
      %v1429 = vunpack.c.l.s4 1966171168
      %v1430 = vunpack.c.0.s8 %v1429
      %v1431 = vlaneseq
      %v1432 = vshrl.u32 %v1431, 7
      %v1433 = vsub.s32 %v1430, %v1432
      %v1434 = vrot.slane %v1420, %v1433
      %v1435 = vcombine.high %v1427, %v1427
      %v1436 = vcombine.high %v1434, %v1434
      %v1438 = vunpack.c.l.s4 1966171168
      %v1439 = vunpack.c.0.s8 %v1438
      %v1440 = vlaneseq
      %v1441 = vshrl.u32 %v1440, 7
      %v1442 = vsub.s32 %v1439, %v1441
      %v1443 = vrot.slane %v1427, %v1442
      %v1445 = vunpack.c.l.s4 1966171168
      %v1446 = vunpack.c.0.s8 %v1445
      %v1447 = vlaneseq
      %v1448 = vshrl.u32 %v1447, 7
      %v1449 = vsub.s32 %v1446, %v1448
      %v1450 = vrot.slane %v1434, %v1449
      %v1452 = vunpack.c.l.s4 1966171168
      %v1453 = vunpack.c.0.s8 %v1452
      %v1454 = vlaneseq
      %v1455 = vshrl.u32 %v1454, 7
      %v1456 = vsub.s32 %v1453, %v1455
      %v1457 = vrot.slane %v1435, %v1456
      %v1459 = vunpack.c.l.s4 1966171168
      %v1460 = vunpack.c.0.s8 %v1459
      %v1461 = vlaneseq
      %v1462 = vshrl.u32 %v1461, 7
      %v1463 = vsub.s32 %v1460, %v1462
      %v1464 = vrot.slane %v1436, %v1463
      %v1465 = vcombine.high %v1443, %v1443
      %v1466 = vcombine.high %v1450, %v1450
      %v1467 = vcombine.high %v1457, %v1457
      %1468 = vrot.lane.b32.xlu0 %v1443, 108
      %v1469 = vpop.permute.xlu0 %1468
      %1470 = vrot.lane.b32.xlu0 %v1457, 108
      %v1471 = vpop.permute.xlu0 %1470
      %1472 = vrot.lane.b32.xlu0 %v1465, 108
      %v1473 = vpop.permute.xlu0 %1472
      %1474 = vrot.lane.b32.xlu0 %v1467, 108
      %v1475 = vpop.permute.xlu0 %1474
      %1476 = vrot.lane.b32.xlu0 %v1450, 108
      %v1477 = vpop.permute.xlu0 %1476
      %1478 = vrot.lane.b32.xlu0 %v1464, 108
      %v1479 = vpop.permute.xlu0 %1478
      %1480 = vrot.lane.b32.xlu0 %v1466, 108
      %v1481 = vpop.permute.xlu0 %1480
      %vm1482 = vcmask 883712
      %v1483 = vsel %vm1482, %v1469, %v1471
      %v1484 = vsel %vm1482, %v1471, %v1473
      %v1485 = vsel %vm1482, %v1473, %v1475
      %v1486 = vsel %vm1482, %v1475, %v1477
      %v1487 = vsel %vm1482, %v1477, %v1479
      %v1488 = vsel %vm1482, %v1479, %v1481
      %v1490 = vsel %vm407, %v1418, 0
      %v1493 = vand.u32 %v1483, %v413
      %v1496 = vand.u32 %v1484, %v413
      %v1499 = vand.u32 %v1485, %v413
      %v1502 = vand.u32 %v1486, %v413
      %v1505 = vand.u32 %v1487, %v413
      %v1508 = vand.u32 %v1488, %v413
      %1510 = vmatprep.subr.bf16.mxu0 %v1496
      %1511 = vmatpush1.bf16.msra.mxu0 %v1493
      %1512 = vmatprep.subr.bf16.mxu0 0
      %1513 = vmatpush1.bf16.msra.mxu0 0
      %1514 = vmatprep.subr.bf16.mxu0 0
      %1515 = vmatpush1.bf16.msra.mxu0 0
      %1516 = vmatprep.subr.bf16.mxu0 0
      %1517 = vmatpush1.bf16.msra.mxu0 0
      %1518 = vmatprep.subr.bf16.mxu0 0
      %1519 = vmatpush1.bf16.msra.mxu0 0
      %1520 = vmatprep.subr.bf16.mxu0 0
      %1521 = vmatpush1.bf16.msra.mxu0 0
      %1522 = vmatprep.subr.bf16.mxu0 0
      %1523 = vmatpush1.bf16.msra.mxu0 0
      %1524 = vmatprep.subr.bf16.mxu0 0
      %1525 = vmatpush1.bf16.msra.mxu0 0
      %1526 = vmatprep.subr.bf16.mxu0 0
      %1527 = vmatpush1.bf16.msra.mxu0 0
      %1528 = vmatprep.subr.bf16.mxu0 0
      %1529 = vmatpush1.bf16.msra.mxu0 0
      %1530 = vmatprep.subr.bf16.mxu0 0
      %1531 = vmatpush1.bf16.msra.mxu0 0
      %1532 = vmatprep.subr.bf16.mxu0 0
      %1533 = vmatpush1.bf16.msra.mxu0 0
      %1534 = vmatprep.subr.bf16.mxu0 0
      %1535 = vmatpush1.bf16.msra.mxu0 0
      %1536 = vmatprep.subr.bf16.mxu0 0
      %1537 = vmatpush1.bf16.msra.mxu0 0
      %1538 = vmatprep.subr.bf16.mxu0 0
      %1539 = vmatpush1.bf16.msra.mxu0 0
      %1540 = vmatprep.subr.bf16.mxu0 0
      %1541 = vmatpush1.bf16.msra.mxu0 0
      %1542 = vmatprep.mubr.bf16.mxu0 0
      %1543 = vmatmul.mubr.bf16.gmra.mrb[0].mxu0 %v1490
      %v1544 = vpop.f32.mrb[0].mxu0
      %v1545 = vadd.f32 0.0, %v1544
      %v1546 = vpop.f32.mrb[0].mxu0
      %v1547 = vadd.f32 0.0, %v1546
      %v1548 = vpop.f32.mrb[0].mxu0
      %v1549 = vpop.f32.mrb[0].mxu0
      %1550 = vdwg.mxu0
      %1551 = vmatprep.subr.bf16.mxu0 %v1502
      %1552 = vmatpush1.bf16.msra.mxu0 %v1499
      %1553 = vmatprep.subr.bf16.mxu0 0
      %1554 = vmatpush1.bf16.msra.mxu0 0
      %1555 = vmatprep.subr.bf16.mxu0 0
      %1556 = vmatpush1.bf16.msra.mxu0 0
      %1557 = vmatprep.subr.bf16.mxu0 0
      %1558 = vmatpush1.bf16.msra.mxu0 0
      %1559 = vmatprep.subr.bf16.mxu0 0
      %1560 = vmatpush1.bf16.msra.mxu0 0
      %1561 = vmatprep.subr.bf16.mxu0 0
      %1562 = vmatpush1.bf16.msra.mxu0 0
      %1563 = vmatprep.subr.bf16.mxu0 0
      %1564 = vmatpush1.bf16.msra.mxu0 0
      %1565 = vmatprep.subr.bf16.mxu0 0
      %1566 = vmatpush1.bf16.msra.mxu0 0
      %1567 = vmatprep.subr.bf16.mxu0 0
      %1568 = vmatpush1.bf16.msra.mxu0 0
      %1569 = vmatprep.subr.bf16.mxu0 0
      %1570 = vmatpush1.bf16.msra.mxu0 0
      %1571 = vmatprep.subr.bf16.mxu0 0
      %1572 = vmatpush1.bf16.msra.mxu0 0
      %1573 = vmatprep.subr.bf16.mxu0 0
      %1574 = vmatpush1.bf16.msra.mxu0 0
      %1575 = vmatprep.subr.bf16.mxu0 0
      %1576 = vmatpush1.bf16.msra.mxu0 0
      %1577 = vmatprep.subr.bf16.mxu0 0
      %1578 = vmatpush1.bf16.msra.mxu0 0
      %1579 = vmatprep.subr.bf16.mxu0 0
      %1580 = vmatpush1.bf16.msra.mxu0 0
      %1581 = vmatprep.subr.bf16.mxu0 0
      %1582 = vmatpush1.bf16.msra.mxu0 0
      %1583 = vmatprep.mubr.bf16.mxu0 0
      %1584 = vmatmul.mubr.bf16.gmra.mrb[0].mxu0 %v1490
      %v1585 = vpop.f32.mrb[0].mxu0
      %v1586 = vadd.f32 0.0, %v1585
      %v1587 = vpop.f32.mrb[0].mxu0
      %v1588 = vadd.f32 0.0, %v1587
      %v1589 = vpop.f32.mrb[0].mxu0
      %v1590 = vpop.f32.mrb[0].mxu0
      %1591 = vdwg.mxu0
      %1592 = vmatprep.subr.bf16.mxu0 %v1508
      %1593 = vmatpush1.bf16.msra.mxu0 %v1505
      %1594 = vmatprep.subr.bf16.mxu0 0
      %1595 = vmatpush1.bf16.msra.mxu0 0
      %1596 = vmatprep.subr.bf16.mxu0 0
      %1597 = vmatpush1.bf16.msra.mxu0 0
      %1598 = vmatprep.subr.bf16.mxu0 0
      %1599 = vmatpush1.bf16.msra.mxu0 0
      %1600 = vmatprep.subr.bf16.mxu0 0
      %1601 = vmatpush1.bf16.msra.mxu0 0
      %1602 = vmatprep.subr.bf16.mxu0 0
      %1603 = vmatpush1.bf16.msra.mxu0 0
      %1604 = vmatprep.subr.bf16.mxu0 0
      %1605 = vmatpush1.bf16.msra.mxu0 0
      %1606 = vmatprep.subr.bf16.mxu0 0
      %1607 = vmatpush1.bf16.msra.mxu0 0
      %1608 = vmatprep.subr.bf16.mxu0 0
      %1609 = vmatpush1.bf16.msra.mxu0 0
      %1610 = vmatprep.subr.bf16.mxu0 0
      %1611 = vmatpush1.bf16.msra.mxu0 0
      %1612 = vmatprep.subr.bf16.mxu0 0
      %1613 = vmatpush1.bf16.msra.mxu0 0
      %1614 = vmatprep.subr.bf16.mxu0 0
      %1615 = vmatpush1.bf16.msra.mxu0 0
      %1616 = vmatprep.subr.bf16.mxu0 0
      %1617 = vmatpush1.bf16.msra.mxu0 0
      %1618 = vmatprep.subr.bf16.mxu0 0
      %1619 = vmatpush1.bf16.msra.mxu0 0
      %1620 = vmatprep.subr.bf16.mxu0 0
      %1621 = vmatpush1.bf16.msra.mxu0 0
      %1622 = vmatprep.subr.bf16.mxu0 0
      %1623 = vmatpush1.bf16.msra.mxu0 0
      %1624 = vmatprep.mubr.bf16.mxu0 0
      %1625 = vmatmul.mubr.bf16.gmra.mrb[0].mxu0 %v1490
      %v1626 = vpop.f32.mrb[0].mxu0
      %v1627 = vadd.f32 0.0, %v1626
      %v1628 = vpop.f32.mrb[0].mxu0
      %v1629 = vadd.f32 0.0, %v1628
      %v1630 = vpop.f32.mrb[0].mxu0
      %v1631 = vpop.f32.mrb[0].mxu0
      %1632 = vdwg.mxu0
      %v1633 = vadd.f32 %v1410, %v1545
      %v1634 = vadd.f32 %v1411, %v1547
      %v1635 = vadd.f32 %v1412, %v1586
      %v1636 = vadd.f32 %v1413, %v1588
      %v1637 = vadd.f32 %v1414, %v1627
      %v1638 = vadd.f32 %v1415, %v1629
      %v1639 = vld [vmem:[#allocation2] sm:$0x7f]
      %s1640 = scalar_lea.vmem %s3, 6
      %v1641 = vld [vmem:[%s1640] sm:$0x1]
      %v1643 = vcombine.high %v1639, %v1639
      %v1645 = vunpack.c.l.s4 1966171168
      %v1646 = vunpack.c.0.s8 %v1645
      %v1647 = vlaneseq
      %v1648 = vshrl.u32 %v1647, 7
      %v1649 = vsub.s32 %v1646, %v1648
      %v1650 = vrot.slane %v1639, %v1649
      %v1652 = vunpack.c.l.s4 1966171168
      %v1653 = vunpack.c.0.s8 %v1652
      %v1654 = vlaneseq
      %v1655 = vshrl.u32 %v1654, 7
      %v1656 = vsub.s32 %v1653, %v1655
      %v1657 = vrot.slane %v1643, %v1656
      %v1658 = vcombine.high %v1650, %v1650
      %v1659 = vcombine.high %v1657, %v1657
      %v1661 = vunpack.c.l.s4 1966171168
      %v1662 = vunpack.c.0.s8 %v1661
      %v1663 = vlaneseq
      %v1664 = vshrl.u32 %v1663, 7
      %v1665 = vsub.s32 %v1662, %v1664
      %v1666 = vrot.slane %v1650, %v1665
      %v1668 = vunpack.c.l.s4 1966171168
      %v1669 = vunpack.c.0.s8 %v1668
      %v1670 = vlaneseq
      %v1671 = vshrl.u32 %v1670, 7
      %v1672 = vsub.s32 %v1669, %v1671
      %v1673 = vrot.slane %v1657, %v1672
      %v1675 = vunpack.c.l.s4 1966171168
      %v1676 = vunpack.c.0.s8 %v1675
      %v1677 = vlaneseq
      %v1678 = vshrl.u32 %v1677, 7
      %v1679 = vsub.s32 %v1676, %v1678
      %v1680 = vrot.slane %v1658, %v1679
      %v1682 = vunpack.c.l.s4 1966171168
      %v1683 = vunpack.c.0.s8 %v1682
      %v1684 = vlaneseq
      %v1685 = vshrl.u32 %v1684, 7
      %v1686 = vsub.s32 %v1683, %v1685
      %v1687 = vrot.slane %v1659, %v1686
      %v1688 = vcombine.high %v1666, %v1666
      %v1689 = vcombine.high %v1673, %v1673
      %v1690 = vcombine.high %v1680, %v1680
      %1691 = vrot.lane.b32.xlu0 %v1666, 92
      %v1692 = vpop.permute.xlu0 %1691
      %1693 = vrot.lane.b32.xlu0 %v1680, 92
      %v1694 = vpop.permute.xlu0 %1693
      %1695 = vrot.lane.b32.xlu0 %v1688, 92
      %v1696 = vpop.permute.xlu0 %1695
      %1697 = vrot.lane.b32.xlu0 %v1690, 92
      %v1698 = vpop.permute.xlu0 %1697
      %1699 = vrot.lane.b32.xlu0 %v1673, 92
      %v1700 = vpop.permute.xlu0 %1699
      %1701 = vrot.lane.b32.xlu0 %v1687, 92
      %v1702 = vpop.permute.xlu0 %1701
      %1703 = vrot.lane.b32.xlu0 %v1689, 92
      %v1704 = vpop.permute.xlu0 %1703
      %vm1705 = vcmask 752640
      %v1706 = vsel %vm1705, %v1692, %v1694
      %v1707 = vsel %vm1705, %v1694, %v1696
      %v1708 = vsel %vm1705, %v1696, %v1698
      %v1709 = vsel %vm1705, %v1698, %v1700
      %v1710 = vsel %vm1705, %v1700, %v1702
      %v1711 = vsel %vm1705, %v1702, %v1704
      %v1713 = vsel %vm407, %v1641, 0
      %v1716 = vand.u32 %v1706, %v413
      %v1719 = vand.u32 %v1707, %v413
      %v1722 = vand.u32 %v1708, %v413
      %v1725 = vand.u32 %v1709, %v413
      %v1728 = vand.u32 %v1710, %v413
      %v1731 = vand.u32 %v1711, %v413
      %1733 = vmatprep.subr.bf16.mxu0 %v1719
      %1734 = vmatpush1.bf16.msra.mxu0 %v1716
      %1735 = vmatprep.subr.bf16.mxu0 0
      %1736 = vmatpush1.bf16.msra.mxu0 0
      %1737 = vmatprep.subr.bf16.mxu0 0
      %1738 = vmatpush1.bf16.msra.mxu0 0
      %1739 = vmatprep.subr.bf16.mxu0 0
      %1740 = vmatpush1.bf16.msra.mxu0 0
      %1741 = vmatprep.subr.bf16.mxu0 0
      %1742 = vmatpush1.bf16.msra.mxu0 0
      %1743 = vmatprep.subr.bf16.mxu0 0
      %1744 = vmatpush1.bf16.msra.mxu0 0
      %1745 = vmatprep.subr.bf16.mxu0 0
      %1746 = vmatpush1.bf16.msra.mxu0 0
      %1747 = vmatprep.subr.bf16.mxu0 0
      %1748 = vmatpush1.bf16.msra.mxu0 0
      %1749 = vmatprep.subr.bf16.mxu0 0
      %1750 = vmatpush1.bf16.msra.mxu0 0
      %1751 = vmatprep.subr.bf16.mxu0 0
      %1752 = vmatpush1.bf16.msra.mxu0 0
      %1753 = vmatprep.subr.bf16.mxu0 0
      %1754 = vmatpush1.bf16.msra.mxu0 0
      %1755 = vmatprep.subr.bf16.mxu0 0
      %1756 = vmatpush1.bf16.msra.mxu0 0
      %1757 = vmatprep.subr.bf16.mxu0 0
      %1758 = vmatpush1.bf16.msra.mxu0 0
      %1759 = vmatprep.subr.bf16.mxu0 0
      %1760 = vmatpush1.bf16.msra.mxu0 0
      %1761 = vmatprep.subr.bf16.mxu0 0
      %1762 = vmatpush1.bf16.msra.mxu0 0
      %1763 = vmatprep.subr.bf16.mxu0 0
      %1764 = vmatpush1.bf16.msra.mxu0 0
      %1765 = vmatprep.mubr.bf16.mxu0 0
      %1766 = vmatmul.mubr.bf16.gmra.mrb[0].mxu0 %v1713
      %v1767 = vpop.f32.mrb[0].mxu0
      %v1768 = vadd.f32 0.0, %v1767
      %v1769 = vpop.f32.mrb[0].mxu0
      %v1770 = vadd.f32 0.0, %v1769
      %v1771 = vpop.f32.mrb[0].mxu0
      %v1772 = vpop.f32.mrb[0].mxu0
      %1773 = vdwg.mxu0
      %1774 = vmatprep.subr.bf16.mxu0 %v1725
      %1775 = vmatpush1.bf16.msra.mxu0 %v1722
      %1776 = vmatprep.subr.bf16.mxu0 0
      %1777 = vmatpush1.bf16.msra.mxu0 0
      %1778 = vmatprep.subr.bf16.mxu0 0
      %1779 = vmatpush1.bf16.msra.mxu0 0
      %1780 = vmatprep.subr.bf16.mxu0 0
      %1781 = vmatpush1.bf16.msra.mxu0 0
      %1782 = vmatprep.subr.bf16.mxu0 0
      %1783 = vmatpush1.bf16.msra.mxu0 0
      %1784 = vmatprep.subr.bf16.mxu0 0
      %1785 = vmatpush1.bf16.msra.mxu0 0
      %1786 = vmatprep.subr.bf16.mxu0 0
      %1787 = vmatpush1.bf16.msra.mxu0 0
      %1788 = vmatprep.subr.bf16.mxu0 0
      %1789 = vmatpush1.bf16.msra.mxu0 0
      %1790 = vmatprep.subr.bf16.mxu0 0
      %1791 = vmatpush1.bf16.msra.mxu0 0
      %1792 = vmatprep.subr.bf16.mxu0 0
      %1793 = vmatpush1.bf16.msra.mxu0 0
      %1794 = vmatprep.subr.bf16.mxu0 0
      %1795 = vmatpush1.bf16.msra.mxu0 0
      %1796 = vmatprep.subr.bf16.mxu0 0
      %1797 = vmatpush1.bf16.msra.mxu0 0
      %1798 = vmatprep.subr.bf16.mxu0 0
      %1799 = vmatpush1.bf16.msra.mxu0 0
      %1800 = vmatprep.subr.bf16.mxu0 0
      %1801 = vmatpush1.bf16.msra.mxu0 0
      %1802 = vmatprep.subr.bf16.mxu0 0
      %1803 = vmatpush1.bf16.msra.mxu0 0
      %1804 = vmatprep.subr.bf16.mxu0 0
      %1805 = vmatpush1.bf16.msra.mxu0 0
      %1806 = vmatprep.mubr.bf16.mxu0 0
      %1807 = vmatmul.mubr.bf16.gmra.mrb[0].mxu0 %v1713
      %v1808 = vpop.f32.mrb[0].mxu0
      %v1809 = vadd.f32 0.0, %v1808
      %v1810 = vpop.f32.mrb[0].mxu0
      %v1811 = vadd.f32 0.0, %v1810
      %v1812 = vpop.f32.mrb[0].mxu0
      %v1813 = vpop.f32.mrb[0].mxu0
      %1814 = vdwg.mxu0
      %1815 = vmatprep.subr.bf16.mxu0 %v1731
      %1816 = vmatpush1.bf16.msra.mxu0 %v1728
      %1817 = vmatprep.subr.bf16.mxu0 0
      %1818 = vmatpush1.bf16.msra.mxu0 0
      %1819 = vmatprep.subr.bf16.mxu0 0
      %1820 = vmatpush1.bf16.msra.mxu0 0
      %1821 = vmatprep.subr.bf16.mxu0 0
      %1822 = vmatpush1.bf16.msra.mxu0 0
      %1823 = vmatprep.subr.bf16.mxu0 0
      %1824 = vmatpush1.bf16.msra.mxu0 0
      %1825 = vmatprep.subr.bf16.mxu0 0
      %1826 = vmatpush1.bf16.msra.mxu0 0
      %1827 = vmatprep.subr.bf16.mxu0 0
      %1828 = vmatpush1.bf16.msra.mxu0 0
      %1829 = vmatprep.subr.bf16.mxu0 0
      %1830 = vmatpush1.bf16.msra.mxu0 0
      %1831 = vmatprep.subr.bf16.mxu0 0
      %1832 = vmatpush1.bf16.msra.mxu0 0
      %1833 = vmatprep.subr.bf16.mxu0 0
      %1834 = vmatpush1.bf16.msra.mxu0 0
      %1835 = vmatprep.subr.bf16.mxu0 0
      %1836 = vmatpush1.bf16.msra.mxu0 0
      %1837 = vmatprep.subr.bf16.mxu0 0
      %1838 = vmatpush1.bf16.msra.mxu0 0
      %1839 = vmatprep.subr.bf16.mxu0 0
      %1840 = vmatpush1.bf16.msra.mxu0 0
      %1841 = vmatprep.subr.bf16.mxu0 0
      %1842 = vmatpush1.bf16.msra.mxu0 0
      %1843 = vmatprep.subr.bf16.mxu0 0
      %1844 = vmatpush1.bf16.msra.mxu0 0
      %1845 = vmatprep.subr.bf16.mxu0 0
      %1846 = vmatpush1.bf16.msra.mxu0 0
      %1847 = vmatprep.mubr.bf16.mxu0 0
      %1848 = vmatmul.mubr.bf16.gmra.mrb[0].mxu0 %v1713
      %v1849 = vpop.f32.mrb[0].mxu0
      %v1850 = vadd.f32 0.0, %v1849
      %v1851 = vpop.f32.mrb[0].mxu0
      %v1852 = vadd.f32 0.0, %v1851
      %v1853 = vpop.f32.mrb[0].mxu0
      %v1854 = vpop.f32.mrb[0].mxu0
      %1855 = vdwg.mxu0
      %v1856 = vadd.f32 %v1633, %v1768
      %v1857 = vadd.f32 %v1634, %v1770
      %v1858 = vadd.f32 %v1635, %v1809
      %v1859 = vadd.f32 %v1636, %v1811
      %v1860 = vadd.f32 %v1637, %v1850
      %v1861 = vadd.f32 %v1638, %v1852
      %v1862 = vld [vmem:[#allocation2] sm:$0x7f]
      %s1863 = scalar_lea.vmem %s3, 7
      %v1864 = vld [vmem:[%s1863] sm:$0x1]
      %v1866 = vcombine.high %v1862, %v1862
      %v1868 = vunpack.c.l.s4 1966171168
      %v1869 = vunpack.c.0.s8 %v1868
      %v1870 = vlaneseq
      %v1871 = vshrl.u32 %v1870, 7
      %v1872 = vsub.s32 %v1869, %v1871
      %v1873 = vrot.slane %v1862, %v1872
      %v1875 = vunpack.c.l.s4 1966171168
      %v1876 = vunpack.c.0.s8 %v1875
      %v1877 = vlaneseq
      %v1878 = vshrl.u32 %v1877, 7
      %v1879 = vsub.s32 %v1876, %v1878
      %v1880 = vrot.slane %v1866, %v1879
      %v1881 = vcombine.high %v1873, %v1873
      %v1882 = vcombine.high %v1880, %v1880
      %v1884 = vunpack.c.l.s4 1966171168
      %v1885 = vunpack.c.0.s8 %v1884
      %v1886 = vlaneseq
      %v1887 = vshrl.u32 %v1886, 7
      %v1888 = vsub.s32 %v1885, %v1887
      %v1889 = vrot.slane %v1873, %v1888
      %v1891 = vunpack.c.l.s4 1966171168
      %v1892 = vunpack.c.0.s8 %v1891
      %v1893 = vlaneseq
      %v1894 = vshrl.u32 %v1893, 7
      %v1895 = vsub.s32 %v1892, %v1894
      %v1896 = vrot.slane %v1880, %v1895
      %v1898 = vunpack.c.l.s4 1966171168
      %v1899 = vunpack.c.0.s8 %v1898
      %v1900 = vlaneseq
      %v1901 = vshrl.u32 %v1900, 7
      %v1902 = vsub.s32 %v1899, %v1901
      %v1903 = vrot.slane %v1881, %v1902
      %v1905 = vunpack.c.l.s4 1966171168
      %v1906 = vunpack.c.0.s8 %v1905
      %v1907 = vlaneseq
      %v1908 = vshrl.u32 %v1907, 7
      %v1909 = vsub.s32 %v1906, %v1908
      %v1910 = vrot.slane %v1882, %v1909
      %v1911 = vcombine.high %v1889, %v1889
      %v1912 = vcombine.high %v1896, %v1896
      %v1913 = vcombine.high %v1903, %v1903
      %1914 = vrot.lane.b32.xlu0 %v1889, 91
      %v1915 = vpop.permute.xlu0 %1914
      %1916 = vrot.lane.b32.xlu0 %v1903, 91
      %v1917 = vpop.permute.xlu0 %1916
      %1918 = vrot.lane.b32.xlu0 %v1911, 91
      %v1919 = vpop.permute.xlu0 %1918
      %1920 = vrot.lane.b32.xlu0 %v1913, 91
      %v1921 = vpop.permute.xlu0 %1920
      %1922 = vrot.lane.b32.xlu0 %v1896, 91
      %v1923 = vpop.permute.xlu0 %1922
      %1924 = vrot.lane.b32.xlu0 %v1910, 91
      %v1925 = vpop.permute.xlu0 %1924
      %1926 = vrot.lane.b32.xlu0 %v1912, 91
      %v1927 = vpop.permute.xlu0 %1926
      %vm1928 = vcmask 744448
      %v1929 = vsel %vm1928, %v1915, %v1917
      %v1930 = vsel %vm1928, %v1917, %v1919
      %v1931 = vsel %vm1928, %v1919, %v1921
      %v1932 = vsel %vm1928, %v1921, %v1923
      %v1933 = vsel %vm1928, %v1923, %v1925
      %v1934 = vsel %vm1928, %v1925, %v1927
      %v1936 = vsel %vm407, %v1864, 0
      %v1939 = vand.u32 %v1929, %v413
      %v1942 = vand.u32 %v1930, %v413
      %v1945 = vand.u32 %v1931, %v413
      %v1948 = vand.u32 %v1932, %v413
      %v1951 = vand.u32 %v1933, %v413
      %v1954 = vand.u32 %v1934, %v413
      %1956 = vmatprep.subr.bf16.mxu0 %v1942
      %1957 = vmatpush1.bf16.msra.mxu0 %v1939
      %1958 = vmatprep.subr.bf16.mxu0 0
      %1959 = vmatpush1.bf16.msra.mxu0 0
      %1960 = vmatprep.subr.bf16.mxu0 0
      %1961 = vmatpush1.bf16.msra.mxu0 0
      %1962 = vmatprep.subr.bf16.mxu0 0
      %1963 = vmatpush1.bf16.msra.mxu0 0
      %1964 = vmatprep.subr.bf16.mxu0 0
      %1965 = vmatpush1.bf16.msra.mxu0 0
      %1966 = vmatprep.subr.bf16.mxu0 0
      %1967 = vmatpush1.bf16.msra.mxu0 0
      %1968 = vmatprep.subr.bf16.mxu0 0
      %1969 = vmatpush1.bf16.msra.mxu0 0
      %1970 = vmatprep.subr.bf16.mxu0 0
      %1971 = vmatpush1.bf16.msra.mxu0 0
      %1972 = vmatprep.subr.bf16.mxu0 0
      %1973 = vmatpush1.bf16.msra.mxu0 0
      %1974 = vmatprep.subr.bf16.mxu0 0
      %1975 = vmatpush1.bf16.msra.mxu0 0
      %1976 = vmatprep.subr.bf16.mxu0 0
      %1977 = vmatpush1.bf16.msra.mxu0 0
      %1978 = vmatprep.subr.bf16.mxu0 0
      %1979 = vmatpush1.bf16.msra.mxu0 0
      %1980 = vmatprep.subr.bf16.mxu0 0
      %1981 = vmatpush1.bf16.msra.mxu0 0
      %1982 = vmatprep.subr.bf16.mxu0 0
      %1983 = vmatpush1.bf16.msra.mxu0 0
      %1984 = vmatprep.subr.bf16.mxu0 0
      %1985 = vmatpush1.bf16.msra.mxu0 0
      %1986 = vmatprep.subr.bf16.mxu0 0
      %1987 = vmatpush1.bf16.msra.mxu0 0
      %1988 = vmatprep.mubr.bf16.mxu0 0
      %1989 = vmatmul.mubr.bf16.gmra.mrb[0].mxu0 %v1936
      %v1990 = vpop.f32.mrb[0].mxu0
      %v1991 = vadd.f32 0.0, %v1990
      %v1992 = vpop.f32.mrb[0].mxu0
      %v1993 = vadd.f32 0.0, %v1992
      %v1994 = vpop.f32.mrb[0].mxu0
      %v1995 = vpop.f32.mrb[0].mxu0
      %1996 = vdwg.mxu0
      %1997 = vmatprep.subr.bf16.mxu0 %v1948
      %1998 = vmatpush1.bf16.msra.mxu0 %v1945
      %1999 = vmatprep.subr.bf16.mxu0 0
      %2000 = vmatpush1.bf16.msra.mxu0 0
      %2001 = vmatprep.subr.bf16.mxu0 0
      %2002 = vmatpush1.bf16.msra.mxu0 0
      %2003 = vmatprep.subr.bf16.mxu0 0
      %2004 = vmatpush1.bf16.msra.mxu0 0
      %2005 = vmatprep.subr.bf16.mxu0 0
      %2006 = vmatpush1.bf16.msra.mxu0 0
      %2007 = vmatprep.subr.bf16.mxu0 0
      %2008 = vmatpush1.bf16.msra.mxu0 0
      %2009 = vmatprep.subr.bf16.mxu0 0
      %2010 = vmatpush1.bf16.msra.mxu0 0
      %2011 = vmatprep.subr.bf16.mxu0 0
      %2012 = vmatpush1.bf16.msra.mxu0 0
      %2013 = vmatprep.subr.bf16.mxu0 0
      %2014 = vmatpush1.bf16.msra.mxu0 0
      %2015 = vmatprep.subr.bf16.mxu0 0
      %2016 = vmatpush1.bf16.msra.mxu0 0
      %2017 = vmatprep.subr.bf16.mxu0 0
      %2018 = vmatpush1.bf16.msra.mxu0 0
      %2019 = vmatprep.subr.bf16.mxu0 0
      %2020 = vmatpush1.bf16.msra.mxu0 0
      %2021 = vmatprep.subr.bf16.mxu0 0
      %2022 = vmatpush1.bf16.msra.mxu0 0
      %2023 = vmatprep.subr.bf16.mxu0 0
      %2024 = vmatpush1.bf16.msra.mxu0 0
      %2025 = vmatprep.subr.bf16.mxu0 0
      %2026 = vmatpush1.bf16.msra.mxu0 0
      %2027 = vmatprep.subr.bf16.mxu0 0
      %2028 = vmatpush1.bf16.msra.mxu0 0
      %2029 = vmatprep.mubr.bf16.mxu0 0
      %2030 = vmatmul.mubr.bf16.gmra.mrb[0].mxu0 %v1936
      %v2031 = vpop.f32.mrb[0].mxu0
      %v2032 = vadd.f32 0.0, %v2031
      %v2033 = vpop.f32.mrb[0].mxu0
      %v2034 = vadd.f32 0.0, %v2033
      %v2035 = vpop.f32.mrb[0].mxu0
      %v2036 = vpop.f32.mrb[0].mxu0
      %2037 = vdwg.mxu0
      %2038 = vmatprep.subr.bf16.mxu0 %v1954
      %2039 = vmatpush1.bf16.msra.mxu0 %v1951
      %2040 = vmatprep.subr.bf16.mxu0 0
      %2041 = vmatpush1.bf16.msra.mxu0 0
      %2042 = vmatprep.subr.bf16.mxu0 0
      %2043 = vmatpush1.bf16.msra.mxu0 0
      %2044 = vmatprep.subr.bf16.mxu0 0
      %2045 = vmatpush1.bf16.msra.mxu0 0
      %2046 = vmatprep.subr.bf16.mxu0 0
      %2047 = vmatpush1.bf16.msra.mxu0 0
      %2048 = vmatprep.subr.bf16.mxu0 0
      %2049 = vmatpush1.bf16.msra.mxu0 0
      %2050 = vmatprep.subr.bf16.mxu0 0
      %2051 = vmatpush1.bf16.msra.mxu0 0
      %2052 = vmatprep.subr.bf16.mxu0 0
      %2053 = vmatpush1.bf16.msra.mxu0 0
      %2054 = vmatprep.subr.bf16.mxu0 0
      %2055 = vmatpush1.bf16.msra.mxu0 0
      %2056 = vmatprep.subr.bf16.mxu0 0
      %2057 = vmatpush1.bf16.msra.mxu0 0
      %2058 = vmatprep.subr.bf16.mxu0 0
      %2059 = vmatpush1.bf16.msra.mxu0 0
      %2060 = vmatprep.subr.bf16.mxu0 0
      %2061 = vmatpush1.bf16.msra.mxu0 0
      %2062 = vmatprep.subr.bf16.mxu0 0
      %2063 = vmatpush1.bf16.msra.mxu0 0
      %2064 = vmatprep.subr.bf16.mxu0 0
      %2065 = vmatpush1.bf16.msra.mxu0 0
      %2066 = vmatprep.subr.bf16.mxu0 0
      %2067 = vmatpush1.bf16.msra.mxu0 0
      %2068 = vmatprep.subr.bf16.mxu0 0
      %2069 = vmatpush1.bf16.msra.mxu0 0
      %2070 = vmatprep.mubr.bf16.mxu0 0
      %2071 = vmatmul.mubr.bf16.gmra.mrb[0].mxu0 %v1936
      %v2072 = vpop.f32.mrb[0].mxu0
      %v2073 = vadd.f32 0.0, %v2072
      %v2074 = vpop.f32.mrb[0].mxu0
      %v2075 = vadd.f32 0.0, %v2074
      %v2076 = vpop.f32.mrb[0].mxu0
      %v2077 = vpop.f32.mrb[0].mxu0
      %2078 = vdwg.mxu0
      %v2079 = vadd.f32 %v1856, %v1991
      %v2080 = vadd.f32 %v1857, %v1993
      %v2081 = vadd.f32 %v1858, %v2032
      %v2082 = vadd.f32 %v1859, %v2034
      %v2083 = vadd.f32 %v1860, %v2073
      %v2084 = vadd.f32 %v1861, %v2075
      %v2085 = vld [vmem:[#allocation2] sm:$0x7f]
      %s2086 = scalar_lea.vmem %s3, 8
      %v2087 = vld [vmem:[%s2086] sm:$0x1]
      %v2089 = vcombine.high %v2085, %v2085
      %v2091 = vunpack.c.l.s4 1966171168
      %v2092 = vunpack.c.0.s8 %v2091
      %v2093 = vlaneseq
      %v2094 = vshrl.u32 %v2093, 7
      %v2095 = vsub.s32 %v2092, %v2094
      %v2096 = vrot.slane %v2085, %v2095
      %v2098 = vunpack.c.l.s4 1966171168
      %v2099 = vunpack.c.0.s8 %v2098
      %v2100 = vlaneseq
      %v2101 = vshrl.u32 %v2100, 7
      %v2102 = vsub.s32 %v2099, %v2101
      %v2103 = vrot.slane %v2089, %v2102
      %v2104 = vcombine.high %v2096, %v2096
      %v2105 = vcombine.high %v2103, %v2103
      %v2107 = vunpack.c.l.s4 1966171168
      %v2108 = vunpack.c.0.s8 %v2107
      %v2109 = vlaneseq
      %v2110 = vshrl.u32 %v2109, 7
      %v2111 = vsub.s32 %v2108, %v2110
      %v2112 = vrot.slane %v2096, %v2111
      %v2114 = vunpack.c.l.s4 1966171168
      %v2115 = vunpack.c.0.s8 %v2114
      %v2116 = vlaneseq
      %v2117 = vshrl.u32 %v2116, 7
      %v2118 = vsub.s32 %v2115, %v2117
      %v2119 = vrot.slane %v2103, %v2118
      %v2121 = vunpack.c.l.s4 1966171168
      %v2122 = vunpack.c.0.s8 %v2121
      %v2123 = vlaneseq
      %v2124 = vshrl.u32 %v2123, 7
      %v2125 = vsub.s32 %v2122, %v2124
      %v2126 = vrot.slane %v2104, %v2125
      %v2128 = vunpack.c.l.s4 1966171168
      %v2129 = vunpack.c.0.s8 %v2128
      %v2130 = vlaneseq
      %v2131 = vshrl.u32 %v2130, 7
      %v2132 = vsub.s32 %v2129, %v2131
      %v2133 = vrot.slane %v2105, %v2132
      %v2134 = vcombine.high %v2112, %v2112
      %v2135 = vcombine.high %v2119, %v2119
      %v2136 = vcombine.high %v2126, %v2126
      %2137 = vrot.lane.b32.xlu0 %v2112, 90
      %v2138 = vpop.permute.xlu0 %2137
      %2139 = vrot.lane.b32.xlu0 %v2126, 90
      %v2140 = vpop.permute.xlu0 %2139
      %2141 = vrot.lane.b32.xlu0 %v2134, 90
      %v2142 = vpop.permute.xlu0 %2141
      %2143 = vrot.lane.b32.xlu0 %v2136, 90
      %v2144 = vpop.permute.xlu0 %2143
      %2145 = vrot.lane.b32.xlu0 %v2119, 90
      %v2146 = vpop.permute.xlu0 %2145
      %2147 = vrot.lane.b32.xlu0 %v2133, 90
      %v2148 = vpop.permute.xlu0 %2147
      %2149 = vrot.lane.b32.xlu0 %v2135, 90
      %v2150 = vpop.permute.xlu0 %2149
      %vm2151 = vcmask 736256
      %v2152 = vsel %vm2151, %v2138, %v2140
      %v2153 = vsel %vm2151, %v2140, %v2142
      %v2154 = vsel %vm2151, %v2142, %v2144
      %v2155 = vsel %vm2151, %v2144, %v2146
      %v2156 = vsel %vm2151, %v2146, %v2148
      %v2157 = vsel %vm2151, %v2148, %v2150
      %v2159 = vsel %vm407, %v2087, 0
      %v2162 = vand.u32 %v2152, %v413
      %v2165 = vand.u32 %v2153, %v413
      %v2168 = vand.u32 %v2154, %v413
      %v2171 = vand.u32 %v2155, %v413
      %v2174 = vand.u32 %v2156, %v413
      %v2177 = vand.u32 %v2157, %v413
      %2179 = vmatprep.subr.bf16.mxu0 %v2165
      %2180 = vmatpush1.bf16.msra.mxu0 %v2162
      %2181 = vmatprep.subr.bf16.mxu0 0
      %2182 = vmatpush1.bf16.msra.mxu0 0
      %2183 = vmatprep.subr.bf16.mxu0 0
      %2184 = vmatpush1.bf16.msra.mxu0 0
      %2185 = vmatprep.subr.bf16.mxu0 0
      %2186 = vmatpush1.bf16.msra.mxu0 0
      %2187 = vmatprep.subr.bf16.mxu0 0
      %2188 = vmatpush1.bf16.msra.mxu0 0
      %2189 = vmatprep.subr.bf16.mxu0 0
      %2190 = vmatpush1.bf16.msra.mxu0 0
      %2191 = vmatprep.subr.bf16.mxu0 0
      %2192 = vmatpush1.bf16.msra.mxu0 0
      %2193 = vmatprep.subr.bf16.mxu0 0
      %2194 = vmatpush1.bf16.msra.mxu0 0
      %2195 = vmatprep.subr.bf16.mxu0 0
      %2196 = vmatpush1.bf16.msra.mxu0 0
      %2197 = vmatprep.subr.bf16.mxu0 0
      %2198 = vmatpush1.bf16.msra.mxu0 0
      %2199 = vmatprep.subr.bf16.mxu0 0
      %2200 = vmatpush1.bf16.msra.mxu0 0
      %2201 = vmatprep.subr.bf16.mxu0 0
      %2202 = vmatpush1.bf16.msra.mxu0 0
      %2203 = vmatprep.subr.bf16.mxu0 0
      %2204 = vmatpush1.bf16.msra.mxu0 0
      %2205 = vmatprep.subr.bf16.mxu0 0
      %2206 = vmatpush1.bf16.msra.mxu0 0
      %2207 = vmatprep.subr.bf16.mxu0 0
      %2208 = vmatpush1.bf16.msra.mxu0 0
      %2209 = vmatprep.subr.bf16.mxu0 0
      %2210 = vmatpush1.bf16.msra.mxu0 0
      %2211 = vmatprep.mubr.bf16.mxu0 0
      %2212 = vmatmul.mubr.bf16.gmra.mrb[0].mxu0 %v2159
      %v2213 = vpop.f32.mrb[0].mxu0
      %v2214 = vadd.f32 0.0, %v2213
      %v2215 = vpop.f32.mrb[0].mxu0
      %v2216 = vadd.f32 0.0, %v2215
      %v2217 = vpop.f32.mrb[0].mxu0
      %v2218 = vpop.f32.mrb[0].mxu0
      %2219 = vdwg.mxu0
      %2220 = vmatprep.subr.bf16.mxu0 %v2171
      %2221 = vmatpush1.bf16.msra.mxu0 %v2168
      %2222 = vmatprep.subr.bf16.mxu0 0
      %2223 = vmatpush1.bf16.msra.mxu0 0
      %2224 = vmatprep.subr.bf16.mxu0 0
      %2225 = vmatpush1.bf16.msra.mxu0 0
      %2226 = vmatprep.subr.bf16.mxu0 0
      %2227 = vmatpush1.bf16.msra.mxu0 0
      %2228 = vmatprep.subr.bf16.mxu0 0
      %2229 = vmatpush1.bf16.msra.mxu0 0
      %2230 = vmatprep.subr.bf16.mxu0 0
      %2231 = vmatpush1.bf16.msra.mxu0 0
      %2232 = vmatprep.subr.bf16.mxu0 0
      %2233 = vmatpush1.bf16.msra.mxu0 0
      %2234 = vmatprep.subr.bf16.mxu0 0
      %2235 = vmatpush1.bf16.msra.mxu0 0
      %2236 = vmatprep.subr.bf16.mxu0 0
      %2237 = vmatpush1.bf16.msra.mxu0 0
      %2238 = vmatprep.subr.bf16.mxu0 0
      %2239 = vmatpush1.bf16.msra.mxu0 0
      %2240 = vmatprep.subr.bf16.mxu0 0
      %2241 = vmatpush1.bf16.msra.mxu0 0
      %2242 = vmatprep.subr.bf16.mxu0 0
      %2243 = vmatpush1.bf16.msra.mxu0 0
      %2244 = vmatprep.subr.bf16.mxu0 0
      %2245 = vmatpush1.bf16.msra.mxu0 0
      %2246 = vmatprep.subr.bf16.mxu0 0
      %2247 = vmatpush1.bf16.msra.mxu0 0
      %2248 = vmatprep.subr.bf16.mxu0 0
      %2249 = vmatpush1.bf16.msra.mxu0 0
      %2250 = vmatprep.subr.bf16.mxu0 0
      %2251 = vmatpush1.bf16.msra.mxu0 0
      %2252 = vmatprep.mubr.bf16.mxu0 0
      %2253 = vmatmul.mubr.bf16.gmra.mrb[0].mxu0 %v2159
      %v2254 = vpop.f32.mrb[0].mxu0
      %v2255 = vadd.f32 0.0, %v2254
      %v2256 = vpop.f32.mrb[0].mxu0
      %v2257 = vadd.f32 0.0, %v2256
      %v2258 = vpop.f32.mrb[0].mxu0
      %v2259 = vpop.f32.mrb[0].mxu0
      %2260 = vdwg.mxu0
      %2261 = vmatprep.subr.bf16.mxu0 %v2177
      %2262 = vmatpush1.bf16.msra.mxu0 %v2174
      %2263 = vmatprep.subr.bf16.mxu0 0
      %2264 = vmatpush1.bf16.msra.mxu0 0
      %2265 = vmatprep.subr.bf16.mxu0 0
      %2266 = vmatpush1.bf16.msra.mxu0 0
      %2267 = vmatprep.subr.bf16.mxu0 0
      %2268 = vmatpush1.bf16.msra.mxu0 0
      %2269 = vmatprep.subr.bf16.mxu0 0
      %2270 = vmatpush1.bf16.msra.mxu0 0
      %2271 = vmatprep.subr.bf16.mxu0 0
      %2272 = vmatpush1.bf16.msra.mxu0 0
      %2273 = vmatprep.subr.bf16.mxu0 0
      %2274 = vmatpush1.bf16.msra.mxu0 0
      %2275 = vmatprep.subr.bf16.mxu0 0
      %2276 = vmatpush1.bf16.msra.mxu0 0
      %2277 = vmatprep.subr.bf16.mxu0 0
      %2278 = vmatpush1.bf16.msra.mxu0 0
      %2279 = vmatprep.subr.bf16.mxu0 0
      %2280 = vmatpush1.bf16.msra.mxu0 0
      %2281 = vmatprep.subr.bf16.mxu0 0
      %2282 = vmatpush1.bf16.msra.mxu0 0
      %2283 = vmatprep.subr.bf16.mxu0 0
      %2284 = vmatpush1.bf16.msra.mxu0 0
      %2285 = vmatprep.subr.bf16.mxu0 0
      %2286 = vmatpush1.bf16.msra.mxu0 0
      %2287 = vmatprep.subr.bf16.mxu0 0
      %2288 = vmatpush1.bf16.msra.mxu0 0
      %2289 = vmatprep.subr.bf16.mxu0 0
      %2290 = vmatpush1.bf16.msra.mxu0 0
      %2291 = vmatprep.subr.bf16.mxu0 0
      %2292 = vmatpush1.bf16.msra.mxu0 0
      %2293 = vmatprep.mubr.bf16.mxu0 0
      %2294 = vmatmul.mubr.bf16.gmra.mrb[0].mxu0 %v2159
      %v2295 = vpop.f32.mrb[0].mxu0
      %v2296 = vadd.f32 0.0, %v2295
      %v2297 = vpop.f32.mrb[0].mxu0
      %v2298 = vadd.f32 0.0, %v2297
      %v2299 = vpop.f32.mrb[0].mxu0
      %v2300 = vpop.f32.mrb[0].mxu0
      %2301 = vdwg.mxu0
      %v2302 = vadd.f32 %v2079, %v2214
      %v2303 = vadd.f32 %v2080, %v2216
      %v2304 = vadd.f32 %v2081, %v2255
      %v2305 = vadd.f32 %v2082, %v2257
      %v2306 = vadd.f32 %v2083, %v2296
      %v2307 = vadd.f32 %v2084, %v2298
      %v2308 = vld [vmem:[#allocation2 + $0x2] sm:$0x7f]
      %s2309 = scalar_lea.vmem %s3, 9
      %v2310 = vld [vmem:[%s2309] sm:$0x1]
      %v2312 = vcombine.high %v2308, %v2308
      %v2314 = vunpack.c.l.s4 1966171168
      %v2315 = vunpack.c.0.s8 %v2314
      %v2316 = vlaneseq
      %v2317 = vshrl.u32 %v2316, 7
      %v2318 = vsub.s32 %v2315, %v2317
      %v2319 = vrot.slane %v2308, %v2318
      %v2321 = vunpack.c.l.s4 1966171168
      %v2322 = vunpack.c.0.s8 %v2321
      %v2323 = vlaneseq
      %v2324 = vshrl.u32 %v2323, 7
      %v2325 = vsub.s32 %v2322, %v2324
      %v2326 = vrot.slane %v2312, %v2325
      %v2327 = vcombine.high %v2319, %v2319
      %v2328 = vcombine.high %v2326, %v2326
      %v2330 = vunpack.c.l.s4 1966171168
      %v2331 = vunpack.c.0.s8 %v2330
      %v2332 = vlaneseq
      %v2333 = vshrl.u32 %v2332, 7
      %v2334 = vsub.s32 %v2331, %v2333
      %v2335 = vrot.slane %v2319, %v2334
      %v2337 = vunpack.c.l.s4 1966171168
      %v2338 = vunpack.c.0.s8 %v2337
      %v2339 = vlaneseq
      %v2340 = vshrl.u32 %v2339, 7
      %v2341 = vsub.s32 %v2338, %v2340
      %v2342 = vrot.slane %v2326, %v2341
      %v2344 = vunpack.c.l.s4 1966171168
      %v2345 = vunpack.c.0.s8 %v2344
      %v2346 = vlaneseq
      %v2347 = vshrl.u32 %v2346, 7
      %v2348 = vsub.s32 %v2345, %v2347
      %v2349 = vrot.slane %v2327, %v2348
      %v2351 = vunpack.c.l.s4 1966171168
      %v2352 = vunpack.c.0.s8 %v2351
      %v2353 = vlaneseq
      %v2354 = vshrl.u32 %v2353, 7
      %v2355 = vsub.s32 %v2352, %v2354
      %v2356 = vrot.slane %v2328, %v2355
      %v2357 = vcombine.high %v2335, %v2335
      %v2358 = vcombine.high %v2342, %v2342
      %v2359 = vcombine.high %v2349, %v2349
      %2360 = vrot.lane.b32.xlu0 %v2335, 60
      %v2361 = vpop.permute.xlu0 %2360
      %2362 = vrot.lane.b32.xlu0 %v2349, 60
      %v2363 = vpop.permute.xlu0 %2362
      %2364 = vrot.lane.b32.xlu0 %v2357, 60
      %v2365 = vpop.permute.xlu0 %2364
      %2366 = vrot.lane.b32.xlu0 %v2359, 60
      %v2367 = vpop.permute.xlu0 %2366
      %2368 = vrot.lane.b32.xlu0 %v2342, 60
      %v2369 = vpop.permute.xlu0 %2368
      %2370 = vrot.lane.b32.xlu0 %v2356, 60
      %v2371 = vpop.permute.xlu0 %2370
      %2372 = vrot.lane.b32.xlu0 %v2358, 60
      %v2373 = vpop.permute.xlu0 %2372
      %vm2374 = vcmask 490496
      %v2375 = vsel %vm2374, %v2361, %v2363
      %v2376 = vsel %vm2374, %v2363, %v2365
      %v2377 = vsel %vm2374, %v2365, %v2367
      %v2378 = vsel %vm2374, %v2367, %v2369
      %v2379 = vsel %vm2374, %v2369, %v2371
      %v2380 = vsel %vm2374, %v2371, %v2373
      %v2382 = vsel %vm407, %v2310, 0
      %v2385 = vand.u32 %v2375, %v413
      %v2388 = vand.u32 %v2376, %v413
      %v2391 = vand.u32 %v2377, %v413
      %v2394 = vand.u32 %v2378, %v413
      %v2397 = vand.u32 %v2379, %v413
      %v2400 = vand.u32 %v2380, %v413
      %2402 = vmatprep.subr.bf16.mxu0 %v2388
      %2403 = vmatpush1.bf16.msra.mxu0 %v2385
      %2404 = vmatprep.subr.bf16.mxu0 0
      %2405 = vmatpush1.bf16.msra.mxu0 0
      %2406 = vmatprep.subr.bf16.mxu0 0
      %2407 = vmatpush1.bf16.msra.mxu0 0
      %2408 = vmatprep.subr.bf16.mxu0 0
      %2409 = vmatpush1.bf16.msra.mxu0 0
      %2410 = vmatprep.subr.bf16.mxu0 0
      %2411 = vmatpush1.bf16.msra.mxu0 0
      %2412 = vmatprep.subr.bf16.mxu0 0
      %2413 = vmatpush1.bf16.msra.mxu0 0
      %2414 = vmatprep.subr.bf16.mxu0 0
      %2415 = vmatpush1.bf16.msra.mxu0 0
      %2416 = vmatprep.subr.bf16.mxu0 0
      %2417 = vmatpush1.bf16.msra.mxu0 0
      %2418 = vmatprep.subr.bf16.mxu0 0
      %2419 = vmatpush1.bf16.msra.mxu0 0
      %2420 = vmatprep.subr.bf16.mxu0 0
      %2421 = vmatpush1.bf16.msra.mxu0 0
      %2422 = vmatprep.subr.bf16.mxu0 0
      %2423 = vmatpush1.bf16.msra.mxu0 0
      %2424 = vmatprep.subr.bf16.mxu0 0
      %2425 = vmatpush1.bf16.msra.mxu0 0
      %2426 = vmatprep.subr.bf16.mxu0 0
      %2427 = vmatpush1.bf16.msra.mxu0 0
      %2428 = vmatprep.subr.bf16.mxu0 0
      %2429 = vmatpush1.bf16.msra.mxu0 0
      %2430 = vmatprep.subr.bf16.mxu0 0
      %2431 = vmatpush1.bf16.msra.mxu0 0
      %2432 = vmatprep.subr.bf16.mxu0 0
      %2433 = vmatpush1.bf16.msra.mxu0 0
      %2434 = vmatprep.mubr.bf16.mxu0 0
      %2435 = vmatmul.mubr.bf16.gmra.mrb[0].mxu0 %v2382
      %v2436 = vpop.f32.mrb[0].mxu0
      %v2437 = vadd.f32 0.0, %v2436
      %v2438 = vpop.f32.mrb[0].mxu0
      %v2439 = vadd.f32 0.0, %v2438
      %v2440 = vpop.f32.mrb[0].mxu0
      %v2441 = vpop.f32.mrb[0].mxu0
      %2442 = vdwg.mxu0
      %2443 = vmatprep.subr.bf16.mxu0 %v2394
      %2444 = vmatpush1.bf16.msra.mxu0 %v2391
      %2445 = vmatprep.subr.bf16.mxu0 0
      %2446 = vmatpush1.bf16.msra.mxu0 0
      %2447 = vmatprep.subr.bf16.mxu0 0
      %2448 = vmatpush1.bf16.msra.mxu0 0
      %2449 = vmatprep.subr.bf16.mxu0 0
      %2450 = vmatpush1.bf16.msra.mxu0 0
      %2451 = vmatprep.subr.bf16.mxu0 0
      %2452 = vmatpush1.bf16.msra.mxu0 0
      %2453 = vmatprep.subr.bf16.mxu0 0
      %2454 = vmatpush1.bf16.msra.mxu0 0
      %2455 = vmatprep.subr.bf16.mxu0 0
      %2456 = vmatpush1.bf16.msra.mxu0 0
      %2457 = vmatprep.subr.bf16.mxu0 0
      %2458 = vmatpush1.bf16.msra.mxu0 0
      %2459 = vmatprep.subr.bf16.mxu0 0
      %2460 = vmatpush1.bf16.msra.mxu0 0
      %2461 = vmatprep.subr.bf16.mxu0 0
      %2462 = vmatpush1.bf16.msra.mxu0 0
      %2463 = vmatprep.subr.bf16.mxu0 0
      %2464 = vmatpush1.bf16.msra.mxu0 0
      %2465 = vmatprep.subr.bf16.mxu0 0
      %2466 = vmatpush1.bf16.msra.mxu0 0
      %2467 = vmatprep.subr.bf16.mxu0 0
      %2468 = vmatpush1.bf16.msra.mxu0 0
      %2469 = vmatprep.subr.bf16.mxu0 0
      %2470 = vmatpush1.bf16.msra.mxu0 0
      %2471 = vmatprep.subr.bf16.mxu0 0
      %2472 = vmatpush1.bf16.msra.mxu0 0
      %2473 = vmatprep.subr.bf16.mxu0 0
      %2474 = vmatpush1.bf16.msra.mxu0 0
      %2475 = vmatprep.mubr.bf16.mxu0 0
      %2476 = vmatmul.mubr.bf16.gmra.mrb[0].mxu0 %v2382
      %v2477 = vpop.f32.mrb[0].mxu0
      %v2478 = vadd.f32 0.0, %v2477
      %v2479 = vpop.f32.mrb[0].mxu0
      %v2480 = vadd.f32 0.0, %v2479
      %v2481 = vpop.f32.mrb[0].mxu0
      %v2482 = vpop.f32.mrb[0].mxu0
      %2483 = vdwg.mxu0
      %2484 = vmatprep.subr.bf16.mxu0 %v2400
      %2485 = vmatpush1.bf16.msra.mxu0 %v2397
      %2486 = vmatprep.subr.bf16.mxu0 0
      %2487 = vmatpush1.bf16.msra.mxu0 0
      %2488 = vmatprep.subr.bf16.mxu0 0
      %2489 = vmatpush1.bf16.msra.mxu0 0
      %2490 = vmatprep.subr.bf16.mxu0 0
      %2491 = vmatpush1.bf16.msra.mxu0 0
      %2492 = vmatprep.subr.bf16.mxu0 0
      %2493 = vmatpush1.bf16.msra.mxu0 0
      %2494 = vmatprep.subr.bf16.mxu0 0
      %2495 = vmatpush1.bf16.msra.mxu0 0
      %2496 = vmatprep.subr.bf16.mxu0 0
      %2497 = vmatpush1.bf16.msra.mxu0 0
      %2498 = vmatprep.subr.bf16.mxu0 0
      %2499 = vmatpush1.bf16.msra.mxu0 0
      %2500 = vmatprep.subr.bf16.mxu0 0
      %2501 = vmatpush1.bf16.msra.mxu0 0
      %2502 = vmatprep.subr.bf16.mxu0 0
      %2503 = vmatpush1.bf16.msra.mxu0 0
      %2504 = vmatprep.subr.bf16.mxu0 0
      %2505 = vmatpush1.bf16.msra.mxu0 0
      %2506 = vmatprep.subr.bf16.mxu0 0
      %2507 = vmatpush1.bf16.msra.mxu0 0
      %2508 = vmatprep.subr.bf16.mxu0 0
      %2509 = vmatpush1.bf16.msra.mxu0 0
      %2510 = vmatprep.subr.bf16.mxu0 0
      %2511 = vmatpush1.bf16.msra.mxu0 0
      %2512 = vmatprep.subr.bf16.mxu0 0
      %2513 = vmatpush1.bf16.msra.mxu0 0
      %2514 = vmatprep.subr.bf16.mxu0 0
      %2515 = vmatpush1.bf16.msra.mxu0 0
      %2516 = vmatprep.mubr.bf16.mxu0 0
      %2517 = vmatmul.mubr.bf16.gmra.mrb[0].mxu0 %v2382
      %v2518 = vpop.f32.mrb[0].mxu0
      %v2519 = vadd.f32 0.0, %v2518
      %v2520 = vpop.f32.mrb[0].mxu0
      %v2521 = vadd.f32 0.0, %v2520
      %v2522 = vpop.f32.mrb[0].mxu0
      %v2523 = vpop.f32.mrb[0].mxu0
      %2524 = vdwg.mxu0
      %v2525 = vadd.f32 %v2302, %v2437
      %v2526 = vadd.f32 %v2303, %v2439
      %v2527 = vadd.f32 %v2304, %v2478
      %v2528 = vadd.f32 %v2305, %v2480
      %v2529 = vadd.f32 %v2306, %v2519
      %v2530 = vadd.f32 %v2307, %v2521
      %v2531 = vld [vmem:[#allocation2 + $0x2] sm:$0x7f]
      %s2532 = scalar_lea.vmem %s3, 10
      %v2533 = vld [vmem:[%s2532] sm:$0x1]
      %v2535 = vcombine.high %v2531, %v2531
      %v2537 = vunpack.c.l.s4 1966171168
      %v2538 = vunpack.c.0.s8 %v2537
      %v2539 = vlaneseq
      %v2540 = vshrl.u32 %v2539, 7
      %v2541 = vsub.s32 %v2538, %v2540
      %v2542 = vrot.slane %v2531, %v2541
      %v2544 = vunpack.c.l.s4 1966171168
      %v2545 = vunpack.c.0.s8 %v2544
      %v2546 = vlaneseq
      %v2547 = vshrl.u32 %v2546, 7
      %v2548 = vsub.s32 %v2545, %v2547
      %v2549 = vrot.slane %v2535, %v2548
      %v2550 = vcombine.high %v2542, %v2542
      %v2551 = vcombine.high %v2549, %v2549
      %v2553 = vunpack.c.l.s4 1966171168
      %v2554 = vunpack.c.0.s8 %v2553
      %v2555 = vlaneseq
      %v2556 = vshrl.u32 %v2555, 7
      %v2557 = vsub.s32 %v2554, %v2556
      %v2558 = vrot.slane %v2542, %v2557
      %v2560 = vunpack.c.l.s4 1966171168
      %v2561 = vunpack.c.0.s8 %v2560
      %v2562 = vlaneseq
      %v2563 = vshrl.u32 %v2562, 7
      %v2564 = vsub.s32 %v2561, %v2563
      %v2565 = vrot.slane %v2549, %v2564
      %v2567 = vunpack.c.l.s4 1966171168
      %v2568 = vunpack.c.0.s8 %v2567
      %v2569 = vlaneseq
      %v2570 = vshrl.u32 %v2569, 7
      %v2571 = vsub.s32 %v2568, %v2570
      %v2572 = vrot.slane %v2550, %v2571
      %v2574 = vunpack.c.l.s4 1966171168
      %v2575 = vunpack.c.0.s8 %v2574
      %v2576 = vlaneseq
      %v2577 = vshrl.u32 %v2576, 7
      %v2578 = vsub.s32 %v2575, %v2577
      %v2579 = vrot.slane %v2551, %v2578
      %v2580 = vcombine.high %v2558, %v2558
      %v2581 = vcombine.high %v2565, %v2565
      %v2582 = vcombine.high %v2572, %v2572
      %2583 = vrot.lane.b32.xlu0 %v2558, 59
      %v2584 = vpop.permute.xlu0 %2583
      %2585 = vrot.lane.b32.xlu0 %v2572, 59
      %v2586 = vpop.permute.xlu0 %2585
      %2587 = vrot.lane.b32.xlu0 %v2580, 59
      %v2588 = vpop.permute.xlu0 %2587
      %2589 = vrot.lane.b32.xlu0 %v2582, 59
      %v2590 = vpop.permute.xlu0 %2589
      %2591 = vrot.lane.b32.xlu0 %v2565, 59
      %v2592 = vpop.permute.xlu0 %2591
      %2593 = vrot.lane.b32.xlu0 %v2579, 59
      %v2594 = vpop.permute.xlu0 %2593
      %2595 = vrot.lane.b32.xlu0 %v2581, 59
      %v2596 = vpop.permute.xlu0 %2595
      %vm2597 = vcmask 482304
      %v2598 = vsel %vm2597, %v2584, %v2586
      %v2599 = vsel %vm2597, %v2586, %v2588
      %v2600 = vsel %vm2597, %v2588, %v2590
      %v2601 = vsel %vm2597, %v2590, %v2592
      %v2602 = vsel %vm2597, %v2592, %v2594
      %v2603 = vsel %vm2597, %v2594, %v2596
      %v2605 = vsel %vm407, %v2533, 0
      %v2608 = vand.u32 %v2598, %v413
      %v2611 = vand.u32 %v2599, %v413
      %v2614 = vand.u32 %v2600, %v413
      %v2617 = vand.u32 %v2601, %v413
      %v2620 = vand.u32 %v2602, %v413
      %v2623 = vand.u32 %v2603, %v413
      %2625 = vmatprep.subr.bf16.mxu0 %v2611
      %2626 = vmatpush1.bf16.msra.mxu0 %v2608
      %2627 = vmatprep.subr.bf16.mxu0 0
      %2628 = vmatpush1.bf16.msra.mxu0 0
      %2629 = vmatprep.subr.bf16.mxu0 0
      %2630 = vmatpush1.bf16.msra.mxu0 0
      %2631 = vmatprep.subr.bf16.mxu0 0
      %2632 = vmatpush1.bf16.msra.mxu0 0
      %2633 = vmatprep.subr.bf16.mxu0 0
      %2634 = vmatpush1.bf16.msra.mxu0 0
      %2635 = vmatprep.subr.bf16.mxu0 0
      %2636 = vmatpush1.bf16.msra.mxu0 0
      %2637 = vmatprep.subr.bf16.mxu0 0
      %2638 = vmatpush1.bf16.msra.mxu0 0
      %2639 = vmatprep.subr.bf16.mxu0 0
      %2640 = vmatpush1.bf16.msra.mxu0 0
      %2641 = vmatprep.subr.bf16.mxu0 0
      %2642 = vmatpush1.bf16.msra.mxu0 0
      %2643 = vmatprep.subr.bf16.mxu0 0
      %2644 = vmatpush1.bf16.msra.mxu0 0
      %2645 = vmatprep.subr.bf16.mxu0 0
      %2646 = vmatpush1.bf16.msra.mxu0 0
      %2647 = vmatprep.subr.bf16.mxu0 0
      %2648 = vmatpush1.bf16.msra.mxu0 0
      %2649 = vmatprep.subr.bf16.mxu0 0
      %2650 = vmatpush1.bf16.msra.mxu0 0
      %2651 = vmatprep.subr.bf16.mxu0 0
      %2652 = vmatpush1.bf16.msra.mxu0 0
      %2653 = vmatprep.subr.bf16.mxu0 0
      %2654 = vmatpush1.bf16.msra.mxu0 0
      %2655 = vmatprep.subr.bf16.mxu0 0
      %2656 = vmatpush1.bf16.msra.mxu0 0
      %2657 = vmatprep.mubr.bf16.mxu0 0
      %2658 = vmatmul.mubr.bf16.gmra.mrb[0].mxu0 %v2605
      %v2659 = vpop.f32.mrb[0].mxu0
      %v2660 = vadd.f32 0.0, %v2659
      %v2661 = vpop.f32.mrb[0].mxu0
      %v2662 = vadd.f32 0.0, %v2661
      %v2663 = vpop.f32.mrb[0].mxu0
      %v2664 = vpop.f32.mrb[0].mxu0
      %2665 = vdwg.mxu0
      %2666 = vmatprep.subr.bf16.mxu0 %v2617
      %2667 = vmatpush1.bf16.msra.mxu0 %v2614
      %2668 = vmatprep.subr.bf16.mxu0 0
      %2669 = vmatpush1.bf16.msra.mxu0 0
      %2670 = vmatprep.subr.bf16.mxu0 0
      %2671 = vmatpush1.bf16.msra.mxu0 0
      %2672 = vmatprep.subr.bf16.mxu0 0
      %2673 = vmatpush1.bf16.msra.mxu0 0
      %2674 = vmatprep.subr.bf16.mxu0 0
      %2675 = vmatpush1.bf16.msra.mxu0 0
      %2676 = vmatprep.subr.bf16.mxu0 0
      %2677 = vmatpush1.bf16.msra.mxu0 0
      %2678 = vmatprep.subr.bf16.mxu0 0
      %2679 = vmatpush1.bf16.msra.mxu0 0
      %2680 = vmatprep.subr.bf16.mxu0 0
      %2681 = vmatpush1.bf16.msra.mxu0 0
      %2682 = vmatprep.subr.bf16.mxu0 0
      %2683 = vmatpush1.bf16.msra.mxu0 0
      %2684 = vmatprep.subr.bf16.mxu0 0
      %2685 = vmatpush1.bf16.msra.mxu0 0
      %2686 = vmatprep.subr.bf16.mxu0 0
      %2687 = vmatpush1.bf16.msra.mxu0 0
      %2688 = vmatprep.subr.bf16.mxu0 0
      %2689 = vmatpush1.bf16.msra.mxu0 0
      %2690 = vmatprep.subr.bf16.mxu0 0
      %2691 = vmatpush1.bf16.msra.mxu0 0
      %2692 = vmatprep.subr.bf16.mxu0 0
      %2693 = vmatpush1.bf16.msra.mxu0 0
      %2694 = vmatprep.subr.bf16.mxu0 0
      %2695 = vmatpush1.bf16.msra.mxu0 0
      %2696 = vmatprep.subr.bf16.mxu0 0
      %2697 = vmatpush1.bf16.msra.mxu0 0
      %2698 = vmatprep.mubr.bf16.mxu0 0
      %2699 = vmatmul.mubr.bf16.gmra.mrb[0].mxu0 %v2605
      %v2700 = vpop.f32.mrb[0].mxu0
      %v2701 = vadd.f32 0.0, %v2700
      %v2702 = vpop.f32.mrb[0].mxu0
      %v2703 = vadd.f32 0.0, %v2702
      %v2704 = vpop.f32.mrb[0].mxu0
      %v2705 = vpop.f32.mrb[0].mxu0
      %2706 = vdwg.mxu0
      %2707 = vmatprep.subr.bf16.mxu0 %v2623
      %2708 = vmatpush1.bf16.msra.mxu0 %v2620
      %2709 = vmatprep.subr.bf16.mxu0 0
      %2710 = vmatpush1.bf16.msra.mxu0 0
      %2711 = vmatprep.subr.bf16.mxu0 0
      %2712 = vmatpush1.bf16.msra.mxu0 0
      %2713 = vmatprep.subr.bf16.mxu0 0
      %2714 = vmatpush1.bf16.msra.mxu0 0
      %2715 = vmatprep.subr.bf16.mxu0 0
      %2716 = vmatpush1.bf16.msra.mxu0 0
      %2717 = vmatprep.subr.bf16.mxu0 0
      %2718 = vmatpush1.bf16.msra.mxu0 0
      %2719 = vmatprep.subr.bf16.mxu0 0
      %2720 = vmatpush1.bf16.msra.mxu0 0
      %2721 = vmatprep.subr.bf16.mxu0 0
      %2722 = vmatpush1.bf16.msra.mxu0 0
      %2723 = vmatprep.subr.bf16.mxu0 0
      %2724 = vmatpush1.bf16.msra.mxu0 0
      %2725 = vmatprep.subr.bf16.mxu0 0
      %2726 = vmatpush1.bf16.msra.mxu0 0
      %2727 = vmatprep.subr.bf16.mxu0 0
      %2728 = vmatpush1.bf16.msra.mxu0 0
      %2729 = vmatprep.subr.bf16.mxu0 0
      %2730 = vmatpush1.bf16.msra.mxu0 0
      %2731 = vmatprep.subr.bf16.mxu0 0
      %2732 = vmatpush1.bf16.msra.mxu0 0
      %2733 = vmatprep.subr.bf16.mxu0 0
      %2734 = vmatpush1.bf16.msra.mxu0 0
      %2735 = vmatprep.subr.bf16.mxu0 0
      %2736 = vmatpush1.bf16.msra.mxu0 0
      %2737 = vmatprep.subr.bf16.mxu0 0
      %2738 = vmatpush1.bf16.msra.mxu0 0
      %2739 = vmatprep.mubr.bf16.mxu0 0
      %2740 = vmatmul.mubr.bf16.gmra.mrb[0].mxu0 %v2605
      %v2741 = vpop.f32.mrb[0].mxu0
      %v2742 = vadd.f32 0.0, %v2741
      %v2743 = vpop.f32.mrb[0].mxu0
      %v2744 = vadd.f32 0.0, %v2743
      %v2745 = vpop.f32.mrb[0].mxu0
      %v2746 = vpop.f32.mrb[0].mxu0
      %2747 = vdwg.mxu0
      %v2748 = vadd.f32 %v2525, %v2660
      %v2749 = vadd.f32 %v2526, %v2662
      %v2750 = vadd.f32 %v2527, %v2701
      %v2751 = vadd.f32 %v2528, %v2703
      %v2752 = vadd.f32 %v2529, %v2742
      %v2753 = vadd.f32 %v2530, %v2744
      %v2754 = vld [vmem:[#allocation2 + $0x2] sm:$0x7f]
      %s2755 = scalar_lea.vmem %s3, 11
      %v2756 = vld [vmem:[%s2755] sm:$0x1]
      %v2758 = vcombine.high %v2754, %v2754
      %v2760 = vunpack.c.l.s4 1966171168
      %v2761 = vunpack.c.0.s8 %v2760
      %v2762 = vlaneseq
      %v2763 = vshrl.u32 %v2762, 7
      %v2764 = vsub.s32 %v2761, %v2763
      %v2765 = vrot.slane %v2754, %v2764
      %v2767 = vunpack.c.l.s4 1966171168
      %v2768 = vunpack.c.0.s8 %v2767
      %v2769 = vlaneseq
      %v2770 = vshrl.u32 %v2769, 7
      %v2771 = vsub.s32 %v2768, %v2770
      %v2772 = vrot.slane %v2758, %v2771
      %v2773 = vcombine.high %v2765, %v2765
      %v2774 = vcombine.high %v2772, %v2772
      %v2776 = vunpack.c.l.s4 1966171168
      %v2777 = vunpack.c.0.s8 %v2776
      %v2778 = vlaneseq
      %v2779 = vshrl.u32 %v2778, 7
      %v2780 = vsub.s32 %v2777, %v2779
      %v2781 = vrot.slane %v2765, %v2780
      %v2783 = vunpack.c.l.s4 1966171168
      %v2784 = vunpack.c.0.s8 %v2783
      %v2785 = vlaneseq
      %v2786 = vshrl.u32 %v2785, 7
      %v2787 = vsub.s32 %v2784, %v2786
      %v2788 = vrot.slane %v2772, %v2787
      %v2790 = vunpack.c.l.s4 1966171168
      %v2791 = vunpack.c.0.s8 %v2790
      %v2792 = vlaneseq
      %v2793 = vshrl.u32 %v2792, 7
      %v2794 = vsub.s32 %v2791, %v2793
      %v2795 = vrot.slane %v2773, %v2794
      %v2797 = vunpack.c.l.s4 1966171168
      %v2798 = vunpack.c.0.s8 %v2797
      %v2799 = vlaneseq
      %v2800 = vshrl.u32 %v2799, 7
      %v2801 = vsub.s32 %v2798, %v2800
      %v2802 = vrot.slane %v2774, %v2801
      %v2803 = vcombine.high %v2781, %v2781
      %v2804 = vcombine.high %v2788, %v2788
      %v2805 = vcombine.high %v2795, %v2795
      %2806 = vrot.lane.b32.xlu0 %v2781, 58
      %v2807 = vpop.permute.xlu0 %2806
      %2808 = vrot.lane.b32.xlu0 %v2795, 58
      %v2809 = vpop.permute.xlu0 %2808
      %2810 = vrot.lane.b32.xlu0 %v2803, 58
      %v2811 = vpop.permute.xlu0 %2810
      %2812 = vrot.lane.b32.xlu0 %v2805, 58
      %v2813 = vpop.permute.xlu0 %2812
      %2814 = vrot.lane.b32.xlu0 %v2788, 58
      %v2815 = vpop.permute.xlu0 %2814
      %2816 = vrot.lane.b32.xlu0 %v2802, 58
      %v2817 = vpop.permute.xlu0 %2816
      %2818 = vrot.lane.b32.xlu0 %v2804, 58
      %v2819 = vpop.permute.xlu0 %2818
      %vm2820 = vcmask 474112
      %v2821 = vsel %vm2820, %v2807, %v2809
      %v2822 = vsel %vm2820, %v2809, %v2811
      %v2823 = vsel %vm2820, %v2811, %v2813
      %v2824 = vsel %vm2820, %v2813, %v2815
      %v2825 = vsel %vm2820, %v2815, %v2817
      %v2826 = vsel %vm2820, %v2817, %v2819
      %v2828 = vsel %vm407, %v2756, 0
      %v2831 = vand.u32 %v2821, %v413
      %v2834 = vand.u32 %v2822, %v413
      %v2837 = vand.u32 %v2823, %v413
      %v2840 = vand.u32 %v2824, %v413
      %v2843 = vand.u32 %v2825, %v413
      %v2846 = vand.u32 %v2826, %v413
      %2848 = vmatprep.subr.bf16.mxu0 %v2834
      %2849 = vmatpush1.bf16.msra.mxu0 %v2831
      %2850 = vmatprep.subr.bf16.mxu0 0
      %2851 = vmatpush1.bf16.msra.mxu0 0
      %2852 = vmatprep.subr.bf16.mxu0 0
      %2853 = vmatpush1.bf16.msra.mxu0 0
      %2854 = vmatprep.subr.bf16.mxu0 0
      %2855 = vmatpush1.bf16.msra.mxu0 0
      %2856 = vmatprep.subr.bf16.mxu0 0
      %2857 = vmatpush1.bf16.msra.mxu0 0
      %2858 = vmatprep.subr.bf16.mxu0 0
      %2859 = vmatpush1.bf16.msra.mxu0 0
      %2860 = vmatprep.subr.bf16.mxu0 0
      %2861 = vmatpush1.bf16.msra.mxu0 0
      %2862 = vmatprep.subr.bf16.mxu0 0
      %2863 = vmatpush1.bf16.msra.mxu0 0
      %2864 = vmatprep.subr.bf16.mxu0 0
      %2865 = vmatpush1.bf16.msra.mxu0 0
      %2866 = vmatprep.subr.bf16.mxu0 0
      %2867 = vmatpush1.bf16.msra.mxu0 0
      %2868 = vmatprep.subr.bf16.mxu0 0
      %2869 = vmatpush1.bf16.msra.mxu0 0
      %2870 = vmatprep.subr.bf16.mxu0 0
      %2871 = vmatpush1.bf16.msra.mxu0 0
      %2872 = vmatprep.subr.bf16.mxu0 0
      %2873 = vmatpush1.bf16.msra.mxu0 0
      %2874 = vmatprep.subr.bf16.mxu0 0
      %2875 = vmatpush1.bf16.msra.mxu0 0
      %2876 = vmatprep.subr.bf16.mxu0 0
      %2877 = vmatpush1.bf16.msra.mxu0 0
      %2878 = vmatprep.subr.bf16.mxu0 0
      %2879 = vmatpush1.bf16.msra.mxu0 0
      %2880 = vmatprep.mubr.bf16.mxu0 0
      %2881 = vmatmul.mubr.bf16.gmra.mrb[0].mxu0 %v2828
      %v2882 = vpop.f32.mrb[0].mxu0
      %v2883 = vadd.f32 0.0, %v2882
      %v2884 = vpop.f32.mrb[0].mxu0
      %v2885 = vadd.f32 0.0, %v2884
      %v2886 = vpop.f32.mrb[0].mxu0
      %v2887 = vpop.f32.mrb[0].mxu0
      %2888 = vdwg.mxu0
      %2889 = vmatprep.subr.bf16.mxu0 %v2840
      %2890 = vmatpush1.bf16.msra.mxu0 %v2837
      %2891 = vmatprep.subr.bf16.mxu0 0
      %2892 = vmatpush1.bf16.msra.mxu0 0
      %2893 = vmatprep.subr.bf16.mxu0 0
      %2894 = vmatpush1.bf16.msra.mxu0 0
      %2895 = vmatprep.subr.bf16.mxu0 0
      %2896 = vmatpush1.bf16.msra.mxu0 0
      %2897 = vmatprep.subr.bf16.mxu0 0
      %2898 = vmatpush1.bf16.msra.mxu0 0
      %2899 = vmatprep.subr.bf16.mxu0 0
      %2900 = vmatpush1.bf16.msra.mxu0 0
      %2901 = vmatprep.subr.bf16.mxu0 0
      %2902 = vmatpush1.bf16.msra.mxu0 0
      %2903 = vmatprep.subr.bf16.mxu0 0
      %2904 = vmatpush1.bf16.msra.mxu0 0
      %2905 = vmatprep.subr.bf16.mxu0 0
      %2906 = vmatpush1.bf16.msra.mxu0 0
      %2907 = vmatprep.subr.bf16.mxu0 0
      %2908 = vmatpush1.bf16.msra.mxu0 0
      %2909 = vmatprep.subr.bf16.mxu0 0
      %2910 = vmatpush1.bf16.msra.mxu0 0
      %2911 = vmatprep.subr.bf16.mxu0 0
      %2912 = vmatpush1.bf16.msra.mxu0 0
      %2913 = vmatprep.subr.bf16.mxu0 0
      %2914 = vmatpush1.bf16.msra.mxu0 0
      %2915 = vmatprep.subr.bf16.mxu0 0
      %2916 = vmatpush1.bf16.msra.mxu0 0
      %2917 = vmatprep.subr.bf16.mxu0 0
      %2918 = vmatpush1.bf16.msra.mxu0 0
      %2919 = vmatprep.subr.bf16.mxu0 0
      %2920 = vmatpush1.bf16.msra.mxu0 0
      %2921 = vmatprep.mubr.bf16.mxu0 0
      %2922 = vmatmul.mubr.bf16.gmra.mrb[0].mxu0 %v2828
      %v2923 = vpop.f32.mrb[0].mxu0
      %v2924 = vadd.f32 0.0, %v2923
      %v2925 = vpop.f32.mrb[0].mxu0
      %v2926 = vadd.f32 0.0, %v2925
      %v2927 = vpop.f32.mrb[0].mxu0
      %v2928 = vpop.f32.mrb[0].mxu0
      %2929 = vdwg.mxu0
      %2930 = vmatprep.subr.bf16.mxu0 %v2846
      %2931 = vmatpush1.bf16.msra.mxu0 %v2843
      %2932 = vmatprep.subr.bf16.mxu0 0
      %2933 = vmatpush1.bf16.msra.mxu0 0
      %2934 = vmatprep.subr.bf16.mxu0 0
      %2935 = vmatpush1.bf16.msra.mxu0 0
      %2936 = vmatprep.subr.bf16.mxu0 0
      %2937 = vmatpush1.bf16.msra.mxu0 0
      %2938 = vmatprep.subr.bf16.mxu0 0
      %2939 = vmatpush1.bf16.msra.mxu0 0
      %2940 = vmatprep.subr.bf16.mxu0 0
      %2941 = vmatpush1.bf16.msra.mxu0 0
      %2942 = vmatprep.subr.bf16.mxu0 0
      %2943 = vmatpush1.bf16.msra.mxu0 0
      %2944 = vmatprep.subr.bf16.mxu0 0
      %2945 = vmatpush1.bf16.msra.mxu0 0
      %2946 = vmatprep.subr.bf16.mxu0 0
      %2947 = vmatpush1.bf16.msra.mxu0 0
      %2948 = vmatprep.subr.bf16.mxu0 0
      %2949 = vmatpush1.bf16.msra.mxu0 0
      %2950 = vmatprep.subr.bf16.mxu0 0
      %2951 = vmatpush1.bf16.msra.mxu0 0
      %2952 = vmatprep.subr.bf16.mxu0 0
      %2953 = vmatpush1.bf16.msra.mxu0 0
      %2954 = vmatprep.subr.bf16.mxu0 0
      %2955 = vmatpush1.bf16.msra.mxu0 0
      %2956 = vmatprep.subr.bf16.mxu0 0
      %2957 = vmatpush1.bf16.msra.mxu0 0
      %2958 = vmatprep.subr.bf16.mxu0 0
      %2959 = vmatpush1.bf16.msra.mxu0 0
      %2960 = vmatprep.subr.bf16.mxu0 0
      %2961 = vmatpush1.bf16.msra.mxu0 0
      %2962 = vmatprep.mubr.bf16.mxu0 0
      %2963 = vmatmul.mubr.bf16.gmra.mrb[0].mxu0 %v2828
      %v2964 = vpop.f32.mrb[0].mxu0
      %v2965 = vadd.f32 0.0, %v2964
      %v2966 = vpop.f32.mrb[0].mxu0
      %v2967 = vadd.f32 0.0, %v2966
      %v2968 = vpop.f32.mrb[0].mxu0
      %v2969 = vpop.f32.mrb[0].mxu0
      %2970 = vdwg.mxu0
      %v2971 = vadd.f32 %v2748, %v2883
      %v2972 = vadd.f32 %v2749, %v2885
      %v2973 = vadd.f32 %v2750, %v2924
      %v2974 = vadd.f32 %v2751, %v2926
      %v2975 = vadd.f32 %v2752, %v2965
      %v2976 = vadd.f32 %v2753, %v2967
      %v2977 = vld [vmem:[#allocation2 + $0x2] sm:$0x7f]
      %s2978 = scalar_lea.vmem %s3, 12
      %v2979 = vld [vmem:[%s2978] sm:$0x1]
      %v2981 = vcombine.high %v2977, %v2977
      %v2983 = vunpack.c.l.s4 1966171168
      %v2984 = vunpack.c.0.s8 %v2983
      %v2985 = vlaneseq
      %v2986 = vshrl.u32 %v2985, 7
      %v2987 = vsub.s32 %v2984, %v2986
      %v2988 = vrot.slane %v2977, %v2987
      %v2990 = vunpack.c.l.s4 1966171168
      %v2991 = vunpack.c.0.s8 %v2990
      %v2992 = vlaneseq
      %v2993 = vshrl.u32 %v2992, 7
      %v2994 = vsub.s32 %v2991, %v2993
      %v2995 = vrot.slane %v2981, %v2994
      %v2996 = vcombine.high %v2988, %v2988
      %v2997 = vcombine.high %v2995, %v2995
      %v2999 = vunpack.c.l.s4 1966171168
      %v3000 = vunpack.c.0.s8 %v2999
      %v3001 = vlaneseq
      %v3002 = vshrl.u32 %v3001, 7
      %v3003 = vsub.s32 %v3000, %v3002
      %v3004 = vrot.slane %v2988, %v3003
      %v3006 = vunpack.c.l.s4 1966171168
      %v3007 = vunpack.c.0.s8 %v3006
      %v3008 = vlaneseq
      %v3009 = vshrl.u32 %v3008, 7
      %v3010 = vsub.s32 %v3007, %v3009
      %v3011 = vrot.slane %v2995, %v3010
      %v3013 = vunpack.c.l.s4 1966171168
      %v3014 = vunpack.c.0.s8 %v3013
      %v3015 = vlaneseq
      %v3016 = vshrl.u32 %v3015, 7
      %v3017 = vsub.s32 %v3014, %v3016
      %v3018 = vrot.slane %v2996, %v3017
      %v3020 = vunpack.c.l.s4 1966171168
      %v3021 = vunpack.c.0.s8 %v3020
      %v3022 = vlaneseq
      %v3023 = vshrl.u32 %v3022, 7
      %v3024 = vsub.s32 %v3021, %v3023
      %v3025 = vrot.slane %v2997, %v3024
      %v3026 = vcombine.high %v3004, %v3004
      %v3027 = vcombine.high %v3011, %v3011
      %v3028 = vcombine.high %v3018, %v3018
      %3029 = vrot.lane.b32.xlu0 %v3004, 42
      %v3030 = vpop.permute.xlu0 %3029
      %3031 = vrot.lane.b32.xlu0 %v3018, 42
      %v3032 = vpop.permute.xlu0 %3031
      %3033 = vrot.lane.b32.xlu0 %v3026, 42
      %v3034 = vpop.permute.xlu0 %3033
      %3035 = vrot.lane.b32.xlu0 %v3028, 42
      %v3036 = vpop.permute.xlu0 %3035
      %3037 = vrot.lane.b32.xlu0 %v3011, 42
      %v3038 = vpop.permute.xlu0 %3037
      %3039 = vrot.lane.b32.xlu0 %v3025, 42
      %v3040 = vpop.permute.xlu0 %3039
      %3041 = vrot.lane.b32.xlu0 %v3027, 42
      %v3042 = vpop.permute.xlu0 %3041
      %vm3043 = vcmask 343040
      %v3044 = vsel %vm3043, %v3030, %v3032
      %v3045 = vsel %vm3043, %v3032, %v3034
      %v3046 = vsel %vm3043, %v3034, %v3036
      %v3047 = vsel %vm3043, %v3036, %v3038
      %v3048 = vsel %vm3043, %v3038, %v3040
      %v3049 = vsel %vm3043, %v3040, %v3042
      %v3051 = vsel %vm407, %v2979, 0
      %v3054 = vand.u32 %v3044, %v413
      %v3057 = vand.u32 %v3045, %v413
      %v3060 = vand.u32 %v3046, %v413
      %v3063 = vand.u32 %v3047, %v413
      %v3066 = vand.u32 %v3048, %v413
      %v3069 = vand.u32 %v3049, %v413
      %3071 = vmatprep.subr.bf16.mxu0 %v3057
      %3072 = vmatpush1.bf16.msra.mxu0 %v3054
      %3073 = vmatprep.subr.bf16.mxu0 0
      %3074 = vmatpush1.bf16.msra.mxu0 0
      %3075 = vmatprep.subr.bf16.mxu0 0
      %3076 = vmatpush1.bf16.msra.mxu0 0
      %3077 = vmatprep.subr.bf16.mxu0 0
      %3078 = vmatpush1.bf16.msra.mxu0 0
      %3079 = vmatprep.subr.bf16.mxu0 0
      %3080 = vmatpush1.bf16.msra.mxu0 0
      %3081 = vmatprep.subr.bf16.mxu0 0
      %3082 = vmatpush1.bf16.msra.mxu0 0
      %3083 = vmatprep.subr.bf16.mxu0 0
      %3084 = vmatpush1.bf16.msra.mxu0 0
      %3085 = vmatprep.subr.bf16.mxu0 0
      %3086 = vmatpush1.bf16.msra.mxu0 0
      %3087 = vmatprep.subr.bf16.mxu0 0
      %3088 = vmatpush1.bf16.msra.mxu0 0
      %3089 = vmatprep.subr.bf16.mxu0 0
      %3090 = vmatpush1.bf16.msra.mxu0 0
      %3091 = vmatprep.subr.bf16.mxu0 0
      %3092 = vmatpush1.bf16.msra.mxu0 0
      %3093 = vmatprep.subr.bf16.mxu0 0
      %3094 = vmatpush1.bf16.msra.mxu0 0
      %3095 = vmatprep.subr.bf16.mxu0 0
      %3096 = vmatpush1.bf16.msra.mxu0 0
      %3097 = vmatprep.subr.bf16.mxu0 0
      %3098 = vmatpush1.bf16.msra.mxu0 0
      %3099 = vmatprep.subr.bf16.mxu0 0
      %3100 = vmatpush1.bf16.msra.mxu0 0
      %3101 = vmatprep.subr.bf16.mxu0 0
      %3102 = vmatpush1.bf16.msra.mxu0 0
      %3103 = vmatprep.mubr.bf16.mxu0 0
      %3104 = vmatmul.mubr.bf16.gmra.mrb[0].mxu0 %v3051
      %v3105 = vpop.f32.mrb[0].mxu0
      %v3106 = vadd.f32 0.0, %v3105
      %v3107 = vpop.f32.mrb[0].mxu0
      %v3108 = vadd.f32 0.0, %v3107
      %v3109 = vpop.f32.mrb[0].mxu0
      %v3110 = vpop.f32.mrb[0].mxu0
      %3111 = vdwg.mxu0
      %3112 = vmatprep.subr.bf16.mxu0 %v3063
      %3113 = vmatpush1.bf16.msra.mxu0 %v3060
      %3114 = vmatprep.subr.bf16.mxu0 0
      %3115 = vmatpush1.bf16.msra.mxu0 0
      %3116 = vmatprep.subr.bf16.mxu0 0
      %3117 = vmatpush1.bf16.msra.mxu0 0
      %3118 = vmatprep.subr.bf16.mxu0 0
      %3119 = vmatpush1.bf16.msra.mxu0 0
      %3120 = vmatprep.subr.bf16.mxu0 0
      %3121 = vmatpush1.bf16.msra.mxu0 0
      %3122 = vmatprep.subr.bf16.mxu0 0
      %3123 = vmatpush1.bf16.msra.mxu0 0
      %3124 = vmatprep.subr.bf16.mxu0 0
      %3125 = vmatpush1.bf16.msra.mxu0 0
      %3126 = vmatprep.subr.bf16.mxu0 0
      %3127 = vmatpush1.bf16.msra.mxu0 0
      %3128 = vmatprep.subr.bf16.mxu0 0
      %3129 = vmatpush1.bf16.msra.mxu0 0
      %3130 = vmatprep.subr.bf16.mxu0 0
      %3131 = vmatpush1.bf16.msra.mxu0 0
      %3132 = vmatprep.subr.bf16.mxu0 0
      %3133 = vmatpush1.bf16.msra.mxu0 0
      %3134 = vmatprep.subr.bf16.mxu0 0
      %3135 = vmatpush1.bf16.msra.mxu0 0
      %3136 = vmatprep.subr.bf16.mxu0 0
      %3137 = vmatpush1.bf16.msra.mxu0 0
      %3138 = vmatprep.subr.bf16.mxu0 0
      %3139 = vmatpush1.bf16.msra.mxu0 0
      %3140 = vmatprep.subr.bf16.mxu0 0
      %3141 = vmatpush1.bf16.msra.mxu0 0
      %3142 = vmatprep.subr.bf16.mxu0 0
      %3143 = vmatpush1.bf16.msra.mxu0 0
      %3144 = vmatprep.mubr.bf16.mxu0 0
      %3145 = vmatmul.mubr.bf16.gmra.mrb[0].mxu0 %v3051
      %v3146 = vpop.f32.mrb[0].mxu0
      %v3147 = vadd.f32 0.0, %v3146
      %v3148 = vpop.f32.mrb[0].mxu0
      %v3149 = vadd.f32 0.0, %v3148
      %v3150 = vpop.f32.mrb[0].mxu0
      %v3151 = vpop.f32.mrb[0].mxu0
      %3152 = vdwg.mxu0
      %3153 = vmatprep.subr.bf16.mxu0 %v3069
      %3154 = vmatpush1.bf16.msra.mxu0 %v3066
      %3155 = vmatprep.subr.bf16.mxu0 0
      %3156 = vmatpush1.bf16.msra.mxu0 0
      %3157 = vmatprep.subr.bf16.mxu0 0
      %3158 = vmatpush1.bf16.msra.mxu0 0
      %3159 = vmatprep.subr.bf16.mxu0 0
      %3160 = vmatpush1.bf16.msra.mxu0 0
      %3161 = vmatprep.subr.bf16.mxu0 0
      %3162 = vmatpush1.bf16.msra.mxu0 0
      %3163 = vmatprep.subr.bf16.mxu0 0
      %3164 = vmatpush1.bf16.msra.mxu0 0
      %3165 = vmatprep.subr.bf16.mxu0 0
      %3166 = vmatpush1.bf16.msra.mxu0 0
      %3167 = vmatprep.subr.bf16.mxu0 0
      %3168 = vmatpush1.bf16.msra.mxu0 0
      %3169 = vmatprep.subr.bf16.mxu0 0
      %3170 = vmatpush1.bf16.msra.mxu0 0
      %3171 = vmatprep.subr.bf16.mxu0 0
      %3172 = vmatpush1.bf16.msra.mxu0 0
      %3173 = vmatprep.subr.bf16.mxu0 0
      %3174 = vmatpush1.bf16.msra.mxu0 0
      %3175 = vmatprep.subr.bf16.mxu0 0
      %3176 = vmatpush1.bf16.msra.mxu0 0
      %3177 = vmatprep.subr.bf16.mxu0 0
      %3178 = vmatpush1.bf16.msra.mxu0 0
      %3179 = vmatprep.subr.bf16.mxu0 0
      %3180 = vmatpush1.bf16.msra.mxu0 0
      %3181 = vmatprep.subr.bf16.mxu0 0
      %3182 = vmatpush1.bf16.msra.mxu0 0
      %3183 = vmatprep.subr.bf16.mxu0 0
      %3184 = vmatpush1.bf16.msra.mxu0 0
      %3185 = vmatprep.mubr.bf16.mxu0 0
      %3186 = vmatmul.mubr.bf16.gmra.mrb[0].mxu0 %v3051
      %v3187 = vpop.f32.mrb[0].mxu0
      %v3188 = vadd.f32 0.0, %v3187
      %v3189 = vpop.f32.mrb[0].mxu0
      %v3190 = vadd.f32 0.0, %v3189
      %v3191 = vpop.f32.mrb[0].mxu0
      %v3192 = vpop.f32.mrb[0].mxu0
      %3193 = vdwg.mxu0
      %v3194 = vadd.f32 %v2971, %v3106
      %v3195 = vadd.f32 %v2972, %v3108
      %v3196 = vadd.f32 %v2973, %v3147
      %v3197 = vadd.f32 %v2974, %v3149
      %v3198 = vadd.f32 %v2975, %v3188
      %v3199 = vadd.f32 %v2976, %v3190
      %v3200 = vld [vmem:[#allocation2 + $0x2] sm:$0x7f]
      %s3201 = scalar_lea.vmem %s3, 13
      %v3202 = vld [vmem:[%s3201] sm:$0x1]
      %v3204 = vcombine.high %v3200, %v3200
      %v3206 = vunpack.c.l.s4 1966171168
      %v3207 = vunpack.c.0.s8 %v3206
      %v3208 = vlaneseq
      %v3209 = vshrl.u32 %v3208, 7
      %v3210 = vsub.s32 %v3207, %v3209
      %v3211 = vrot.slane %v3200, %v3210
      %v3213 = vunpack.c.l.s4 1966171168
      %v3214 = vunpack.c.0.s8 %v3213
      %v3215 = vlaneseq
      %v3216 = vshrl.u32 %v3215, 7
      %v3217 = vsub.s32 %v3214, %v3216
      %v3218 = vrot.slane %v3204, %v3217
      %v3219 = vcombine.high %v3211, %v3211
      %v3220 = vcombine.high %v3218, %v3218
      %v3222 = vunpack.c.l.s4 1966171168
      %v3223 = vunpack.c.0.s8 %v3222
      %v3224 = vlaneseq
      %v3225 = vshrl.u32 %v3224, 7
      %v3226 = vsub.s32 %v3223, %v3225
      %v3227 = vrot.slane %v3211, %v3226
      %v3229 = vunpack.c.l.s4 1966171168
      %v3230 = vunpack.c.0.s8 %v3229
      %v3231 = vlaneseq
      %v3232 = vshrl.u32 %v3231, 7
      %v3233 = vsub.s32 %v3230, %v3232
      %v3234 = vrot.slane %v3218, %v3233
      %v3236 = vunpack.c.l.s4 1966171168
      %v3237 = vunpack.c.0.s8 %v3236
      %v3238 = vlaneseq
      %v3239 = vshrl.u32 %v3238, 7
      %v3240 = vsub.s32 %v3237, %v3239
      %v3241 = vrot.slane %v3219, %v3240
      %v3243 = vunpack.c.l.s4 1966171168
      %v3244 = vunpack.c.0.s8 %v3243
      %v3245 = vlaneseq
      %v3246 = vshrl.u32 %v3245, 7
      %v3247 = vsub.s32 %v3244, %v3246
      %v3248 = vrot.slane %v3220, %v3247
      %v3249 = vcombine.high %v3227, %v3227
      %v3250 = vcombine.high %v3234, %v3234
      %v3251 = vcombine.high %v3241, %v3241
      %3252 = vrot.lane.b32.xlu0 %v3227, 41
      %v3253 = vpop.permute.xlu0 %3252
      %3254 = vrot.lane.b32.xlu0 %v3241, 41
      %v3255 = vpop.permute.xlu0 %3254
      %3256 = vrot.lane.b32.xlu0 %v3249, 41
      %v3257 = vpop.permute.xlu0 %3256
      %3258 = vrot.lane.b32.xlu0 %v3251, 41
      %v3259 = vpop.permute.xlu0 %3258
      %3260 = vrot.lane.b32.xlu0 %v3234, 41
      %v3261 = vpop.permute.xlu0 %3260
      %3262 = vrot.lane.b32.xlu0 %v3248, 41
      %v3263 = vpop.permute.xlu0 %3262
      %3264 = vrot.lane.b32.xlu0 %v3250, 41
      %v3265 = vpop.permute.xlu0 %3264
      %vm3266 = vcmask 334848
      %v3267 = vsel %vm3266, %v3253, %v3255
      %v3268 = vsel %vm3266, %v3255, %v3257
      %v3269 = vsel %vm3266, %v3257, %v3259
      %v3270 = vsel %vm3266, %v3259, %v3261
      %v3271 = vsel %vm3266, %v3261, %v3263
      %v3272 = vsel %vm3266, %v3263, %v3265
      %v3274 = vsel %vm407, %v3202, 0
      %v3277 = vand.u32 %v3267, %v413
      %v3280 = vand.u32 %v3268, %v413
      %v3283 = vand.u32 %v3269, %v413
      %v3286 = vand.u32 %v3270, %v413
      %v3289 = vand.u32 %v3271, %v413
      %v3292 = vand.u32 %v3272, %v413
      %3294 = vmatprep.subr.bf16.mxu0 %v3280
      %3295 = vmatpush1.bf16.msra.mxu0 %v3277
      %3296 = vmatprep.subr.bf16.mxu0 0
      %3297 = vmatpush1.bf16.msra.mxu0 0
      %3298 = vmatprep.subr.bf16.mxu0 0
      %3299 = vmatpush1.bf16.msra.mxu0 0
      %3300 = vmatprep.subr.bf16.mxu0 0
      %3301 = vmatpush1.bf16.msra.mxu0 0
      %3302 = vmatprep.subr.bf16.mxu0 0
      %3303 = vmatpush1.bf16.msra.mxu0 0
      %3304 = vmatprep.subr.bf16.mxu0 0
      %3305 = vmatpush1.bf16.msra.mxu0 0
      %3306 = vmatprep.subr.bf16.mxu0 0
      %3307 = vmatpush1.bf16.msra.mxu0 0
      %3308 = vmatprep.subr.bf16.mxu0 0
      %3309 = vmatpush1.bf16.msra.mxu0 0
      %3310 = vmatprep.subr.bf16.mxu0 0
      %3311 = vmatpush1.bf16.msra.mxu0 0
      %3312 = vmatprep.subr.bf16.mxu0 0
      %3313 = vmatpush1.bf16.msra.mxu0 0
      %3314 = vmatprep.subr.bf16.mxu0 0
      %3315 = vmatpush1.bf16.msra.mxu0 0
      %3316 = vmatprep.subr.bf16.mxu0 0
      %3317 = vmatpush1.bf16.msra.mxu0 0
      %3318 = vmatprep.subr.bf16.mxu0 0
      %3319 = vmatpush1.bf16.msra.mxu0 0
      %3320 = vmatprep.subr.bf16.mxu0 0
      %3321 = vmatpush1.bf16.msra.mxu0 0
      %3322 = vmatprep.subr.bf16.mxu0 0
      %3323 = vmatpush1.bf16.msra.mxu0 0
      %3324 = vmatprep.subr.bf16.mxu0 0
      %3325 = vmatpush1.bf16.msra.mxu0 0
      %3326 = vmatprep.mubr.bf16.mxu0 0
      %3327 = vmatmul.mubr.bf16.gmra.mrb[0].mxu0 %v3274
      %v3328 = vpop.f32.mrb[0].mxu0
      %v3329 = vadd.f32 0.0, %v3328
      %v3330 = vpop.f32.mrb[0].mxu0
      %v3331 = vadd.f32 0.0, %v3330
      %v3332 = vpop.f32.mrb[0].mxu0
      %v3333 = vpop.f32.mrb[0].mxu0
      %3334 = vdwg.mxu0
      %3335 = vmatprep.subr.bf16.mxu0 %v3286
      %3336 = vmatpush1.bf16.msra.mxu0 %v3283
      %3337 = vmatprep.subr.bf16.mxu0 0
      %3338 = vmatpush1.bf16.msra.mxu0 0
      %3339 = vmatprep.subr.bf16.mxu0 0
      %3340 = vmatpush1.bf16.msra.mxu0 0
      %3341 = vmatprep.subr.bf16.mxu0 0
      %3342 = vmatpush1.bf16.msra.mxu0 0
      %3343 = vmatprep.subr.bf16.mxu0 0
      %3344 = vmatpush1.bf16.msra.mxu0 0
      %3345 = vmatprep.subr.bf16.mxu0 0
      %3346 = vmatpush1.bf16.msra.mxu0 0
      %3347 = vmatprep.subr.bf16.mxu0 0
      %3348 = vmatpush1.bf16.msra.mxu0 0
      %3349 = vmatprep.subr.bf16.mxu0 0
      %3350 = vmatpush1.bf16.msra.mxu0 0
      %3351 = vmatprep.subr.bf16.mxu0 0
      %3352 = vmatpush1.bf16.msra.mxu0 0
      %3353 = vmatprep.subr.bf16.mxu0 0
      %3354 = vmatpush1.bf16.msra.mxu0 0
      %3355 = vmatprep.subr.bf16.mxu0 0
      %3356 = vmatpush1.bf16.msra.mxu0 0
      %3357 = vmatprep.subr.bf16.mxu0 0
      %3358 = vmatpush1.bf16.msra.mxu0 0
      %3359 = vmatprep.subr.bf16.mxu0 0
      %3360 = vmatpush1.bf16.msra.mxu0 0
      %3361 = vmatprep.subr.bf16.mxu0 0
      %3362 = vmatpush1.bf16.msra.mxu0 0
      %3363 = vmatprep.subr.bf16.mxu0 0
      %3364 = vmatpush1.bf16.msra.mxu0 0
      %3365 = vmatprep.subr.bf16.mxu0 0
      %3366 = vmatpush1.bf16.msra.mxu0 0
      %3367 = vmatprep.mubr.bf16.mxu0 0
      %3368 = vmatmul.mubr.bf16.gmra.mrb[0].mxu0 %v3274
      %v3369 = vpop.f32.mrb[0].mxu0
      %v3370 = vadd.f32 0.0, %v3369
      %v3371 = vpop.f32.mrb[0].mxu0
      %v3372 = vadd.f32 0.0, %v3371
      %v3373 = vpop.f32.mrb[0].mxu0
      %v3374 = vpop.f32.mrb[0].mxu0
      %3375 = vdwg.mxu0
      %3376 = vmatprep.subr.bf16.mxu0 %v3292
      %3377 = vmatpush1.bf16.msra.mxu0 %v3289
      %3378 = vmatprep.subr.bf16.mxu0 0
      %3379 = vmatpush1.bf16.msra.mxu0 0
      %3380 = vmatprep.subr.bf16.mxu0 0
      %3381 = vmatpush1.bf16.msra.mxu0 0
      %3382 = vmatprep.subr.bf16.mxu0 0
      %3383 = vmatpush1.bf16.msra.mxu0 0
      %3384 = vmatprep.subr.bf16.mxu0 0
      %3385 = vmatpush1.bf16.msra.mxu0 0
      %3386 = vmatprep.subr.bf16.mxu0 0
      %3387 = vmatpush1.bf16.msra.mxu0 0
      %3388 = vmatprep.subr.bf16.mxu0 0
      %3389 = vmatpush1.bf16.msra.mxu0 0
      %3390 = vmatprep.subr.bf16.mxu0 0
      %3391 = vmatpush1.bf16.msra.mxu0 0
      %3392 = vmatprep.subr.bf16.mxu0 0
      %3393 = vmatpush1.bf16.msra.mxu0 0
      %3394 = vmatprep.subr.bf16.mxu0 0
      %3395 = vmatpush1.bf16.msra.mxu0 0
      %3396 = vmatprep.subr.bf16.mxu0 0
      %3397 = vmatpush1.bf16.msra.mxu0 0
      %3398 = vmatprep.subr.bf16.mxu0 0
      %3399 = vmatpush1.bf16.msra.mxu0 0
      %3400 = vmatprep.subr.bf16.mxu0 0
      %3401 = vmatpush1.bf16.msra.mxu0 0
      %3402 = vmatprep.subr.bf16.mxu0 0
      %3403 = vmatpush1.bf16.msra.mxu0 0
      %3404 = vmatprep.subr.bf16.mxu0 0
      %3405 = vmatpush1.bf16.msra.mxu0 0
      %3406 = vmatprep.subr.bf16.mxu0 0
      %3407 = vmatpush1.bf16.msra.mxu0 0
      %3408 = vmatprep.mubr.bf16.mxu0 0
      %3409 = vmatmul.mubr.bf16.gmra.mrb[0].mxu0 %v3274
      %v3410 = vpop.f32.mrb[0].mxu0
      %v3411 = vadd.f32 0.0, %v3410
      %v3412 = vpop.f32.mrb[0].mxu0
      %v3413 = vadd.f32 0.0, %v3412
      %v3414 = vpop.f32.mrb[0].mxu0
      %v3415 = vpop.f32.mrb[0].mxu0
      %3416 = vdwg.mxu0
      %v3417 = vadd.f32 %v3194, %v3329
      %v3418 = vadd.f32 %v3195, %v3331
      %v3419 = vadd.f32 %v3196, %v3370
      %v3420 = vadd.f32 %v3197, %v3372
      %v3421 = vadd.f32 %v3198, %v3411
      %v3422 = vadd.f32 %v3199, %v3413
      %v3423 = vld [vmem:[#allocation2 + $0x2] sm:$0x7f]
      %s3424 = scalar_lea.vmem %s3, 14
      %v3425 = vld [vmem:[%s3424] sm:$0x1]
      %v3427 = vcombine.high %v3423, %v3423
      %v3429 = vunpack.c.l.s4 1966171168
      %v3430 = vunpack.c.0.s8 %v3429
      %v3431 = vlaneseq
      %v3432 = vshrl.u32 %v3431, 7
      %v3433 = vsub.s32 %v3430, %v3432
      %v3434 = vrot.slane %v3423, %v3433
      %v3436 = vunpack.c.l.s4 1966171168
      %v3437 = vunpack.c.0.s8 %v3436
      %v3438 = vlaneseq
      %v3439 = vshrl.u32 %v3438, 7
      %v3440 = vsub.s32 %v3437, %v3439
      %v3441 = vrot.slane %v3427, %v3440
      %v3442 = vcombine.high %v3434, %v3434
      %v3443 = vcombine.high %v3441, %v3441
      %v3445 = vunpack.c.l.s4 1966171168
      %v3446 = vunpack.c.0.s8 %v3445
      %v3447 = vlaneseq
      %v3448 = vshrl.u32 %v3447, 7
      %v3449 = vsub.s32 %v3446, %v3448
      %v3450 = vrot.slane %v3434, %v3449
      %v3452 = vunpack.c.l.s4 1966171168
      %v3453 = vunpack.c.0.s8 %v3452
      %v3454 = vlaneseq
      %v3455 = vshrl.u32 %v3454, 7
      %v3456 = vsub.s32 %v3453, %v3455
      %v3457 = vrot.slane %v3441, %v3456
      %v3459 = vunpack.c.l.s4 1966171168
      %v3460 = vunpack.c.0.s8 %v3459
      %v3461 = vlaneseq
      %v3462 = vshrl.u32 %v3461, 7
      %v3463 = vsub.s32 %v3460, %v3462
      %v3464 = vrot.slane %v3442, %v3463
      %v3466 = vunpack.c.l.s4 1966171168
      %v3467 = vunpack.c.0.s8 %v3466
      %v3468 = vlaneseq
      %v3469 = vshrl.u32 %v3468, 7
      %v3470 = vsub.s32 %v3467, %v3469
      %v3471 = vrot.slane %v3443, %v3470
      %v3472 = vcombine.high %v3450, %v3450
      %v3473 = vcombine.high %v3457, %v3457
      %v3474 = vcombine.high %v3464, %v3464
      %3475 = vrot.lane.b32.xlu0 %v3450, 40
      %v3476 = vpop.permute.xlu0 %3475
      %3477 = vrot.lane.b32.xlu0 %v3464, 40
      %v3478 = vpop.permute.xlu0 %3477
      %3479 = vrot.lane.b32.xlu0 %v3472, 40
      %v3480 = vpop.permute.xlu0 %3479
      %3481 = vrot.lane.b32.xlu0 %v3474, 40
      %v3482 = vpop.permute.xlu0 %3481
      %3483 = vrot.lane.b32.xlu0 %v3457, 40
      %v3484 = vpop.permute.xlu0 %3483
      %3485 = vrot.lane.b32.xlu0 %v3471, 40
      %v3486 = vpop.permute.xlu0 %3485
      %3487 = vrot.lane.b32.xlu0 %v3473, 40
      %v3488 = vpop.permute.xlu0 %3487
      %vm3489 = vcmask 326656
      %v3490 = vsel %vm3489, %v3476, %v3478
      %v3491 = vsel %vm3489, %v3478, %v3480
      %v3492 = vsel %vm3489, %v3480, %v3482
      %v3493 = vsel %vm3489, %v3482, %v3484
      %v3494 = vsel %vm3489, %v3484, %v3486
      %v3495 = vsel %vm3489, %v3486, %v3488
      %v3497 = vsel %vm407, %v3425, 0
      %v3500 = vand.u32 %v3490, %v413
      %v3503 = vand.u32 %v3491, %v413
      %v3506 = vand.u32 %v3492, %v413
      %v3509 = vand.u32 %v3493, %v413
      %v3512 = vand.u32 %v3494, %v413
      %v3515 = vand.u32 %v3495, %v413
      %3517 = vmatprep.subr.bf16.mxu0 %v3503
      %3518 = vmatpush1.bf16.msra.mxu0 %v3500
      %3519 = vmatprep.subr.bf16.mxu0 0
      %3520 = vmatpush1.bf16.msra.mxu0 0
      %3521 = vmatprep.subr.bf16.mxu0 0
      %3522 = vmatpush1.bf16.msra.mxu0 0
      %3523 = vmatprep.subr.bf16.mxu0 0
      %3524 = vmatpush1.bf16.msra.mxu0 0
      %3525 = vmatprep.subr.bf16.mxu0 0
      %3526 = vmatpush1.bf16.msra.mxu0 0
      %3527 = vmatprep.subr.bf16.mxu0 0
      %3528 = vmatpush1.bf16.msra.mxu0 0
      %3529 = vmatprep.subr.bf16.mxu0 0
      %3530 = vmatpush1.bf16.msra.mxu0 0
      %3531 = vmatprep.subr.bf16.mxu0 0
      %3532 = vmatpush1.bf16.msra.mxu0 0
      %3533 = vmatprep.subr.bf16.mxu0 0
      %3534 = vmatpush1.bf16.msra.mxu0 0
      %3535 = vmatprep.subr.bf16.mxu0 0
      %3536 = vmatpush1.bf16.msra.mxu0 0
      %3537 = vmatprep.subr.bf16.mxu0 0
      %3538 = vmatpush1.bf16.msra.mxu0 0
      %3539 = vmatprep.subr.bf16.mxu0 0
      %3540 = vmatpush1.bf16.msra.mxu0 0
      %3541 = vmatprep.subr.bf16.mxu0 0
      %3542 = vmatpush1.bf16.msra.mxu0 0
      %3543 = vmatprep.subr.bf16.mxu0 0
      %3544 = vmatpush1.bf16.msra.mxu0 0
      %3545 = vmatprep.subr.bf16.mxu0 0
      %3546 = vmatpush1.bf16.msra.mxu0 0
      %3547 = vmatprep.subr.bf16.mxu0 0
      %3548 = vmatpush1.bf16.msra.mxu0 0
      %3549 = vmatprep.mubr.bf16.mxu0 0
      %3550 = vmatmul.mubr.bf16.gmra.mrb[0].mxu0 %v3497
      %v3551 = vpop.f32.mrb[0].mxu0
      %v3552 = vadd.f32 0.0, %v3551
      %v3553 = vpop.f32.mrb[0].mxu0
      %v3554 = vadd.f32 0.0, %v3553
      %v3555 = vpop.f32.mrb[0].mxu0
      %v3556 = vpop.f32.mrb[0].mxu0
      %3557 = vdwg.mxu0
      %3558 = vmatprep.subr.bf16.mxu0 %v3509
      %3559 = vmatpush1.bf16.msra.mxu0 %v3506
      %3560 = vmatprep.subr.bf16.mxu0 0
      %3561 = vmatpush1.bf16.msra.mxu0 0
      %3562 = vmatprep.subr.bf16.mxu0 0
      %3563 = vmatpush1.bf16.msra.mxu0 0
      %3564 = vmatprep.subr.bf16.mxu0 0
      %3565 = vmatpush1.bf16.msra.mxu0 0
      %3566 = vmatprep.subr.bf16.mxu0 0
      %3567 = vmatpush1.bf16.msra.mxu0 0
      %3568 = vmatprep.subr.bf16.mxu0 0
      %3569 = vmatpush1.bf16.msra.mxu0 0
      %3570 = vmatprep.subr.bf16.mxu0 0
      %3571 = vmatpush1.bf16.msra.mxu0 0
      %3572 = vmatprep.subr.bf16.mxu0 0
      %3573 = vmatpush1.bf16.msra.mxu0 0
      %3574 = vmatprep.subr.bf16.mxu0 0
      %3575 = vmatpush1.bf16.msra.mxu0 0
      %3576 = vmatprep.subr.bf16.mxu0 0
      %3577 = vmatpush1.bf16.msra.mxu0 0
      %3578 = vmatprep.subr.bf16.mxu0 0
      %3579 = vmatpush1.bf16.msra.mxu0 0
      %3580 = vmatprep.subr.bf16.mxu0 0
      %3581 = vmatpush1.bf16.msra.mxu0 0
      %3582 = vmatprep.subr.bf16.mxu0 0
      %3583 = vmatpush1.bf16.msra.mxu0 0
      %3584 = vmatprep.subr.bf16.mxu0 0
      %3585 = vmatpush1.bf16.msra.mxu0 0
      %3586 = vmatprep.subr.bf16.mxu0 0
      %3587 = vmatpush1.bf16.msra.mxu0 0
      %3588 = vmatprep.subr.bf16.mxu0 0
      %3589 = vmatpush1.bf16.msra.mxu0 0
      %3590 = vmatprep.mubr.bf16.mxu0 0
      %3591 = vmatmul.mubr.bf16.gmra.mrb[0].mxu0 %v3497
      %v3592 = vpop.f32.mrb[0].mxu0
      %v3593 = vadd.f32 0.0, %v3592
      %v3594 = vpop.f32.mrb[0].mxu0
      %v3595 = vadd.f32 0.0, %v3594
      %v3596 = vpop.f32.mrb[0].mxu0
      %v3597 = vpop.f32.mrb[0].mxu0
      %3598 = vdwg.mxu0
      %3599 = vmatprep.subr.bf16.mxu0 %v3515
      %3600 = vmatpush1.bf16.msra.mxu0 %v3512
      %3601 = vmatprep.subr.bf16.mxu0 0
      %3602 = vmatpush1.bf16.msra.mxu0 0
      %3603 = vmatprep.subr.bf16.mxu0 0
      %3604 = vmatpush1.bf16.msra.mxu0 0
      %3605 = vmatprep.subr.bf16.mxu0 0
      %3606 = vmatpush1.bf16.msra.mxu0 0
      %3607 = vmatprep.subr.bf16.mxu0 0
      %3608 = vmatpush1.bf16.msra.mxu0 0
      %3609 = vmatprep.subr.bf16.mxu0 0
      %3610 = vmatpush1.bf16.msra.mxu0 0
      %3611 = vmatprep.subr.bf16.mxu0 0
      %3612 = vmatpush1.bf16.msra.mxu0 0
      %3613 = vmatprep.subr.bf16.mxu0 0
      %3614 = vmatpush1.bf16.msra.mxu0 0
      %3615 = vmatprep.subr.bf16.mxu0 0
      %3616 = vmatpush1.bf16.msra.mxu0 0
      %3617 = vmatprep.subr.bf16.mxu0 0
      %3618 = vmatpush1.bf16.msra.mxu0 0
      %3619 = vmatprep.subr.bf16.mxu0 0
      %3620 = vmatpush1.bf16.msra.mxu0 0
      %3621 = vmatprep.subr.bf16.mxu0 0
      %3622 = vmatpush1.bf16.msra.mxu0 0
      %3623 = vmatprep.subr.bf16.mxu0 0
      %3624 = vmatpush1.bf16.msra.mxu0 0
      %3625 = vmatprep.subr.bf16.mxu0 0
      %3626 = vmatpush1.bf16.msra.mxu0 0
      %3627 = vmatprep.subr.bf16.mxu0 0
      %3628 = vmatpush1.bf16.msra.mxu0 0
      %3629 = vmatprep.subr.bf16.mxu0 0
      %3630 = vmatpush1.bf16.msra.mxu0 0
      %3631 = vmatprep.mubr.bf16.mxu0 0
      %3632 = vmatmul.mubr.bf16.gmra.mrb[0].mxu0 %v3497
      %v3633 = vpop.f32.mrb[0].mxu0
      %v3634 = vadd.f32 0.0, %v3633
      %v3635 = vpop.f32.mrb[0].mxu0
      %v3636 = vadd.f32 0.0, %v3635
      %v3637 = vpop.f32.mrb[0].mxu0
      %v3638 = vpop.f32.mrb[0].mxu0
      %3639 = vdwg.mxu0
      %v3640 = vadd.f32 %v3417, %v3552
      %v3641 = vadd.f32 %v3418, %v3554
      %v3642 = vadd.f32 %v3419, %v3593
      %v3643 = vadd.f32 %v3420, %v3595
      %v3644 = vadd.f32 %v3421, %v3634
      %v3645 = vadd.f32 %v3422, %v3636
      %v3646 = vld [vmem:[#allocation2 + $0x2] sm:$0x7f]
      %s3647 = scalar_lea.vmem %s3, 15
      %v3648 = vld [vmem:[%s3647] sm:$0x1]
      %v3650 = vcombine.high %v3646, %v3646
      %v3652 = vunpack.c.l.s4 1966171168
      %v3653 = vunpack.c.0.s8 %v3652
      %v3654 = vlaneseq
      %v3655 = vshrl.u32 %v3654, 7
      %v3656 = vsub.s32 %v3653, %v3655
      %v3657 = vrot.slane %v3646, %v3656
      %v3659 = vunpack.c.l.s4 1966171168
      %v3660 = vunpack.c.0.s8 %v3659
      %v3661 = vlaneseq
      %v3662 = vshrl.u32 %v3661, 7
      %v3663 = vsub.s32 %v3660, %v3662
      %v3664 = vrot.slane %v3650, %v3663
      %v3665 = vcombine.high %v3657, %v3657
      %v3666 = vcombine.high %v3664, %v3664
      %v3668 = vunpack.c.l.s4 1966171168
      %v3669 = vunpack.c.0.s8 %v3668
      %v3670 = vlaneseq
      %v3671 = vshrl.u32 %v3670, 7
      %v3672 = vsub.s32 %v3669, %v3671
      %v3673 = vrot.slane %v3657, %v3672
      %v3675 = vunpack.c.l.s4 1966171168
      %v3676 = vunpack.c.0.s8 %v3675
      %v3677 = vlaneseq
      %v3678 = vshrl.u32 %v3677, 7
      %v3679 = vsub.s32 %v3676, %v3678
      %v3680 = vrot.slane %v3664, %v3679
      %v3682 = vunpack.c.l.s4 1966171168
      %v3683 = vunpack.c.0.s8 %v3682
      %v3684 = vlaneseq
      %v3685 = vshrl.u32 %v3684, 7
      %v3686 = vsub.s32 %v3683, %v3685
      %v3687 = vrot.slane %v3665, %v3686
      %v3689 = vunpack.c.l.s4 1966171168
      %v3690 = vunpack.c.0.s8 %v3689
      %v3691 = vlaneseq
      %v3692 = vshrl.u32 %v3691, 7
      %v3693 = vsub.s32 %v3690, %v3692
      %v3694 = vrot.slane %v3666, %v3693
      %v3695 = vcombine.high %v3673, %v3673
      %v3696 = vcombine.high %v3680, %v3680
      %v3697 = vcombine.high %v3687, %v3687
      %3698 = vrot.lane.b32.xlu0 %v3673, 24
      %v3699 = vpop.permute.xlu0 %3698
      %3700 = vrot.lane.b32.xlu0 %v3687, 24
      %v3701 = vpop.permute.xlu0 %3700
      %3702 = vrot.lane.b32.xlu0 %v3695, 24
      %v3703 = vpop.permute.xlu0 %3702
      %3704 = vrot.lane.b32.xlu0 %v3697, 24
      %v3705 = vpop.permute.xlu0 %3704
      %3706 = vrot.lane.b32.xlu0 %v3680, 24
      %v3707 = vpop.permute.xlu0 %3706
      %3708 = vrot.lane.b32.xlu0 %v3694, 24
      %v3709 = vpop.permute.xlu0 %3708
      %3710 = vrot.lane.b32.xlu0 %v3696, 24
      %v3711 = vpop.permute.xlu0 %3710
      %vm3712 = vcmask 195584
      %v3713 = vsel %vm3712, %v3699, %v3701
      %v3714 = vsel %vm3712, %v3701, %v3703
      %v3715 = vsel %vm3712, %v3703, %v3705
      %v3716 = vsel %vm3712, %v3705, %v3707
      %v3717 = vsel %vm3712, %v3707, %v3709
      %v3718 = vsel %vm3712, %v3709, %v3711
      %v3720 = vsel %vm407, %v3648, 0
      %v3723 = vand.u32 %v3713, %v413
      %v3726 = vand.u32 %v3714, %v413
      %v3729 = vand.u32 %v3715, %v413
      %v3732 = vand.u32 %v3716, %v413
      %v3735 = vand.u32 %v3717, %v413
      %v3738 = vand.u32 %v3718, %v413
      %3740 = vmatprep.subr.bf16.mxu0 %v3726
      %3741 = vmatpush1.bf16.msra.mxu0 %v3723
      %3742 = vmatprep.subr.bf16.mxu0 0
      %3743 = vmatpush1.bf16.msra.mxu0 0
      %3744 = vmatprep.subr.bf16.mxu0 0
      %3745 = vmatpush1.bf16.msra.mxu0 0
      %3746 = vmatprep.subr.bf16.mxu0 0
      %3747 = vmatpush1.bf16.msra.mxu0 0
      %3748 = vmatprep.subr.bf16.mxu0 0
      %3749 = vmatpush1.bf16.msra.mxu0 0
      %3750 = vmatprep.subr.bf16.mxu0 0
      %3751 = vmatpush1.bf16.msra.mxu0 0
      %3752 = vmatprep.subr.bf16.mxu0 0
      %3753 = vmatpush1.bf16.msra.mxu0 0
      %3754 = vmatprep.subr.bf16.mxu0 0
      %3755 = vmatpush1.bf16.msra.mxu0 0
      %3756 = vmatprep.subr.bf16.mxu0 0
      %3757 = vmatpush1.bf16.msra.mxu0 0
      %3758 = vmatprep.subr.bf16.mxu0 0
      %3759 = vmatpush1.bf16.msra.mxu0 0
      %3760 = vmatprep.subr.bf16.mxu0 0
      %3761 = vmatpush1.bf16.msra.mxu0 0
      %3762 = vmatprep.subr.bf16.mxu0 0
      %3763 = vmatpush1.bf16.msra.mxu0 0
      %3764 = vmatprep.subr.bf16.mxu0 0
      %3765 = vmatpush1.bf16.msra.mxu0 0
      %3766 = vmatprep.subr.bf16.mxu0 0
      %3767 = vmatpush1.bf16.msra.mxu0 0
      %3768 = vmatprep.subr.bf16.mxu0 0
      %3769 = vmatpush1.bf16.msra.mxu0 0
      %3770 = vmatprep.subr.bf16.mxu0 0
      %3771 = vmatpush1.bf16.msra.mxu0 0
      %3772 = vmatprep.mubr.bf16.mxu0 0
      %3773 = vmatmul.mubr.bf16.gmra.mrb[0].mxu0 %v3720
      %v3774 = vpop.f32.mrb[0].mxu0
      %v3775 = vadd.f32 0.0, %v3774
      %v3776 = vpop.f32.mrb[0].mxu0
      %v3777 = vadd.f32 0.0, %v3776
      %v3778 = vpop.f32.mrb[0].mxu0
      %v3779 = vpop.f32.mrb[0].mxu0
      %3780 = vdwg.mxu0
      %3781 = vmatprep.subr.bf16.mxu0 %v3732
      %3782 = vmatpush1.bf16.msra.mxu0 %v3729
      %3783 = vmatprep.subr.bf16.mxu0 0
      %3784 = vmatpush1.bf16.msra.mxu0 0
      %3785 = vmatprep.subr.bf16.mxu0 0
      %3786 = vmatpush1.bf16.msra.mxu0 0
      %3787 = vmatprep.subr.bf16.mxu0 0
      %3788 = vmatpush1.bf16.msra.mxu0 0
      %3789 = vmatprep.subr.bf16.mxu0 0
      %3790 = vmatpush1.bf16.msra.mxu0 0
      %3791 = vmatprep.subr.bf16.mxu0 0
      %3792 = vmatpush1.bf16.msra.mxu0 0
      %3793 = vmatprep.subr.bf16.mxu0 0
      %3794 = vmatpush1.bf16.msra.mxu0 0
      %3795 = vmatprep.subr.bf16.mxu0 0
      %3796 = vmatpush1.bf16.msra.mxu0 0
      %3797 = vmatprep.subr.bf16.mxu0 0
      %3798 = vmatpush1.bf16.msra.mxu0 0
      %3799 = vmatprep.subr.bf16.mxu0 0
      %3800 = vmatpush1.bf16.msra.mxu0 0
      %3801 = vmatprep.subr.bf16.mxu0 0
      %3802 = vmatpush1.bf16.msra.mxu0 0
      %3803 = vmatprep.subr.bf16.mxu0 0
      %3804 = vmatpush1.bf16.msra.mxu0 0
      %3805 = vmatprep.subr.bf16.mxu0 0
      %3806 = vmatpush1.bf16.msra.mxu0 0
      %3807 = vmatprep.subr.bf16.mxu0 0
      %3808 = vmatpush1.bf16.msra.mxu0 0
      %3809 = vmatprep.subr.bf16.mxu0 0
      %3810 = vmatpush1.bf16.msra.mxu0 0
      %3811 = vmatprep.subr.bf16.mxu0 0
      %3812 = vmatpush1.bf16.msra.mxu0 0
      %3813 = vmatprep.mubr.bf16.mxu0 0
      %3814 = vmatmul.mubr.bf16.gmra.mrb[0].mxu0 %v3720
      %v3815 = vpop.f32.mrb[0].mxu0
      %v3816 = vadd.f32 0.0, %v3815
      %v3817 = vpop.f32.mrb[0].mxu0
      %v3818 = vadd.f32 0.0, %v3817
      %v3819 = vpop.f32.mrb[0].mxu0
      %v3820 = vpop.f32.mrb[0].mxu0
      %3821 = vdwg.mxu0
      %3822 = vmatprep.subr.bf16.mxu0 %v3738
      %3823 = vmatpush1.bf16.msra.mxu0 %v3735
      %3824 = vmatprep.subr.bf16.mxu0 0
      %3825 = vmatpush1.bf16.msra.mxu0 0
      %3826 = vmatprep.subr.bf16.mxu0 0
      %3827 = vmatpush1.bf16.msra.mxu0 0
      %3828 = vmatprep.subr.bf16.mxu0 0
      %3829 = vmatpush1.bf16.msra.mxu0 0
      %3830 = vmatprep.subr.bf16.mxu0 0
      %3831 = vmatpush1.bf16.msra.mxu0 0
      %3832 = vmatprep.subr.bf16.mxu0 0
      %3833 = vmatpush1.bf16.msra.mxu0 0
      %3834 = vmatprep.subr.bf16.mxu0 0
      %3835 = vmatpush1.bf16.msra.mxu0 0
      %3836 = vmatprep.subr.bf16.mxu0 0
      %3837 = vmatpush1.bf16.msra.mxu0 0
      %3838 = vmatprep.subr.bf16.mxu0 0
      %3839 = vmatpush1.bf16.msra.mxu0 0
      %3840 = vmatprep.subr.bf16.mxu0 0
      %3841 = vmatpush1.bf16.msra.mxu0 0
      %3842 = vmatprep.subr.bf16.mxu0 0
      %3843 = vmatpush1.bf16.msra.mxu0 0
      %3844 = vmatprep.subr.bf16.mxu0 0
      %3845 = vmatpush1.bf16.msra.mxu0 0
      %3846 = vmatprep.subr.bf16.mxu0 0
      %3847 = vmatpush1.bf16.msra.mxu0 0
      %3848 = vmatprep.subr.bf16.mxu0 0
      %3849 = vmatpush1.bf16.msra.mxu0 0
      %3850 = vmatprep.subr.bf16.mxu0 0
      %3851 = vmatpush1.bf16.msra.mxu0 0
      %3852 = vmatprep.subr.bf16.mxu0 0
      %3853 = vmatpush1.bf16.msra.mxu0 0
      %3854 = vmatprep.mubr.bf16.mxu0 0
      %3855 = vmatmul.mubr.bf16.gmra.mrb[0].mxu0 %v3720
      %v3856 = vpop.f32.mrb[0].mxu0
      %v3857 = vadd.f32 0.0, %v3856
      %v3858 = vpop.f32.mrb[0].mxu0
      %v3859 = vadd.f32 0.0, %v3858
      %v3860 = vpop.f32.mrb[0].mxu0
      %v3861 = vpop.f32.mrb[0].mxu0
      %3862 = vdwg.mxu0
      %v3863 = vadd.f32 %v3640, %v3775
      %v3864 = vadd.f32 %v3641, %v3777
      %v3865 = vadd.f32 %v3642, %v3816
      %v3866 = vadd.f32 %v3643, %v3818
      %v3867 = vadd.f32 %v3644, %v3857
      %v3868 = vadd.f32 %v3645, %v3859
      %v3869 = vld [vmem:[#allocation2 + $0x2] sm:$0x7f]
      %s3870 = scalar_lea.vmem %s3, 16
      %v3871 = vld [vmem:[%s3870] sm:$0x1]
      %v3873 = vcombine.high %v3869, %v3869
      %v3875 = vunpack.c.l.s4 1966171168
      %v3876 = vunpack.c.0.s8 %v3875
      %v3877 = vlaneseq
      %v3878 = vshrl.u32 %v3877, 7
      %v3879 = vsub.s32 %v3876, %v3878
      %v3880 = vrot.slane %v3869, %v3879
      %v3882 = vunpack.c.l.s4 1966171168
      %v3883 = vunpack.c.0.s8 %v3882
      %v3884 = vlaneseq
      %v3885 = vshrl.u32 %v3884, 7
      %v3886 = vsub.s32 %v3883, %v3885
      %v3887 = vrot.slane %v3873, %v3886
      %v3888 = vcombine.high %v3880, %v3880
      %v3889 = vcombine.high %v3887, %v3887
      %v3891 = vunpack.c.l.s4 1966171168
      %v3892 = vunpack.c.0.s8 %v3891
      %v3893 = vlaneseq
      %v3894 = vshrl.u32 %v3893, 7
      %v3895 = vsub.s32 %v3892, %v3894
      %v3896 = vrot.slane %v3880, %v3895
      %v3898 = vunpack.c.l.s4 1966171168
      %v3899 = vunpack.c.0.s8 %v3898
      %v3900 = vlaneseq
      %v3901 = vshrl.u32 %v3900, 7
      %v3902 = vsub.s32 %v3899, %v3901
      %v3903 = vrot.slane %v3887, %v3902
      %v3905 = vunpack.c.l.s4 1966171168
      %v3906 = vunpack.c.0.s8 %v3905
      %v3907 = vlaneseq
      %v3908 = vshrl.u32 %v3907, 7
      %v3909 = vsub.s32 %v3906, %v3908
      %v3910 = vrot.slane %v3888, %v3909
      %v3912 = vunpack.c.l.s4 1966171168
      %v3913 = vunpack.c.0.s8 %v3912
      %v3914 = vlaneseq
      %v3915 = vshrl.u32 %v3914, 7
      %v3916 = vsub.s32 %v3913, %v3915
      %v3917 = vrot.slane %v3889, %v3916
      %v3918 = vcombine.high %v3896, %v3896
      %v3919 = vcombine.high %v3903, %v3903
      %v3920 = vcombine.high %v3910, %v3910
      %3921 = vrot.lane.b32.xlu0 %v3896, 23
      %v3922 = vpop.permute.xlu0 %3921
      %3923 = vrot.lane.b32.xlu0 %v3910, 23
      %v3924 = vpop.permute.xlu0 %3923
      %3925 = vrot.lane.b32.xlu0 %v3918, 23
      %v3926 = vpop.permute.xlu0 %3925
      %3927 = vrot.lane.b32.xlu0 %v3920, 23
      %v3928 = vpop.permute.xlu0 %3927
      %3929 = vrot.lane.b32.xlu0 %v3903, 23
      %v3930 = vpop.permute.xlu0 %3929
      %3931 = vrot.lane.b32.xlu0 %v3917, 23
      %v3932 = vpop.permute.xlu0 %3931
      %3933 = vrot.lane.b32.xlu0 %v3919, 23
      %v3934 = vpop.permute.xlu0 %3933
      %vm3935 = vcmask 187392
      %v3936 = vsel %vm3935, %v3922, %v3924
      %v3937 = vsel %vm3935, %v3924, %v3926
      %v3938 = vsel %vm3935, %v3926, %v3928
      %v3939 = vsel %vm3935, %v3928, %v3930
      %v3940 = vsel %vm3935, %v3930, %v3932
      %v3941 = vsel %vm3935, %v3932, %v3934
      %v3943 = vsel %vm407, %v3871, 0
      %v3946 = vand.u32 %v3936, %v413
      %v3949 = vand.u32 %v3937, %v413
      %v3952 = vand.u32 %v3938, %v413
      %v3955 = vand.u32 %v3939, %v413
      %v3958 = vand.u32 %v3940, %v413
      %v3961 = vand.u32 %v3941, %v413
      %3963 = vmatprep.subr.bf16.mxu0 %v3949
      %3964 = vmatpush1.bf16.msra.mxu0 %v3946
      %3965 = vmatprep.subr.bf16.mxu0 0
      %3966 = vmatpush1.bf16.msra.mxu0 0
      %3967 = vmatprep.subr.bf16.mxu0 0
      %3968 = vmatpush1.bf16.msra.mxu0 0
      %3969 = vmatprep.subr.bf16.mxu0 0
      %3970 = vmatpush1.bf16.msra.mxu0 0
      %3971 = vmatprep.subr.bf16.mxu0 0
      %3972 = vmatpush1.bf16.msra.mxu0 0
      %3973 = vmatprep.subr.bf16.mxu0 0
      %3974 = vmatpush1.bf16.msra.mxu0 0
      %3975 = vmatprep.subr.bf16.mxu0 0
      %3976 = vmatpush1.bf16.msra.mxu0 0
      %3977 = vmatprep.subr.bf16.mxu0 0
      %3978 = vmatpush1.bf16.msra.mxu0 0
      %3979 = vmatprep.subr.bf16.mxu0 0
      %3980 = vmatpush1.bf16.msra.mxu0 0
      %3981 = vmatprep.subr.bf16.mxu0 0
      %3982 = vmatpush1.bf16.msra.mxu0 0
      %3983 = vmatprep.subr.bf16.mxu0 0
      %3984 = vmatpush1.bf16.msra.mxu0 0
      %3985 = vmatprep.subr.bf16.mxu0 0
      %3986 = vmatpush1.bf16.msra.mxu0 0
      %3987 = vmatprep.subr.bf16.mxu0 0
      %3988 = vmatpush1.bf16.msra.mxu0 0
      %3989 = vmatprep.subr.bf16.mxu0 0
      %3990 = vmatpush1.bf16.msra.mxu0 0
      %3991 = vmatprep.subr.bf16.mxu0 0
      %3992 = vmatpush1.bf16.msra.mxu0 0
      %3993 = vmatprep.subr.bf16.mxu0 0
      %3994 = vmatpush1.bf16.msra.mxu0 0
      %3995 = vmatprep.mubr.bf16.mxu0 0
      %3996 = vmatmul.mubr.bf16.gmra.mrb[0].mxu0 %v3943
      %v3997 = vpop.f32.mrb[0].mxu0
      %v3998 = vadd.f32 0.0, %v3997
      %v3999 = vpop.f32.mrb[0].mxu0
      %v4000 = vadd.f32 0.0, %v3999
      %v4001 = vpop.f32.mrb[0].mxu0
      %v4002 = vpop.f32.mrb[0].mxu0
      %4003 = vdwg.mxu0
      %4004 = vmatprep.subr.bf16.mxu0 %v3955
      %4005 = vmatpush1.bf16.msra.mxu0 %v3952
      %4006 = vmatprep.subr.bf16.mxu0 0
      %4007 = vmatpush1.bf16.msra.mxu0 0
      %4008 = vmatprep.subr.bf16.mxu0 0
      %4009 = vmatpush1.bf16.msra.mxu0 0
      %4010 = vmatprep.subr.bf16.mxu0 0
      %4011 = vmatpush1.bf16.msra.mxu0 0
      %4012 = vmatprep.subr.bf16.mxu0 0
      %4013 = vmatpush1.bf16.msra.mxu0 0
      %4014 = vmatprep.subr.bf16.mxu0 0
      %4015 = vmatpush1.bf16.msra.mxu0 0
      %4016 = vmatprep.subr.bf16.mxu0 0
      %4017 = vmatpush1.bf16.msra.mxu0 0
      %4018 = vmatprep.subr.bf16.mxu0 0
      %4019 = vmatpush1.bf16.msra.mxu0 0
      %4020 = vmatprep.subr.bf16.mxu0 0
      %4021 = vmatpush1.bf16.msra.mxu0 0
      %4022 = vmatprep.subr.bf16.mxu0 0
      %4023 = vmatpush1.bf16.msra.mxu0 0
      %4024 = vmatprep.subr.bf16.mxu0 0
      %4025 = vmatpush1.bf16.msra.mxu0 0
      %4026 = vmatprep.subr.bf16.mxu0 0
      %4027 = vmatpush1.bf16.msra.mxu0 0
      %4028 = vmatprep.subr.bf16.mxu0 0
      %4029 = vmatpush1.bf16.msra.mxu0 0
      %4030 = vmatprep.subr.bf16.mxu0 0
      %4031 = vmatpush1.bf16.msra.mxu0 0
      %4032 = vmatprep.subr.bf16.mxu0 0
      %4033 = vmatpush1.bf16.msra.mxu0 0
      %4034 = vmatprep.subr.bf16.mxu0 0
      %4035 = vmatpush1.bf16.msra.mxu0 0
      %4036 = vmatprep.mubr.bf16.mxu0 0
      %4037 = vmatmul.mubr.bf16.gmra.mrb[0].mxu0 %v3943
      %v4038 = vpop.f32.mrb[0].mxu0
      %v4039 = vadd.f32 0.0, %v4038
      %v4040 = vpop.f32.mrb[0].mxu0
      %v4041 = vadd.f32 0.0, %v4040
      %v4042 = vpop.f32.mrb[0].mxu0
      %v4043 = vpop.f32.mrb[0].mxu0
      %4044 = vdwg.mxu0
      %4045 = vmatprep.subr.bf16.mxu0 %v3961
      %4046 = vmatpush1.bf16.msra.mxu0 %v3958
      %4047 = vmatprep.subr.bf16.mxu0 0
      %4048 = vmatpush1.bf16.msra.mxu0 0
      %4049 = vmatprep.subr.bf16.mxu0 0
      %4050 = vmatpush1.bf16.msra.mxu0 0
      %4051 = vmatprep.subr.bf16.mxu0 0
      %4052 = vmatpush1.bf16.msra.mxu0 0
      %4053 = vmatprep.subr.bf16.mxu0 0
      %4054 = vmatpush1.bf16.msra.mxu0 0
      %4055 = vmatprep.subr.bf16.mxu0 0
      %4056 = vmatpush1.bf16.msra.mxu0 0
      %4057 = vmatprep.subr.bf16.mxu0 0
      %4058 = vmatpush1.bf16.msra.mxu0 0
      %4059 = vmatprep.subr.bf16.mxu0 0
      %4060 = vmatpush1.bf16.msra.mxu0 0
      %4061 = vmatprep.subr.bf16.mxu0 0
      %4062 = vmatpush1.bf16.msra.mxu0 0
      %4063 = vmatprep.subr.bf16.mxu0 0
      %4064 = vmatpush1.bf16.msra.mxu0 0
      %4065 = vmatprep.subr.bf16.mxu0 0
      %4066 = vmatpush1.bf16.msra.mxu0 0
      %4067 = vmatprep.subr.bf16.mxu0 0
      %4068 = vmatpush1.bf16.msra.mxu0 0
      %4069 = vmatprep.subr.bf16.mxu0 0
      %4070 = vmatpush1.bf16.msra.mxu0 0
      %4071 = vmatprep.subr.bf16.mxu0 0
      %4072 = vmatpush1.bf16.msra.mxu0 0
      %4073 = vmatprep.subr.bf16.mxu0 0
      %4074 = vmatpush1.bf16.msra.mxu0 0
      %4075 = vmatprep.subr.bf16.mxu0 0
      %4076 = vmatpush1.bf16.msra.mxu0 0
      %4077 = vmatprep.mubr.bf16.mxu0 0
      %4078 = vmatmul.mubr.bf16.gmra.mrb[0].mxu0 %v3943
      %v4079 = vpop.f32.mrb[0].mxu0
      %v4080 = vadd.f32 0.0, %v4079
      %v4081 = vpop.f32.mrb[0].mxu0
      %v4082 = vadd.f32 0.0, %v4081
      %v4083 = vpop.f32.mrb[0].mxu0
      %v4084 = vpop.f32.mrb[0].mxu0
      %4085 = vdwg.mxu0
      %v4086 = vadd.f32 %v3863, %v3998
      %v4087 = vadd.f32 %v3864, %v4000
      %v4088 = vadd.f32 %v3865, %v4039
      %v4089 = vadd.f32 %v3866, %v4041
      %v4090 = vadd.f32 %v3867, %v4080
      %v4091 = vadd.f32 %v3868, %v4082
      %v4092 = vld [vmem:[#allocation2 + $0x2] sm:$0x7f]
      %s4093 = scalar_lea.vmem %s3, 17
      %v4094 = vld [vmem:[%s4093] sm:$0x1]
      %v4096 = vcombine.high %v4092, %v4092
      %v4098 = vunpack.c.l.s4 1966171168
      %v4099 = vunpack.c.0.s8 %v4098
      %v4100 = vlaneseq
      %v4101 = vshrl.u32 %v4100, 7
      %v4102 = vsub.s32 %v4099, %v4101
      %v4103 = vrot.slane %v4092, %v4102
      %v4105 = vunpack.c.l.s4 1966171168
      %v4106 = vunpack.c.0.s8 %v4105
      %v4107 = vlaneseq
      %v4108 = vshrl.u32 %v4107, 7
      %v4109 = vsub.s32 %v4106, %v4108
      %v4110 = vrot.slane %v4096, %v4109
      %v4111 = vcombine.high %v4103, %v4103
      %v4112 = vcombine.high %v4110, %v4110
      %v4114 = vunpack.c.l.s4 1966171168
      %v4115 = vunpack.c.0.s8 %v4114
      %v4116 = vlaneseq
      %v4117 = vshrl.u32 %v4116, 7
      %v4118 = vsub.s32 %v4115, %v4117
      %v4119 = vrot.slane %v4103, %v4118
      %v4121 = vunpack.c.l.s4 1966171168
      %v4122 = vunpack.c.0.s8 %v4121
      %v4123 = vlaneseq
      %v4124 = vshrl.u32 %v4123, 7
      %v4125 = vsub.s32 %v4122, %v4124
      %v4126 = vrot.slane %v4110, %v4125
      %v4128 = vunpack.c.l.s4 1966171168
      %v4129 = vunpack.c.0.s8 %v4128
      %v4130 = vlaneseq
      %v4131 = vshrl.u32 %v4130, 7
      %v4132 = vsub.s32 %v4129, %v4131
      %v4133 = vrot.slane %v4111, %v4132
      %v4135 = vunpack.c.l.s4 1966171168
      %v4136 = vunpack.c.0.s8 %v4135
      %v4137 = vlaneseq
      %v4138 = vshrl.u32 %v4137, 7
      %v4139 = vsub.s32 %v4136, %v4138
      %v4140 = vrot.slane %v4112, %v4139
      %v4141 = vcombine.high %v4119, %v4119
      %v4142 = vcombine.high %v4126, %v4126
      %v4143 = vcombine.high %v4133, %v4133
      %4144 = vrot.lane.b32.xlu0 %v4119, 22
      %v4145 = vpop.permute.xlu0 %4144
      %4146 = vrot.lane.b32.xlu0 %v4133, 22
      %v4147 = vpop.permute.xlu0 %4146
      %4148 = vrot.lane.b32.xlu0 %v4141, 22
      %v4149 = vpop.permute.xlu0 %4148
      %4150 = vrot.lane.b32.xlu0 %v4143, 22
      %v4151 = vpop.permute.xlu0 %4150
      %4152 = vrot.lane.b32.xlu0 %v4126, 22
      %v4153 = vpop.permute.xlu0 %4152
      %4154 = vrot.lane.b32.xlu0 %v4140, 22
      %v4155 = vpop.permute.xlu0 %4154
      %4156 = vrot.lane.b32.xlu0 %v4142, 22
      %v4157 = vpop.permute.xlu0 %4156
      %vm4158 = vcmask 179200
      %v4159 = vsel %vm4158, %v4145, %v4147
      %v4160 = vsel %vm4158, %v4147, %v4149
      %v4161 = vsel %vm4158, %v4149, %v4151
      %v4162 = vsel %vm4158, %v4151, %v4153
      %v4163 = vsel %vm4158, %v4153, %v4155
      %v4164 = vsel %vm4158, %v4155, %v4157
      %v4166 = vsel %vm407, %v4094, 0
      %v4169 = vand.u32 %v4159, %v413
      %v4172 = vand.u32 %v4160, %v413
      %v4175 = vand.u32 %v4161, %v413
      %v4178 = vand.u32 %v4162, %v413
      %v4181 = vand.u32 %v4163, %v413
      %v4184 = vand.u32 %v4164, %v413
      %4186 = vmatprep.subr.bf16.mxu0 %v4172
      %4187 = vmatpush1.bf16.msra.mxu0 %v4169
      %4188 = vmatprep.subr.bf16.mxu0 0
      %4189 = vmatpush1.bf16.msra.mxu0 0
      %4190 = vmatprep.subr.bf16.mxu0 0
      %4191 = vmatpush1.bf16.msra.mxu0 0
      %4192 = vmatprep.subr.bf16.mxu0 0
      %4193 = vmatpush1.bf16.msra.mxu0 0
      %4194 = vmatprep.subr.bf16.mxu0 0
      %4195 = vmatpush1.bf16.msra.mxu0 0
      %4196 = vmatprep.subr.bf16.mxu0 0
      %4197 = vmatpush1.bf16.msra.mxu0 0
      %4198 = vmatprep.subr.bf16.mxu0 0
      %4199 = vmatpush1.bf16.msra.mxu0 0
      %4200 = vmatprep.subr.bf16.mxu0 0
      %4201 = vmatpush1.bf16.msra.mxu0 0
      %4202 = vmatprep.subr.bf16.mxu0 0
      %4203 = vmatpush1.bf16.msra.mxu0 0
      %4204 = vmatprep.subr.bf16.mxu0 0
      %4205 = vmatpush1.bf16.msra.mxu0 0
      %4206 = vmatprep.subr.bf16.mxu0 0
      %4207 = vmatpush1.bf16.msra.mxu0 0
      %4208 = vmatprep.subr.bf16.mxu0 0
      %4209 = vmatpush1.bf16.msra.mxu0 0
      %4210 = vmatprep.subr.bf16.mxu0 0
      %4211 = vmatpush1.bf16.msra.mxu0 0
      %4212 = vmatprep.subr.bf16.mxu0 0
      %4213 = vmatpush1.bf16.msra.mxu0 0
      %4214 = vmatprep.subr.bf16.mxu0 0
      %4215 = vmatpush1.bf16.msra.mxu0 0
      %4216 = vmatprep.subr.bf16.mxu0 0
      %4217 = vmatpush1.bf16.msra.mxu0 0
      %4218 = vmatprep.mubr.bf16.mxu0 0
      %4219 = vmatmul.mubr.bf16.gmra.mrb[0].mxu0 %v4166
      %v4220 = vpop.f32.mrb[0].mxu0
      %v4221 = vadd.f32 0.0, %v4220
      %v4222 = vpop.f32.mrb[0].mxu0
      %v4223 = vadd.f32 0.0, %v4222
      %v4224 = vpop.f32.mrb[0].mxu0
      %v4225 = vpop.f32.mrb[0].mxu0
      %4226 = vdwg.mxu0
      %4227 = vmatprep.subr.bf16.mxu0 %v4178
      %4228 = vmatpush1.bf16.msra.mxu0 %v4175
      %4229 = vmatprep.subr.bf16.mxu0 0
      %4230 = vmatpush1.bf16.msra.mxu0 0
      %4231 = vmatprep.subr.bf16.mxu0 0
      %4232 = vmatpush1.bf16.msra.mxu0 0
      %4233 = vmatprep.subr.bf16.mxu0 0
      %4234 = vmatpush1.bf16.msra.mxu0 0
      %4235 = vmatprep.subr.bf16.mxu0 0
      %4236 = vmatpush1.bf16.msra.mxu0 0
      %4237 = vmatprep.subr.bf16.mxu0 0
      %4238 = vmatpush1.bf16.msra.mxu0 0
      %4239 = vmatprep.subr.bf16.mxu0 0
      %4240 = vmatpush1.bf16.msra.mxu0 0
      %4241 = vmatprep.subr.bf16.mxu0 0
      %4242 = vmatpush1.bf16.msra.mxu0 0
      %4243 = vmatprep.subr.bf16.mxu0 0
      %4244 = vmatpush1.bf16.msra.mxu0 0
      %4245 = vmatprep.subr.bf16.mxu0 0
      %4246 = vmatpush1.bf16.msra.mxu0 0
      %4247 = vmatprep.subr.bf16.mxu0 0
      %4248 = vmatpush1.bf16.msra.mxu0 0
      %4249 = vmatprep.subr.bf16.mxu0 0
      %4250 = vmatpush1.bf16.msra.mxu0 0
      %4251 = vmatprep.subr.bf16.mxu0 0
      %4252 = vmatpush1.bf16.msra.mxu0 0
      %4253 = vmatprep.subr.bf16.mxu0 0
      %4254 = vmatpush1.bf16.msra.mxu0 0
      %4255 = vmatprep.subr.bf16.mxu0 0
      %4256 = vmatpush1.bf16.msra.mxu0 0
      %4257 = vmatprep.subr.bf16.mxu0 0
      %4258 = vmatpush1.bf16.msra.mxu0 0
      %4259 = vmatprep.mubr.bf16.mxu0 0
      %4260 = vmatmul.mubr.bf16.gmra.mrb[0].mxu0 %v4166
      %v4261 = vpop.f32.mrb[0].mxu0
      %v4262 = vadd.f32 0.0, %v4261
      %v4263 = vpop.f32.mrb[0].mxu0
      %v4264 = vadd.f32 0.0, %v4263
      %v4265 = vpop.f32.mrb[0].mxu0
      %v4266 = vpop.f32.mrb[0].mxu0
      %4267 = vdwg.mxu0
      %4268 = vmatprep.subr.bf16.mxu0 %v4184
      %4269 = vmatpush1.bf16.msra.mxu0 %v4181
      %4270 = vmatprep.subr.bf16.mxu0 0
      %4271 = vmatpush1.bf16.msra.mxu0 0
      %4272 = vmatprep.subr.bf16.mxu0 0
      %4273 = vmatpush1.bf16.msra.mxu0 0
      %4274 = vmatprep.subr.bf16.mxu0 0
      %4275 = vmatpush1.bf16.msra.mxu0 0
      %4276 = vmatprep.subr.bf16.mxu0 0
      %4277 = vmatpush1.bf16.msra.mxu0 0
      %4278 = vmatprep.subr.bf16.mxu0 0
      %4279 = vmatpush1.bf16.msra.mxu0 0
      %4280 = vmatprep.subr.bf16.mxu0 0
      %4281 = vmatpush1.bf16.msra.mxu0 0
      %4282 = vmatprep.subr.bf16.mxu0 0
      %4283 = vmatpush1.bf16.msra.mxu0 0
      %4284 = vmatprep.subr.bf16.mxu0 0
      %4285 = vmatpush1.bf16.msra.mxu0 0
      %4286 = vmatprep.subr.bf16.mxu0 0
      %4287 = vmatpush1.bf16.msra.mxu0 0
      %4288 = vmatprep.subr.bf16.mxu0 0
      %4289 = vmatpush1.bf16.msra.mxu0 0
      %4290 = vmatprep.subr.bf16.mxu0 0
      %4291 = vmatpush1.bf16.msra.mxu0 0
      %4292 = vmatprep.subr.bf16.mxu0 0
      %4293 = vmatpush1.bf16.msra.mxu0 0
      %4294 = vmatprep.subr.bf16.mxu0 0
      %4295 = vmatpush1.bf16.msra.mxu0 0
      %4296 = vmatprep.subr.bf16.mxu0 0
      %4297 = vmatpush1.bf16.msra.mxu0 0
      %4298 = vmatprep.subr.bf16.mxu0 0
      %4299 = vmatpush1.bf16.msra.mxu0 0
      %4300 = vmatprep.mubr.bf16.mxu0 0
      %4301 = vmatmul.mubr.bf16.gmra.mrb[0].mxu0 %v4166
      %v4302 = vpop.f32.mrb[0].mxu0
      %v4303 = vadd.f32 0.0, %v4302
      %v4304 = vpop.f32.mrb[0].mxu0
      %v4305 = vadd.f32 0.0, %v4304
      %v4306 = vpop.f32.mrb[0].mxu0
      %v4307 = vpop.f32.mrb[0].mxu0
      %4308 = vdwg.mxu0
      %v4309 = vadd.f32 %v4086, %v4221
      %v4310 = vadd.f32 %v4087, %v4223
      %v4311 = vadd.f32 %v4088, %v4262
      %v4312 = vadd.f32 %v4089, %v4264
      %v4313 = vadd.f32 %v4090, %v4303
      %v4314 = vadd.f32 %v4091, %v4305
      %v4315 = vld [vmem:[#allocation2 + $0x5] sm:$0x7f]
      %s4316 = scalar_lea.vmem %s3, 18
      %v4317 = vld [vmem:[%s4316] sm:$0x1]
      %v4319 = vcombine.high %v4315, %v4315
      %v4321 = vunpack.c.l.s4 1966171168
      %v4322 = vunpack.c.0.s8 %v4321
      %v4323 = vlaneseq
      %v4324 = vshrl.u32 %v4323, 7
      %v4325 = vsub.s32 %v4322, %v4324
      %v4326 = vrot.slane %v4315, %v4325
      %v4328 = vunpack.c.l.s4 1966171168
      %v4329 = vunpack.c.0.s8 %v4328
      %v4330 = vlaneseq
      %v4331 = vshrl.u32 %v4330, 7
      %v4332 = vsub.s32 %v4329, %v4331
      %v4333 = vrot.slane %v4319, %v4332
      %v4334 = vcombine.high %v4326, %v4326
      %v4335 = vcombine.high %v4333, %v4333
      %v4337 = vunpack.c.l.s4 1966171168
      %v4338 = vunpack.c.0.s8 %v4337
      %v4339 = vlaneseq
      %v4340 = vshrl.u32 %v4339, 7
      %v4341 = vsub.s32 %v4338, %v4340
      %v4342 = vrot.slane %v4326, %v4341
      %v4344 = vunpack.c.l.s4 1966171168
      %v4345 = vunpack.c.0.s8 %v4344
      %v4346 = vlaneseq
      %v4347 = vshrl.u32 %v4346, 7
      %v4348 = vsub.s32 %v4345, %v4347
      %v4349 = vrot.slane %v4333, %v4348
      %v4351 = vunpack.c.l.s4 1966171168
      %v4352 = vunpack.c.0.s8 %v4351
      %v4353 = vlaneseq
      %v4354 = vshrl.u32 %v4353, 7
      %v4355 = vsub.s32 %v4352, %v4354
      %v4356 = vrot.slane %v4334, %v4355
      %v4358 = vunpack.c.l.s4 1966171168
      %v4359 = vunpack.c.0.s8 %v4358
      %v4360 = vlaneseq
      %v4361 = vshrl.u32 %v4360, 7
      %v4362 = vsub.s32 %v4359, %v4361
      %v4363 = vrot.slane %v4335, %v4362
      %v4364 = vcombine.high %v4342, %v4342
      %v4365 = vcombine.high %v4349, %v4349
      %v4366 = vcombine.high %v4356, %v4356
      %4367 = vrot.lane.b32.xlu0 %v4342, 120
      %v4368 = vpop.permute.xlu0 %4367
      %4369 = vrot.lane.b32.xlu0 %v4356, 120
      %v4370 = vpop.permute.xlu0 %4369
      %4371 = vrot.lane.b32.xlu0 %v4364, 120
      %v4372 = vpop.permute.xlu0 %4371
      %4373 = vrot.lane.b32.xlu0 %v4366, 120
      %v4374 = vpop.permute.xlu0 %4373
      %4375 = vrot.lane.b32.xlu0 %v4349, 120
      %v4376 = vpop.permute.xlu0 %4375
      %4377 = vrot.lane.b32.xlu0 %v4363, 120
      %v4378 = vpop.permute.xlu0 %4377
      %4379 = vrot.lane.b32.xlu0 %v4365, 120
      %v4380 = vpop.permute.xlu0 %4379
      %vm4381 = vcmask 982016
      %v4382 = vsel %vm4381, %v4368, %v4370
      %v4383 = vsel %vm4381, %v4370, %v4372
      %v4384 = vsel %vm4381, %v4372, %v4374
      %v4385 = vsel %vm4381, %v4374, %v4376
      %v4386 = vsel %vm4381, %v4376, %v4378
      %v4387 = vsel %vm4381, %v4378, %v4380
      %v4389 = vsel %vm407, %v4317, 0
      %v4392 = vand.u32 %v4382, %v413
      %v4395 = vand.u32 %v4383, %v413
      %v4398 = vand.u32 %v4384, %v413
      %v4401 = vand.u32 %v4385, %v413
      %v4404 = vand.u32 %v4386, %v413
      %v4407 = vand.u32 %v4387, %v413
      %4409 = vmatprep.subr.bf16.mxu0 %v4395
      %4410 = vmatpush1.bf16.msra.mxu0 %v4392
      %4411 = vmatprep.subr.bf16.mxu0 0
      %4412 = vmatpush1.bf16.msra.mxu0 0
      %4413 = vmatprep.subr.bf16.mxu0 0
      %4414 = vmatpush1.bf16.msra.mxu0 0
      %4415 = vmatprep.subr.bf16.mxu0 0
      %4416 = vmatpush1.bf16.msra.mxu0 0
      %4417 = vmatprep.subr.bf16.mxu0 0
      %4418 = vmatpush1.bf16.msra.mxu0 0
      %4419 = vmatprep.subr.bf16.mxu0 0
      %4420 = vmatpush1.bf16.msra.mxu0 0
      %4421 = vmatprep.subr.bf16.mxu0 0
      %4422 = vmatpush1.bf16.msra.mxu0 0
      %4423 = vmatprep.subr.bf16.mxu0 0
      %4424 = vmatpush1.bf16.msra.mxu0 0
      %4425 = vmatprep.subr.bf16.mxu0 0
      %4426 = vmatpush1.bf16.msra.mxu0 0
      %4427 = vmatprep.subr.bf16.mxu0 0
      %4428 = vmatpush1.bf16.msra.mxu0 0
      %4429 = vmatprep.subr.bf16.mxu0 0
      %4430 = vmatpush1.bf16.msra.mxu0 0
      %4431 = vmatprep.subr.bf16.mxu0 0
      %4432 = vmatpush1.bf16.msra.mxu0 0
      %4433 = vmatprep.subr.bf16.mxu0 0
      %4434 = vmatpush1.bf16.msra.mxu0 0
      %4435 = vmatprep.subr.bf16.mxu0 0
      %4436 = vmatpush1.bf16.msra.mxu0 0
      %4437 = vmatprep.subr.bf16.mxu0 0
      %4438 = vmatpush1.bf16.msra.mxu0 0
      %4439 = vmatprep.subr.bf16.mxu0 0
      %4440 = vmatpush1.bf16.msra.mxu0 0
      %4441 = vmatprep.mubr.bf16.mxu0 0
      %4442 = vmatmul.mubr.bf16.gmra.mrb[0].mxu0 %v4389
      %v4443 = vpop.f32.mrb[0].mxu0
      %v4444 = vadd.f32 0.0, %v4443
      %v4445 = vpop.f32.mrb[0].mxu0
      %v4446 = vadd.f32 0.0, %v4445
      %v4447 = vpop.f32.mrb[0].mxu0
      %v4448 = vpop.f32.mrb[0].mxu0
      %4449 = vdwg.mxu0
      %4450 = vmatprep.subr.bf16.mxu0 %v4401
      %4451 = vmatpush1.bf16.msra.mxu0 %v4398
      %4452 = vmatprep.subr.bf16.mxu0 0
      %4453 = vmatpush1.bf16.msra.mxu0 0
      %4454 = vmatprep.subr.bf16.mxu0 0
      %4455 = vmatpush1.bf16.msra.mxu0 0
      %4456 = vmatprep.subr.bf16.mxu0 0
      %4457 = vmatpush1.bf16.msra.mxu0 0
      %4458 = vmatprep.subr.bf16.mxu0 0
      %4459 = vmatpush1.bf16.msra.mxu0 0
      %4460 = vmatprep.subr.bf16.mxu0 0
      %4461 = vmatpush1.bf16.msra.mxu0 0
      %4462 = vmatprep.subr.bf16.mxu0 0
      %4463 = vmatpush1.bf16.msra.mxu0 0
      %4464 = vmatprep.subr.bf16.mxu0 0
      %4465 = vmatpush1.bf16.msra.mxu0 0
      %4466 = vmatprep.subr.bf16.mxu0 0
      %4467 = vmatpush1.bf16.msra.mxu0 0
      %4468 = vmatprep.subr.bf16.mxu0 0
      %4469 = vmatpush1.bf16.msra.mxu0 0
      %4470 = vmatprep.subr.bf16.mxu0 0
      %4471 = vmatpush1.bf16.msra.mxu0 0
      %4472 = vmatprep.subr.bf16.mxu0 0
      %4473 = vmatpush1.bf16.msra.mxu0 0
      %4474 = vmatprep.subr.bf16.mxu0 0
      %4475 = vmatpush1.bf16.msra.mxu0 0
      %4476 = vmatprep.subr.bf16.mxu0 0
      %4477 = vmatpush1.bf16.msra.mxu0 0
      %4478 = vmatprep.subr.bf16.mxu0 0
      %4479 = vmatpush1.bf16.msra.mxu0 0
      %4480 = vmatprep.subr.bf16.mxu0 0
      %4481 = vmatpush1.bf16.msra.mxu0 0
      %4482 = vmatprep.mubr.bf16.mxu0 0
      %4483 = vmatmul.mubr.bf16.gmra.mrb[0].mxu0 %v4389
      %v4484 = vpop.f32.mrb[0].mxu0
      %v4485 = vadd.f32 0.0, %v4484
      %v4486 = vpop.f32.mrb[0].mxu0
      %v4487 = vadd.f32 0.0, %v4486
      %v4488 = vpop.f32.mrb[0].mxu0
      %v4489 = vpop.f32.mrb[0].mxu0
      %4490 = vdwg.mxu0
      %4491 = vmatprep.subr.bf16.mxu0 %v4407
      %4492 = vmatpush1.bf16.msra.mxu0 %v4404
      %4493 = vmatprep.subr.bf16.mxu0 0
      %4494 = vmatpush1.bf16.msra.mxu0 0
      %4495 = vmatprep.subr.bf16.mxu0 0
      %4496 = vmatpush1.bf16.msra.mxu0 0
      %4497 = vmatprep.subr.bf16.mxu0 0
      %4498 = vmatpush1.bf16.msra.mxu0 0
      %4499 = vmatprep.subr.bf16.mxu0 0
      %4500 = vmatpush1.bf16.msra.mxu0 0
      %4501 = vmatprep.subr.bf16.mxu0 0
      %4502 = vmatpush1.bf16.msra.mxu0 0
      %4503 = vmatprep.subr.bf16.mxu0 0
      %4504 = vmatpush1.bf16.msra.mxu0 0
      %4505 = vmatprep.subr.bf16.mxu0 0
      %4506 = vmatpush1.bf16.msra.mxu0 0
      %4507 = vmatprep.subr.bf16.mxu0 0
      %4508 = vmatpush1.bf16.msra.mxu0 0
      %4509 = vmatprep.subr.bf16.mxu0 0
      %4510 = vmatpush1.bf16.msra.mxu0 0
      %4511 = vmatprep.subr.bf16.mxu0 0
      %4512 = vmatpush1.bf16.msra.mxu0 0
      %4513 = vmatprep.subr.bf16.mxu0 0
      %4514 = vmatpush1.bf16.msra.mxu0 0
      %4515 = vmatprep.subr.bf16.mxu0 0
      %4516 = vmatpush1.bf16.msra.mxu0 0
      %4517 = vmatprep.subr.bf16.mxu0 0
      %4518 = vmatpush1.bf16.msra.mxu0 0
      %4519 = vmatprep.subr.bf16.mxu0 0
      %4520 = vmatpush1.bf16.msra.mxu0 0
      %4521 = vmatprep.subr.bf16.mxu0 0
      %4522 = vmatpush1.bf16.msra.mxu0 0
      %4523 = vmatprep.mubr.bf16.mxu0 0
      %4524 = vmatmul.mubr.bf16.gmra.mrb[0].mxu0 %v4389
      %v4525 = vpop.f32.mrb[0].mxu0
      %v4526 = vadd.f32 0.0, %v4525
      %v4527 = vpop.f32.mrb[0].mxu0
      %v4528 = vadd.f32 0.0, %v4527
      %v4529 = vpop.f32.mrb[0].mxu0
      %v4530 = vpop.f32.mrb[0].mxu0
      %4531 = vdwg.mxu0
      %v4532 = vadd.f32 %v4309, %v4444
      %v4533 = vadd.f32 %v4310, %v4446
      %v4534 = vadd.f32 %v4311, %v4485
      %v4535 = vadd.f32 %v4312, %v4487
      %v4536 = vadd.f32 %v4313, %v4526
      %v4537 = vadd.f32 %v4314, %v4528
      %v4538 = vld [vmem:[#allocation2 + $0x5] sm:$0x7f]
      %s4539 = scalar_lea.vmem %s3, 19
      %v4540 = vld [vmem:[%s4539] sm:$0x1]
      %v4542 = vcombine.high %v4538, %v4538
      %v4544 = vunpack.c.l.s4 1966171168
      %v4545 = vunpack.c.0.s8 %v4544
      %v4546 = vlaneseq
      %v4547 = vshrl.u32 %v4546, 7
      %v4548 = vsub.s32 %v4545, %v4547
      %v4549 = vrot.slane %v4538, %v4548
      %v4551 = vunpack.c.l.s4 1966171168
      %v4552 = vunpack.c.0.s8 %v4551
      %v4553 = vlaneseq
      %v4554 = vshrl.u32 %v4553, 7
      %v4555 = vsub.s32 %v4552, %v4554
      %v4556 = vrot.slane %v4542, %v4555
      %v4557 = vcombine.high %v4549, %v4549
      %v4558 = vcombine.high %v4556, %v4556
      %v4560 = vunpack.c.l.s4 1966171168
      %v4561 = vunpack.c.0.s8 %v4560
      %v4562 = vlaneseq
      %v4563 = vshrl.u32 %v4562, 7
      %v4564 = vsub.s32 %v4561, %v4563
      %v4565 = vrot.slane %v4549, %v4564
      %v4567 = vunpack.c.l.s4 1966171168
      %v4568 = vunpack.c.0.s8 %v4567
      %v4569 = vlaneseq
      %v4570 = vshrl.u32 %v4569, 7
      %v4571 = vsub.s32 %v4568, %v4570
      %v4572 = vrot.slane %v4556, %v4571
      %v4574 = vunpack.c.l.s4 1966171168
      %v4575 = vunpack.c.0.s8 %v4574
      %v4576 = vlaneseq
      %v4577 = vshrl.u32 %v4576, 7
      %v4578 = vsub.s32 %v4575, %v4577
      %v4579 = vrot.slane %v4557, %v4578
      %v4581 = vunpack.c.l.s4 1966171168
      %v4582 = vunpack.c.0.s8 %v4581
      %v4583 = vlaneseq
      %v4584 = vshrl.u32 %v4583, 7
      %v4585 = vsub.s32 %v4582, %v4584
      %v4586 = vrot.slane %v4558, %v4585
      %v4587 = vcombine.high %v4565, %v4565
      %v4588 = vcombine.high %v4572, %v4572
      %v4589 = vcombine.high %v4579, %v4579
      %4590 = vrot.lane.b32.xlu0 %v4565, 119
      %v4591 = vpop.permute.xlu0 %4590
      %4592 = vrot.lane.b32.xlu0 %v4579, 119
      %v4593 = vpop.permute.xlu0 %4592
      %4594 = vrot.lane.b32.xlu0 %v4587, 119
      %v4595 = vpop.permute.xlu0 %4594
      %4596 = vrot.lane.b32.xlu0 %v4589, 119
      %v4597 = vpop.permute.xlu0 %4596
      %4598 = vrot.lane.b32.xlu0 %v4572, 119
      %v4599 = vpop.permute.xlu0 %4598
      %4600 = vrot.lane.b32.xlu0 %v4586, 119
      %v4601 = vpop.permute.xlu0 %4600
      %4602 = vrot.lane.b32.xlu0 %v4588, 119
      %v4603 = vpop.permute.xlu0 %4602
      %vm4604 = vcmask 973824
      %v4605 = vsel %vm4604, %v4591, %v4593
      %v4606 = vsel %vm4604, %v4593, %v4595
      %v4607 = vsel %vm4604, %v4595, %v4597
      %v4608 = vsel %vm4604, %v4597, %v4599
      %v4609 = vsel %vm4604, %v4599, %v4601
      %v4610 = vsel %vm4604, %v4601, %v4603
      %v4612 = vsel %vm407, %v4540, 0
      %v4615 = vand.u32 %v4605, %v413
      %v4618 = vand.u32 %v4606, %v413
      %v4621 = vand.u32 %v4607, %v413
      %v4624 = vand.u32 %v4608, %v413
      %v4627 = vand.u32 %v4609, %v413
      %v4630 = vand.u32 %v4610, %v413
      %4632 = vmatprep.subr.bf16.mxu0 %v4618
      %4633 = vmatpush1.bf16.msra.mxu0 %v4615
      %4634 = vmatprep.subr.bf16.mxu0 0
      %4635 = vmatpush1.bf16.msra.mxu0 0
      %4636 = vmatprep.subr.bf16.mxu0 0
      %4637 = vmatpush1.bf16.msra.mxu0 0
      %4638 = vmatprep.subr.bf16.mxu0 0
      %4639 = vmatpush1.bf16.msra.mxu0 0
      %4640 = vmatprep.subr.bf16.mxu0 0
      %4641 = vmatpush1.bf16.msra.mxu0 0
      %4642 = vmatprep.subr.bf16.mxu0 0
      %4643 = vmatpush1.bf16.msra.mxu0 0
      %4644 = vmatprep.subr.bf16.mxu0 0
      %4645 = vmatpush1.bf16.msra.mxu0 0
      %4646 = vmatprep.subr.bf16.mxu0 0
      %4647 = vmatpush1.bf16.msra.mxu0 0
      %4648 = vmatprep.subr.bf16.mxu0 0
      %4649 = vmatpush1.bf16.msra.mxu0 0
      %4650 = vmatprep.subr.bf16.mxu0 0
      %4651 = vmatpush1.bf16.msra.mxu0 0
      %4652 = vmatprep.subr.bf16.mxu0 0
      %4653 = vmatpush1.bf16.msra.mxu0 0
      %4654 = vmatprep.subr.bf16.mxu0 0
      %4655 = vmatpush1.bf16.msra.mxu0 0
      %4656 = vmatprep.subr.bf16.mxu0 0
      %4657 = vmatpush1.bf16.msra.mxu0 0
      %4658 = vmatprep.subr.bf16.mxu0 0
      %4659 = vmatpush1.bf16.msra.mxu0 0
      %4660 = vmatprep.subr.bf16.mxu0 0
      %4661 = vmatpush1.bf16.msra.mxu0 0
      %4662 = vmatprep.subr.bf16.mxu0 0
      %4663 = vmatpush1.bf16.msra.mxu0 0
      %4664 = vmatprep.mubr.bf16.mxu0 0
      %4665 = vmatmul.mubr.bf16.gmra.mrb[0].mxu0 %v4612
      %v4666 = vpop.f32.mrb[0].mxu0
      %v4667 = vadd.f32 0.0, %v4666
      %v4668 = vpop.f32.mrb[0].mxu0
      %v4669 = vadd.f32 0.0, %v4668
      %v4670 = vpop.f32.mrb[0].mxu0
      %v4671 = vpop.f32.mrb[0].mxu0
      %4672 = vdwg.mxu0
      %4673 = vmatprep.subr.bf16.mxu0 %v4624
      %4674 = vmatpush1.bf16.msra.mxu0 %v4621
      %4675 = vmatprep.subr.bf16.mxu0 0
      %4676 = vmatpush1.bf16.msra.mxu0 0
      %4677 = vmatprep.subr.bf16.mxu0 0
      %4678 = vmatpush1.bf16.msra.mxu0 0
      %4679 = vmatprep.subr.bf16.mxu0 0
      %4680 = vmatpush1.bf16.msra.mxu0 0
      %4681 = vmatprep.subr.bf16.mxu0 0
      %4682 = vmatpush1.bf16.msra.mxu0 0
      %4683 = vmatprep.subr.bf16.mxu0 0
      %4684 = vmatpush1.bf16.msra.mxu0 0
      %4685 = vmatprep.subr.bf16.mxu0 0
      %4686 = vmatpush1.bf16.msra.mxu0 0
      %4687 = vmatprep.subr.bf16.mxu0 0
      %4688 = vmatpush1.bf16.msra.mxu0 0
      %4689 = vmatprep.subr.bf16.mxu0 0
      %4690 = vmatpush1.bf16.msra.mxu0 0
      %4691 = vmatprep.subr.bf16.mxu0 0
      %4692 = vmatpush1.bf16.msra.mxu0 0
      %4693 = vmatprep.subr.bf16.mxu0 0
      %4694 = vmatpush1.bf16.msra.mxu0 0
      %4695 = vmatprep.subr.bf16.mxu0 0
      %4696 = vmatpush1.bf16.msra.mxu0 0
      %4697 = vmatprep.subr.bf16.mxu0 0
      %4698 = vmatpush1.bf16.msra.mxu0 0
      %4699 = vmatprep.subr.bf16.mxu0 0
      %4700 = vmatpush1.bf16.msra.mxu0 0
      %4701 = vmatprep.subr.bf16.mxu0 0
      %4702 = vmatpush1.bf16.msra.mxu0 0
      %4703 = vmatprep.subr.bf16.mxu0 0
      %4704 = vmatpush1.bf16.msra.mxu0 0
      %4705 = vmatprep.mubr.bf16.mxu0 0
      %4706 = vmatmul.mubr.bf16.gmra.mrb[0].mxu0 %v4612
      %v4707 = vpop.f32.mrb[0].mxu0
      %v4708 = vadd.f32 0.0, %v4707
      %v4709 = vpop.f32.mrb[0].mxu0
      %v4710 = vadd.f32 0.0, %v4709
      %v4711 = vpop.f32.mrb[0].mxu0
      %v4712 = vpop.f32.mrb[0].mxu0
      %4713 = vdwg.mxu0
      %4714 = vmatprep.subr.bf16.mxu0 %v4630
      %4715 = vmatpush1.bf16.msra.mxu0 %v4627
      %4716 = vmatprep.subr.bf16.mxu0 0
      %4717 = vmatpush1.bf16.msra.mxu0 0
      %4718 = vmatprep.subr.bf16.mxu0 0
      %4719 = vmatpush1.bf16.msra.mxu0 0
      %4720 = vmatprep.subr.bf16.mxu0 0
      %4721 = vmatpush1.bf16.msra.mxu0 0
      %4722 = vmatprep.subr.bf16.mxu0 0
      %4723 = vmatpush1.bf16.msra.mxu0 0
      %4724 = vmatprep.subr.bf16.mxu0 0
      %4725 = vmatpush1.bf16.msra.mxu0 0
      %4726 = vmatprep.subr.bf16.mxu0 0
      %4727 = vmatpush1.bf16.msra.mxu0 0
      %4728 = vmatprep.subr.bf16.mxu0 0
      %4729 = vmatpush1.bf16.msra.mxu0 0
      %4730 = vmatprep.subr.bf16.mxu0 0
      %4731 = vmatpush1.bf16.msra.mxu0 0
      %4732 = vmatprep.subr.bf16.mxu0 0
      %4733 = vmatpush1.bf16.msra.mxu0 0
      %4734 = vmatprep.subr.bf16.mxu0 0
      %4735 = vmatpush1.bf16.msra.mxu0 0
      %4736 = vmatprep.subr.bf16.mxu0 0
      %4737 = vmatpush1.bf16.msra.mxu0 0
      %4738 = vmatprep.subr.bf16.mxu0 0
      %4739 = vmatpush1.bf16.msra.mxu0 0
      %4740 = vmatprep.subr.bf16.mxu0 0
      %4741 = vmatpush1.bf16.msra.mxu0 0
      %4742 = vmatprep.subr.bf16.mxu0 0
      %4743 = vmatpush1.bf16.msra.mxu0 0
      %4744 = vmatprep.subr.bf16.mxu0 0
      %4745 = vmatpush1.bf16.msra.mxu0 0
      %4746 = vmatprep.mubr.bf16.mxu0 0
      %4747 = vmatmul.mubr.bf16.gmra.mrb[0].mxu0 %v4612
      %v4748 = vpop.f32.mrb[0].mxu0
      %v4749 = vadd.f32 0.0, %v4748
      %v4750 = vpop.f32.mrb[0].mxu0
      %v4751 = vadd.f32 0.0, %v4750
      %v4752 = vpop.f32.mrb[0].mxu0
      %v4753 = vpop.f32.mrb[0].mxu0
      %4754 = vdwg.mxu0
      %v4755 = vadd.f32 %v4532, %v4667
      %v4756 = vadd.f32 %v4533, %v4669
      %v4757 = vadd.f32 %v4534, %v4708
      %v4758 = vadd.f32 %v4535, %v4710
      %v4759 = vadd.f32 %v4536, %v4749
      %v4760 = vadd.f32 %v4537, %v4751
      %v4761 = vld [vmem:[#allocation2 + $0x5] sm:$0x7f]
      %s4762 = scalar_lea.vmem %s3, 20
      %v4763 = vld [vmem:[%s4762] sm:$0x1]
      %v4765 = vcombine.high %v4761, %v4761
      %v4767 = vunpack.c.l.s4 1966171168
      %v4768 = vunpack.c.0.s8 %v4767
      %v4769 = vlaneseq
      %v4770 = vshrl.u32 %v4769, 7
      %v4771 = vsub.s32 %v4768, %v4770
      %v4772 = vrot.slane %v4761, %v4771
      %v4774 = vunpack.c.l.s4 1966171168
      %v4775 = vunpack.c.0.s8 %v4774
      %v4776 = vlaneseq
      %v4777 = vshrl.u32 %v4776, 7
      %v4778 = vsub.s32 %v4775, %v4777
      %v4779 = vrot.slane %v4765, %v4778
      %v4780 = vcombine.high %v4772, %v4772
      %v4781 = vcombine.high %v4779, %v4779
      %v4783 = vunpack.c.l.s4 1966171168
      %v4784 = vunpack.c.0.s8 %v4783
      %v4785 = vlaneseq
      %v4786 = vshrl.u32 %v4785, 7
      %v4787 = vsub.s32 %v4784, %v4786
      %v4788 = vrot.slane %v4772, %v4787
      %v4790 = vunpack.c.l.s4 1966171168
      %v4791 = vunpack.c.0.s8 %v4790
      %v4792 = vlaneseq
      %v4793 = vshrl.u32 %v4792, 7
      %v4794 = vsub.s32 %v4791, %v4793
      %v4795 = vrot.slane %v4779, %v4794
      %v4797 = vunpack.c.l.s4 1966171168
      %v4798 = vunpack.c.0.s8 %v4797
      %v4799 = vlaneseq
      %v4800 = vshrl.u32 %v4799, 7
      %v4801 = vsub.s32 %v4798, %v4800
      %v4802 = vrot.slane %v4780, %v4801
      %v4804 = vunpack.c.l.s4 1966171168
      %v4805 = vunpack.c.0.s8 %v4804
      %v4806 = vlaneseq
      %v4807 = vshrl.u32 %v4806, 7
      %v4808 = vsub.s32 %v4805, %v4807
      %v4809 = vrot.slane %v4781, %v4808
      %v4810 = vcombine.high %v4788, %v4788
      %v4811 = vcombine.high %v4795, %v4795
      %v4812 = vcombine.high %v4802, %v4802
      %4813 = vrot.lane.b32.xlu0 %v4788, 118
      %v4814 = vpop.permute.xlu0 %4813
      %4815 = vrot.lane.b32.xlu0 %v4802, 118
      %v4816 = vpop.permute.xlu0 %4815
      %4817 = vrot.lane.b32.xlu0 %v4810, 118
      %v4818 = vpop.permute.xlu0 %4817
      %4819 = vrot.lane.b32.xlu0 %v4812, 118
      %v4820 = vpop.permute.xlu0 %4819
      %4821 = vrot.lane.b32.xlu0 %v4795, 118
      %v4822 = vpop.permute.xlu0 %4821
      %4823 = vrot.lane.b32.xlu0 %v4809, 118
      %v4824 = vpop.permute.xlu0 %4823
      %4825 = vrot.lane.b32.xlu0 %v4811, 118
      %v4826 = vpop.permute.xlu0 %4825
      %vm4827 = vcmask 965632
      %v4828 = vsel %vm4827, %v4814, %v4816
      %v4829 = vsel %vm4827, %v4816, %v4818
      %v4830 = vsel %vm4827, %v4818, %v4820
      %v4831 = vsel %vm4827, %v4820, %v4822
      %v4832 = vsel %vm4827, %v4822, %v4824
      %v4833 = vsel %vm4827, %v4824, %v4826
      %v4835 = vsel %vm407, %v4763, 0
      %v4838 = vand.u32 %v4828, %v413
      %v4841 = vand.u32 %v4829, %v413
      %v4844 = vand.u32 %v4830, %v413
      %v4847 = vand.u32 %v4831, %v413
      %v4850 = vand.u32 %v4832, %v413
      %v4853 = vand.u32 %v4833, %v413
      %4855 = vmatprep.subr.bf16.mxu0 %v4841
      %4856 = vmatpush1.bf16.msra.mxu0 %v4838
      %4857 = vmatprep.subr.bf16.mxu0 0
      %4858 = vmatpush1.bf16.msra.mxu0 0
      %4859 = vmatprep.subr.bf16.mxu0 0
      %4860 = vmatpush1.bf16.msra.mxu0 0
      %4861 = vmatprep.subr.bf16.mxu0 0
      %4862 = vmatpush1.bf16.msra.mxu0 0
      %4863 = vmatprep.subr.bf16.mxu0 0
      %4864 = vmatpush1.bf16.msra.mxu0 0
      %4865 = vmatprep.subr.bf16.mxu0 0
      %4866 = vmatpush1.bf16.msra.mxu0 0
      %4867 = vmatprep.subr.bf16.mxu0 0
      %4868 = vmatpush1.bf16.msra.mxu0 0
      %4869 = vmatprep.subr.bf16.mxu0 0
      %4870 = vmatpush1.bf16.msra.mxu0 0
      %4871 = vmatprep.subr.bf16.mxu0 0
      %4872 = vmatpush1.bf16.msra.mxu0 0
      %4873 = vmatprep.subr.bf16.mxu0 0
      %4874 = vmatpush1.bf16.msra.mxu0 0
      %4875 = vmatprep.subr.bf16.mxu0 0
      %4876 = vmatpush1.bf16.msra.mxu0 0
      %4877 = vmatprep.subr.bf16.mxu0 0
      %4878 = vmatpush1.bf16.msra.mxu0 0
      %4879 = vmatprep.subr.bf16.mxu0 0
      %4880 = vmatpush1.bf16.msra.mxu0 0
      %4881 = vmatprep.subr.bf16.mxu0 0
      %4882 = vmatpush1.bf16.msra.mxu0 0
      %4883 = vmatprep.subr.bf16.mxu0 0
      %4884 = vmatpush1.bf16.msra.mxu0 0
      %4885 = vmatprep.subr.bf16.mxu0 0
      %4886 = vmatpush1.bf16.msra.mxu0 0
      %4887 = vmatprep.mubr.bf16.mxu0 0
      %4888 = vmatmul.mubr.bf16.gmra.mrb[0].mxu0 %v4835
      %v4889 = vpop.f32.mrb[0].mxu0
      %v4890 = vadd.f32 0.0, %v4889
      %v4891 = vpop.f32.mrb[0].mxu0
      %v4892 = vadd.f32 0.0, %v4891
      %v4893 = vpop.f32.mrb[0].mxu0
      %v4894 = vpop.f32.mrb[0].mxu0
      %4895 = vdwg.mxu0
      %4896 = vmatprep.subr.bf16.mxu0 %v4847
      %4897 = vmatpush1.bf16.msra.mxu0 %v4844
      %4898 = vmatprep.subr.bf16.mxu0 0
      %4899 = vmatpush1.bf16.msra.mxu0 0
      %4900 = vmatprep.subr.bf16.mxu0 0
      %4901 = vmatpush1.bf16.msra.mxu0 0
      %4902 = vmatprep.subr.bf16.mxu0 0
      %4903 = vmatpush1.bf16.msra.mxu0 0
      %4904 = vmatprep.subr.bf16.mxu0 0
      %4905 = vmatpush1.bf16.msra.mxu0 0
      %4906 = vmatprep.subr.bf16.mxu0 0
      %4907 = vmatpush1.bf16.msra.mxu0 0
      %4908 = vmatprep.subr.bf16.mxu0 0
      %4909 = vmatpush1.bf16.msra.mxu0 0
      %4910 = vmatprep.subr.bf16.mxu0 0
      %4911 = vmatpush1.bf16.msra.mxu0 0
      %4912 = vmatprep.subr.bf16.mxu0 0
      %4913 = vmatpush1.bf16.msra.mxu0 0
      %4914 = vmatprep.subr.bf16.mxu0 0
      %4915 = vmatpush1.bf16.msra.mxu0 0
      %4916 = vmatprep.subr.bf16.mxu0 0
      %4917 = vmatpush1.bf16.msra.mxu0 0
      %4918 = vmatprep.subr.bf16.mxu0 0
      %4919 = vmatpush1.bf16.msra.mxu0 0
      %4920 = vmatprep.subr.bf16.mxu0 0
      %4921 = vmatpush1.bf16.msra.mxu0 0
      %4922 = vmatprep.subr.bf16.mxu0 0
      %4923 = vmatpush1.bf16.msra.mxu0 0
      %4924 = vmatprep.subr.bf16.mxu0 0
      %4925 = vmatpush1.bf16.msra.mxu0 0
      %4926 = vmatprep.subr.bf16.mxu0 0
      %4927 = vmatpush1.bf16.msra.mxu0 0
      %4928 = vmatprep.mubr.bf16.mxu0 0
      %4929 = vmatmul.mubr.bf16.gmra.mrb[0].mxu0 %v4835
      %v4930 = vpop.f32.mrb[0].mxu0
      %v4931 = vadd.f32 0.0, %v4930
      %v4932 = vpop.f32.mrb[0].mxu0
      %v4933 = vadd.f32 0.0, %v4932
      %v4934 = vpop.f32.mrb[0].mxu0
      %v4935 = vpop.f32.mrb[0].mxu0
      %4936 = vdwg.mxu0
      %4937 = vmatprep.subr.bf16.mxu0 %v4853
      %4938 = vmatpush1.bf16.msra.mxu0 %v4850
      %4939 = vmatprep.subr.bf16.mxu0 0
      %4940 = vmatpush1.bf16.msra.mxu0 0
      %4941 = vmatprep.subr.bf16.mxu0 0
      %4942 = vmatpush1.bf16.msra.mxu0 0
      %4943 = vmatprep.subr.bf16.mxu0 0
      %4944 = vmatpush1.bf16.msra.mxu0 0
      %4945 = vmatprep.subr.bf16.mxu0 0
      %4946 = vmatpush1.bf16.msra.mxu0 0
      %4947 = vmatprep.subr.bf16.mxu0 0
      %4948 = vmatpush1.bf16.msra.mxu0 0
      %4949 = vmatprep.subr.bf16.mxu0 0
      %4950 = vmatpush1.bf16.msra.mxu0 0
      %4951 = vmatprep.subr.bf16.mxu0 0
      %4952 = vmatpush1.bf16.msra.mxu0 0
      %4953 = vmatprep.subr.bf16.mxu0 0
      %4954 = vmatpush1.bf16.msra.mxu0 0
      %4955 = vmatprep.subr.bf16.mxu0 0
      %4956 = vmatpush1.bf16.msra.mxu0 0
      %4957 = vmatprep.subr.bf16.mxu0 0
      %4958 = vmatpush1.bf16.msra.mxu0 0
      %4959 = vmatprep.subr.bf16.mxu0 0
      %4960 = vmatpush1.bf16.msra.mxu0 0
      %4961 = vmatprep.subr.bf16.mxu0 0
      %4962 = vmatpush1.bf16.msra.mxu0 0
      %4963 = vmatprep.subr.bf16.mxu0 0
      %4964 = vmatpush1.bf16.msra.mxu0 0
      %4965 = vmatprep.subr.bf16.mxu0 0
      %4966 = vmatpush1.bf16.msra.mxu0 0
      %4967 = vmatprep.subr.bf16.mxu0 0
      %4968 = vmatpush1.bf16.msra.mxu0 0
      %4969 = vmatprep.mubr.bf16.mxu0 0
      %4970 = vmatmul.mubr.bf16.gmra.mrb[0].mxu0 %v4835
      %v4971 = vpop.f32.mrb[0].mxu0
      %v4972 = vadd.f32 0.0, %v4971
      %v4973 = vpop.f32.mrb[0].mxu0
      %v4974 = vadd.f32 0.0, %v4973
      %v4975 = vpop.f32.mrb[0].mxu0
      %v4976 = vpop.f32.mrb[0].mxu0
      %4977 = vdwg.mxu0
      %v4978 = vadd.f32 %v4755, %v4890
      %v4979 = vadd.f32 %v4756, %v4892
      %v4980 = vadd.f32 %v4757, %v4931
      %v4981 = vadd.f32 %v4758, %v4933
      %v4982 = vadd.f32 %v4759, %v4972
      %v4983 = vadd.f32 %v4760, %v4974
      %v4984 = vld [vmem:[#allocation2 + $0x5] sm:$0x7f]
      %s4985 = scalar_lea.vmem %s3, 21
      %v4986 = vld [vmem:[%s4985] sm:$0x1]
      %v4988 = vcombine.high %v4984, %v4984
      %v4990 = vunpack.c.l.s4 1966171168
      %v4991 = vunpack.c.0.s8 %v4990
      %v4992 = vlaneseq
      %v4993 = vshrl.u32 %v4992, 7
      %v4994 = vsub.s32 %v4991, %v4993
      %v4995 = vrot.slane %v4984, %v4994
      %v4997 = vunpack.c.l.s4 1966171168
      %v4998 = vunpack.c.0.s8 %v4997
      %v4999 = vlaneseq
      %v5000 = vshrl.u32 %v4999, 7
      %v5001 = vsub.s32 %v4998, %v5000
      %v5002 = vrot.slane %v4988, %v5001
      %v5003 = vcombine.high %v4995, %v4995
      %v5004 = vcombine.high %v5002, %v5002
      %v5006 = vunpack.c.l.s4 1966171168
      %v5007 = vunpack.c.0.s8 %v5006
      %v5008 = vlaneseq
      %v5009 = vshrl.u32 %v5008, 7
      %v5010 = vsub.s32 %v5007, %v5009
      %v5011 = vrot.slane %v4995, %v5010
      %v5013 = vunpack.c.l.s4 1966171168
      %v5014 = vunpack.c.0.s8 %v5013
      %v5015 = vlaneseq
      %v5016 = vshrl.u32 %v5015, 7
      %v5017 = vsub.s32 %v5014, %v5016
      %v5018 = vrot.slane %v5002, %v5017
      %v5020 = vunpack.c.l.s4 1966171168
      %v5021 = vunpack.c.0.s8 %v5020
      %v5022 = vlaneseq
      %v5023 = vshrl.u32 %v5022, 7
      %v5024 = vsub.s32 %v5021, %v5023
      %v5025 = vrot.slane %v5003, %v5024
      %v5027 = vunpack.c.l.s4 1966171168
      %v5028 = vunpack.c.0.s8 %v5027
      %v5029 = vlaneseq
      %v5030 = vshrl.u32 %v5029, 7
      %v5031 = vsub.s32 %v5028, %v5030
      %v5032 = vrot.slane %v5004, %v5031
      %v5033 = vcombine.high %v5011, %v5011
      %v5034 = vcombine.high %v5018, %v5018
      %v5035 = vcombine.high %v5025, %v5025
      %5036 = vrot.lane.b32.xlu0 %v5011, 102
      %v5037 = vpop.permute.xlu0 %5036
      %5038 = vrot.lane.b32.xlu0 %v5025, 102
      %v5039 = vpop.permute.xlu0 %5038
      %5040 = vrot.lane.b32.xlu0 %v5033, 102
      %v5041 = vpop.permute.xlu0 %5040
      %5042 = vrot.lane.b32.xlu0 %v5035, 102
      %v5043 = vpop.permute.xlu0 %5042
      %5044 = vrot.lane.b32.xlu0 %v5018, 102
      %v5045 = vpop.permute.xlu0 %5044
      %5046 = vrot.lane.b32.xlu0 %v5032, 102
      %v5047 = vpop.permute.xlu0 %5046
      %5048 = vrot.lane.b32.xlu0 %v5034, 102
      %v5049 = vpop.permute.xlu0 %5048
      %vm5050 = vcmask 834560
      %v5051 = vsel %vm5050, %v5037, %v5039
      %v5052 = vsel %vm5050, %v5039, %v5041
      %v5053 = vsel %vm5050, %v5041, %v5043
      %v5054 = vsel %vm5050, %v5043, %v5045
      %v5055 = vsel %vm5050, %v5045, %v5047
      %v5056 = vsel %vm5050, %v5047, %v5049
      %v5058 = vsel %vm407, %v4986, 0
      %v5061 = vand.u32 %v5051, %v413
      %v5064 = vand.u32 %v5052, %v413
      %v5067 = vand.u32 %v5053, %v413
      %v5070 = vand.u32 %v5054, %v413
      %v5073 = vand.u32 %v5055, %v413
      %v5076 = vand.u32 %v5056, %v413
      %5078 = vmatprep.subr.bf16.mxu0 %v5064
      %5079 = vmatpush1.bf16.msra.mxu0 %v5061
      %5080 = vmatprep.subr.bf16.mxu0 0
      %5081 = vmatpush1.bf16.msra.mxu0 0
      %5082 = vmatprep.subr.bf16.mxu0 0
      %5083 = vmatpush1.bf16.msra.mxu0 0
      %5084 = vmatprep.subr.bf16.mxu0 0
      %5085 = vmatpush1.bf16.msra.mxu0 0
      %5086 = vmatprep.subr.bf16.mxu0 0
      %5087 = vmatpush1.bf16.msra.mxu0 0
      %5088 = vmatprep.subr.bf16.mxu0 0
      %5089 = vmatpush1.bf16.msra.mxu0 0
      %5090 = vmatprep.subr.bf16.mxu0 0
      %5091 = vmatpush1.bf16.msra.mxu0 0
      %5092 = vmatprep.subr.bf16.mxu0 0
      %5093 = vmatpush1.bf16.msra.mxu0 0
      %5094 = vmatprep.subr.bf16.mxu0 0
      %5095 = vmatpush1.bf16.msra.mxu0 0
      %5096 = vmatprep.subr.bf16.mxu0 0
      %5097 = vmatpush1.bf16.msra.mxu0 0
      %5098 = vmatprep.subr.bf16.mxu0 0
      %5099 = vmatpush1.bf16.msra.mxu0 0
      %5100 = vmatprep.subr.bf16.mxu0 0
      %5101 = vmatpush1.bf16.msra.mxu0 0
      %5102 = vmatprep.subr.bf16.mxu0 0
      %5103 = vmatpush1.bf16.msra.mxu0 0
      %5104 = vmatprep.subr.bf16.mxu0 0
      %5105 = vmatpush1.bf16.msra.mxu0 0
      %5106 = vmatprep.subr.bf16.mxu0 0
      %5107 = vmatpush1.bf16.msra.mxu0 0
      %5108 = vmatprep.subr.bf16.mxu0 0
      %5109 = vmatpush1.bf16.msra.mxu0 0
      %5110 = vmatprep.mubr.bf16.mxu0 0
      %5111 = vmatmul.mubr.bf16.gmra.mrb[0].mxu0 %v5058
      %v5112 = vpop.f32.mrb[0].mxu0
      %v5113 = vadd.f32 0.0, %v5112
      %v5114 = vpop.f32.mrb[0].mxu0
      %v5115 = vadd.f32 0.0, %v5114
      %v5116 = vpop.f32.mrb[0].mxu0
      %v5117 = vpop.f32.mrb[0].mxu0
      %5118 = vdwg.mxu0
      %5119 = vmatprep.subr.bf16.mxu0 %v5070
      %5120 = vmatpush1.bf16.msra.mxu0 %v5067
      %5121 = vmatprep.subr.bf16.mxu0 0
      %5122 = vmatpush1.bf16.msra.mxu0 0
      %5123 = vmatprep.subr.bf16.mxu0 0
      %5124 = vmatpush1.bf16.msra.mxu0 0
      %5125 = vmatprep.subr.bf16.mxu0 0
      %5126 = vmatpush1.bf16.msra.mxu0 0
      %5127 = vmatprep.subr.bf16.mxu0 0
      %5128 = vmatpush1.bf16.msra.mxu0 0
      %5129 = vmatprep.subr.bf16.mxu0 0
      %5130 = vmatpush1.bf16.msra.mxu0 0
      %5131 = vmatprep.subr.bf16.mxu0 0
      %5132 = vmatpush1.bf16.msra.mxu0 0
      %5133 = vmatprep.subr.bf16.mxu0 0
      %5134 = vmatpush1.bf16.msra.mxu0 0
      %5135 = vmatprep.subr.bf16.mxu0 0
      %5136 = vmatpush1.bf16.msra.mxu0 0
      %5137 = vmatprep.subr.bf16.mxu0 0
      %5138 = vmatpush1.bf16.msra.mxu0 0
      %5139 = vmatprep.subr.bf16.mxu0 0
      %5140 = vmatpush1.bf16.msra.mxu0 0
      %5141 = vmatprep.subr.bf16.mxu0 0
      %5142 = vmatpush1.bf16.msra.mxu0 0
      %5143 = vmatprep.subr.bf16.mxu0 0
      %5144 = vmatpush1.bf16.msra.mxu0 0
      %5145 = vmatprep.subr.bf16.mxu0 0
      %5146 = vmatpush1.bf16.msra.mxu0 0
      %5147 = vmatprep.subr.bf16.mxu0 0
      %5148 = vmatpush1.bf16.msra.mxu0 0
      %5149 = vmatprep.subr.bf16.mxu0 0
      %5150 = vmatpush1.bf16.msra.mxu0 0
      %5151 = vmatprep.mubr.bf16.mxu0 0
      %5152 = vmatmul.mubr.bf16.gmra.mrb[0].mxu0 %v5058
      %v5153 = vpop.f32.mrb[0].mxu0
      %v5154 = vadd.f32 0.0, %v5153
      %v5155 = vpop.f32.mrb[0].mxu0
      %v5156 = vadd.f32 0.0, %v5155
      %v5157 = vpop.f32.mrb[0].mxu0
      %v5158 = vpop.f32.mrb[0].mxu0
      %5159 = vdwg.mxu0
      %5160 = vmatprep.subr.bf16.mxu0 %v5076
      %5161 = vmatpush1.bf16.msra.mxu0 %v5073
      %5162 = vmatprep.subr.bf16.mxu0 0
      %5163 = vmatpush1.bf16.msra.mxu0 0
      %5164 = vmatprep.subr.bf16.mxu0 0
      %5165 = vmatpush1.bf16.msra.mxu0 0
      %5166 = vmatprep.subr.bf16.mxu0 0
      %5167 = vmatpush1.bf16.msra.mxu0 0
      %5168 = vmatprep.subr.bf16.mxu0 0
      %5169 = vmatpush1.bf16.msra.mxu0 0
      %5170 = vmatprep.subr.bf16.mxu0 0
      %5171 = vmatpush1.bf16.msra.mxu0 0
      %5172 = vmatprep.subr.bf16.mxu0 0
      %5173 = vmatpush1.bf16.msra.mxu0 0
      %5174 = vmatprep.subr.bf16.mxu0 0
      %5175 = vmatpush1.bf16.msra.mxu0 0
      %5176 = vmatprep.subr.bf16.mxu0 0
      %5177 = vmatpush1.bf16.msra.mxu0 0
      %5178 = vmatprep.subr.bf16.mxu0 0
      %5179 = vmatpush1.bf16.msra.mxu0 0
      %5180 = vmatprep.subr.bf16.mxu0 0
      %5181 = vmatpush1.bf16.msra.mxu0 0
      %5182 = vmatprep.subr.bf16.mxu0 0
      %5183 = vmatpush1.bf16.msra.mxu0 0
      %5184 = vmatprep.subr.bf16.mxu0 0
      %5185 = vmatpush1.bf16.msra.mxu0 0
      %5186 = vmatprep.subr.bf16.mxu0 0
      %5187 = vmatpush1.bf16.msra.mxu0 0
      %5188 = vmatprep.subr.bf16.mxu0 0
      %5189 = vmatpush1.bf16.msra.mxu0 0
      %5190 = vmatprep.subr.bf16.mxu0 0
      %5191 = vmatpush1.bf16.msra.mxu0 0
      %5192 = vmatprep.mubr.bf16.mxu0 0
      %5193 = vmatmul.mubr.bf16.gmra.mrb[0].mxu0 %v5058
      %v5194 = vpop.f32.mrb[0].mxu0
      %v5195 = vadd.f32 0.0, %v5194
      %v5196 = vpop.f32.mrb[0].mxu0
      %v5197 = vadd.f32 0.0, %v5196
      %v5198 = vpop.f32.mrb[0].mxu0
      %v5199 = vpop.f32.mrb[0].mxu0
      %5200 = vdwg.mxu0
      %v5201 = vadd.f32 %v4978, %v5113
      %v5202 = vadd.f32 %v4979, %v5115
      %v5203 = vadd.f32 %v4980, %v5154
      %v5204 = vadd.f32 %v4981, %v5156
      %v5205 = vadd.f32 %v4982, %v5195
      %v5206 = vadd.f32 %v4983, %v5197
      %v5207 = vld [vmem:[#allocation2 + $0x5] sm:$0x7f]
      %s5208 = scalar_lea.vmem %s3, 22
      %v5209 = vld [vmem:[%s5208] sm:$0x1]
      %v5211 = vcombine.high %v5207, %v5207
      %v5213 = vunpack.c.l.s4 1966171168
      %v5214 = vunpack.c.0.s8 %v5213
      %v5215 = vlaneseq
      %v5216 = vshrl.u32 %v5215, 7
      %v5217 = vsub.s32 %v5214, %v5216
      %v5218 = vrot.slane %v5207, %v5217
      %v5220 = vunpack.c.l.s4 1966171168
      %v5221 = vunpack.c.0.s8 %v5220
      %v5222 = vlaneseq
      %v5223 = vshrl.u32 %v5222, 7
      %v5224 = vsub.s32 %v5221, %v5223
      %v5225 = vrot.slane %v5211, %v5224
      %v5226 = vcombine.high %v5218, %v5218
      %v5227 = vcombine.high %v5225, %v5225
      %v5229 = vunpack.c.l.s4 1966171168
      %v5230 = vunpack.c.0.s8 %v5229
      %v5231 = vlaneseq
      %v5232 = vshrl.u32 %v5231, 7
      %v5233 = vsub.s32 %v5230, %v5232
      %v5234 = vrot.slane %v5218, %v5233
      %v5236 = vunpack.c.l.s4 1966171168
      %v5237 = vunpack.c.0.s8 %v5236
      %v5238 = vlaneseq
      %v5239 = vshrl.u32 %v5238, 7
      %v5240 = vsub.s32 %v5237, %v5239
      %v5241 = vrot.slane %v5225, %v5240
      %v5243 = vunpack.c.l.s4 1966171168
      %v5244 = vunpack.c.0.s8 %v5243
      %v5245 = vlaneseq
      %v5246 = vshrl.u32 %v5245, 7
      %v5247 = vsub.s32 %v5244, %v5246
      %v5248 = vrot.slane %v5226, %v5247
      %v5250 = vunpack.c.l.s4 1966171168
      %v5251 = vunpack.c.0.s8 %v5250
      %v5252 = vlaneseq
      %v5253 = vshrl.u32 %v5252, 7
      %v5254 = vsub.s32 %v5251, %v5253
      %v5255 = vrot.slane %v5227, %v5254
      %v5256 = vcombine.high %v5234, %v5234
      %v5257 = vcombine.high %v5241, %v5241
      %v5258 = vcombine.high %v5248, %v5248
      %5259 = vrot.lane.b32.xlu0 %v5234, 101
      %v5260 = vpop.permute.xlu0 %5259
      %5261 = vrot.lane.b32.xlu0 %v5248, 101
      %v5262 = vpop.permute.xlu0 %5261
      %5263 = vrot.lane.b32.xlu0 %v5256, 101
      %v5264 = vpop.permute.xlu0 %5263
      %5265 = vrot.lane.b32.xlu0 %v5258, 101
      %v5266 = vpop.permute.xlu0 %5265
      %5267 = vrot.lane.b32.xlu0 %v5241, 101
      %v5268 = vpop.permute.xlu0 %5267
      %5269 = vrot.lane.b32.xlu0 %v5255, 101
      %v5270 = vpop.permute.xlu0 %5269
      %5271 = vrot.lane.b32.xlu0 %v5257, 101
      %v5272 = vpop.permute.xlu0 %5271
      %vm5273 = vcmask 826368
      %v5274 = vsel %vm5273, %v5260, %v5262
      %v5275 = vsel %vm5273, %v5262, %v5264
      %v5276 = vsel %vm5273, %v5264, %v5266
      %v5277 = vsel %vm5273, %v5266, %v5268
      %v5278 = vsel %vm5273, %v5268, %v5270
      %v5279 = vsel %vm5273, %v5270, %v5272
      %v5281 = vsel %vm407, %v5209, 0
      %v5284 = vand.u32 %v5274, %v413
      %v5287 = vand.u32 %v5275, %v413
      %v5290 = vand.u32 %v5276, %v413
      %v5293 = vand.u32 %v5277, %v413
      %v5296 = vand.u32 %v5278, %v413
      %v5299 = vand.u32 %v5279, %v413
      %5301 = vmatprep.subr.bf16.mxu0 %v5287
      %5302 = vmatpush1.bf16.msra.mxu0 %v5284
      %5303 = vmatprep.subr.bf16.mxu0 0
      %5304 = vmatpush1.bf16.msra.mxu0 0
      %5305 = vmatprep.subr.bf16.mxu0 0
      %5306 = vmatpush1.bf16.msra.mxu0 0
      %5307 = vmatprep.subr.bf16.mxu0 0
      %5308 = vmatpush1.bf16.msra.mxu0 0
      %5309 = vmatprep.subr.bf16.mxu0 0
      %5310 = vmatpush1.bf16.msra.mxu0 0
      %5311 = vmatprep.subr.bf16.mxu0 0
      %5312 = vmatpush1.bf16.msra.mxu0 0
      %5313 = vmatprep.subr.bf16.mxu0 0
      %5314 = vmatpush1.bf16.msra.mxu0 0
      %5315 = vmatprep.subr.bf16.mxu0 0
      %5316 = vmatpush1.bf16.msra.mxu0 0
      %5317 = vmatprep.subr.bf16.mxu0 0
      %5318 = vmatpush1.bf16.msra.mxu0 0
      %5319 = vmatprep.subr.bf16.mxu0 0
      %5320 = vmatpush1.bf16.msra.mxu0 0
      %5321 = vmatprep.subr.bf16.mxu0 0
      %5322 = vmatpush1.bf16.msra.mxu0 0
      %5323 = vmatprep.subr.bf16.mxu0 0
      %5324 = vmatpush1.bf16.msra.mxu0 0
      %5325 = vmatprep.subr.bf16.mxu0 0
      %5326 = vmatpush1.bf16.msra.mxu0 0
      %5327 = vmatprep.subr.bf16.mxu0 0
      %5328 = vmatpush1.bf16.msra.mxu0 0
      %5329 = vmatprep.subr.bf16.mxu0 0
      %5330 = vmatpush1.bf16.msra.mxu0 0
      %5331 = vmatprep.subr.bf16.mxu0 0
      %5332 = vmatpush1.bf16.msra.mxu0 0
      %5333 = vmatprep.mubr.bf16.mxu0 0
      %5334 = vmatmul.mubr.bf16.gmra.mrb[0].mxu0 %v5281
      %v5335 = vpop.f32.mrb[0].mxu0
      %v5336 = vadd.f32 0.0, %v5335
      %v5337 = vpop.f32.mrb[0].mxu0
      %v5338 = vadd.f32 0.0, %v5337
      %v5339 = vpop.f32.mrb[0].mxu0
      %v5340 = vpop.f32.mrb[0].mxu0
      %5341 = vdwg.mxu0
      %5342 = vmatprep.subr.bf16.mxu0 %v5293
      %5343 = vmatpush1.bf16.msra.mxu0 %v5290
      %5344 = vmatprep.subr.bf16.mxu0 0
      %5345 = vmatpush1.bf16.msra.mxu0 0
      %5346 = vmatprep.subr.bf16.mxu0 0
      %5347 = vmatpush1.bf16.msra.mxu0 0
      %5348 = vmatprep.subr.bf16.mxu0 0
      %5349 = vmatpush1.bf16.msra.mxu0 0
      %5350 = vmatprep.subr.bf16.mxu0 0
      %5351 = vmatpush1.bf16.msra.mxu0 0
      %5352 = vmatprep.subr.bf16.mxu0 0
      %5353 = vmatpush1.bf16.msra.mxu0 0
      %5354 = vmatprep.subr.bf16.mxu0 0
      %5355 = vmatpush1.bf16.msra.mxu0 0
      %5356 = vmatprep.subr.bf16.mxu0 0
      %5357 = vmatpush1.bf16.msra.mxu0 0
      %5358 = vmatprep.subr.bf16.mxu0 0
      %5359 = vmatpush1.bf16.msra.mxu0 0
      %5360 = vmatprep.subr.bf16.mxu0 0
      %5361 = vmatpush1.bf16.msra.mxu0 0
      %5362 = vmatprep.subr.bf16.mxu0 0
      %5363 = vmatpush1.bf16.msra.mxu0 0
      %5364 = vmatprep.subr.bf16.mxu0 0
      %5365 = vmatpush1.bf16.msra.mxu0 0
      %5366 = vmatprep.subr.bf16.mxu0 0
      %5367 = vmatpush1.bf16.msra.mxu0 0
      %5368 = vmatprep.subr.bf16.mxu0 0
      %5369 = vmatpush1.bf16.msra.mxu0 0
      %5370 = vmatprep.subr.bf16.mxu0 0
      %5371 = vmatpush1.bf16.msra.mxu0 0
      %5372 = vmatprep.subr.bf16.mxu0 0
      %5373 = vmatpush1.bf16.msra.mxu0 0
      %5374 = vmatprep.mubr.bf16.mxu0 0
      %5375 = vmatmul.mubr.bf16.gmra.mrb[0].mxu0 %v5281
      %v5376 = vpop.f32.mrb[0].mxu0
      %v5377 = vadd.f32 0.0, %v5376
      %v5378 = vpop.f32.mrb[0].mxu0
      %v5379 = vadd.f32 0.0, %v5378
      %v5380 = vpop.f32.mrb[0].mxu0
      %v5381 = vpop.f32.mrb[0].mxu0
      %5382 = vdwg.mxu0
      %5383 = vmatprep.subr.bf16.mxu0 %v5299
      %5384 = vmatpush1.bf16.msra.mxu0 %v5296
      %5385 = vmatprep.subr.bf16.mxu0 0
      %5386 = vmatpush1.bf16.msra.mxu0 0
      %5387 = vmatprep.subr.bf16.mxu0 0
      %5388 = vmatpush1.bf16.msra.mxu0 0
      %5389 = vmatprep.subr.bf16.mxu0 0
      %5390 = vmatpush1.bf16.msra.mxu0 0
      %5391 = vmatprep.subr.bf16.mxu0 0
      %5392 = vmatpush1.bf16.msra.mxu0 0
      %5393 = vmatprep.subr.bf16.mxu0 0
      %5394 = vmatpush1.bf16.msra.mxu0 0
      %5395 = vmatprep.subr.bf16.mxu0 0
      %5396 = vmatpush1.bf16.msra.mxu0 0
      %5397 = vmatprep.subr.bf16.mxu0 0
      %5398 = vmatpush1.bf16.msra.mxu0 0
      %5399 = vmatprep.subr.bf16.mxu0 0
      %5400 = vmatpush1.bf16.msra.mxu0 0
      %5401 = vmatprep.subr.bf16.mxu0 0
      %5402 = vmatpush1.bf16.msra.mxu0 0
      %5403 = vmatprep.subr.bf16.mxu0 0
      %5404 = vmatpush1.bf16.msra.mxu0 0
      %5405 = vmatprep.subr.bf16.mxu0 0
      %5406 = vmatpush1.bf16.msra.mxu0 0
      %5407 = vmatprep.subr.bf16.mxu0 0
      %5408 = vmatpush1.bf16.msra.mxu0 0
      %5409 = vmatprep.subr.bf16.mxu0 0
      %5410 = vmatpush1.bf16.msra.mxu0 0
      %5411 = vmatprep.subr.bf16.mxu0 0
      %5412 = vmatpush1.bf16.msra.mxu0 0
      %5413 = vmatprep.subr.bf16.mxu0 0
      %5414 = vmatpush1.bf16.msra.mxu0 0
      %5415 = vmatprep.mubr.bf16.mxu0 0
      %5416 = vmatmul.mubr.bf16.gmra.mrb[0].mxu0 %v5281
      %v5417 = vpop.f32.mrb[0].mxu0
      %v5418 = vadd.f32 0.0, %v5417
      %v5419 = vpop.f32.mrb[0].mxu0
      %v5420 = vadd.f32 0.0, %v5419
      %v5421 = vpop.f32.mrb[0].mxu0
      %v5422 = vpop.f32.mrb[0].mxu0
      %5423 = vdwg.mxu0
      %v5424 = vadd.f32 %v5201, %v5336
      %v5425 = vadd.f32 %v5202, %v5338
      %v5426 = vadd.f32 %v5203, %v5377
      %v5427 = vadd.f32 %v5204, %v5379
      %v5428 = vadd.f32 %v5205, %v5418
      %v5429 = vadd.f32 %v5206, %v5420
      %v5430 = vld [vmem:[#allocation2 + $0x5] sm:$0x7f]
      %s5431 = scalar_lea.vmem %s3, 23
      %v5432 = vld [vmem:[%s5431] sm:$0x1]
      %v5434 = vcombine.high %v5430, %v5430
      %v5436 = vunpack.c.l.s4 1966171168
      %v5437 = vunpack.c.0.s8 %v5436
      %v5438 = vlaneseq
      %v5439 = vshrl.u32 %v5438, 7
      %v5440 = vsub.s32 %v5437, %v5439
      %v5441 = vrot.slane %v5430, %v5440
      %v5443 = vunpack.c.l.s4 1966171168
      %v5444 = vunpack.c.0.s8 %v5443
      %v5445 = vlaneseq
      %v5446 = vshrl.u32 %v5445, 7
      %v5447 = vsub.s32 %v5444, %v5446
      %v5448 = vrot.slane %v5434, %v5447
      %v5449 = vcombine.high %v5441, %v5441
      %v5450 = vcombine.high %v5448, %v5448
      %v5452 = vunpack.c.l.s4 1966171168
      %v5453 = vunpack.c.0.s8 %v5452
      %v5454 = vlaneseq
      %v5455 = vshrl.u32 %v5454, 7
      %v5456 = vsub.s32 %v5453, %v5455
      %v5457 = vrot.slane %v5441, %v5456
      %v5459 = vunpack.c.l.s4 1966171168
      %v5460 = vunpack.c.0.s8 %v5459
      %v5461 = vlaneseq
      %v5462 = vshrl.u32 %v5461, 7
      %v5463 = vsub.s32 %v5460, %v5462
      %v5464 = vrot.slane %v5448, %v5463
      %v5466 = vunpack.c.l.s4 1966171168
      %v5467 = vunpack.c.0.s8 %v5466
      %v5468 = vlaneseq
      %v5469 = vshrl.u32 %v5468, 7
      %v5470 = vsub.s32 %v5467, %v5469
      %v5471 = vrot.slane %v5449, %v5470
      %v5473 = vunpack.c.l.s4 1966171168
      %v5474 = vunpack.c.0.s8 %v5473
      %v5475 = vlaneseq
      %v5476 = vshrl.u32 %v5475, 7
      %v5477 = vsub.s32 %v5474, %v5476
      %v5478 = vrot.slane %v5450, %v5477
      %v5479 = vcombine.high %v5457, %v5457
      %v5480 = vcombine.high %v5464, %v5464
      %v5481 = vcombine.high %v5471, %v5471
      %5482 = vrot.lane.b32.xlu0 %v5457, 100
      %v5483 = vpop.permute.xlu0 %5482
      %5484 = vrot.lane.b32.xlu0 %v5471, 100
      %v5485 = vpop.permute.xlu0 %5484
      %5486 = vrot.lane.b32.xlu0 %v5479, 100
      %v5487 = vpop.permute.xlu0 %5486
      %5488 = vrot.lane.b32.xlu0 %v5481, 100
      %v5489 = vpop.permute.xlu0 %5488
      %5490 = vrot.lane.b32.xlu0 %v5464, 100
      %v5491 = vpop.permute.xlu0 %5490
      %5492 = vrot.lane.b32.xlu0 %v5478, 100
      %v5493 = vpop.permute.xlu0 %5492
      %5494 = vrot.lane.b32.xlu0 %v5480, 100
      %v5495 = vpop.permute.xlu0 %5494
      %vm5496 = vcmask 818176
      %v5497 = vsel %vm5496, %v5483, %v5485
      %v5498 = vsel %vm5496, %v5485, %v5487
      %v5499 = vsel %vm5496, %v5487, %v5489
      %v5500 = vsel %vm5496, %v5489, %v5491
      %v5501 = vsel %vm5496, %v5491, %v5493
      %v5502 = vsel %vm5496, %v5493, %v5495
      %v5504 = vsel %vm407, %v5432, 0
      %v5507 = vand.u32 %v5497, %v413
      %v5510 = vand.u32 %v5498, %v413
      %v5513 = vand.u32 %v5499, %v413
      %v5516 = vand.u32 %v5500, %v413
      %v5519 = vand.u32 %v5501, %v413
      %v5522 = vand.u32 %v5502, %v413
      %5524 = vmatprep.subr.bf16.mxu0 %v5510
      %5525 = vmatpush1.bf16.msra.mxu0 %v5507
      %5526 = vmatprep.subr.bf16.mxu0 0
      %5527 = vmatpush1.bf16.msra.mxu0 0
      %5528 = vmatprep.subr.bf16.mxu0 0
      %5529 = vmatpush1.bf16.msra.mxu0 0
      %5530 = vmatprep.subr.bf16.mxu0 0
      %5531 = vmatpush1.bf16.msra.mxu0 0
      %5532 = vmatprep.subr.bf16.mxu0 0
      %5533 = vmatpush1.bf16.msra.mxu0 0
      %5534 = vmatprep.subr.bf16.mxu0 0
      %5535 = vmatpush1.bf16.msra.mxu0 0
      %5536 = vmatprep.subr.bf16.mxu0 0
      %5537 = vmatpush1.bf16.msra.mxu0 0
      %5538 = vmatprep.subr.bf16.mxu0 0
      %5539 = vmatpush1.bf16.msra.mxu0 0
      %5540 = vmatprep.subr.bf16.mxu0 0
      %5541 = vmatpush1.bf16.msra.mxu0 0
      %5542 = vmatprep.subr.bf16.mxu0 0
      %5543 = vmatpush1.bf16.msra.mxu0 0
      %5544 = vmatprep.subr.bf16.mxu0 0
      %5545 = vmatpush1.bf16.msra.mxu0 0
      %5546 = vmatprep.subr.bf16.mxu0 0
      %5547 = vmatpush1.bf16.msra.mxu0 0
      %5548 = vmatprep.subr.bf16.mxu0 0
      %5549 = vmatpush1.bf16.msra.mxu0 0
      %5550 = vmatprep.subr.bf16.mxu0 0
      %5551 = vmatpush1.bf16.msra.mxu0 0
      %5552 = vmatprep.subr.bf16.mxu0 0
      %5553 = vmatpush1.bf16.msra.mxu0 0
      %5554 = vmatprep.subr.bf16.mxu0 0
      %5555 = vmatpush1.bf16.msra.mxu0 0
      %5556 = vmatprep.mubr.bf16.mxu0 0
      %5557 = vmatmul.mubr.bf16.gmra.mrb[0].mxu0 %v5504
      %v5558 = vpop.f32.mrb[0].mxu0
      %v5559 = vadd.f32 0.0, %v5558
      %v5560 = vpop.f32.mrb[0].mxu0
      %v5561 = vadd.f32 0.0, %v5560
      %v5562 = vpop.f32.mrb[0].mxu0
      %v5563 = vpop.f32.mrb[0].mxu0
      %5564 = vdwg.mxu0
      %5565 = vmatprep.subr.bf16.mxu0 %v5516
      %5566 = vmatpush1.bf16.msra.mxu0 %v5513
      %5567 = vmatprep.subr.bf16.mxu0 0
      %5568 = vmatpush1.bf16.msra.mxu0 0
      %5569 = vmatprep.subr.bf16.mxu0 0
      %5570 = vmatpush1.bf16.msra.mxu0 0
      %5571 = vmatprep.subr.bf16.mxu0 0
      %5572 = vmatpush1.bf16.msra.mxu0 0
      %5573 = vmatprep.subr.bf16.mxu0 0
      %5574 = vmatpush1.bf16.msra.mxu0 0
      %5575 = vmatprep.subr.bf16.mxu0 0
      %5576 = vmatpush1.bf16.msra.mxu0 0
      %5577 = vmatprep.subr.bf16.mxu0 0
      %5578 = vmatpush1.bf16.msra.mxu0 0
      %5579 = vmatprep.subr.bf16.mxu0 0
      %5580 = vmatpush1.bf16.msra.mxu0 0
      %5581 = vmatprep.subr.bf16.mxu0 0
      %5582 = vmatpush1.bf16.msra.mxu0 0
      %5583 = vmatprep.subr.bf16.mxu0 0
      %5584 = vmatpush1.bf16.msra.mxu0 0
      %5585 = vmatprep.subr.bf16.mxu0 0
      %5586 = vmatpush1.bf16.msra.mxu0 0
      %5587 = vmatprep.subr.bf16.mxu0 0
      %5588 = vmatpush1.bf16.msra.mxu0 0
      %5589 = vmatprep.subr.bf16.mxu0 0
      %5590 = vmatpush1.bf16.msra.mxu0 0
      %5591 = vmatprep.subr.bf16.mxu0 0
      %5592 = vmatpush1.bf16.msra.mxu0 0
      %5593 = vmatprep.subr.bf16.mxu0 0
      %5594 = vmatpush1.bf16.msra.mxu0 0
      %5595 = vmatprep.subr.bf16.mxu0 0
      %5596 = vmatpush1.bf16.msra.mxu0 0
      %5597 = vmatprep.mubr.bf16.mxu0 0
      %5598 = vmatmul.mubr.bf16.gmra.mrb[0].mxu0 %v5504
      %v5599 = vpop.f32.mrb[0].mxu0
      %v5600 = vadd.f32 0.0, %v5599
      %v5601 = vpop.f32.mrb[0].mxu0
      %v5602 = vadd.f32 0.0, %v5601
      %v5603 = vpop.f32.mrb[0].mxu0
      %v5604 = vpop.f32.mrb[0].mxu0
      %5605 = vdwg.mxu0
      %5606 = vmatprep.subr.bf16.mxu0 %v5522
      %5607 = vmatpush1.bf16.msra.mxu0 %v5519
      %5608 = vmatprep.subr.bf16.mxu0 0
      %5609 = vmatpush1.bf16.msra.mxu0 0
      %5610 = vmatprep.subr.bf16.mxu0 0
      %5611 = vmatpush1.bf16.msra.mxu0 0
      %5612 = vmatprep.subr.bf16.mxu0 0
      %5613 = vmatpush1.bf16.msra.mxu0 0
      %5614 = vmatprep.subr.bf16.mxu0 0
      %5615 = vmatpush1.bf16.msra.mxu0 0
      %5616 = vmatprep.subr.bf16.mxu0 0
      %5617 = vmatpush1.bf16.msra.mxu0 0
      %5618 = vmatprep.subr.bf16.mxu0 0
      %5619 = vmatpush1.bf16.msra.mxu0 0
      %5620 = vmatprep.subr.bf16.mxu0 0
      %5621 = vmatpush1.bf16.msra.mxu0 0
      %5622 = vmatprep.subr.bf16.mxu0 0
      %5623 = vmatpush1.bf16.msra.mxu0 0
      %5624 = vmatprep.subr.bf16.mxu0 0
      %5625 = vmatpush1.bf16.msra.mxu0 0
      %5626 = vmatprep.subr.bf16.mxu0 0
      %5627 = vmatpush1.bf16.msra.mxu0 0
      %5628 = vmatprep.subr.bf16.mxu0 0
      %5629 = vmatpush1.bf16.msra.mxu0 0
      %5630 = vmatprep.subr.bf16.mxu0 0
      %5631 = vmatpush1.bf16.msra.mxu0 0
      %5632 = vmatprep.subr.bf16.mxu0 0
      %5633 = vmatpush1.bf16.msra.mxu0 0
      %5634 = vmatprep.subr.bf16.mxu0 0
      %5635 = vmatpush1.bf16.msra.mxu0 0
      %5636 = vmatprep.subr.bf16.mxu0 0
      %5637 = vmatpush1.bf16.msra.mxu0 0
      %5638 = vmatprep.mubr.bf16.mxu0 0
      %5639 = vmatmul.mubr.bf16.gmra.mrb[0].mxu0 %v5504
      %v5640 = vpop.f32.mrb[0].mxu0
      %v5641 = vadd.f32 0.0, %v5640
      %v5642 = vpop.f32.mrb[0].mxu0
      %v5643 = vadd.f32 0.0, %v5642
      %v5644 = vpop.f32.mrb[0].mxu0
      %v5645 = vpop.f32.mrb[0].mxu0
      %5646 = vdwg.mxu0
      %v5647 = vadd.f32 %v5424, %v5559
      %v5648 = vadd.f32 %v5425, %v5561
      %v5649 = vadd.f32 %v5426, %v5600
      %v5650 = vadd.f32 %v5427, %v5602
      %v5651 = vadd.f32 %v5428, %v5641
      %v5652 = vadd.f32 %v5429, %v5643
      %v5653 = vld [vmem:[#allocation2 + $0x5] sm:$0x7f]
      %s5654 = scalar_lea.vmem %s3, 24
      %v5655 = vld [vmem:[%s5654] sm:$0x1]
      %v5657 = vcombine.high %v5653, %v5653
      %v5659 = vunpack.c.l.s4 1966171168
      %v5660 = vunpack.c.0.s8 %v5659
      %v5661 = vlaneseq
      %v5662 = vshrl.u32 %v5661, 7
      %v5663 = vsub.s32 %v5660, %v5662
      %v5664 = vrot.slane %v5653, %v5663
      %v5666 = vunpack.c.l.s4 1966171168
      %v5667 = vunpack.c.0.s8 %v5666
      %v5668 = vlaneseq
      %v5669 = vshrl.u32 %v5668, 7
      %v5670 = vsub.s32 %v5667, %v5669
      %v5671 = vrot.slane %v5657, %v5670
      %v5672 = vcombine.high %v5664, %v5664
      %v5673 = vcombine.high %v5671, %v5671
      %v5675 = vunpack.c.l.s4 1966171168
      %v5676 = vunpack.c.0.s8 %v5675
      %v5677 = vlaneseq
      %v5678 = vshrl.u32 %v5677, 7
      %v5679 = vsub.s32 %v5676, %v5678
      %v5680 = vrot.slane %v5664, %v5679
      %v5682 = vunpack.c.l.s4 1966171168
      %v5683 = vunpack.c.0.s8 %v5682
      %v5684 = vlaneseq
      %v5685 = vshrl.u32 %v5684, 7
      %v5686 = vsub.s32 %v5683, %v5685
      %v5687 = vrot.slane %v5671, %v5686
      %v5689 = vunpack.c.l.s4 1966171168
      %v5690 = vunpack.c.0.s8 %v5689
      %v5691 = vlaneseq
      %v5692 = vshrl.u32 %v5691, 7
      %v5693 = vsub.s32 %v5690, %v5692
      %v5694 = vrot.slane %v5672, %v5693
      %v5696 = vunpack.c.l.s4 1966171168
      %v5697 = vunpack.c.0.s8 %v5696
      %v5698 = vlaneseq
      %v5699 = vshrl.u32 %v5698, 7
      %v5700 = vsub.s32 %v5697, %v5699
      %v5701 = vrot.slane %v5673, %v5700
      %v5702 = vcombine.high %v5680, %v5680
      %v5703 = vcombine.high %v5687, %v5687
      %v5704 = vcombine.high %v5694, %v5694
      %5705 = vrot.lane.b32.xlu0 %v5680, 84
      %v5706 = vpop.permute.xlu0 %5705
      %5707 = vrot.lane.b32.xlu0 %v5694, 84
      %v5708 = vpop.permute.xlu0 %5707
      %5709 = vrot.lane.b32.xlu0 %v5702, 84
      %v5710 = vpop.permute.xlu0 %5709
      %5711 = vrot.lane.b32.xlu0 %v5704, 84
      %v5712 = vpop.permute.xlu0 %5711
      %5713 = vrot.lane.b32.xlu0 %v5687, 84
      %v5714 = vpop.permute.xlu0 %5713
      %5715 = vrot.lane.b32.xlu0 %v5701, 84
      %v5716 = vpop.permute.xlu0 %5715
      %5717 = vrot.lane.b32.xlu0 %v5703, 84
      %v5718 = vpop.permute.xlu0 %5717
      %vm5719 = vcmask 687104
      %v5720 = vsel %vm5719, %v5706, %v5708
      %v5721 = vsel %vm5719, %v5708, %v5710
      %v5722 = vsel %vm5719, %v5710, %v5712
      %v5723 = vsel %vm5719, %v5712, %v5714
      %v5724 = vsel %vm5719, %v5714, %v5716
      %v5725 = vsel %vm5719, %v5716, %v5718
      %v5727 = vsel %vm407, %v5655, 0
      %v5730 = vand.u32 %v5720, %v413
      %v5733 = vand.u32 %v5721, %v413
      %v5736 = vand.u32 %v5722, %v413
      %v5739 = vand.u32 %v5723, %v413
      %v5742 = vand.u32 %v5724, %v413
      %v5745 = vand.u32 %v5725, %v413
      %5747 = vmatprep.subr.bf16.mxu0 %v5733
      %5748 = vmatpush1.bf16.msra.mxu0 %v5730
      %5749 = vmatprep.subr.bf16.mxu0 0
      %5750 = vmatpush1.bf16.msra.mxu0 0
      %5751 = vmatprep.subr.bf16.mxu0 0
      %5752 = vmatpush1.bf16.msra.mxu0 0
      %5753 = vmatprep.subr.bf16.mxu0 0
      %5754 = vmatpush1.bf16.msra.mxu0 0
      %5755 = vmatprep.subr.bf16.mxu0 0
      %5756 = vmatpush1.bf16.msra.mxu0 0
      %5757 = vmatprep.subr.bf16.mxu0 0
      %5758 = vmatpush1.bf16.msra.mxu0 0
      %5759 = vmatprep.subr.bf16.mxu0 0
      %5760 = vmatpush1.bf16.msra.mxu0 0
      %5761 = vmatprep.subr.bf16.mxu0 0
      %5762 = vmatpush1.bf16.msra.mxu0 0
      %5763 = vmatprep.subr.bf16.mxu0 0
      %5764 = vmatpush1.bf16.msra.mxu0 0
      %5765 = vmatprep.subr.bf16.mxu0 0
      %5766 = vmatpush1.bf16.msra.mxu0 0
      %5767 = vmatprep.subr.bf16.mxu0 0
      %5768 = vmatpush1.bf16.msra.mxu0 0
      %5769 = vmatprep.subr.bf16.mxu0 0
      %5770 = vmatpush1.bf16.msra.mxu0 0
      %5771 = vmatprep.subr.bf16.mxu0 0
      %5772 = vmatpush1.bf16.msra.mxu0 0
      %5773 = vmatprep.subr.bf16.mxu0 0
      %5774 = vmatpush1.bf16.msra.mxu0 0
      %5775 = vmatprep.subr.bf16.mxu0 0
      %5776 = vmatpush1.bf16.msra.mxu0 0
      %5777 = vmatprep.subr.bf16.mxu0 0
      %5778 = vmatpush1.bf16.msra.mxu0 0
      %5779 = vmatprep.mubr.bf16.mxu0 0
      %5780 = vmatmul.mubr.bf16.gmra.mrb[0].mxu0 %v5727
      %v5781 = vpop.f32.mrb[0].mxu0
      %v5782 = vadd.f32 0.0, %v5781
      %v5783 = vpop.f32.mrb[0].mxu0
      %v5784 = vadd.f32 0.0, %v5783
      %v5785 = vpop.f32.mrb[0].mxu0
      %v5786 = vpop.f32.mrb[0].mxu0
      %5787 = vdwg.mxu0
      %5788 = vmatprep.subr.bf16.mxu0 %v5739
      %5789 = vmatpush1.bf16.msra.mxu0 %v5736
      %5790 = vmatprep.subr.bf16.mxu0 0
      %5791 = vmatpush1.bf16.msra.mxu0 0
      %5792 = vmatprep.subr.bf16.mxu0 0
      %5793 = vmatpush1.bf16.msra.mxu0 0
      %5794 = vmatprep.subr.bf16.mxu0 0
      %5795 = vmatpush1.bf16.msra.mxu0 0
      %5796 = vmatprep.subr.bf16.mxu0 0
      %5797 = vmatpush1.bf16.msra.mxu0 0
      %5798 = vmatprep.subr.bf16.mxu0 0
      %5799 = vmatpush1.bf16.msra.mxu0 0
      %5800 = vmatprep.subr.bf16.mxu0 0
      %5801 = vmatpush1.bf16.msra.mxu0 0
      %5802 = vmatprep.subr.bf16.mxu0 0
      %5803 = vmatpush1.bf16.msra.mxu0 0
      %5804 = vmatprep.subr.bf16.mxu0 0
      %5805 = vmatpush1.bf16.msra.mxu0 0
      %5806 = vmatprep.subr.bf16.mxu0 0
      %5807 = vmatpush1.bf16.msra.mxu0 0
      %5808 = vmatprep.subr.bf16.mxu0 0
      %5809 = vmatpush1.bf16.msra.mxu0 0
      %5810 = vmatprep.subr.bf16.mxu0 0
      %5811 = vmatpush1.bf16.msra.mxu0 0
      %5812 = vmatprep.subr.bf16.mxu0 0
      %5813 = vmatpush1.bf16.msra.mxu0 0
      %5814 = vmatprep.subr.bf16.mxu0 0
      %5815 = vmatpush1.bf16.msra.mxu0 0
      %5816 = vmatprep.subr.bf16.mxu0 0
      %5817 = vmatpush1.bf16.msra.mxu0 0
      %5818 = vmatprep.subr.bf16.mxu0 0
      %5819 = vmatpush1.bf16.msra.mxu0 0
      %5820 = vmatprep.mubr.bf16.mxu0 0
      %5821 = vmatmul.mubr.bf16.gmra.mrb[0].mxu0 %v5727
      %v5822 = vpop.f32.mrb[0].mxu0
      %v5823 = vadd.f32 0.0, %v5822
      %v5824 = vpop.f32.mrb[0].mxu0
      %v5825 = vadd.f32 0.0, %v5824
      %v5826 = vpop.f32.mrb[0].mxu0
      %v5827 = vpop.f32.mrb[0].mxu0
      %5828 = vdwg.mxu0
      %5829 = vmatprep.subr.bf16.mxu0 %v5745
      %5830 = vmatpush1.bf16.msra.mxu0 %v5742
      %5831 = vmatprep.subr.bf16.mxu0 0
      %5832 = vmatpush1.bf16.msra.mxu0 0
      %5833 = vmatprep.subr.bf16.mxu0 0
      %5834 = vmatpush1.bf16.msra.mxu0 0
      %5835 = vmatprep.subr.bf16.mxu0 0
      %5836 = vmatpush1.bf16.msra.mxu0 0
      %5837 = vmatprep.subr.bf16.mxu0 0
      %5838 = vmatpush1.bf16.msra.mxu0 0
      %5839 = vmatprep.subr.bf16.mxu0 0
      %5840 = vmatpush1.bf16.msra.mxu0 0
      %5841 = vmatprep.subr.bf16.mxu0 0
      %5842 = vmatpush1.bf16.msra.mxu0 0
      %5843 = vmatprep.subr.bf16.mxu0 0
      %5844 = vmatpush1.bf16.msra.mxu0 0
      %5845 = vmatprep.subr.bf16.mxu0 0
      %5846 = vmatpush1.bf16.msra.mxu0 0
      %5847 = vmatprep.subr.bf16.mxu0 0
      %5848 = vmatpush1.bf16.msra.mxu0 0
      %5849 = vmatprep.subr.bf16.mxu0 0
      %5850 = vmatpush1.bf16.msra.mxu0 0
      %5851 = vmatprep.subr.bf16.mxu0 0
      %5852 = vmatpush1.bf16.msra.mxu0 0
      %5853 = vmatprep.subr.bf16.mxu0 0
      %5854 = vmatpush1.bf16.msra.mxu0 0
      %5855 = vmatprep.subr.bf16.mxu0 0
      %5856 = vmatpush1.bf16.msra.mxu0 0
      %5857 = vmatprep.subr.bf16.mxu0 0
      %5858 = vmatpush1.bf16.msra.mxu0 0
      %5859 = vmatprep.subr.bf16.mxu0 0
      %5860 = vmatpush1.bf16.msra.mxu0 0
      %5861 = vmatprep.mubr.bf16.mxu0 0
      %5862 = vmatmul.mubr.bf16.gmra.mrb[0].mxu0 %v5727
      %v5863 = vpop.f32.mrb[0].mxu0
      %v5864 = vadd.f32 0.0, %v5863
      %v5865 = vpop.f32.mrb[0].mxu0
      %v5866 = vadd.f32 0.0, %v5865
      %v5867 = vpop.f32.mrb[0].mxu0
      %v5868 = vpop.f32.mrb[0].mxu0
      %5869 = vdwg.mxu0
      %v5870 = vadd.f32 %v5647, %v5782
      %v5871 = vadd.f32 %v5648, %v5784
      %v5872 = vadd.f32 %v5649, %v5823
      %v5873 = vadd.f32 %v5650, %v5825
      %v5874 = vadd.f32 %v5651, %v5864
      %v5875 = vadd.f32 %v5652, %v5866
      %v5876 = vld [vmem:[#allocation2 + $0x5] sm:$0x7f]
      %s5877 = scalar_lea.vmem %s3, 25
      %v5878 = vld [vmem:[%s5877] sm:$0x1]
      %v5880 = vcombine.high %v5876, %v5876
      %v5882 = vunpack.c.l.s4 1966171168
      %v5883 = vunpack.c.0.s8 %v5882
      %v5884 = vlaneseq
      %v5885 = vshrl.u32 %v5884, 7
      %v5886 = vsub.s32 %v5883, %v5885
      %v5887 = vrot.slane %v5876, %v5886
      %v5889 = vunpack.c.l.s4 1966171168
      %v5890 = vunpack.c.0.s8 %v5889
      %v5891 = vlaneseq
      %v5892 = vshrl.u32 %v5891, 7
      %v5893 = vsub.s32 %v5890, %v5892
      %v5894 = vrot.slane %v5880, %v5893
      %v5895 = vcombine.high %v5887, %v5887
      %v5896 = vcombine.high %v5894, %v5894
      %v5898 = vunpack.c.l.s4 1966171168
      %v5899 = vunpack.c.0.s8 %v5898
      %v5900 = vlaneseq
      %v5901 = vshrl.u32 %v5900, 7
      %v5902 = vsub.s32 %v5899, %v5901
      %v5903 = vrot.slane %v5887, %v5902
      %v5905 = vunpack.c.l.s4 1966171168
      %v5906 = vunpack.c.0.s8 %v5905
      %v5907 = vlaneseq
      %v5908 = vshrl.u32 %v5907, 7
      %v5909 = vsub.s32 %v5906, %v5908
      %v5910 = vrot.slane %v5894, %v5909
      %v5912 = vunpack.c.l.s4 1966171168
      %v5913 = vunpack.c.0.s8 %v5912
      %v5914 = vlaneseq
      %v5915 = vshrl.u32 %v5914, 7
      %v5916 = vsub.s32 %v5913, %v5915
      %v5917 = vrot.slane %v5895, %v5916
      %v5919 = vunpack.c.l.s4 1966171168
      %v5920 = vunpack.c.0.s8 %v5919
      %v5921 = vlaneseq
      %v5922 = vshrl.u32 %v5921, 7
      %v5923 = vsub.s32 %v5920, %v5922
      %v5924 = vrot.slane %v5896, %v5923
      %v5925 = vcombine.high %v5903, %v5903
      %v5926 = vcombine.high %v5910, %v5910
      %v5927 = vcombine.high %v5917, %v5917
      %5928 = vrot.lane.b32.xlu0 %v5903, 83
      %v5929 = vpop.permute.xlu0 %5928
      %5930 = vrot.lane.b32.xlu0 %v5917, 83
      %v5931 = vpop.permute.xlu0 %5930
      %5932 = vrot.lane.b32.xlu0 %v5925, 83
      %v5933 = vpop.permute.xlu0 %5932
      %5934 = vrot.lane.b32.xlu0 %v5927, 83
      %v5935 = vpop.permute.xlu0 %5934
      %5936 = vrot.lane.b32.xlu0 %v5910, 83
      %v5937 = vpop.permute.xlu0 %5936
      %5938 = vrot.lane.b32.xlu0 %v5924, 83
      %v5939 = vpop.permute.xlu0 %5938
      %5940 = vrot.lane.b32.xlu0 %v5926, 83
      %v5941 = vpop.permute.xlu0 %5940
      %vm5942 = vcmask 678912
      %v5943 = vsel %vm5942, %v5929, %v5931
      %v5944 = vsel %vm5942, %v5931, %v5933
      %v5945 = vsel %vm5942, %v5933, %v5935
      %v5946 = vsel %vm5942, %v5935, %v5937
      %v5947 = vsel %vm5942, %v5937, %v5939
      %v5948 = vsel %vm5942, %v5939, %v5941
      %v5950 = vsel %vm407, %v5878, 0
      %v5953 = vand.u32 %v5943, %v413
      %v5956 = vand.u32 %v5944, %v413
      %v5959 = vand.u32 %v5945, %v413
      %v5962 = vand.u32 %v5946, %v413
      %v5965 = vand.u32 %v5947, %v413
      %v5968 = vand.u32 %v5948, %v413
      %5970 = vmatprep.subr.bf16.mxu0 %v5956
      %5971 = vmatpush1.bf16.msra.mxu0 %v5953
      %5972 = vmatprep.subr.bf16.mxu0 0
      %5973 = vmatpush1.bf16.msra.mxu0 0
      %5974 = vmatprep.subr.bf16.mxu0 0
      %5975 = vmatpush1.bf16.msra.mxu0 0
      %5976 = vmatprep.subr.bf16.mxu0 0
      %5977 = vmatpush1.bf16.msra.mxu0 0
      %5978 = vmatprep.subr.bf16.mxu0 0
      %5979 = vmatpush1.bf16.msra.mxu0 0
      %5980 = vmatprep.subr.bf16.mxu0 0
      %5981 = vmatpush1.bf16.msra.mxu0 0
      %5982 = vmatprep.subr.bf16.mxu0 0
      %5983 = vmatpush1.bf16.msra.mxu0 0
      %5984 = vmatprep.subr.bf16.mxu0 0
      %5985 = vmatpush1.bf16.msra.mxu0 0
      %5986 = vmatprep.subr.bf16.mxu0 0
      %5987 = vmatpush1.bf16.msra.mxu0 0
      %5988 = vmatprep.subr.bf16.mxu0 0
      %5989 = vmatpush1.bf16.msra.mxu0 0
      %5990 = vmatprep.subr.bf16.mxu0 0
      %5991 = vmatpush1.bf16.msra.mxu0 0
      %5992 = vmatprep.subr.bf16.mxu0 0
      %5993 = vmatpush1.bf16.msra.mxu0 0
      %5994 = vmatprep.subr.bf16.mxu0 0
      %5995 = vmatpush1.bf16.msra.mxu0 0
      %5996 = vmatprep.subr.bf16.mxu0 0
      %5997 = vmatpush1.bf16.msra.mxu0 0
      %5998 = vmatprep.subr.bf16.mxu0 0
      %5999 = vmatpush1.bf16.msra.mxu0 0
      %6000 = vmatprep.subr.bf16.mxu0 0
      %6001 = vmatpush1.bf16.msra.mxu0 0
      %6002 = vmatprep.mubr.bf16.mxu0 0
      %6003 = vmatmul.mubr.bf16.gmra.mrb[0].mxu0 %v5950
      %v6004 = vpop.f32.mrb[0].mxu0
      %v6005 = vadd.f32 0.0, %v6004
      %v6006 = vpop.f32.mrb[0].mxu0
      %v6007 = vadd.f32 0.0, %v6006
      %v6008 = vpop.f32.mrb[0].mxu0
      %v6009 = vpop.f32.mrb[0].mxu0
      %6010 = vdwg.mxu0
      %6011 = vmatprep.subr.bf16.mxu0 %v5962
      %6012 = vmatpush1.bf16.msra.mxu0 %v5959
      %6013 = vmatprep.subr.bf16.mxu0 0
      %6014 = vmatpush1.bf16.msra.mxu0 0
      %6015 = vmatprep.subr.bf16.mxu0 0
      %6016 = vmatpush1.bf16.msra.mxu0 0
      %6017 = vmatprep.subr.bf16.mxu0 0
      %6018 = vmatpush1.bf16.msra.mxu0 0
      %6019 = vmatprep.subr.bf16.mxu0 0
      %6020 = vmatpush1.bf16.msra.mxu0 0
      %6021 = vmatprep.subr.bf16.mxu0 0
      %6022 = vmatpush1.bf16.msra.mxu0 0
      %6023 = vmatprep.subr.bf16.mxu0 0
      %6024 = vmatpush1.bf16.msra.mxu0 0
      %6025 = vmatprep.subr.bf16.mxu0 0
      %6026 = vmatpush1.bf16.msra.mxu0 0
      %6027 = vmatprep.subr.bf16.mxu0 0
      %6028 = vmatpush1.bf16.msra.mxu0 0
      %6029 = vmatprep.subr.bf16.mxu0 0
      %6030 = vmatpush1.bf16.msra.mxu0 0
      %6031 = vmatprep.subr.bf16.mxu0 0
      %6032 = vmatpush1.bf16.msra.mxu0 0
      %6033 = vmatprep.subr.bf16.mxu0 0
      %6034 = vmatpush1.bf16.msra.mxu0 0
      %6035 = vmatprep.subr.bf16.mxu0 0
      %6036 = vmatpush1.bf16.msra.mxu0 0
      %6037 = vmatprep.subr.bf16.mxu0 0
      %6038 = vmatpush1.bf16.msra.mxu0 0
      %6039 = vmatprep.subr.bf16.mxu0 0
      %6040 = vmatpush1.bf16.msra.mxu0 0
      %6041 = vmatprep.subr.bf16.mxu0 0
      %6042 = vmatpush1.bf16.msra.mxu0 0
      %6043 = vmatprep.mubr.bf16.mxu0 0
      %6044 = vmatmul.mubr.bf16.gmra.mrb[0].mxu0 %v5950
      %v6045 = vpop.f32.mrb[0].mxu0
      %v6046 = vadd.f32 0.0, %v6045
      %v6047 = vpop.f32.mrb[0].mxu0
      %v6048 = vadd.f32 0.0, %v6047
      %v6049 = vpop.f32.mrb[0].mxu0
      %v6050 = vpop.f32.mrb[0].mxu0
      %6051 = vdwg.mxu0
      %6052 = vmatprep.subr.bf16.mxu0 %v5968
      %6053 = vmatpush1.bf16.msra.mxu0 %v5965
      %6054 = vmatprep.subr.bf16.mxu0 0
      %6055 = vmatpush1.bf16.msra.mxu0 0
      %6056 = vmatprep.subr.bf16.mxu0 0
      %6057 = vmatpush1.bf16.msra.mxu0 0
      %6058 = vmatprep.subr.bf16.mxu0 0
      %6059 = vmatpush1.bf16.msra.mxu0 0
      %6060 = vmatprep.subr.bf16.mxu0 0
      %6061 = vmatpush1.bf16.msra.mxu0 0
      %6062 = vmatprep.subr.bf16.mxu0 0
      %6063 = vmatpush1.bf16.msra.mxu0 0
      %6064 = vmatprep.subr.bf16.mxu0 0
      %6065 = vmatpush1.bf16.msra.mxu0 0
      %6066 = vmatprep.subr.bf16.mxu0 0
      %6067 = vmatpush1.bf16.msra.mxu0 0
      %6068 = vmatprep.subr.bf16.mxu0 0
      %6069 = vmatpush1.bf16.msra.mxu0 0
      %6070 = vmatprep.subr.bf16.mxu0 0
      %6071 = vmatpush1.bf16.msra.mxu0 0
      %6072 = vmatprep.subr.bf16.mxu0 0
      %6073 = vmatpush1.bf16.msra.mxu0 0
      %6074 = vmatprep.subr.bf16.mxu0 0
      %6075 = vmatpush1.bf16.msra.mxu0 0
      %6076 = vmatprep.subr.bf16.mxu0 0
      %6077 = vmatpush1.bf16.msra.mxu0 0
      %6078 = vmatprep.subr.bf16.mxu0 0
      %6079 = vmatpush1.bf16.msra.mxu0 0
      %6080 = vmatprep.subr.bf16.mxu0 0
      %6081 = vmatpush1.bf16.msra.mxu0 0
      %6082 = vmatprep.subr.bf16.mxu0 0
      %6083 = vmatpush1.bf16.msra.mxu0 0
      %6084 = vmatprep.mubr.bf16.mxu0 0
      %6085 = vmatmul.mubr.bf16.gmra.mrb[0].mxu0 %v5950
      %v6086 = vpop.f32.mrb[0].mxu0
      %v6087 = vadd.f32 0.0, %v6086
      %v6088 = vpop.f32.mrb[0].mxu0
      %v6089 = vadd.f32 0.0, %v6088
      %v6090 = vpop.f32.mrb[0].mxu0
      %v6091 = vpop.f32.mrb[0].mxu0
      %6092 = vdwg.mxu0
      %v6093 = vadd.f32 %v5870, %v6005
      %v6094 = vadd.f32 %v5871, %v6007
      %v6095 = vadd.f32 %v5872, %v6046
      %v6096 = vadd.f32 %v5873, %v6048
      %v6097 = vadd.f32 %v5874, %v6087
      %v6098 = vadd.f32 %v5875, %v6089
      %v6099 = vld [vmem:[#allocation2 + $0x5] sm:$0x7f]
      %s6100 = scalar_lea.vmem %s3, 26
      %v6101 = vld [vmem:[%s6100] sm:$0x1]
      %v6103 = vcombine.high %v6099, %v6099
      %v6105 = vunpack.c.l.s4 1966171168
      %v6106 = vunpack.c.0.s8 %v6105
      %v6107 = vlaneseq
      %v6108 = vshrl.u32 %v6107, 7
      %v6109 = vsub.s32 %v6106, %v6108
      %v6110 = vrot.slane %v6099, %v6109
      %v6112 = vunpack.c.l.s4 1966171168
      %v6113 = vunpack.c.0.s8 %v6112
      %v6114 = vlaneseq
      %v6115 = vshrl.u32 %v6114, 7
      %v6116 = vsub.s32 %v6113, %v6115
      %v6117 = vrot.slane %v6103, %v6116
      %v6118 = vcombine.high %v6110, %v6110
      %v6119 = vcombine.high %v6117, %v6117
      %v6121 = vunpack.c.l.s4 1966171168
      %v6122 = vunpack.c.0.s8 %v6121
      %v6123 = vlaneseq
      %v6124 = vshrl.u32 %v6123, 7
      %v6125 = vsub.s32 %v6122, %v6124
      %v6126 = vrot.slane %v6110, %v6125
      %v6128 = vunpack.c.l.s4 1966171168
      %v6129 = vunpack.c.0.s8 %v6128
      %v6130 = vlaneseq
      %v6131 = vshrl.u32 %v6130, 7
      %v6132 = vsub.s32 %v6129, %v6131
      %v6133 = vrot.slane %v6117, %v6132
      %v6135 = vunpack.c.l.s4 1966171168
      %v6136 = vunpack.c.0.s8 %v6135
      %v6137 = vlaneseq
      %v6138 = vshrl.u32 %v6137, 7
      %v6139 = vsub.s32 %v6136, %v6138
      %v6140 = vrot.slane %v6118, %v6139
      %v6142 = vunpack.c.l.s4 1966171168
      %v6143 = vunpack.c.0.s8 %v6142
      %v6144 = vlaneseq
      %v6145 = vshrl.u32 %v6144, 7
      %v6146 = vsub.s32 %v6143, %v6145
      %v6147 = vrot.slane %v6119, %v6146
      %v6148 = vcombine.high %v6126, %v6126
      %v6149 = vcombine.high %v6133, %v6133
      %v6150 = vcombine.high %v6140, %v6140
      %6151 = vrot.lane.b32.xlu0 %v6126, 82
      %v6152 = vpop.permute.xlu0 %6151
      %6153 = vrot.lane.b32.xlu0 %v6140, 82
      %v6154 = vpop.permute.xlu0 %6153
      %6155 = vrot.lane.b32.xlu0 %v6148, 82
      %v6156 = vpop.permute.xlu0 %6155
      %6157 = vrot.lane.b32.xlu0 %v6150, 82
      %v6158 = vpop.permute.xlu0 %6157
      %6159 = vrot.lane.b32.xlu0 %v6133, 82
      %v6160 = vpop.permute.xlu0 %6159
      %6161 = vrot.lane.b32.xlu0 %v6147, 82
      %v6162 = vpop.permute.xlu0 %6161
      %6163 = vrot.lane.b32.xlu0 %v6149, 82
      %v6164 = vpop.permute.xlu0 %6163
      %vm6165 = vcmask 670720
      %v6166 = vsel %vm6165, %v6152, %v6154
      %v6167 = vsel %vm6165, %v6154, %v6156
      %v6168 = vsel %vm6165, %v6156, %v6158
      %v6169 = vsel %vm6165, %v6158, %v6160
      %v6170 = vsel %vm6165, %v6160, %v6162
      %v6171 = vsel %vm6165, %v6162, %v6164
      %v6173 = vsel %vm407, %v6101, 0
      %v6176 = vand.u32 %v6166, %v413
      %v6179 = vand.u32 %v6167, %v413
      %v6182 = vand.u32 %v6168, %v413
      %v6185 = vand.u32 %v6169, %v413
      %v6188 = vand.u32 %v6170, %v413
      %v6191 = vand.u32 %v6171, %v413
      %6193 = vmatprep.subr.bf16.mxu0 %v6179
      %6194 = vmatpush1.bf16.msra.mxu0 %v6176
      %6195 = vmatprep.subr.bf16.mxu0 0
      %6196 = vmatpush1.bf16.msra.mxu0 0
      %6197 = vmatprep.subr.bf16.mxu0 0
      %6198 = vmatpush1.bf16.msra.mxu0 0
      %6199 = vmatprep.subr.bf16.mxu0 0
      %6200 = vmatpush1.bf16.msra.mxu0 0
      %6201 = vmatprep.subr.bf16.mxu0 0
      %6202 = vmatpush1.bf16.msra.mxu0 0
      %6203 = vmatprep.subr.bf16.mxu0 0
      %6204 = vmatpush1.bf16.msra.mxu0 0
      %6205 = vmatprep.subr.bf16.mxu0 0
      %6206 = vmatpush1.bf16.msra.mxu0 0
      %6207 = vmatprep.subr.bf16.mxu0 0
      %6208 = vmatpush1.bf16.msra.mxu0 0
      %6209 = vmatprep.subr.bf16.mxu0 0
      %6210 = vmatpush1.bf16.msra.mxu0 0
      %6211 = vmatprep.subr.bf16.mxu0 0
      %6212 = vmatpush1.bf16.msra.mxu0 0
      %6213 = vmatprep.subr.bf16.mxu0 0
      %6214 = vmatpush1.bf16.msra.mxu0 0
      %6215 = vmatprep.subr.bf16.mxu0 0
      %6216 = vmatpush1.bf16.msra.mxu0 0
      %6217 = vmatprep.subr.bf16.mxu0 0
      %6218 = vmatpush1.bf16.msra.mxu0 0
      %6219 = vmatprep.subr.bf16.mxu0 0
      %6220 = vmatpush1.bf16.msra.mxu0 0
      %6221 = vmatprep.subr.bf16.mxu0 0
      %6222 = vmatpush1.bf16.msra.mxu0 0
      %6223 = vmatprep.subr.bf16.mxu0 0
      %6224 = vmatpush1.bf16.msra.mxu0 0
      %6225 = vmatprep.mubr.bf16.mxu0 0
      %6226 = vmatmul.mubr.bf16.gmra.mrb[0].mxu0 %v6173
      %v6227 = vpop.f32.mrb[0].mxu0
      %v6228 = vadd.f32 0.0, %v6227
      %v6229 = vpop.f32.mrb[0].mxu0
      %v6230 = vadd.f32 0.0, %v6229
      %v6231 = vpop.f32.mrb[0].mxu0
      %v6232 = vpop.f32.mrb[0].mxu0
      %6233 = vdwg.mxu0
      %6234 = vmatprep.subr.bf16.mxu0 %v6185
      %6235 = vmatpush1.bf16.msra.mxu0 %v6182
      %6236 = vmatprep.subr.bf16.mxu0 0
      %6237 = vmatpush1.bf16.msra.mxu0 0
      %6238 = vmatprep.subr.bf16.mxu0 0
      %6239 = vmatpush1.bf16.msra.mxu0 0
      %6240 = vmatprep.subr.bf16.mxu0 0
      %6241 = vmatpush1.bf16.msra.mxu0 0
      %6242 = vmatprep.subr.bf16.mxu0 0
      %6243 = vmatpush1.bf16.msra.mxu0 0
      %6244 = vmatprep.subr.bf16.mxu0 0
      %6245 = vmatpush1.bf16.msra.mxu0 0
      %6246 = vmatprep.subr.bf16.mxu0 0
      %6247 = vmatpush1.bf16.msra.mxu0 0
      %6248 = vmatprep.subr.bf16.mxu0 0
      %6249 = vmatpush1.bf16.msra.mxu0 0
      %6250 = vmatprep.subr.bf16.mxu0 0
      %6251 = vmatpush1.bf16.msra.mxu0 0
      %6252 = vmatprep.subr.bf16.mxu0 0
      %6253 = vmatpush1.bf16.msra.mxu0 0
      %6254 = vmatprep.subr.bf16.mxu0 0
      %6255 = vmatpush1.bf16.msra.mxu0 0
      %6256 = vmatprep.subr.bf16.mxu0 0
      %6257 = vmatpush1.bf16.msra.mxu0 0
      %6258 = vmatprep.subr.bf16.mxu0 0
      %6259 = vmatpush1.bf16.msra.mxu0 0
      %6260 = vmatprep.subr.bf16.mxu0 0
      %6261 = vmatpush1.bf16.msra.mxu0 0
      %6262 = vmatprep.subr.bf16.mxu0 0
      %6263 = vmatpush1.bf16.msra.mxu0 0
      %6264 = vmatprep.subr.bf16.mxu0 0
      %6265 = vmatpush1.bf16.msra.mxu0 0
      %6266 = vmatprep.mubr.bf16.mxu0 0
      %6267 = vmatmul.mubr.bf16.gmra.mrb[0].mxu0 %v6173
      %v6268 = vpop.f32.mrb[0].mxu0
      %v6269 = vadd.f32 0.0, %v6268
      %v6270 = vpop.f32.mrb[0].mxu0
      %v6271 = vadd.f32 0.0, %v6270
      %v6272 = vpop.f32.mrb[0].mxu0
      %v6273 = vpop.f32.mrb[0].mxu0
      %6274 = vdwg.mxu0
      %6275 = vmatprep.subr.bf16.mxu0 %v6191
      %6276 = vmatpush1.bf16.msra.mxu0 %v6188
      %6277 = vmatprep.subr.bf16.mxu0 0
      %6278 = vmatpush1.bf16.msra.mxu0 0
      %6279 = vmatprep.subr.bf16.mxu0 0
      %6280 = vmatpush1.bf16.msra.mxu0 0
      %6281 = vmatprep.subr.bf16.mxu0 0
      %6282 = vmatpush1.bf16.msra.mxu0 0
      %6283 = vmatprep.subr.bf16.mxu0 0
      %6284 = vmatpush1.bf16.msra.mxu0 0
      %6285 = vmatprep.subr.bf16.mxu0 0
      %6286 = vmatpush1.bf16.msra.mxu0 0
      %6287 = vmatprep.subr.bf16.mxu0 0
      %6288 = vmatpush1.bf16.msra.mxu0 0
      %6289 = vmatprep.subr.bf16.mxu0 0
      %6290 = vmatpush1.bf16.msra.mxu0 0
      %6291 = vmatprep.subr.bf16.mxu0 0
      %6292 = vmatpush1.bf16.msra.mxu0 0
      %6293 = vmatprep.subr.bf16.mxu0 0
      %6294 = vmatpush1.bf16.msra.mxu0 0
      %6295 = vmatprep.subr.bf16.mxu0 0
      %6296 = vmatpush1.bf16.msra.mxu0 0
      %6297 = vmatprep.subr.bf16.mxu0 0
      %6298 = vmatpush1.bf16.msra.mxu0 0
      %6299 = vmatprep.subr.bf16.mxu0 0
      %6300 = vmatpush1.bf16.msra.mxu0 0
      %6301 = vmatprep.subr.bf16.mxu0 0
      %6302 = vmatpush1.bf16.msra.mxu0 0
      %6303 = vmatprep.subr.bf16.mxu0 0
      %6304 = vmatpush1.bf16.msra.mxu0 0
      %6305 = vmatprep.subr.bf16.mxu0 0
      %6306 = vmatpush1.bf16.msra.mxu0 0
      %6307 = vmatprep.mubr.bf16.mxu0 0
      %6308 = vmatmul.mubr.bf16.gmra.mrb[0].mxu0 %v6173
      %v6309 = vpop.f32.mrb[0].mxu0
      %v6310 = vadd.f32 0.0, %v6309
      %v6311 = vpop.f32.mrb[0].mxu0
      %v6312 = vadd.f32 0.0, %v6311
      %v6313 = vpop.f32.mrb[0].mxu0
      %v6314 = vpop.f32.mrb[0].mxu0
      %6315 = vdwg.mxu0
      %v6316 = vadd.f32 %v6093, %v6228
      %v6317 = vadd.f32 %v6094, %v6230
      %v6318 = vadd.f32 %v6095, %v6269
      %v6319 = vadd.f32 %v6096, %v6271
      %v6320 = vadd.f32 %v6097, %v6310
      %v6321 = vadd.f32 %v6098, %v6312
      %v6322 = vld [vmem:[%s4] sm:$0x3]
      %6324 = vset.pattern.permute.xlu0 0
      %6325 = vperm.xlu0 %6324, %v6322
      %v6326 = vpop.permute.xlu0 %6325
      %v6328 = vadd.f32 %v6316, %v6326
      %v6329 = vadd.f32 %v6317, %v6326
      %v6330 = vadd.f32 %v6318, %v6326
      %v6331 = vadd.f32 %v6319, %v6326
      %v6332 = vadd.f32 %v6320, %v6326
      %v6333 = vadd.f32 %v6321, %v6326
      %s6334 = sld [smem:[#allocation3]]
      %vm6335 = vcmp.ge.f32.partialorder %v6328, 0.0
      %vm6336 = vcmp.ge.f32.partialorder %v6329, 0.0
      %vm6337 = vcmp.ge.f32.partialorder %v6330, 0.0
      %vm6338 = vcmp.ge.f32.partialorder %v6331, 0.0
      %vm6339 = vcmp.ge.f32.partialorder %v6332, 0.0
      %vm6340 = vcmp.ge.f32.partialorder %v6333, 0.0
      %v6341 = vstv %s6334
      %v6342 = vmul.f32 %v6341, %v6328
      %v6343 = vmul.f32 %v6341, %v6329
      %v6344 = vmul.f32 %v6341, %v6330
      %v6345 = vmul.f32 %v6341, %v6331
      %v6346 = vmul.f32 %v6341, %v6332
      %v6347 = vmul.f32 %v6341, %v6333
      %v6348 = vsel %vm6335, %v6328, %v6342
      %v6349 = vsel %vm6336, %v6329, %v6343
      %v6350 = vsel %vm6337, %v6330, %v6344
      %v6351 = vsel %vm6338, %v6331, %v6345
      %v6352 = vsel %vm6339, %v6332, %v6346
      %v6353 = vsel %vm6340, %v6333, %v6347
      %v6354 = vpack.c.bf16 %v6348, %v6348
      %v6355 = vpack.c.bf16 %v6349, %v6349
      %v6356 = vpack.c.bf16 %v6350, %v6350
      %v6357 = vpack.c.bf16 %v6351, %v6351
      %v6358 = vpack.c.bf16 %v6352, %v6352
      %v6359 = vpack.c.bf16 %v6353, %v6353
      %v6366 = vcombine.low %v6354, %v6355
      %v6367 = vcombine.low %v6356, %v6357
      %v6368 = vcombine.low %v6358, %v6359
      %v6370 = vunpack.c.l.s4 1966171168
      %v6371 = vunpack.c.0.s8 %v6370
      %v6372 = vlaneseq
      %v6373 = vshrl.u32 %v6372, 7
      %v6374 = vsub.s32 %v6371, %v6373
      %v6375 = vrot.slane %v6366, %v6374
      %v6377 = vunpack.c.l.s4 1966171168
      %v6378 = vunpack.c.0.s8 %v6377
      %v6379 = vlaneseq
      %v6380 = vshrl.u32 %v6379, 7
      %v6381 = vsub.s32 %v6378, %v6380
      %v6382 = vrot.slane %v6367, %v6381
      %v6384 = vunpack.c.l.s4 1966171168
      %v6385 = vunpack.c.0.s8 %v6384
      %v6386 = vlaneseq
      %v6387 = vshrl.u32 %v6386, 7
      %v6388 = vsub.s32 %v6385, %v6387
      %v6389 = vrot.slane %v6368, %v6388
      %v6390 = vcombine.low %v6375, %v6382
      %v6392 = vunpack.c.l.s4 1966171168
      %v6393 = vunpack.c.0.s8 %v6392
      %v6394 = vlaneseq
      %v6395 = vshrl.u32 %v6394, 7
      %v6396 = vsub.s32 %v6393, %v6395
      %v6397 = vrot.slane %v6390, %v6396
      %v6399 = vunpack.c.l.s4 1966171168
      %v6400 = vunpack.c.0.s8 %v6399
      %v6401 = vlaneseq
      %v6402 = vshrl.u32 %v6401, 7
      %v6403 = vsub.s32 %v6400, %v6402
      %v6404 = vrot.slane %v6389, %v6403
      %v6405 = vcombine.low %v6397, %v6404
      %6407 = vst [vmem:[%s298] sm:$0x3f] %v6405
      %s6408 = smul.u32 6, %s22
      %p6409 = scmp.lt.s32.totalorder %s21, 0
      %s6410 = scalar_select %p6409, %s21, 0
      %p6411 = scmp.lt.s32.totalorder %s6408, 41
      %s6412 = scalar_select %p6411, %s6408, 41
      %s6413 = smul.addr %s6410, 42
      %s6414 = sadd.s32 %s6412, %s6413
      %s6415 = scalar_lea.vmem %s5, %s6414
      // Predicated region
      $region41: #{conv3x3_cf.1} parent=39 // pred_check
        %p6416 = pneg %p170
      $region42: #{conv3x3_cf.1} parent=39 // pred_check_branch
        %6418 = sbr.rel (%p6416) target = $region44
      $region43: #{conv3x3_cf.1} parent=39 // pred_region
        %s6419 = smul.u32 6, %s22
      $region44: #{conv3x3_cf.1} parent=39 // pred_fallthru
        _
    $region40: #{conv3x3_cf.1} parent=5 // pred_fallthru
      _
    %p6420 = scmp.le.s32.totalorder 2, %s12
    // Predicated region
    $region45: #{conv3x3_cf.1} parent=5 // pred_check
      %p6421 = pneg %p6420
    $region46: #{conv3x3_cf.1} parent=5 // pred_check_branch
      %6423 = sbr.rel (%p6421) target = $region48
    $region47: #{conv3x3_cf.1} parent=5 // pred_region
      %s6424 = ssub.s32 %s12, 2
      // Predicated region
      $region49: #{conv3x3_cf.1} parent=47 // pred_check
        %p6425 = pneg %p176
      $region50: #{conv3x3_cf.1} parent=47 // pred_check_branch
        %6427 = sbr.rel (%p6425) target = $region52
      $region51: #{conv3x3_cf.1} parent=47 // pred_region
        %s6428 = smul.u32 6, %s24
        %p6429 = scmp.lt.s32.totalorder %s23, 0
        %s6430 = scalar_select %p6429, %s23, 0
        %p6431 = scmp.lt.s32.totalorder %s6428, 41
        %s6432 = scalar_select %p6431, %s6428, 41
        %s6433 = smul.addr %s6430, 42
        %s6434 = sadd.s32 %s6432, %s6433
        %s6435 = scalar_lea.vmem %s5, %s6434
      $region52: #{conv3x3_cf.1} parent=47 // pred_fallthru
        _
    $region48: #{conv3x3_cf.1} parent=5 // pred_fallthru
      _
  $region6: #{conv3x3_cf.1} parent=0 // loop_footer
    %s16 = sadd.s32 1, %s12
  $region7: #{conv3x3_cf.1} parent=0 // loop_footer_branch
    %11 = sbr.rel target = $region3
  $region8: #{conv3x3_cf.1} parent=0 // loop_exit
    _

</llo_original>
